<compile_context>
chip_gen: v5e
topology: v5e:2x2
jax: 0.10.0
libtpu: 0.0.40
codegen_flags: <defaults>
</compile_context>

<pallas_src>
import functools

import jax
import jax.numpy as jnp
from jax import lax
from jax.experimental import pallas as pl
from jax.experimental.pallas import tpu as pltpu

# ----------------------------- block config ---------------------------------
DIM        = 64          # embedding dim (heads * head_dim)
MLP_RATIO  = 4
HEADS      = 4
HEAD_DIM   = 16
PROPOSAL_W = 2           # sqrt(#proposals) per region
PROPOSAL_H = 2
FOLD_W     = 2           # sqrt(#regions)
FOLD_H     = 2
LAYER_SCALE_INIT = 1e-5
GN_EPS = 1e-5            # nn.GroupNorm default eps

_SQRT_HALF = 0.7071067811865476


def _gelu_exact(x):
    # Exact (erf) GELU, erf via the Abramowitz & Stegun 7.1.26 polynomial
    # (|err| <= 1.5e-7, f32 level), so only abs/exp/div/where/mul/add are used.
    # TODO(synk): switch to lax.erf if/when erf_p gets a Pallas-TPU lowering.
    z = x * _SQRT_HALF
    az = jnp.abs(z)
    t = 1.0 / (1.0 + 0.3275911 * az)
    poly = ((((1.061405429 * t - 1.453152027) * t + 1.421413741) * t
             - 0.284496736) * t + 0.254829592) * t
    erf_abs = 1.0 - poly * jnp.exp(-az * az)
    erf = jnp.where(z < 0.0, -erf_abs, erf_abs)
    return 0.5 * x * (1.0 + erf)


def _mean_all(x, inv_n):
    # two single-axis reductions (lane then sublane) -> shape (1, 1)
    return jnp.sum(jnp.sum(x, axis=-1, keepdims=True), axis=-2, keepdims=True) * inv_n


# --------------------------- fused block kernel ------------------------------
def _cluster_block_kernel(alpha_ref, beta_ref, x_ref, wfv_ref, bfv_ref,
                          pool_ref, rmask_ref, wp_ref, bp_ref,
                          w1_ref, b1_ref, w2_ref, b2_ref, o_ref,
                          *, heads, head_dim, hd, inv_n):
    alpha = alpha_ref[0, 0]
    beta = beta_ref[0, 0]

    x0 = x_ref[0]                                     # [C, HW], channel-major

    # ---- GroupNorm1 (1 group); affine folded into wfv/bfv ----
    mu = _mean_all(x0, inv_n)
    xc = x0 - mu
    var = _mean_all(xc * xc, inv_n)
    xn = xc * lax.rsqrt(var + GN_EPS)

    # ---- fused (f | v) 1x1-conv: one [2hd, C] @ [C, HW] GEMM ----
    fv = jnp.dot(wfv_ref[...], xn, preferred_element_type=jnp.float32) + bfv_ref[...]
    f_all = fv[:hd, :]                                # [hd, HW] (sublane slice)
    v_all = fv[hd:, :]                                # [hd, HW]

    pool = pool_ref[...]                              # [RM, HW] avg-pool matrix
    rmask = rmask_ref[...]                            # [RM, HW] region membership
    RM = rmask.shape[0]
    dims_tb = (((1,), (1,)), ((), ()))                # contract lane dim of both

    # pooled centers / value-centers for all regions & heads (two trans_b GEMMs)
    c_all = lax.dot_general(f_all, pool, dims_tb,
                            preferred_element_type=jnp.float32)    # [hd, RM]
    vc_all = lax.dot_general(v_all, pool, dims_tb,
                             preferred_element_type=jnp.float32)   # [hd, RM]

    outs = []
    for h in range(heads):                            # static 4-way unroll
        s = slice(h * head_dim, (h + 1) * head_dim)   # 8-aligned sublane slice
        x_h, v_h = f_all[s, :], v_all[s, :]           # [D, HW]
        c_h, vc_h = c_all[s, :], vc_all[s, :]         # [D, RM]

        # l2-normalize over the channel (sublane) dim with fused rsqrt (EUP)
        cn = c_h * lax.rsqrt(jnp.sum(c_h * c_h, axis=0, keepdims=True) + 1e-12)
        pn = x_h * lax.rsqrt(jnp.sum(x_h * x_h, axis=0, keepdims=True) + 1e-12)

        # cosine similarity centers x points  -> [RM, HW]
        cos = lax.dot_general(cn, pn, (((0,), (0,)), ((), ())),
                              preferred_element_type=jnp.float32)
        # zero cross-region pairs -> equivalent to per-region clustering
        sim = jax.nn.sigmoid(beta + alpha * cos) * rmask

        # hard assignment: each point -> its max-sim center (first index wins)
        rm_iota = lax.broadcasted_iota(jnp.int32, sim.shape, 0)
        sim_max = jnp.max(sim, axis=0, keepdims=True)
        first = jnp.min(jnp.where(sim == sim_max, rm_iota, RM),
                        axis=0, keepdims=True)                       # [1, HW]
        mask = (rm_iota == first).astype(jnp.float32)                # [RM, HW]
        msim = sim * mask

        # aggregate assigned points into centers (count-normalization folded
        # into the dispatch weights -> no [RM,1] transposes needed)
        agg = lax.dot_general(v_h, msim, dims_tb,
                              preferred_element_type=jnp.float32) + vc_h   # [D, RM]
        inv_cnt = 1.0 / (jnp.sum(mask, axis=-1, keepdims=True) + 1.0)       # [RM, 1]
        outs.append(jnp.dot(agg, msim * inv_cnt,
                            preferred_element_type=jnp.float32))            # [D, HW]

    co = jnp.concatenate(outs, axis=0)                # [hd, HW], sublane concat

    # ---- proj (layer_scale_1 folded) + residual ----
    y1 = jnp.dot(wp_ref[...], co, preferred_element_type=jnp.float32) + bp_ref[...]
    x1 = x0 + y1                                      # [C, HW]

    # ---- GroupNorm2 (affine folded into fc1) + MLP (ls2 folded) + residual ----
    mu2 = _mean_all(x1, inv_n)
    xc2 = x1 - mu2
    var2 = _mean_all(xc2 * xc2, inv_n)
    xn2 = xc2 * lax.rsqrt(var2 + GN_EPS)
    hmid = jnp.dot(w1_ref[...], xn2, preferred_element_type=jnp.float32) + b1_ref[...]
    hmid = _gelu_exact(hmid)
    y2 = jnp.dot(w2_ref[...], hmid, preferred_element_type=jnp.float32) + b2_ref[...]
    o_ref[0] = x1 + y2                                # lane-dense [C, HW] store


def cluster_block_pallas(x, wfvT, bfvT, pool, rmask, alpha, beta,
                         wpT, bpT, w1T, b1T, w2T, b2T):
    B, C, HW = x.shape
    two_hd = wfvT.shape[0]
    hd = two_hd // 2
    RM = pool.shape[0]
    hidden = w1T.shape[0]
    return pl.pallas_call(
        functools.partial(_cluster_block_kernel, heads=HEADS, head_dim=HEAD_DIM,
                          hd=hd, inv_n=1.0 / (HW * C)),
        out_shape=jax.ShapeDtypeStruct((B, C, HW), jnp.float32),
        grid=(B,),
        in_specs=[
            pl.BlockSpec(memory_space=pltpu.MemorySpace.SMEM),   # sim_alpha
            pl.BlockSpec(memory_space=pltpu.MemorySpace.SMEM),   # sim_beta
            pl.BlockSpec((1, C, HW), lambda i: (i, 0, 0)),       # x
            pl.BlockSpec((two_hd, C), lambda i: (0, 0)),         # fused f|v weight
            pl.BlockSpec((two_hd, 1), lambda i: (0, 0)),         # fused f|v bias
            pl.BlockSpec((RM, HW), lambda i: (0, 0)),            # pool matrix
            pl.BlockSpec((RM, HW), lambda i: (0, 0)),            # region mask
            pl.BlockSpec((C, hd), lambda i: (0, 0)),             # proj weight
            pl.BlockSpec((C, 1), lambda i: (0, 0)),              # proj bias
            pl.BlockSpec((hidden, C), lambda i: (0, 0)),         # fc1 weight
            pl.BlockSpec((hidden, 1), lambda i: (0, 0)),         # fc1 bias
            pl.BlockSpec((C, hidden), lambda i: (0, 0)),         # fc2 weight
            pl.BlockSpec((C, 1), lambda i: (0, 0)),              # fc2 bias
        ],
        out_specs=pl.BlockSpec((1, C, HW), lambda i: (i, 0, 0)),
        compiler_params=pltpu.CompilerParams(dimension_semantics=("parallel",)),
    )(alpha, beta, x, wfvT, bfvT, pool, rmask, wpT, bpT, w1T, b1T, w2T, b2T)


# ------------------------------ model glue -----------------------------------
def build_pool_and_region_mask(s1, s2, fold_w, fold_h, pw, ph):
    """Static [RM, HW] adaptive-avg-pool matrix and region-membership mask."""
    wr, hr = s1 // fold_w, s2 // fold_h
    cw, ch = wr // pw, hr // ph
    hw = s1 * s2
    m_per_region = pw * ph
    rm_total = fold_w * fold_h * m_per_region
    idx = jnp.arange(hw, dtype=jnp.int32)
    i, j = idx // s2, idx % s2
    f1, f2 = i // wr, j // hr
    p1, p2 = (i % wr) // cw, (j % hr) // ch
    region = f1 * fold_h + f2                                   # [HW]
    cell = region * m_per_region + p1 * ph + p2                 # [HW]
    rm = jnp.arange(rm_total, dtype=jnp.int32)
    pool = (rm[:, None] == cell[None, :]).astype(jnp.float32) / float(cw * ch)
    rmask = ((rm[:, None] // m_per_region) == region[None, :]).astype(jnp.float32)
    return pool, rmask


def cluster_block_forward(params, x_nchw, pool, rmask):
    B, C, S1, S2 = x_nchw.shape
    HW = S1 * S2
    x = x_nchw.reshape(B, C, HW)          # contiguous reshape only, no transpose

    # fold norm1 affine into the fused (f | v) 1x1-conv weights (channel-major)
    w_fv0 = jnp.concatenate([params["f_w"], params["v_w"]], axis=1)    # [C, 2hd]
    b_fv0 = jnp.concatenate([params["f_b"], params["v_b"]], axis=0)    # [2hd]
    wfvT = (params["gn1_g"][:, None] * w_fv0).T                        # [2hd, C]
    bfvT = (params["gn1_b"] @ w_fv0 + b_fv0)[:, None]                  # [2hd, 1]

    # fold layer_scale_1 into proj, norm2 affine into fc1, layer_scale_2 into fc2
    wpT = (params["proj_w"] * params["ls1"][None, :]).T                # [C, hd]
    bpT = (params["proj_b"] * params["ls1"])[:, None]                  # [C, 1]
    w1T = (params["gn2_g"][:, None] * params["fc1_w"]).T               # [hidden, C]
    b1T = (params["gn2_b"] @ params["fc1_w"] + params["fc1_b"])[:, None]
    w2T = (params["fc2_w"] * params["ls2"][None, :]).T                 # [C, hidden]
    b2T = (params["fc2_b"] * params["ls2"])[:, None]                   # [C, 1]

    out = cluster_block_pallas(x, wfvT, bfvT, pool, rmask,
                               params["sim_alpha"], params["sim_beta"],
                               wpT, bpT, w1T, b1T, w2T, b2T)           # [B, C, HW]
    return out.reshape(B, C, S1, S2)


# ---------------------------- parameter init ---------------------------------
def init_params(key):
    hd = HEADS * HEAD_DIM
    hidden = DIM * MLP_RATIO
    ks = iter(jax.random.split(key, 16))

    def nrm(shape, std=0.02):
        return std * jax.random.normal(next(ks), shape, dtype=jnp.float32)

    return {
        "gn1_g": jnp.ones((DIM,), jnp.float32), "gn1_b": jnp.zeros((DIM,), jnp.float32),
        "gn2_g": jnp.ones((DIM,), jnp.float32), "gn2_b": jnp.zeros((DIM,), jnp.float32),
        "f_w": nrm((DIM, hd)),   "f_b": jnp.zeros((hd,), jnp.float32),
        "v_w": nrm((DIM, hd)),   "v_b": jnp.zeros((hd,), jnp.float32),
        "proj_w": nrm((hd, DIM)), "proj_b": jnp.zeros((DIM,), jnp.float32),
        "sim_alpha": jnp.ones((1, 1), jnp.float32),   # torch init: ones(1)
        "sim_beta": jnp.zeros((1, 1), jnp.float32),   # torch init: zeros(1)
        "fc1_w": nrm((DIM, hidden)), "fc1_b": jnp.zeros((hidden,), jnp.float32),
        "fc2_w": nrm((hidden, DIM)), "fc2_b": jnp.zeros((DIM,), jnp.float32),
        "ls1": LAYER_SCALE_INIT * jnp.ones((DIM,), jnp.float32),
        "ls2": LAYER_SCALE_INIT * jnp.ones((DIM,), jnp.float32),
    }


# --------------------------------- main ---------------------------------------
if __name__ == "__main__":
    key = jax.random.PRNGKey(0)
    pkey, xkey = jax.random.split(key)
    params = init_params(pkey)

    B, S1, S2 = 2, 16, 16
    x = jax.random.normal(xkey, (B, DIM, S1, S2), dtype=jnp.float32)
    pool, rmask = build_pool_and_region_mask(S1, S2, FOLD_W, FOLD_H,
                                             PROPOSAL_W, PROPOSAL_H)

    fwd = jax.jit(cluster_block_forward)
    out = jax.block_until_ready(fwd(params, x, pool, rmask))

    assert out.shape == (B, DIM, S1, S2), out.shape
    assert bool(jnp.all(jnp.isfinite(out)))
    print("KERNEL_OK")
</pallas_src>

<mosaic_0001>
module attributes {stable_mosaic.version = 11 : i64} {
  func.func @_cluster_block_kernel(%arg0: i32, %arg1: memref<1x1xf32, #tpu.memory_space<smem>>, %arg2: memref<1x1xf32, #tpu.memory_space<smem>>, %arg3: memref<1x64x256xf32, #tpu.memory_space<vmem>>, %arg4: memref<128x64xf32, #tpu.memory_space<vmem>>, %arg5: memref<128x1xf32, #tpu.memory_space<vmem>>, %arg6: memref<16x256xf32, #tpu.memory_space<vmem>>, %arg7: memref<16x256xf32, #tpu.memory_space<vmem>>, %arg8: memref<64x64xf32, #tpu.memory_space<vmem>>, %arg9: memref<64x1xf32, #tpu.memory_space<vmem>>, %arg10: memref<256x64xf32, #tpu.memory_space<vmem>>, %arg11: memref<256x1xf32, #tpu.memory_space<vmem>>, %arg12: memref<64x256xf32, #tpu.memory_space<vmem>>, %arg13: memref<64x1xf32, #tpu.memory_space<vmem>>, %arg14: memref<1x64x256xf32, #tpu.memory_space<vmem>>) attributes {dimension_semantics = [#tpu.dimension_semantics<parallel>], iteration_bounds = array<i64: 2>, scalar_prefetch = 0 : i64, scratch_operands = 0 : i64, tpu.core_type = #tpu.core_type<tc>, window_params = [{transform_indices = @transform_0, window_bounds = array<i64: 1, 1>}, {transform_indices = @transform_1, window_bounds = array<i64: 1, 1>}, {transform_indices = @transform_2, window_bounds = array<i64: 1, 64, 256>}, {pipeline_mode = #tpu.pipeline_mode<synchronous>, transform_indices = @transform_3, window_bounds = array<i64: 128, 64>}, {pipeline_mode = #tpu.pipeline_mode<synchronous>, transform_indices = @transform_4, window_bounds = array<i64: 128, 1>}, {pipeline_mode = #tpu.pipeline_mode<synchronous>, transform_indices = @transform_5, window_bounds = array<i64: 16, 256>}, {pipeline_mode = #tpu.pipeline_mode<synchronous>, transform_indices = @transform_6, window_bounds = array<i64: 16, 256>}, {pipeline_mode = #tpu.pipeline_mode<synchronous>, transform_indices = @transform_7, window_bounds = array<i64: 64, 64>}, {pipeline_mode = #tpu.pipeline_mode<synchronous>, transform_indices = @transform_8, window_bounds = array<i64: 64, 1>}, {pipeline_mode = #tpu.pipeline_mode<synchronous>, transform_indices = @transform_9, window_bounds = array<i64: 256, 64>}, {pipeline_mode = #tpu.pipeline_mode<synchronous>, transform_indices = @transform_10, window_bounds = array<i64: 256, 1>}, {pipeline_mode = #tpu.pipeline_mode<synchronous>, transform_indices = @transform_11, window_bounds = array<i64: 64, 256>}, {pipeline_mode = #tpu.pipeline_mode<synchronous>, transform_indices = @transform_12, window_bounds = array<i64: 64, 1>}, {transform_indices = @transform_13, window_bounds = array<i64: 1, 64, 256>}]} {
    %c0 = arith.constant 0 : index
    %c0_0 = arith.constant 0 : index
    %0 = memref.load %arg1[%c0, %c0_0] : memref<1x1xf32, #tpu.memory_space<smem>>
    %c0_1 = arith.constant 0 : index
    %c0_2 = arith.constant 0 : index
    %1 = memref.load %arg2[%c0_1, %c0_2] : memref<1x1xf32, #tpu.memory_space<smem>>
    %c0_3 = arith.constant 0 : index
    %c0_4 = arith.constant 0 : index
    %c0_5 = arith.constant 0 : index
    %2 = vector.load %arg3[%c0_3, %c0_4, %c0_5] : memref<1x64x256xf32, #tpu.memory_space<vmem>>, vector<1x64x256xf32>
    %3 = vector.shape_cast %2 : vector<1x64x256xf32> to vector<64x256xf32>
    %cst = arith.constant dense<0.000000e+00> : vector<64xf32>
    %4 = vector.multi_reduction <add>, %3, %cst [1] : vector<64x256xf32> to vector<64xf32>
    %5 = vector.shape_cast %4 : vector<64xf32> to vector<64x1xf32>
    %cst_6 = arith.constant dense<0.000000e+00> : vector<1xf32>
    %6 = vector.multi_reduction <add>, %5, %cst_6 [0] : vector<64x1xf32> to vector<1xf32>
    %7 = vector.shape_cast %6 : vector<1xf32> to vector<1x1xf32>
    %cst_7 = arith.constant 6.10351563E-5 : f32
    %8 = vector.broadcast %cst_7 : f32 to vector<1x1xf32>
    %9 = arith.mulf %7, %8 : vector<1x1xf32>
    %10 = vector.broadcast %9 : vector<1x1xf32> to vector<64x256xf32>
    %11 = arith.subf %3, %10 : vector<64x256xf32>
    %12 = arith.mulf %11, %11 : vector<64x256xf32>
    %cst_8 = arith.constant dense<0.000000e+00> : vector<64xf32>
    %13 = vector.multi_reduction <add>, %12, %cst_8 [1] : vector<64x256xf32> to vector<64xf32>
    %14 = vector.shape_cast %13 : vector<64xf32> to vector<64x1xf32>
    %cst_9 = arith.constant dense<0.000000e+00> : vector<1xf32>
    %15 = vector.multi_reduction <add>, %14, %cst_9 [0] : vector<64x1xf32> to vector<1xf32>
    %16 = vector.shape_cast %15 : vector<1xf32> to vector<1x1xf32>
    %cst_10 = arith.constant 6.10351563E-5 : f32
    %17 = vector.broadcast %cst_10 : f32 to vector<1x1xf32>
    %18 = arith.mulf %16, %17 : vector<1x1xf32>
    %cst_11 = arith.constant 9.99999974E-6 : f32
    %19 = vector.broadcast %cst_11 : f32 to vector<1x1xf32>
    %20 = arith.addf %18, %19 : vector<1x1xf32>
    %21 = math.rsqrt %20 : vector<1x1xf32>
    %22 = vector.broadcast %21 : vector<1x1xf32> to vector<64x256xf32>
    %23 = arith.mulf %11, %22 : vector<64x256xf32>
    %c0_12 = arith.constant 0 : index
    %c0_13 = arith.constant 0 : index
    %24 = vector.load %arg4[%c0_12, %c0_13] : memref<128x64xf32, #tpu.memory_space<vmem>>, vector<128x64xf32>
    %cst_14 = arith.constant dense<0.000000e+00> : vector<128x256xf32>
    %25 = tpu.matmul %24, %23, %cst_14 {dimension_numbers = #tpu.dot_dimension_numbers<[1], [0], [0], [1], [0, 0, 1, 1], [], []>} : vector<128x64xf32>, vector<64x256xf32>, vector<128x256xf32> -> vector<128x256xf32>
    %c0_15 = arith.constant 0 : index
    %c0_16 = arith.constant 0 : index
    %26 = vector.load %arg5[%c0_15, %c0_16] : memref<128x1xf32, #tpu.memory_space<vmem>>, vector<128x1xf32>
    %27 = vector.broadcast %26 : vector<128x1xf32> to vector<128x256xf32>
    %28 = arith.addf %25, %27 : vector<128x256xf32>
    %29 = vector.extract_strided_slice %28 {offsets = [0, 0], sizes = [64, 256], strides = [1, 1]} : vector<128x256xf32> to vector<64x256xf32>
    %30 = vector.extract_strided_slice %28 {offsets = [64, 0], sizes = [64, 256], strides = [1, 1]} : vector<128x256xf32> to vector<64x256xf32>
    %c0_17 = arith.constant 0 : index
    %c0_18 = arith.constant 0 : index
    %31 = vector.load %arg6[%c0_17, %c0_18] : memref<16x256xf32, #tpu.memory_space<vmem>>, vector<16x256xf32>
    %c0_19 = arith.constant 0 : index
    %c0_20 = arith.constant 0 : index
    %32 = vector.load %arg7[%c0_19, %c0_20] : memref<16x256xf32, #tpu.memory_space<vmem>>, vector<16x256xf32>
    %cst_21 = arith.constant dense<0.000000e+00> : vector<64x16xf32>
    %33 = tpu.matmul %29, %31, %cst_21 {dimension_numbers = #tpu.dot_dimension_numbers<[1], [1], [0], [0], [0, 0, 1, 0], [], []>} : vector<64x256xf32>, vector<16x256xf32>, vector<64x16xf32> -> vector<64x16xf32>
    %cst_22 = arith.constant dense<0.000000e+00> : vector<64x16xf32>
    %34 = tpu.matmul %30, %31, %cst_22 {dimension_numbers = #tpu.dot_dimension_numbers<[1], [1], [0], [0], [0, 0, 1, 0], [], []>} : vector<64x256xf32>, vector<16x256xf32>, vector<64x16xf32> -> vector<64x16xf32>
    %35 = vector.extract_strided_slice %29 {offsets = [0, 0], sizes = [16, 256], strides = [1, 1]} : vector<64x256xf32> to vector<16x256xf32>
    %36 = vector.extract_strided_slice %30 {offsets = [0, 0], sizes = [16, 256], strides = [1, 1]} : vector<64x256xf32> to vector<16x256xf32>
    %37 = vector.extract_strided_slice %33 {offsets = [0, 0], sizes = [16, 16], strides = [1, 1]} : vector<64x16xf32> to vector<16x16xf32>
    %38 = vector.extract_strided_slice %34 {offsets = [0, 0], sizes = [16, 16], strides = [1, 1]} : vector<64x16xf32> to vector<16x16xf32>
    %39 = arith.mulf %37, %37 : vector<16x16xf32>
    %cst_23 = arith.constant dense<0.000000e+00> : vector<16xf32>
    %40 = vector.multi_reduction <add>, %39, %cst_23 [0] : vector<16x16xf32> to vector<16xf32>
    %41 = vector.shape_cast %40 : vector<16xf32> to vector<1x16xf32>
    %cst_24 = arith.constant 9.99999996E-13 : f32
    %42 = vector.broadcast %cst_24 : f32 to vector<1x16xf32>
    %43 = arith.addf %41, %42 : vector<1x16xf32>
    %44 = math.rsqrt %43 : vector<1x16xf32>
    %45 = vector.broadcast %44 : vector<1x16xf32> to vector<16x16xf32>
    %46 = arith.mulf %37, %45 : vector<16x16xf32>
    %47 = arith.mulf %35, %35 : vector<16x256xf32>
    %cst_25 = arith.constant dense<0.000000e+00> : vector<256xf32>
    %48 = vector.multi_reduction <add>, %47, %cst_25 [0] : vector<16x256xf32> to vector<256xf32>
    %49 = vector.shape_cast %48 : vector<256xf32> to vector<1x256xf32>
    %cst_26 = arith.constant 9.99999996E-13 : f32
    %50 = vector.broadcast %cst_26 : f32 to vector<1x256xf32>
    %51 = arith.addf %49, %50 : vector<1x256xf32>
    %52 = math.rsqrt %51 : vector<1x256xf32>
    %53 = vector.broadcast %52 : vector<1x256xf32> to vector<16x256xf32>
    %54 = arith.mulf %35, %53 : vector<16x256xf32>
    %cst_27 = arith.constant dense<0.000000e+00> : vector<16x256xf32>
    %55 = tpu.matmul %46, %54, %cst_27 {dimension_numbers = #tpu.dot_dimension_numbers<[0], [0], [1], [1], [0, 1, 1, 1], [], []>} : vector<16x16xf32>, vector<16x256xf32>, vector<16x256xf32> -> vector<16x256xf32>
    %56 = vector.broadcast %0 : f32 to vector<16x256xf32>
    %57 = arith.mulf %56, %55 : vector<16x256xf32>
    %58 = vector.broadcast %1 : f32 to vector<16x256xf32>
    %59 = arith.addf %58, %57 : vector<16x256xf32>
    %60 = arith.negf %59 : vector<16x256xf32>
    %61 = math.exp %60 : vector<16x256xf32>
    %cst_28 = arith.constant 1.000000e+00 : f32
    %62 = vector.broadcast %cst_28 : f32 to vector<16x256xf32>
    %63 = arith.addf %62, %61 : vector<16x256xf32>
    %64 = arith.divf %62, %63 : vector<16x256xf32>
    %65 = arith.mulf %64, %32 : vector<16x256xf32>
    %66 = tpu.iota {dimensions = array<i32: 0>} : vector<16x256xi32>
    %cst_29 = arith.constant dense<0xFF800000> : vector<256xf32>
    %67 = vector.multi_reduction <maximumf>, %65, %cst_29 [0] : vector<16x256xf32> to vector<256xf32>
    %68 = vector.shape_cast %67 : vector<256xf32> to vector<1x256xf32>
    %69 = vector.broadcast %68 : vector<1x256xf32> to vector<16x256xf32>
    %70 = arith.cmpf oeq, %65, %69 : vector<16x256xf32>
    %c16_i32 = arith.constant 16 : i32
    %71 = vector.broadcast %c16_i32 : i32 to vector<16x256xi32>
    %72 = arith.select %70, %66, %71 : vector<16x256xi1>, vector<16x256xi32>
    %cst_30 = arith.constant dense<2147483647> : vector<256xi32>
    %73 = vector.multi_reduction <minsi>, %72, %cst_30 [0] : vector<16x256xi32> to vector<256xi32>
    %74 = vector.shape_cast %73 : vector<256xi32> to vector<1x256xi32>
    %75 = vector.broadcast %74 : vector<1x256xi32> to vector<16x256xi32>
    %76 = arith.cmpi eq, %66, %75 : vector<16x256xi32>
    %77 = arith.extui %76 : vector<16x256xi1> to vector<16x256xi32>
    %78 = arith.sitofp %77 : vector<16x256xi32> to vector<16x256xf32>
    %79 = arith.mulf %65, %78 : vector<16x256xf32>
    %cst_31 = arith.constant dense<0.000000e+00> : vector<16x16xf32>
    %80 = tpu.matmul %36, %79, %cst_31 {dimension_numbers = #tpu.dot_dimension_numbers<[1], [1], [0], [0], [0, 0, 1, 0], [], []>} : vector<16x256xf32>, vector<16x256xf32>, vector<16x16xf32> -> vector<16x16xf32>
    %81 = arith.addf %80, %38 : vector<16x16xf32>
    %cst_32 = arith.constant dense<0.000000e+00> : vector<16xf32>
    %82 = vector.multi_reduction <add>, %78, %cst_32 [1] : vector<16x256xf32> to vector<16xf32>
    %83 = vector.shape_cast %82 : vector<16xf32> to vector<16x1xf32>
    %cst_33 = arith.constant 1.000000e+00 : f32
    %84 = vector.broadcast %cst_33 : f32 to vector<16x1xf32>
    %85 = arith.addf %83, %84 : vector<16x1xf32>
    %cst_34 = arith.constant 1.000000e+00 : f32
    %86 = vector.broadcast %cst_34 : f32 to vector<16x1xf32>
    %87 = arith.divf %86, %85 : vector<16x1xf32>
    %88 = vector.broadcast %87 : vector<16x1xf32> to vector<16x256xf32>
    %89 = arith.mulf %79, %88 : vector<16x256xf32>
    %cst_35 = arith.constant dense<0.000000e+00> : vector<16x256xf32>
    %90 = tpu.matmul %81, %89, %cst_35 {dimension_numbers = #tpu.dot_dimension_numbers<[1], [0], [0], [1], [0, 0, 1, 1], [], []>} : vector<16x16xf32>, vector<16x256xf32>, vector<16x256xf32> -> vector<16x256xf32>
    %91 = vector.extract_strided_slice %29 {offsets = [16, 0], sizes = [16, 256], strides = [1, 1]} : vector<64x256xf32> to vector<16x256xf32>
    %92 = vector.extract_strided_slice %30 {offsets = [16, 0], sizes = [16, 256], strides = [1, 1]} : vector<64x256xf32> to vector<16x256xf32>
    %93 = vector.extract_strided_slice %33 {offsets = [16, 0], sizes = [16, 16], strides = [1, 1]} : vector<64x16xf32> to vector<16x16xf32>
    %94 = vector.extract_strided_slice %34 {offsets = [16, 0], sizes = [16, 16], strides = [1, 1]} : vector<64x16xf32> to vector<16x16xf32>
    %95 = arith.mulf %93, %93 : vector<16x16xf32>
    %cst_36 = arith.constant dense<0.000000e+00> : vector<16xf32>
    %96 = vector.multi_reduction <add>, %95, %cst_36 [0] : vector<16x16xf32> to vector<16xf32>
    %97 = vector.shape_cast %96 : vector<16xf32> to vector<1x16xf32>
    %cst_37 = arith.constant 9.99999996E-13 : f32
    %98 = vector.broadcast %cst_37 : f32 to vector<1x16xf32>
    %99 = arith.addf %97, %98 : vector<1x16xf32>
    %100 = math.rsqrt %99 : vector<1x16xf32>
    %101 = vector.broadcast %100 : vector<1x16xf32> to vector<16x16xf32>
    %102 = arith.mulf %93, %101 : vector<16x16xf32>
    %103 = arith.mulf %91, %91 : vector<16x256xf32>
    %cst_38 = arith.constant dense<0.000000e+00> : vector<256xf32>
    %104 = vector.multi_reduction <add>, %103, %cst_38 [0] : vector<16x256xf32> to vector<256xf32>
    %105 = vector.shape_cast %104 : vector<256xf32> to vector<1x256xf32>
    %cst_39 = arith.constant 9.99999996E-13 : f32
    %106 = vector.broadcast %cst_39 : f32 to vector<1x256xf32>
    %107 = arith.addf %105, %106 : vector<1x256xf32>
    %108 = math.rsqrt %107 : vector<1x256xf32>
    %109 = vector.broadcast %108 : vector<1x256xf32> to vector<16x256xf32>
    %110 = arith.mulf %91, %109 : vector<16x256xf32>
    %cst_40 = arith.constant dense<0.000000e+00> : vector<16x256xf32>
    %111 = tpu.matmul %102, %110, %cst_40 {dimension_numbers = #tpu.dot_dimension_numbers<[0], [0], [1], [1], [0, 1, 1, 1], [], []>} : vector<16x16xf32>, vector<16x256xf32>, vector<16x256xf32> -> vector<16x256xf32>
    %112 = vector.broadcast %0 : f32 to vector<16x256xf32>
    %113 = arith.mulf %112, %111 : vector<16x256xf32>
    %114 = vector.broadcast %1 : f32 to vector<16x256xf32>
    %115 = arith.addf %114, %113 : vector<16x256xf32>
    %116 = arith.negf %115 : vector<16x256xf32>
    %117 = math.exp %116 : vector<16x256xf32>
    %cst_41 = arith.constant 1.000000e+00 : f32
    %118 = vector.broadcast %cst_41 : f32 to vector<16x256xf32>
    %119 = arith.addf %118, %117 : vector<16x256xf32>
    %120 = arith.divf %118, %119 : vector<16x256xf32>
    %121 = arith.mulf %120, %32 : vector<16x256xf32>
    %122 = tpu.iota {dimensions = array<i32: 0>} : vector<16x256xi32>
    %cst_42 = arith.constant dense<0xFF800000> : vector<256xf32>
    %123 = vector.multi_reduction <maximumf>, %121, %cst_42 [0] : vector<16x256xf32> to vector<256xf32>
    %124 = vector.shape_cast %123 : vector<256xf32> to vector<1x256xf32>
    %125 = vector.broadcast %124 : vector<1x256xf32> to vector<16x256xf32>
    %126 = arith.cmpf oeq, %121, %125 : vector<16x256xf32>
    %c16_i32_43 = arith.constant 16 : i32
    %127 = vector.broadcast %c16_i32_43 : i32 to vector<16x256xi32>
    %128 = arith.select %126, %122, %127 : vector<16x256xi1>, vector<16x256xi32>
    %cst_44 = arith.constant dense<2147483647> : vector<256xi32>
    %129 = vector.multi_reduction <minsi>, %128, %cst_44 [0] : vector<16x256xi32> to vector<256xi32>
    %130 = vector.shape_cast %129 : vector<256xi32> to vector<1x256xi32>
    %131 = vector.broadcast %130 : vector<1x256xi32> to vector<16x256xi32>
    %132 = arith.cmpi eq, %122, %131 : vector<16x256xi32>
    %133 = arith.extui %132 : vector<16x256xi1> to vector<16x256xi32>
    %134 = arith.sitofp %133 : vector<16x256xi32> to vector<16x256xf32>
    %135 = arith.mulf %121, %134 : vector<16x256xf32>
    %cst_45 = arith.constant dense<0.000000e+00> : vector<16x16xf32>
    %136 = tpu.matmul %92, %135, %cst_45 {dimension_numbers = #tpu.dot_dimension_numbers<[1], [1], [0], [0], [0, 0, 1, 0], [], []>} : vector<16x256xf32>, vector<16x256xf32>, vector<16x16xf32> -> vector<16x16xf32>
    %137 = arith.addf %136, %94 : vector<16x16xf32>
    %cst_46 = arith.constant dense<0.000000e+00> : vector<16xf32>
    %138 = vector.multi_reduction <add>, %134, %cst_46 [1] : vector<16x256xf32> to vector<16xf32>
    %139 = vector.shape_cast %138 : vector<16xf32> to vector<16x1xf32>
    %cst_47 = arith.constant 1.000000e+00 : f32
    %140 = vector.broadcast %cst_47 : f32 to vector<16x1xf32>
    %141 = arith.addf %139, %140 : vector<16x1xf32>
    %cst_48 = arith.constant 1.000000e+00 : f32
    %142 = vector.broadcast %cst_48 : f32 to vector<16x1xf32>
    %143 = arith.divf %142, %141 : vector<16x1xf32>
    %144 = vector.broadcast %143 : vector<16x1xf32> to vector<16x256xf32>
    %145 = arith.mulf %135, %144 : vector<16x256xf32>
    %cst_49 = arith.constant dense<0.000000e+00> : vector<16x256xf32>
    %146 = tpu.matmul %137, %145, %cst_49 {dimension_numbers = #tpu.dot_dimension_numbers<[1], [0], [0], [1], [0, 0, 1, 1], [], []>} : vector<16x16xf32>, vector<16x256xf32>, vector<16x256xf32> -> vector<16x256xf32>
    %147 = vector.extract_strided_slice %29 {offsets = [32, 0], sizes = [16, 256], strides = [1, 1]} : vector<64x256xf32> to vector<16x256xf32>
    %148 = vector.extract_strided_slice %30 {offsets = [32, 0], sizes = [16, 256], strides = [1, 1]} : vector<64x256xf32> to vector<16x256xf32>
    %149 = vector.extract_strided_slice %33 {offsets = [32, 0], sizes = [16, 16], strides = [1, 1]} : vector<64x16xf32> to vector<16x16xf32>
    %150 = vector.extract_strided_slice %34 {offsets = [32, 0], sizes = [16, 16], strides = [1, 1]} : vector<64x16xf32> to vector<16x16xf32>
    %151 = arith.mulf %149, %149 : vector<16x16xf32>
    %cst_50 = arith.constant dense<0.000000e+00> : vector<16xf32>
    %152 = vector.multi_reduction <add>, %151, %cst_50 [0] : vector<16x16xf32> to vector<16xf32>
    %153 = vector.shape_cast %152 : vector<16xf32> to vector<1x16xf32>
    %cst_51 = arith.constant 9.99999996E-13 : f32
    %154 = vector.broadcast %cst_51 : f32 to vector<1x16xf32>
    %155 = arith.addf %153, %154 : vector<1x16xf32>
    %156 = math.rsqrt %155 : vector<1x16xf32>
    %157 = vector.broadcast %156 : vector<1x16xf32> to vector<16x16xf32>
    %158 = arith.mulf %149, %157 : vector<16x16xf32>
    %159 = arith.mulf %147, %147 : vector<16x256xf32>
    %cst_52 = arith.constant dense<0.000000e+00> : vector<256xf32>
    %160 = vector.multi_reduction <add>, %159, %cst_52 [0] : vector<16x256xf32> to vector<256xf32>
    %161 = vector.shape_cast %160 : vector<256xf32> to vector<1x256xf32>
    %cst_53 = arith.constant 9.99999996E-13 : f32
    %162 = vector.broadcast %cst_53 : f32 to vector<1x256xf32>
    %163 = arith.addf %161, %162 : vector<1x256xf32>
    %164 = math.rsqrt %163 : vector<1x256xf32>
    %165 = vector.broadcast %164 : vector<1x256xf32> to vector<16x256xf32>
    %166 = arith.mulf %147, %165 : vector<16x256xf32>
    %cst_54 = arith.constant dense<0.000000e+00> : vector<16x256xf32>
    %167 = tpu.matmul %158, %166, %cst_54 {dimension_numbers = #tpu.dot_dimension_numbers<[0], [0], [1], [1], [0, 1, 1, 1], [], []>} : vector<16x16xf32>, vector<16x256xf32>, vector<16x256xf32> -> vector<16x256xf32>
    %168 = vector.broadcast %0 : f32 to vector<16x256xf32>
    %169 = arith.mulf %168, %167 : vector<16x256xf32>
    %170 = vector.broadcast %1 : f32 to vector<16x256xf32>
    %171 = arith.addf %170, %169 : vector<16x256xf32>
    %172 = arith.negf %171 : vector<16x256xf32>
    %173 = math.exp %172 : vector<16x256xf32>
    %cst_55 = arith.constant 1.000000e+00 : f32
    %174 = vector.broadcast %cst_55 : f32 to vector<16x256xf32>
    %175 = arith.addf %174, %173 : vector<16x256xf32>
    %176 = arith.divf %174, %175 : vector<16x256xf32>
    %177 = arith.mulf %176, %32 : vector<16x256xf32>
    %178 = tpu.iota {dimensions = array<i32: 0>} : vector<16x256xi32>
    %cst_56 = arith.constant dense<0xFF800000> : vector<256xf32>
    %179 = vector.multi_reduction <maximumf>, %177, %cst_56 [0] : vector<16x256xf32> to vector<256xf32>
    %180 = vector.shape_cast %179 : vector<256xf32> to vector<1x256xf32>
    %181 = vector.broadcast %180 : vector<1x256xf32> to vector<16x256xf32>
    %182 = arith.cmpf oeq, %177, %181 : vector<16x256xf32>
    %c16_i32_57 = arith.constant 16 : i32
    %183 = vector.broadcast %c16_i32_57 : i32 to vector<16x256xi32>
    %184 = arith.select %182, %178, %183 : vector<16x256xi1>, vector<16x256xi32>
    %cst_58 = arith.constant dense<2147483647> : vector<256xi32>
    %185 = vector.multi_reduction <minsi>, %184, %cst_58 [0] : vector<16x256xi32> to vector<256xi32>
    %186 = vector.shape_cast %185 : vector<256xi32> to vector<1x256xi32>
    %187 = vector.broadcast %186 : vector<1x256xi32> to vector<16x256xi32>
    %188 = arith.cmpi eq, %178, %187 : vector<16x256xi32>
    %189 = arith.extui %188 : vector<16x256xi1> to vector<16x256xi32>
    %190 = arith.sitofp %189 : vector<16x256xi32> to vector<16x256xf32>
    %191 = arith.mulf %177, %190 : vector<16x256xf32>
    %cst_59 = arith.constant dense<0.000000e+00> : vector<16x16xf32>
    %192 = tpu.matmul %148, %191, %cst_59 {dimension_numbers = #tpu.dot_dimension_numbers<[1], [1], [0], [0], [0, 0, 1, 0], [], []>} : vector<16x256xf32>, vector<16x256xf32>, vector<16x16xf32> -> vector<16x16xf32>
    %193 = arith.addf %192, %150 : vector<16x16xf32>
    %cst_60 = arith.constant dense<0.000000e+00> : vector<16xf32>
    %194 = vector.multi_reduction <add>, %190, %cst_60 [1] : vector<16x256xf32> to vector<16xf32>
    %195 = vector.shape_cast %194 : vector<16xf32> to vector<16x1xf32>
    %cst_61 = arith.constant 1.000000e+00 : f32
    %196 = vector.broadcast %cst_61 : f32 to vector<16x1xf32>
    %197 = arith.addf %195, %196 : vector<16x1xf32>
    %cst_62 = arith.constant 1.000000e+00 : f32
    %198 = vector.broadcast %cst_62 : f32 to vector<16x1xf32>
    %199 = arith.divf %198, %197 : vector<16x1xf32>
    %200 = vector.broadcast %199 : vector<16x1xf32> to vector<16x256xf32>
    %201 = arith.mulf %191, %200 : vector<16x256xf32>
    %cst_63 = arith.constant dense<0.000000e+00> : vector<16x256xf32>
    %202 = tpu.matmul %193, %201, %cst_63 {dimension_numbers = #tpu.dot_dimension_numbers<[1], [0], [0], [1], [0, 0, 1, 1], [], []>} : vector<16x16xf32>, vector<16x256xf32>, vector<16x256xf32> -> vector<16x256xf32>
    %203 = vector.extract_strided_slice %29 {offsets = [48, 0], sizes = [16, 256], strides = [1, 1]} : vector<64x256xf32> to vector<16x256xf32>
    %204 = vector.extract_strided_slice %30 {offsets = [48, 0], sizes = [16, 256], strides = [1, 1]} : vector<64x256xf32> to vector<16x256xf32>
    %205 = vector.extract_strided_slice %33 {offsets = [48, 0], sizes = [16, 16], strides = [1, 1]} : vector<64x16xf32> to vector<16x16xf32>
    %206 = vector.extract_strided_slice %34 {offsets = [48, 0], sizes = [16, 16], strides = [1, 1]} : vector<64x16xf32> to vector<16x16xf32>
    %207 = arith.mulf %205, %205 : vector<16x16xf32>
    %cst_64 = arith.constant dense<0.000000e+00> : vector<16xf32>
    %208 = vector.multi_reduction <add>, %207, %cst_64 [0] : vector<16x16xf32> to vector<16xf32>
    %209 = vector.shape_cast %208 : vector<16xf32> to vector<1x16xf32>
    %cst_65 = arith.constant 9.99999996E-13 : f32
    %210 = vector.broadcast %cst_65 : f32 to vector<1x16xf32>
    %211 = arith.addf %209, %210 : vector<1x16xf32>
    %212 = math.rsqrt %211 : vector<1x16xf32>
    %213 = vector.broadcast %212 : vector<1x16xf32> to vector<16x16xf32>
    %214 = arith.mulf %205, %213 : vector<16x16xf32>
    %215 = arith.mulf %203, %203 : vector<16x256xf32>
    %cst_66 = arith.constant dense<0.000000e+00> : vector<256xf32>
    %216 = vector.multi_reduction <add>, %215, %cst_66 [0] : vector<16x256xf32> to vector<256xf32>
    %217 = vector.shape_cast %216 : vector<256xf32> to vector<1x256xf32>
    %cst_67 = arith.constant 9.99999996E-13 : f32
    %218 = vector.broadcast %cst_67 : f32 to vector<1x256xf32>
    %219 = arith.addf %217, %218 : vector<1x256xf32>
    %220 = math.rsqrt %219 : vector<1x256xf32>
    %221 = vector.broadcast %220 : vector<1x256xf32> to vector<16x256xf32>
    %222 = arith.mulf %203, %221 : vector<16x256xf32>
    %cst_68 = arith.constant dense<0.000000e+00> : vector<16x256xf32>
    %223 = tpu.matmul %214, %222, %cst_68 {dimension_numbers = #tpu.dot_dimension_numbers<[0], [0], [1], [1], [0, 1, 1, 1], [], []>} : vector<16x16xf32>, vector<16x256xf32>, vector<16x256xf32> -> vector<16x256xf32>
    %224 = vector.broadcast %0 : f32 to vector<16x256xf32>
    %225 = arith.mulf %224, %223 : vector<16x256xf32>
    %226 = vector.broadcast %1 : f32 to vector<16x256xf32>
    %227 = arith.addf %226, %225 : vector<16x256xf32>
    %228 = arith.negf %227 : vector<16x256xf32>
    %229 = math.exp %228 : vector<16x256xf32>
    %cst_69 = arith.constant 1.000000e+00 : f32
    %230 = vector.broadcast %cst_69 : f32 to vector<16x256xf32>
    %231 = arith.addf %230, %229 : vector<16x256xf32>
    %232 = arith.divf %230, %231 : vector<16x256xf32>
    %233 = arith.mulf %232, %32 : vector<16x256xf32>
    %234 = tpu.iota {dimensions = array<i32: 0>} : vector<16x256xi32>
    %cst_70 = arith.constant dense<0xFF800000> : vector<256xf32>
    %235 = vector.multi_reduction <maximumf>, %233, %cst_70 [0] : vector<16x256xf32> to vector<256xf32>
    %236 = vector.shape_cast %235 : vector<256xf32> to vector<1x256xf32>
    %237 = vector.broadcast %236 : vector<1x256xf32> to vector<16x256xf32>
    %238 = arith.cmpf oeq, %233, %237 : vector<16x256xf32>
    %c16_i32_71 = arith.constant 16 : i32
    %239 = vector.broadcast %c16_i32_71 : i32 to vector<16x256xi32>
    %240 = arith.select %238, %234, %239 : vector<16x256xi1>, vector<16x256xi32>
    %cst_72 = arith.constant dense<2147483647> : vector<256xi32>
    %241 = vector.multi_reduction <minsi>, %240, %cst_72 [0] : vector<16x256xi32> to vector<256xi32>
    %242 = vector.shape_cast %241 : vector<256xi32> to vector<1x256xi32>
    %243 = vector.broadcast %242 : vector<1x256xi32> to vector<16x256xi32>
    %244 = arith.cmpi eq, %234, %243 : vector<16x256xi32>
    %245 = arith.extui %244 : vector<16x256xi1> to vector<16x256xi32>
    %246 = arith.sitofp %245 : vector<16x256xi32> to vector<16x256xf32>
    %247 = arith.mulf %233, %246 : vector<16x256xf32>
    %cst_73 = arith.constant dense<0.000000e+00> : vector<16x16xf32>
    %248 = tpu.matmul %204, %247, %cst_73 {dimension_numbers = #tpu.dot_dimension_numbers<[1], [1], [0], [0], [0, 0, 1, 0], [], []>} : vector<16x256xf32>, vector<16x256xf32>, vector<16x16xf32> -> vector<16x16xf32>
    %249 = arith.addf %248, %206 : vector<16x16xf32>
    %cst_74 = arith.constant dense<0.000000e+00> : vector<16xf32>
    %250 = vector.multi_reduction <add>, %246, %cst_74 [1] : vector<16x256xf32> to vector<16xf32>
    %251 = vector.shape_cast %250 : vector<16xf32> to vector<16x1xf32>
    %cst_75 = arith.constant 1.000000e+00 : f32
    %252 = vector.broadcast %cst_75 : f32 to vector<16x1xf32>
    %253 = arith.addf %251, %252 : vector<16x1xf32>
    %cst_76 = arith.constant 1.000000e+00 : f32
    %254 = vector.broadcast %cst_76 : f32 to vector<16x1xf32>
    %255 = arith.divf %254, %253 : vector<16x1xf32>
    %256 = vector.broadcast %255 : vector<16x1xf32> to vector<16x256xf32>
    %257 = arith.mulf %247, %256 : vector<16x256xf32>
    %cst_77 = arith.constant dense<0.000000e+00> : vector<16x256xf32>
    %258 = tpu.matmul %249, %257, %cst_77 {dimension_numbers = #tpu.dot_dimension_numbers<[1], [0], [0], [1], [0, 0, 1, 1], [], []>} : vector<16x16xf32>, vector<16x256xf32>, vector<16x256xf32> -> vector<16x256xf32>
    %259 = tpu.concatenate %90, %146, %202, %258 in 0 : vector<16x256xf32>, vector<16x256xf32>, vector<16x256xf32>, vector<16x256xf32> -> vector<64x256xf32>
    %c0_78 = arith.constant 0 : index
    %c0_79 = arith.constant 0 : index
    %260 = vector.load %arg8[%c0_78, %c0_79] : memref<64x64xf32, #tpu.memory_space<vmem>>, vector<64x64xf32>
    %cst_80 = arith.constant dense<0.000000e+00> : vector<64x256xf32>
    %261 = tpu.matmul %260, %259, %cst_80 {dimension_numbers = #tpu.dot_dimension_numbers<[1], [0], [0], [1], [0, 0, 1, 1], [], []>} : vector<64x64xf32>, vector<64x256xf32>, vector<64x256xf32> -> vector<64x256xf32>
    %c0_81 = arith.constant 0 : index
    %c0_82 = arith.constant 0 : index
    %262 = vector.load %arg9[%c0_81, %c0_82] : memref<64x1xf32, #tpu.memory_space<vmem>>, vector<64x1xf32>
    %263 = vector.broadcast %262 : vector<64x1xf32> to vector<64x256xf32>
    %264 = arith.addf %261, %263 : vector<64x256xf32>
    %265 = arith.addf %3, %264 : vector<64x256xf32>
    %cst_83 = arith.constant dense<0.000000e+00> : vector<64xf32>
    %266 = vector.multi_reduction <add>, %265, %cst_83 [1] : vector<64x256xf32> to vector<64xf32>
    %267 = vector.shape_cast %266 : vector<64xf32> to vector<64x1xf32>
    %cst_84 = arith.constant dense<0.000000e+00> : vector<1xf32>
    %268 = vector.multi_reduction <add>, %267, %cst_84 [0] : vector<64x1xf32> to vector<1xf32>
    %269 = vector.shape_cast %268 : vector<1xf32> to vector<1x1xf32>
    %cst_85 = arith.constant 6.10351563E-5 : f32
    %270 = vector.broadcast %cst_85 : f32 to vector<1x1xf32>
    %271 = arith.mulf %269, %270 : vector<1x1xf32>
    %272 = vector.broadcast %271 : vector<1x1xf32> to vector<64x256xf32>
    %273 = arith.subf %265, %272 : vector<64x256xf32>
    %274 = arith.mulf %273, %273 : vector<64x256xf32>
    %cst_86 = arith.constant dense<0.000000e+00> : vector<64xf32>
    %275 = vector.multi_reduction <add>, %274, %cst_86 [1] : vector<64x256xf32> to vector<64xf32>
    %276 = vector.shape_cast %275 : vector<64xf32> to vector<64x1xf32>
    %cst_87 = arith.constant dense<0.000000e+00> : vector<1xf32>
    %277 = vector.multi_reduction <add>, %276, %cst_87 [0] : vector<64x1xf32> to vector<1xf32>
    %278 = vector.shape_cast %277 : vector<1xf32> to vector<1x1xf32>
    %cst_88 = arith.constant 6.10351563E-5 : f32
    %279 = vector.broadcast %cst_88 : f32 to vector<1x1xf32>
    %280 = arith.mulf %278, %279 : vector<1x1xf32>
    %cst_89 = arith.constant 9.99999974E-6 : f32
    %281 = vector.broadcast %cst_89 : f32 to vector<1x1xf32>
    %282 = arith.addf %280, %281 : vector<1x1xf32>
    %283 = math.rsqrt %282 : vector<1x1xf32>
    %284 = vector.broadcast %283 : vector<1x1xf32> to vector<64x256xf32>
    %285 = arith.mulf %273, %284 : vector<64x256xf32>
    %c0_90 = arith.constant 0 : index
    %c0_91 = arith.constant 0 : index
    %286 = vector.load %arg10[%c0_90, %c0_91] : memref<256x64xf32, #tpu.memory_space<vmem>>, vector<256x64xf32>
    %cst_92 = arith.constant dense<0.000000e+00> : vector<256x256xf32>
    %287 = tpu.matmul %286, %285, %cst_92 {dimension_numbers = #tpu.dot_dimension_numbers<[1], [0], [0], [1], [0, 0, 1, 1], [], []>} : vector<256x64xf32>, vector<64x256xf32>, vector<256x256xf32> -> vector<256x256xf32>
    %c0_93 = arith.constant 0 : index
    %c0_94 = arith.constant 0 : index
    %288 = vector.load %arg11[%c0_93, %c0_94] : memref<256x1xf32, #tpu.memory_space<vmem>>, vector<256x1xf32>
    %289 = vector.broadcast %288 : vector<256x1xf32> to vector<256x256xf32>
    %290 = arith.addf %287, %289 : vector<256x256xf32>
    %cst_95 = arith.constant 0.707106769 : f32
    %291 = vector.broadcast %cst_95 : f32 to vector<256x256xf32>
    %292 = arith.mulf %290, %291 : vector<256x256xf32>
    %293 = math.absf %292 : vector<256x256xf32>
    %cst_96 = arith.constant 0.327591091 : f32
    %294 = vector.broadcast %cst_96 : f32 to vector<256x256xf32>
    %295 = arith.mulf %294, %293 : vector<256x256xf32>
    %cst_97 = arith.constant 1.000000e+00 : f32
    %296 = vector.broadcast %cst_97 : f32 to vector<256x256xf32>
    %297 = arith.addf %296, %295 : vector<256x256xf32>
    %cst_98 = arith.constant 1.000000e+00 : f32
    %298 = vector.broadcast %cst_98 : f32 to vector<256x256xf32>
    %299 = arith.divf %298, %297 : vector<256x256xf32>
    %cst_99 = arith.constant 1.06140542 : f32
    %300 = vector.broadcast %cst_99 : f32 to vector<256x256xf32>
    %301 = arith.mulf %300, %299 : vector<256x256xf32>
    %cst_100 = arith.constant 1.45315206 : f32
    %302 = vector.broadcast %cst_100 : f32 to vector<256x256xf32>
    %303 = arith.subf %301, %302 : vector<256x256xf32>
    %304 = arith.mulf %303, %299 : vector<256x256xf32>
    %cst_101 = arith.constant 1.42141378 : f32
    %305 = vector.broadcast %cst_101 : f32 to vector<256x256xf32>
    %306 = arith.addf %304, %305 : vector<256x256xf32>
    %307 = arith.mulf %306, %299 : vector<256x256xf32>
    %cst_102 = arith.constant 0.284496725 : f32
    %308 = vector.broadcast %cst_102 : f32 to vector<256x256xf32>
    %309 = arith.subf %307, %308 : vector<256x256xf32>
    %310 = arith.mulf %309, %299 : vector<256x256xf32>
    %cst_103 = arith.constant 0.254829586 : f32
    %311 = vector.broadcast %cst_103 : f32 to vector<256x256xf32>
    %312 = arith.addf %310, %311 : vector<256x256xf32>
    %313 = arith.mulf %312, %299 : vector<256x256xf32>
    %cst_104 = arith.constant 0.000000e+00 : f32
    %314 = vector.broadcast %cst_104 : f32 to vector<256x256xf32>
    %315 = arith.subf %314, %293 : vector<256x256xf32>
    %316 = arith.mulf %315, %293 : vector<256x256xf32>
    %317 = math.exp %316 : vector<256x256xf32>
    %318 = arith.mulf %313, %317 : vector<256x256xf32>
    %cst_105 = arith.constant 1.000000e+00 : f32
    %319 = vector.broadcast %cst_105 : f32 to vector<256x256xf32>
    %320 = arith.subf %319, %318 : vector<256x256xf32>
    %cst_106 = arith.constant 0.000000e+00 : f32
    %321 = vector.broadcast %cst_106 : f32 to vector<256x256xf32>
    %322 = arith.cmpf olt, %292, %321 : vector<256x256xf32>
    %cst_107 = arith.constant 0.000000e+00 : f32
    %323 = vector.broadcast %cst_107 : f32 to vector<256x256xf32>
    %324 = arith.subf %323, %320 : vector<256x256xf32>
    %325 = arith.select %322, %324, %320 : vector<256x256xi1>, vector<256x256xf32>
    %cst_108 = arith.constant 5.000000e-01 : f32
    %326 = vector.broadcast %cst_108 : f32 to vector<256x256xf32>
    %327 = arith.mulf %326, %290 : vector<256x256xf32>
    %cst_109 = arith.constant 1.000000e+00 : f32
    %328 = vector.broadcast %cst_109 : f32 to vector<256x256xf32>
    %329 = arith.addf %328, %325 : vector<256x256xf32>
    %330 = arith.mulf %327, %329 : vector<256x256xf32>
    %c0_110 = arith.constant 0 : index
    %c0_111 = arith.constant 0 : index
    %331 = vector.load %arg12[%c0_110, %c0_111] : memref<64x256xf32, #tpu.memory_space<vmem>>, vector<64x256xf32>
    %cst_112 = arith.constant dense<0.000000e+00> : vector<64x256xf32>
    %332 = tpu.matmul %331, %330, %cst_112 {dimension_numbers = #tpu.dot_dimension_numbers<[1], [0], [0], [1], [0, 0, 1, 1], [], []>} : vector<64x256xf32>, vector<256x256xf32>, vector<64x256xf32> -> vector<64x256xf32>
    %c0_113 = arith.constant 0 : index
    %c0_114 = arith.constant 0 : index
    %333 = vector.load %arg13[%c0_113, %c0_114] : memref<64x1xf32, #tpu.memory_space<vmem>>, vector<64x1xf32>
    %334 = vector.broadcast %333 : vector<64x1xf32> to vector<64x256xf32>
    %335 = arith.addf %332, %334 : vector<64x256xf32>
    %336 = arith.addf %265, %335 : vector<64x256xf32>
    %c0_115 = arith.constant 0 : index
    %c0_116 = arith.constant 0 : index
    %c0_117 = arith.constant 0 : index
    %337 = vector.load %arg14[%c0_115, %c0_116, %c0_117] : memref<1x64x256xf32, #tpu.memory_space<vmem>>, vector<1x64x256xf32>
    %338 = vector.shape_cast %337 : vector<1x64x256xf32> to vector<64x256xf32>
    %339 = vector.shape_cast %336 : vector<64x256xf32> to vector<1x64x256xf32>
    tpu.vector_store %arg14[%c0_115, %c0_116, %c0_117], %339 {strides = array<i32>} : memref<1x64x256xf32, #tpu.memory_space<vmem>>, vector<1x64x256xf32>,
    return
  }
  func.func @transform_0(%arg0: i32) -> (i32, i32) {
    %c0_i32 = arith.constant 0 : i32
    %c0_i32_0 = arith.constant 0 : i32
    %c0_i32_1 = arith.constant 0 : i32
    return %c0_i32, %c0_i32_0 : i32, i32
  }
  func.func @transform_1(%arg0: i32) -> (i32, i32) {
    %c0_i32 = arith.constant 0 : i32
    %c0_i32_0 = arith.constant 0 : i32
    %c0_i32_1 = arith.constant 0 : i32
    return %c0_i32, %c0_i32_0 : i32, i32
  }
  func.func @transform_2(%arg0: i32) -> (i32, i32, i32) {
    %c0_i32 = arith.constant 0 : i32
    %c0_i32_0 = arith.constant 0 : i32
    %c0_i32_1 = arith.constant 0 : i32
    return %arg0, %c0_i32, %c0_i32_0 : i32, i32, i32
  }
  func.func @transform_3(%arg0: i32) -> (i32, i32) {
    %c0_i32 = arith.constant 0 : i32
    %c0_i32_0 = arith.constant 0 : i32
    %c0_i32_1 = arith.constant 0 : i32
    return %c0_i32, %c0_i32_0 : i32, i32
  }
  func.func @transform_4(%arg0: i32) -> (i32, i32) {
    %c0_i32 = arith.constant 0 : i32
    %c0_i32_0 = arith.constant 0 : i32
    %c0_i32_1 = arith.constant 0 : i32
    return %c0_i32, %c0_i32_0 : i32, i32
  }
  func.func @transform_5(%arg0: i32) -> (i32, i32) {
    %c0_i32 = arith.constant 0 : i32
    %c0_i32_0 = arith.constant 0 : i32
    %c0_i32_1 = arith.constant 0 : i32
    return %c0_i32, %c0_i32_0 : i32, i32
  }
  func.func @transform_6(%arg0: i32) -> (i32, i32) {
    %c0_i32 = arith.constant 0 : i32
    %c0_i32_0 = arith.constant 0 : i32
    %c0_i32_1 = arith.constant 0 : i32
    return %c0_i32, %c0_i32_0 : i32, i32
  }
  func.func @transform_7(%arg0: i32) -> (i32, i32) {
    %c0_i32 = arith.constant 0 : i32
    %c0_i32_0 = arith.constant 0 : i32
    %c0_i32_1 = arith.constant 0 : i32
    return %c0_i32, %c0_i32_0 : i32, i32
  }
  func.func @transform_8(%arg0: i32) -> (i32, i32) {
    %c0_i32 = arith.constant 0 : i32
    %c0_i32_0 = arith.constant 0 : i32
    %c0_i32_1 = arith.constant 0 : i32
    return %c0_i32, %c0_i32_0 : i32, i32
  }
  func.func @transform_9(%arg0: i32) -> (i32, i32) {
    %c0_i32 = arith.constant 0 : i32
    %c0_i32_0 = arith.constant 0 : i32
    %c0_i32_1 = arith.constant 0 : i32
    return %c0_i32, %c0_i32_0 : i32, i32
  }
  func.func @transform_10(%arg0: i32) -> (i32, i32) {
    %c0_i32 = arith.constant 0 : i32
    %c0_i32_0 = arith.constant 0 : i32
    %c0_i32_1 = arith.constant 0 : i32
    return %c0_i32, %c0_i32_0 : i32, i32
  }
  func.func @transform_11(%arg0: i32) -> (i32, i32) {
    %c0_i32 = arith.constant 0 : i32
    %c0_i32_0 = arith.constant 0 : i32
    %c0_i32_1 = arith.constant 0 : i32
    return %c0_i32, %c0_i32_0 : i32, i32
  }
  func.func @transform_12(%arg0: i32) -> (i32, i32) {
    %c0_i32 = arith.constant 0 : i32
    %c0_i32_0 = arith.constant 0 : i32
    %c0_i32_1 = arith.constant 0 : i32
    return %c0_i32, %c0_i32_0 : i32, i32
  }
  func.func @transform_13(%arg0: i32) -> (i32, i32, i32) {
    %c0_i32 = arith.constant 0 : i32
    %c0_i32_0 = arith.constant 0 : i32
    %c0_i32_1 = arith.constant 0 : i32
    return %arg0, %c0_i32, %c0_i32_0 : i32, i32, i32
  }
}

</mosaic_0001>

<llo_original>
// kernel: cluster_block_forward.1
$region0: #{cluster_block_forward.1}
  #allocation0 [shape = 'u32[]', space=smem, size = 0x4, offset = 0x4, fixed_abs, tag = 'smem constant byte address 0x4 - core index']
  #allocation1 [shape = 'u32[72,128]{1,0:T(1,128)}', space=vmem, size = 0x9000, scoped, tag = 'internal scratch']
  #allocation2 [shape = 'f32[1,1]{1,0:T(1,128)S(6)}', space=smem, size = 0x200, scoped, tag = 'scoped memory for cluster_block_forward.1']
  #allocation3 [shape = 'f32[1,1]{1,0:T(1,128)S(6)}', space=smem, size = 0x200, scoped, tag = 'scoped memory for cluster_block_forward.1']
  %s0 = inlined_call_operand.<no memory space> [shape: f32[1,1], index: 0, kind: input, shape index: {}]
  %s1 = inlined_call_operand.<no memory space> [shape: f32[1,1], index: 1, kind: input, shape index: {}]
  %s2 = inlined_call_operand.vmem [shape: f32[2,64,256], index: 2, kind: input, shape index: {}]
  %s3 = inlined_call_operand.vmem [shape: f32[128,64], index: 3, kind: input, shape index: {}]
  %s4 = inlined_call_operand.vmem [shape: f32[128,1], index: 4, kind: input, shape index: {}]
  %s5 = inlined_call_operand.vmem [shape: f32[16,256], index: 5, kind: input, shape index: {}]
  %s6 = inlined_call_operand.vmem [shape: f32[16,256], index: 6, kind: input, shape index: {}]
  %s7 = inlined_call_operand.vmem [shape: f32[64,64], index: 7, kind: input, shape index: {}]
  %s8 = inlined_call_operand.vmem [shape: f32[64,1], index: 8, kind: input, shape index: {}]
  %s9 = inlined_call_operand.vmem [shape: f32[256,64], index: 9, kind: input, shape index: {}]
  %s10 = inlined_call_operand.vmem [shape: f32[256,1], index: 10, kind: input, shape index: {}]
  %s11 = inlined_call_operand.vmem [shape: f32[64,256], index: 11, kind: input, shape index: {}]
  %s12 = inlined_call_operand.vmem [shape: f32[64,1], index: 12, kind: input, shape index: {}]
  %s13 = inlined_call_operand.vmem [shape: f32[2,64,256], index: 13, kind: output, shape index: {}]
  %s14 = sld [smem:[#allocation0]]
  $region85: #{cluster_block_forward.1} parent=0
    _
  %s16 = ssub.s32 1, %s14
  %s17 = scalar_select 0, %s16, %s14
  %18 = sst [smem:[#allocation2]] %s0
  %19 = sst [smem:[#allocation3]] %s1
  loop: start=0, step=1, limit=4
  $region2: #{cluster_block_forward.1} parent=0 // loop_pre_header
    _
  $region3: #{cluster_block_forward.1} parent=0 // loop_header
    %s21 = sphi 0, %s25
    %p22 = scmp.ge.s32.totalorder %s21, 4
    %s29 = sphi 0, %s29
    %s31 = sphi 0, %s29
    %s32 = sphi 0, %s31
    %s46 = sphi 0, %s32
    %s50 = sphi 0, %s50
    %s52 = sphi 0, %s50
    %s53 = sphi 0, %s52
    %s67 = sphi 0, %s53
    %s73 = sphi 0, %s75
    %s76 = sphi 0, %s73
    %s77 = sphi 0, %s76
    %s93 = sphi 0, %s77
    %s97 = sphi 0, %s97
    %s99 = sphi 0, %s97
    %s100 = sphi 0, %s99
    %s114 = sphi 0, %s100
    %s118 = sphi 0, %s118
    %s120 = sphi 0, %s118
    %s121 = sphi 0, %s120
    %s135 = sphi 0, %s121
    %s139 = sphi 0, %s139
    %s141 = sphi 0, %s139
    %s142 = sphi 0, %s141
    %s156 = sphi 0, %s142
    %s160 = sphi 0, %s160
    %s162 = sphi 0, %s160
    %s163 = sphi 0, %s162
    %s177 = sphi 0, %s163
    %s181 = sphi 0, %s181
    %s183 = sphi 0, %s181
    %s184 = sphi 0, %s183
    %s198 = sphi 0, %s184
    %s202 = sphi 0, %s202
    %s204 = sphi 0, %s202
    %s205 = sphi 0, %s204
    %s219 = sphi 0, %s205
    %s223 = sphi 0, %s223
    %s225 = sphi 0, %s223
    %s226 = sphi 0, %s225
    %s240 = sphi 0, %s226
    %s244 = sphi 0, %s244
    %s246 = sphi 0, %s244
    %s247 = sphi 0, %s246
    %s261 = sphi 0, %s247
    %s265 = sphi 0, %s265
    %s267 = sphi 0, %s265
    %s268 = sphi 0, %s267
    %s282 = sphi 0, %s268
    %s286 = sphi 0, %s286
    %s288 = sphi 0, %s286
    %s289 = sphi 0, %s288
    %s303 = sphi 0, %s289
    %s309 = sphi 0, %s311
    %s312 = sphi 0, %s309
    %s313 = sphi 0, %s312
    %s329 = sphi 0, %s313
  $region4: #{cluster_block_forward.1} parent=0 // loop_header_branch
    %24 = sbr.rel (%p22) target = $region8
  $region5: #{cluster_block_forward.1} parent=0 // loop_body
    %s26 = ssub.s32 %s21, 1
    %s27 = ssub.s32 %s21, 2
    %s28 = sadd.s32 %s21, 1
    %s30 = sadd.s32 %s29, 1
    %p33 = scmp.eq.s32.totalorder %s21, 1
    %p34 = scmp.ne.s32.totalorder %s29, %s31
    %p35 = scmp.eq.s32.totalorder %s21, 0
    %p36 = por %p34, %p35
    %p37 = scmp.ne.s32.totalorder %s29, %s31
    %p38 = scmp.eq.s32.totalorder %s26, 1
    %p39 = por %p37, %p38
    %p40 = scmp.ne.s32.totalorder %s31, %s32
    %p41 = scmp.eq.s32.totalorder %s26, 0
    %p42 = por %p40, %p41
    %p43 = scmp.ne.s32.totalorder %s31, %s32
    %p44 = scmp.eq.s32.totalorder %s27, 1
    %p45 = por %p43, %p44
    %p47 = scmp.ne.s32.totalorder %s32, %s46
    %p48 = scmp.eq.s32.totalorder %s27, 0
    %p49 = por %p47, %p48
    %s51 = sadd.s32 %s50, 1
    %p54 = scmp.eq.s32.totalorder %s21, 1
    %p55 = scmp.ne.s32.totalorder %s50, %s52
    %p56 = scmp.eq.s32.totalorder %s21, 0
    %p57 = por %p55, %p56
    %p58 = scmp.ne.s32.totalorder %s50, %s52
    %p59 = scmp.eq.s32.totalorder %s26, 1
    %p60 = por %p58, %p59
    %p61 = scmp.ne.s32.totalorder %s52, %s53
    %p62 = scmp.eq.s32.totalorder %s26, 0
    %p63 = por %p61, %p62
    %p64 = scmp.ne.s32.totalorder %s52, %s53
    %p65 = scmp.eq.s32.totalorder %s27, 1
    %p66 = por %p64, %p65
    %p68 = scmp.ne.s32.totalorder %s53, %s67
    %p69 = scmp.eq.s32.totalorder %s27, 0
    %p70 = por %p68, %p69
    %s71 = ssub.s32 %s21, %s28
    %p72 = scmp.eq.s32.totalorder %s71, 0
    %s74 = sadd.s32 %s73, 1
    %s75 = scalar_select %p72, %s73, %s74
    %p78 = pneg %p72
    %p79 = scmp.eq.s32.totalorder %s21, 1
    %p80 = por %p78, %p79
    %p81 = scmp.ne.s32.totalorder %s73, %s76
    %p82 = scmp.eq.s32.totalorder %s21, 0
    %p83 = por %p81, %p82
    %p84 = scmp.ne.s32.totalorder %s73, %s76
    %p85 = scmp.eq.s32.totalorder %s26, 1
    %p86 = por %p84, %p85
    %p87 = scmp.ne.s32.totalorder %s76, %s77
    %p88 = scmp.eq.s32.totalorder %s26, 0
    %p89 = por %p87, %p88
    %p90 = scmp.ne.s32.totalorder %s76, %s77
    %p91 = scmp.eq.s32.totalorder %s27, 1
    %p92 = por %p90, %p91
    %p94 = scmp.ne.s32.totalorder %s77, %s93
    %p95 = scmp.eq.s32.totalorder %s27, 0
    %p96 = por %p94, %p95
    %s98 = sadd.s32 %s97, 1
    %p101 = scmp.eq.s32.totalorder %s21, 1
    %p102 = scmp.ne.s32.totalorder %s97, %s99
    %p103 = scmp.eq.s32.totalorder %s21, 0
    %p104 = por %p102, %p103
    %p105 = scmp.ne.s32.totalorder %s97, %s99
    %p106 = scmp.eq.s32.totalorder %s26, 1
    %p107 = por %p105, %p106
    %p108 = scmp.ne.s32.totalorder %s99, %s100
    %p109 = scmp.eq.s32.totalorder %s26, 0
    %p110 = por %p108, %p109
    %p111 = scmp.ne.s32.totalorder %s99, %s100
    %p112 = scmp.eq.s32.totalorder %s27, 1
    %p113 = por %p111, %p112
    %p115 = scmp.ne.s32.totalorder %s100, %s114
    %p116 = scmp.eq.s32.totalorder %s27, 0
    %p117 = por %p115, %p116
    %s119 = sadd.s32 %s118, 1
    %p122 = scmp.eq.s32.totalorder %s21, 1
    %p123 = scmp.ne.s32.totalorder %s118, %s120
    %p124 = scmp.eq.s32.totalorder %s21, 0
    %p125 = por %p123, %p124
    %p126 = scmp.ne.s32.totalorder %s118, %s120
    %p127 = scmp.eq.s32.totalorder %s26, 1
    %p128 = por %p126, %p127
    %p129 = scmp.ne.s32.totalorder %s120, %s121
    %p130 = scmp.eq.s32.totalorder %s26, 0
    %p131 = por %p129, %p130
    %p132 = scmp.ne.s32.totalorder %s120, %s121
    %p133 = scmp.eq.s32.totalorder %s27, 1
    %p134 = por %p132, %p133
    %p136 = scmp.ne.s32.totalorder %s121, %s135
    %p137 = scmp.eq.s32.totalorder %s27, 0
    %p138 = por %p136, %p137
    %s140 = sadd.s32 %s139, 1
    %p143 = scmp.eq.s32.totalorder %s21, 1
    %p144 = scmp.ne.s32.totalorder %s139, %s141
    %p145 = scmp.eq.s32.totalorder %s21, 0
    %p146 = por %p144, %p145
    %p147 = scmp.ne.s32.totalorder %s139, %s141
    %p148 = scmp.eq.s32.totalorder %s26, 1
    %p149 = por %p147, %p148
    %p150 = scmp.ne.s32.totalorder %s141, %s142
    %p151 = scmp.eq.s32.totalorder %s26, 0
    %p152 = por %p150, %p151
    %p153 = scmp.ne.s32.totalorder %s141, %s142
    %p154 = scmp.eq.s32.totalorder %s27, 1
    %p155 = por %p153, %p154
    %p157 = scmp.ne.s32.totalorder %s142, %s156
    %p158 = scmp.eq.s32.totalorder %s27, 0
    %p159 = por %p157, %p158
    %s161 = sadd.s32 %s160, 1
    %p164 = scmp.eq.s32.totalorder %s21, 1
    %p165 = scmp.ne.s32.totalorder %s160, %s162
    %p166 = scmp.eq.s32.totalorder %s21, 0
    %p167 = por %p165, %p166
    %p168 = scmp.ne.s32.totalorder %s160, %s162
    %p169 = scmp.eq.s32.totalorder %s26, 1
    %p170 = por %p168, %p169
    %p171 = scmp.ne.s32.totalorder %s162, %s163
    %p172 = scmp.eq.s32.totalorder %s26, 0
    %p173 = por %p171, %p172
    %p174 = scmp.ne.s32.totalorder %s162, %s163
    %p175 = scmp.eq.s32.totalorder %s27, 1
    %p176 = por %p174, %p175
    %p178 = scmp.ne.s32.totalorder %s163, %s177
    %p179 = scmp.eq.s32.totalorder %s27, 0
    %p180 = por %p178, %p179
    %s182 = sadd.s32 %s181, 1
    %p185 = scmp.eq.s32.totalorder %s21, 1
    %p186 = scmp.ne.s32.totalorder %s181, %s183
    %p187 = scmp.eq.s32.totalorder %s21, 0
    %p188 = por %p186, %p187
    %p189 = scmp.ne.s32.totalorder %s181, %s183
    %p190 = scmp.eq.s32.totalorder %s26, 1
    %p191 = por %p189, %p190
    %p192 = scmp.ne.s32.totalorder %s183, %s184
    %p193 = scmp.eq.s32.totalorder %s26, 0
    %p194 = por %p192, %p193
    %p195 = scmp.ne.s32.totalorder %s183, %s184
    %p196 = scmp.eq.s32.totalorder %s27, 1
    %p197 = por %p195, %p196
    %p199 = scmp.ne.s32.totalorder %s184, %s198
    %p200 = scmp.eq.s32.totalorder %s27, 0
    %p201 = por %p199, %p200
    %s203 = sadd.s32 %s202, 1
    %p206 = scmp.eq.s32.totalorder %s21, 1
    %p207 = scmp.ne.s32.totalorder %s202, %s204
    %p208 = scmp.eq.s32.totalorder %s21, 0
    %p209 = por %p207, %p208
    %p210 = scmp.ne.s32.totalorder %s202, %s204
    %p211 = scmp.eq.s32.totalorder %s26, 1
    %p212 = por %p210, %p211
    %p213 = scmp.ne.s32.totalorder %s204, %s205
    %p214 = scmp.eq.s32.totalorder %s26, 0
    %p215 = por %p213, %p214
    %p216 = scmp.ne.s32.totalorder %s204, %s205
    %p217 = scmp.eq.s32.totalorder %s27, 1
    %p218 = por %p216, %p217
    %p220 = scmp.ne.s32.totalorder %s205, %s219
    %p221 = scmp.eq.s32.totalorder %s27, 0
    %p222 = por %p220, %p221
    %s224 = sadd.s32 %s223, 1
    %p227 = scmp.eq.s32.totalorder %s21, 1
    %p228 = scmp.ne.s32.totalorder %s223, %s225
    %p229 = scmp.eq.s32.totalorder %s21, 0
    %p230 = por %p228, %p229
    %p231 = scmp.ne.s32.totalorder %s223, %s225
    %p232 = scmp.eq.s32.totalorder %s26, 1
    %p233 = por %p231, %p232
    %p234 = scmp.ne.s32.totalorder %s225, %s226
    %p235 = scmp.eq.s32.totalorder %s26, 0
    %p236 = por %p234, %p235
    %p237 = scmp.ne.s32.totalorder %s225, %s226
    %p238 = scmp.eq.s32.totalorder %s27, 1
    %p239 = por %p237, %p238
    %p241 = scmp.ne.s32.totalorder %s226, %s240
    %p242 = scmp.eq.s32.totalorder %s27, 0
    %p243 = por %p241, %p242
    %s245 = sadd.s32 %s244, 1
    %p248 = scmp.eq.s32.totalorder %s21, 1
    %p249 = scmp.ne.s32.totalorder %s244, %s246
    %p250 = scmp.eq.s32.totalorder %s21, 0
    %p251 = por %p249, %p250
    %p252 = scmp.ne.s32.totalorder %s244, %s246
    %p253 = scmp.eq.s32.totalorder %s26, 1
    %p254 = por %p252, %p253
    %p255 = scmp.ne.s32.totalorder %s246, %s247
    %p256 = scmp.eq.s32.totalorder %s26, 0
    %p257 = por %p255, %p256
    %p258 = scmp.ne.s32.totalorder %s246, %s247
    %p259 = scmp.eq.s32.totalorder %s27, 1
    %p260 = por %p258, %p259
    %p262 = scmp.ne.s32.totalorder %s247, %s261
    %p263 = scmp.eq.s32.totalorder %s27, 0
    %p264 = por %p262, %p263
    %s266 = sadd.s32 %s265, 1
    %p269 = scmp.eq.s32.totalorder %s21, 1
    %p270 = scmp.ne.s32.totalorder %s265, %s267
    %p271 = scmp.eq.s32.totalorder %s21, 0
    %p272 = por %p270, %p271
    %p273 = scmp.ne.s32.totalorder %s265, %s267
    %p274 = scmp.eq.s32.totalorder %s26, 1
    %p275 = por %p273, %p274
    %p276 = scmp.ne.s32.totalorder %s267, %s268
    %p277 = scmp.eq.s32.totalorder %s26, 0
    %p278 = por %p276, %p277
    %p279 = scmp.ne.s32.totalorder %s267, %s268
    %p280 = scmp.eq.s32.totalorder %s27, 1
    %p281 = por %p279, %p280
    %p283 = scmp.ne.s32.totalorder %s268, %s282
    %p284 = scmp.eq.s32.totalorder %s27, 0
    %p285 = por %p283, %p284
    %s287 = sadd.s32 %s286, 1
    %p290 = scmp.eq.s32.totalorder %s21, 1
    %p291 = scmp.ne.s32.totalorder %s286, %s288
    %p292 = scmp.eq.s32.totalorder %s21, 0
    %p293 = por %p291, %p292
    %p294 = scmp.ne.s32.totalorder %s286, %s288
    %p295 = scmp.eq.s32.totalorder %s26, 1
    %p296 = por %p294, %p295
    %p297 = scmp.ne.s32.totalorder %s288, %s289
    %p298 = scmp.eq.s32.totalorder %s26, 0
    %p299 = por %p297, %p298
    %p300 = scmp.ne.s32.totalorder %s288, %s289
    %p301 = scmp.eq.s32.totalorder %s27, 1
    %p302 = por %p300, %p301
    %p304 = scmp.ne.s32.totalorder %s289, %s303
    %p305 = scmp.eq.s32.totalorder %s27, 0
    %p306 = por %p304, %p305
    %s307 = ssub.s32 %s21, %s28
    %p308 = scmp.eq.s32.totalorder %s307, 0
    %s310 = sadd.s32 %s309, 1
    %s311 = scalar_select %p308, %s309, %s310
    %p314 = pneg %p308
    %p315 = scmp.eq.s32.totalorder %s21, 1
    %p316 = por %p314, %p315
    %p317 = scmp.ne.s32.totalorder %s309, %s312
    %p318 = scmp.eq.s32.totalorder %s21, 0
    %p319 = por %p317, %p318
    %p320 = scmp.ne.s32.totalorder %s309, %s312
    %p321 = scmp.eq.s32.totalorder %s26, 1
    %p322 = por %p320, %p321
    %p323 = scmp.ne.s32.totalorder %s312, %s313
    %p324 = scmp.eq.s32.totalorder %s26, 0
    %p325 = por %p323, %p324
    %p326 = scmp.ne.s32.totalorder %s312, %s313
    %p327 = scmp.eq.s32.totalorder %s27, 1
    %p328 = por %p326, %p327
    %p330 = scmp.ne.s32.totalorder %s313, %s329
    %p331 = scmp.eq.s32.totalorder %s27, 0
    %p332 = por %p330, %p331
    %p333 = scmp.le.s32.totalorder 1, %s21
    %p334 = scmp.lt.s32.totalorder %s21, 3
    %p335 = pnand %p333, %p334
    %p336 = pneg %p335
    // Predicated region
    $region9: #{cluster_block_forward.1} parent=5 // pred_check
      _
    $region10: #{cluster_block_forward.1} parent=5 // pred_check_branch
      %338 = sbr.rel (%p335) target = $region12
    $region11: #{cluster_block_forward.1} parent=5 // pred_region
      %s339 = ssub.s32 %s21, 1
      // Predicated region
      $region13: #{cluster_block_forward.1} parent=11 // pred_check
        %p340 = pneg %p42
      $region14: #{cluster_block_forward.1} parent=11 // pred_check_branch
        %342 = sbr.rel (%p340) target = $region16
      $region15: #{cluster_block_forward.1} parent=11 // pred_region
        _
      $region16: #{cluster_block_forward.1} parent=11 // pred_fallthru
        _
      // Predicated region
      $region17: #{cluster_block_forward.1} parent=11 // pred_check
        %p343 = pneg %p63
      $region18: #{cluster_block_forward.1} parent=11 // pred_check_branch
        %345 = sbr.rel (%p343) target = $region20
      $region19: #{cluster_block_forward.1} parent=11 // pred_region
        _
      $region20: #{cluster_block_forward.1} parent=11 // pred_fallthru
        _
      // Predicated region
      $region21: #{cluster_block_forward.1} parent=11 // pred_check
        %p346 = pneg %p110
      $region22: #{cluster_block_forward.1} parent=11 // pred_check_branch
        %348 = sbr.rel (%p346) target = $region24
      $region23: #{cluster_block_forward.1} parent=11 // pred_region
        _
      $region24: #{cluster_block_forward.1} parent=11 // pred_fallthru
        _
      // Predicated region
      $region25: #{cluster_block_forward.1} parent=11 // pred_check
        %p349 = pneg %p131
      $region26: #{cluster_block_forward.1} parent=11 // pred_check_branch
        %351 = sbr.rel (%p349) target = $region28
      $region27: #{cluster_block_forward.1} parent=11 // pred_region
        _
      $region28: #{cluster_block_forward.1} parent=11 // pred_fallthru
        _
      // Predicated region
      $region29: #{cluster_block_forward.1} parent=11 // pred_check
        %p352 = pneg %p152
      $region30: #{cluster_block_forward.1} parent=11 // pred_check_branch
        %354 = sbr.rel (%p352) target = $region32
      $region31: #{cluster_block_forward.1} parent=11 // pred_region
        _
      $region32: #{cluster_block_forward.1} parent=11 // pred_fallthru
        _
      // Predicated region
      $region33: #{cluster_block_forward.1} parent=11 // pred_check
        %p355 = pneg %p173
      $region34: #{cluster_block_forward.1} parent=11 // pred_check_branch
        %357 = sbr.rel (%p355) target = $region36
      $region35: #{cluster_block_forward.1} parent=11 // pred_region
        _
      $region36: #{cluster_block_forward.1} parent=11 // pred_fallthru
        _
      // Predicated region
      $region37: #{cluster_block_forward.1} parent=11 // pred_check
        %p358 = pneg %p194
      $region38: #{cluster_block_forward.1} parent=11 // pred_check_branch
        %360 = sbr.rel (%p358) target = $region40
      $region39: #{cluster_block_forward.1} parent=11 // pred_region
        _
      $region40: #{cluster_block_forward.1} parent=11 // pred_fallthru
        _
      // Predicated region
      $region41: #{cluster_block_forward.1} parent=11 // pred_check
        %p361 = pneg %p215
      $region42: #{cluster_block_forward.1} parent=11 // pred_check_branch
        %363 = sbr.rel (%p361) target = $region44
      $region43: #{cluster_block_forward.1} parent=11 // pred_region
        _
      $region44: #{cluster_block_forward.1} parent=11 // pred_fallthru
        _
      // Predicated region
      $region45: #{cluster_block_forward.1} parent=11 // pred_check
        %p364 = pneg %p236
      $region46: #{cluster_block_forward.1} parent=11 // pred_check_branch
        %366 = sbr.rel (%p364) target = $region48
      $region47: #{cluster_block_forward.1} parent=11 // pred_region
        _
      $region48: #{cluster_block_forward.1} parent=11 // pred_fallthru
        _
      // Predicated region
      $region49: #{cluster_block_forward.1} parent=11 // pred_check
        %p367 = pneg %p257
      $region50: #{cluster_block_forward.1} parent=11 // pred_check_branch
        %369 = sbr.rel (%p367) target = $region52
      $region51: #{cluster_block_forward.1} parent=11 // pred_region
        _
      $region52: #{cluster_block_forward.1} parent=11 // pred_fallthru
        _
      // Predicated region
      $region53: #{cluster_block_forward.1} parent=11 // pred_check
        %p370 = pneg %p278
      $region54: #{cluster_block_forward.1} parent=11 // pred_check_branch
        %372 = sbr.rel (%p370) target = $region56
      $region55: #{cluster_block_forward.1} parent=11 // pred_region
        _
      $region56: #{cluster_block_forward.1} parent=11 // pred_fallthru
        _
      // Predicated region
      $region57: #{cluster_block_forward.1} parent=11 // pred_check
        %p373 = pneg %p299
      $region58: #{cluster_block_forward.1} parent=11 // pred_check_branch
        %375 = sbr.rel (%p373) target = $region60
      $region59: #{cluster_block_forward.1} parent=11 // pred_region
        _
      $region60: #{cluster_block_forward.1} parent=11 // pred_fallthru
        _
    $region12: #{cluster_block_forward.1} parent=5 // pred_fallthru
      _
    %p376 = scmp.lt.s32.totalorder %s21, 2
    // Predicated region
    $region61: #{cluster_block_forward.1} parent=5 // pred_check
      %p377 = pneg %p376
    $region62: #{cluster_block_forward.1} parent=5 // pred_check_branch
      %379 = sbr.rel (%p377) target = $region64
    $region63: #{cluster_block_forward.1} parent=5 // pred_region
      // Predicated region
      $region65: #{cluster_block_forward.1} parent=63 // pred_check
        %p380 = pneg %p83
      $region66: #{cluster_block_forward.1} parent=63 // pred_check_branch
        %382 = sbr.rel (%p380) target = $region68
      $region67: #{cluster_block_forward.1} parent=63 // pred_region
        %p383 = scmp.lt.s32.totalorder %s21, 1
        %s384 = scalar_select %p383, %s21, 1
        %s385 = smul.addr %s384, 16
        %s386 = smul.addr %s385, 8
        %s387 = scalar_lea.vmem %s2, %s386
      $region68: #{cluster_block_forward.1} parent=63 // pred_fallthru
        _
    $region64: #{cluster_block_forward.1} parent=5 // pred_fallthru
      _
    %p388 = scmp.le.s32.totalorder 1, %s21
    %p389 = scmp.lt.s32.totalorder %s21, 3
    %p390 = pnand %p388, %p389
    %p391 = pneg %p390
    // Predicated region
    $region69: #{cluster_block_forward.1} parent=5 // pred_check
      _
    $region70: #{cluster_block_forward.1} parent=5 // pred_check_branch
      %393 = sbr.rel (%p390) target = $region72
    $region71: #{cluster_block_forward.1} parent=5 // pred_region
      %s394 = ssub.s32 %s21, 1
      %p395 = pneg %p42
      %p396 = pneg %p39
      %p397 = pneg %p63
      %p398 = pneg %p60
      %p399 = scmp.lt.s32.totalorder %s26, 1
      %s400 = scalar_select %p399, %s26, 1
      %s401 = smul.addr %s400, 16
      %s402 = smul.addr %s401, 8
      %s403 = scalar_lea.vmem %s2, %s402
      %p404 = pneg %p89
      %p405 = pneg %p86
      %p406 = pneg %p110
      %p407 = pneg %p107
      %p408 = pneg %p131
      %p409 = pneg %p128
      %p410 = pneg %p152
      %p411 = pneg %p149
      %p412 = pneg %p173
      %p413 = pneg %p170
      %p414 = pneg %p194
      %p415 = pneg %p191
      %p416 = pneg %p215
      %p417 = pneg %p212
      %p418 = pneg %p236
      %p419 = pneg %p233
      %p420 = pneg %p257
      %p421 = pneg %p254
      %p422 = pneg %p278
      %p423 = pneg %p275
      %p424 = pneg %p299
      %p425 = pneg %p296
      %p426 = pneg %p325
      %p427 = pneg %p322
      %p428 = scmp.lt.s32.totalorder %s26, 1
      %s429 = scalar_select %p428, %s26, 1
      %s430 = smul.addr %s429, 16
      %s431 = smul.addr %s430, 8
      %s432 = scalar_lea.vmem %s13, %s431
      %p433 = scmp.lt.s32.totalorder %s26, 1
      %s434 = scalar_select %p433, %s26, 1
      %s435 = smul.addr %s434, 16
      %s436 = smul.addr %s435, 8
      %s437 = scalar_lea.vmem %s2, %s436
      %p438 = scmp.lt.s32.totalorder %s26, 1
      %s439 = scalar_select %p438, %s26, 1
      %s440 = smul.addr %s439, 16
      %s441 = smul.addr %s440, 8
      %s442 = scalar_lea.vmem %s13, %s441
      %s443 = sld [smem:[#allocation2]]
      %s444 = sld [smem:[#allocation3]]
      %v445 = vld [vmem:[%s437] sm:$0xff]
      %v446 = vld [vmem:[%s437 + $0x8] sm:$0xff]
      %v447 = vld [vmem:[%s437 + $0x10] sm:$0xff]
      %v448 = vld [vmem:[%s437 + $0x18] sm:$0xff]
      %v449 = vld [vmem:[%s437 + $0x20] sm:$0xff]
      %v450 = vld [vmem:[%s437 + $0x28] sm:$0xff]
      %v451 = vld [vmem:[%s437 + $0x30] sm:$0xff]
      %v452 = vld [vmem:[%s437 + $0x38] sm:$0xff]
      %v453 = vld [vmem:[%s437 + $0x40] sm:$0xff]
      %v454 = vld [vmem:[%s437 + $0x48] sm:$0xff]
      %v455 = vld [vmem:[%s437 + $0x50] sm:$0xff]
      %v456 = vld [vmem:[%s437 + $0x58] sm:$0xff]
      %v457 = vld [vmem:[%s437 + $0x60] sm:$0xff]
      %v458 = vld [vmem:[%s437 + $0x68] sm:$0xff]
      %v459 = vld [vmem:[%s437 + $0x70] sm:$0xff]
      %v460 = vld [vmem:[%s437 + $0x78] sm:$0xff]
      %v461 = vadd.f32 %v445, %v446
      %462 = vadd.xlane.f32.xlu0 %v461
      %v463 = vpop.xlane.xlu0 %462
      %v464 = vadd.f32 %v447, %v448
      %465 = vadd.xlane.f32.xlu0 %v464
      %v466 = vpop.xlane.xlu0 %465
      %v467 = vadd.f32 %v449, %v450
      %468 = vadd.xlane.f32.xlu0 %v467
      %v469 = vpop.xlane.xlu0 %468
      %v470 = vadd.f32 %v451, %v452
      %471 = vadd.xlane.f32.xlu0 %v470
      %v472 = vpop.xlane.xlu0 %471
      %v473 = vadd.f32 %v453, %v454
      %474 = vadd.xlane.f32.xlu0 %v473
      %v475 = vpop.xlane.xlu0 %474
      %v476 = vadd.f32 %v455, %v456
      %477 = vadd.xlane.f32.xlu0 %v476
      %v478 = vpop.xlane.xlu0 %477
      %v479 = vadd.f32 %v457, %v458
      %480 = vadd.xlane.f32.xlu0 %v479
      %v481 = vpop.xlane.xlu0 %480
      %v482 = vadd.f32 %v459, %v460
      %483 = vadd.xlane.f32.xlu0 %v482
      %v484 = vpop.xlane.xlu0 %483
      %v485 = vadd.f32 %v463, %v466
      %v486 = vadd.f32 %v485, %v469
      %v487 = vadd.f32 %v486, %v472
      %v488 = vadd.f32 %v487, %v475
      %v489 = vadd.f32 %v488, %v478
      %v490 = vadd.f32 %v489, %v481
      %v491 = vadd.f32 %v490, %v484
      %v492 = vrot.slane %v491, 4
      %v493 = vadd.f32 %v491, %v492
      %v494 = vrot.slane %v493, 2
      %v495 = vadd.f32 %v493, %v494
      %v496 = vrot.slane %v495, 1
      %v497 = vadd.f32 %v495, %v496
      %v498 = vmul.f32 %v497, 6.1035156e-05
      %v499 = vsub.f32 %v445, %v498
      %v500 = vsub.f32 %v446, %v498
      %v501 = vsub.f32 %v447, %v498
      %v502 = vsub.f32 %v448, %v498
      %v503 = vsub.f32 %v449, %v498
      %v504 = vsub.f32 %v450, %v498
      %v505 = vsub.f32 %v451, %v498
      %v506 = vsub.f32 %v452, %v498
      %v507 = vsub.f32 %v453, %v498
      %v508 = vsub.f32 %v454, %v498
      %v509 = vsub.f32 %v455, %v498
      %v510 = vsub.f32 %v456, %v498
      %v511 = vsub.f32 %v457, %v498
      %v512 = vsub.f32 %v458, %v498
      %v513 = vsub.f32 %v459, %v498
      %v514 = vsub.f32 %v460, %v498
      %v515 = vmul.f32 %v499, %v499
      %v516 = vmul.f32 %v500, %v500
      %v517 = vmul.f32 %v501, %v501
      %v518 = vmul.f32 %v502, %v502
      %v519 = vmul.f32 %v503, %v503
      %v520 = vmul.f32 %v504, %v504
      %v521 = vmul.f32 %v505, %v505
      %v522 = vmul.f32 %v506, %v506
      %v523 = vmul.f32 %v507, %v507
      %v524 = vmul.f32 %v508, %v508
      %v525 = vmul.f32 %v509, %v509
      %v526 = vmul.f32 %v510, %v510
      %v527 = vmul.f32 %v511, %v511
      %v528 = vmul.f32 %v512, %v512
      %v529 = vmul.f32 %v513, %v513
      %v530 = vmul.f32 %v514, %v514
      %v531 = vadd.f32 %v515, %v516
      %532 = vadd.xlane.f32.xlu0 %v531
      %v533 = vpop.xlane.xlu0 %532
      %v534 = vadd.f32 %v517, %v518
      %535 = vadd.xlane.f32.xlu0 %v534
      %v536 = vpop.xlane.xlu0 %535
      %v537 = vadd.f32 %v519, %v520
      %538 = vadd.xlane.f32.xlu0 %v537
      %v539 = vpop.xlane.xlu0 %538
      %v540 = vadd.f32 %v521, %v522
      %541 = vadd.xlane.f32.xlu0 %v540
      %v542 = vpop.xlane.xlu0 %541
      %v543 = vadd.f32 %v523, %v524
      %544 = vadd.xlane.f32.xlu0 %v543
      %v545 = vpop.xlane.xlu0 %544
      %v546 = vadd.f32 %v525, %v526
      %547 = vadd.xlane.f32.xlu0 %v546
      %v548 = vpop.xlane.xlu0 %547
      %v549 = vadd.f32 %v527, %v528
      %550 = vadd.xlane.f32.xlu0 %v549
      %v551 = vpop.xlane.xlu0 %550
      %v552 = vadd.f32 %v529, %v530
      %553 = vadd.xlane.f32.xlu0 %v552
      %v554 = vpop.xlane.xlu0 %553
      %v555 = vadd.f32 %v533, %v536
      %v556 = vadd.f32 %v555, %v539
      %v557 = vadd.f32 %v556, %v542
      %v558 = vadd.f32 %v557, %v545
      %v559 = vadd.f32 %v558, %v548
      %v560 = vadd.f32 %v559, %v551
      %v561 = vadd.f32 %v560, %v554
      %v562 = vrot.slane %v561, 4
      %v563 = vadd.f32 %v561, %v562
      %v564 = vrot.slane %v563, 2
      %v565 = vadd.f32 %v563, %v564
      %v566 = vrot.slane %v565, 1
      %v567 = vadd.f32 %v565, %v566
      %v568 = vmul.f32 %v567, 6.1035156e-05
      %v569 = vadd.f32 %v568, 1e-05
      %v570 = vrsqrt.pop %v569
      %v571 = vmul.f32 %v570, %v569
      %v572 = vmul.f32 %v571, %v570
      %v573 = vmul.f32 0.5, %v572
      %v574 = vsub.f32 1.5, %v573
      %v575 = vmul.f32 %v570, %v574
      %vm576 = vweird.f32 %v569
      %vm577 = vweird.f32 %v570
      %vm578 = vmor %vm576, %vm577
      %v579 = vsel %vm578, %v570, %v575
      %v580 = vmul.f32 %v499, %v579
      %v581 = vmul.f32 %v500, %v579
      %v582 = vmul.f32 %v501, %v579
      %v583 = vmul.f32 %v502, %v579
      %v584 = vmul.f32 %v503, %v579
      %v585 = vmul.f32 %v504, %v579
      %v586 = vmul.f32 %v505, %v579
      %v587 = vmul.f32 %v506, %v579
      %v588 = vmul.f32 %v507, %v579
      %v589 = vmul.f32 %v508, %v579
      %v590 = vmul.f32 %v509, %v579
      %v591 = vmul.f32 %v510, %v579
      %v592 = vmul.f32 %v511, %v579
      %v593 = vmul.f32 %v512, %v579
      %v594 = vmul.f32 %v513, %v579
      %v595 = vmul.f32 %v514, %v579
      %v596 = vld [vmem:[%s3] sm:$0xff]
      %v597 = vld [vmem:[%s3 + $0x8] sm:$0xff]
      %v598 = vld [vmem:[%s3 + $0x10] sm:$0xff]
      %v599 = vld [vmem:[%s3 + $0x18] sm:$0xff]
      %v600 = vld [vmem:[%s3 + $0x20] sm:$0xff]
      %v601 = vld [vmem:[%s3 + $0x28] sm:$0xff]
      %v602 = vld [vmem:[%s3 + $0x30] sm:$0xff]
      %v603 = vld [vmem:[%s3 + $0x38] sm:$0xff]
      %v604 = vld [vmem:[%s3 + $0x40] sm:$0xff]
      %v605 = vld [vmem:[%s3 + $0x48] sm:$0xff]
      %v606 = vld [vmem:[%s3 + $0x50] sm:$0xff]
      %v607 = vld [vmem:[%s3 + $0x58] sm:$0xff]
      %v608 = vld [vmem:[%s3 + $0x60] sm:$0xff]
      %v609 = vld [vmem:[%s3 + $0x68] sm:$0xff]
      %v610 = vld [vmem:[%s3 + $0x70] sm:$0xff]
      %v611 = vld [vmem:[%s3 + $0x78] sm:$0xff]
      %v612 = vld [vmem:[%s4] sm:$0xff]
      %v613 = vld [vmem:[%s4 + $0x8] sm:$0xff]
      %v614 = vld [vmem:[%s4 + $0x10] sm:$0xff]
      %v615 = vld [vmem:[%s4 + $0x18] sm:$0xff]
      %v616 = vld [vmem:[%s4 + $0x20] sm:$0xff]
      %v617 = vld [vmem:[%s4 + $0x28] sm:$0xff]
      %v618 = vld [vmem:[%s4 + $0x30] sm:$0xff]
      %v619 = vld [vmem:[%s4 + $0x38] sm:$0xff]
      %v620 = vld [vmem:[%s4 + $0x40] sm:$0xff]
      %v621 = vld [vmem:[%s4 + $0x48] sm:$0xff]
      %v622 = vld [vmem:[%s4 + $0x50] sm:$0xff]
      %v623 = vld [vmem:[%s4 + $0x58] sm:$0xff]
      %v624 = vld [vmem:[%s4 + $0x60] sm:$0xff]
      %v625 = vld [vmem:[%s4 + $0x68] sm:$0xff]
      %v626 = vld [vmem:[%s4 + $0x70] sm:$0xff]
      %v627 = vld [vmem:[%s4 + $0x78] sm:$0xff]
      %629 = vset.pattern.permute.xlu0 0
      %630 = vperm.xlu0 %629, %v612
      %v631 = vpop.permute.xlu0 %630
      %634 = vset.pattern.permute.xlu0 0
      %635 = vperm.xlu0 %634, %v613
      %v636 = vpop.permute.xlu0 %635
      %639 = vset.pattern.permute.xlu0 0
      %640 = vperm.xlu0 %639, %v614
      %v641 = vpop.permute.xlu0 %640
      %644 = vset.pattern.permute.xlu0 0
      %645 = vperm.xlu0 %644, %v615
      %v646 = vpop.permute.xlu0 %645
      %649 = vset.pattern.permute.xlu0 0
      %650 = vperm.xlu0 %649, %v616
      %v651 = vpop.permute.xlu0 %650
      %654 = vset.pattern.permute.xlu0 0
      %655 = vperm.xlu0 %654, %v617
      %v656 = vpop.permute.xlu0 %655
      %659 = vset.pattern.permute.xlu0 0
      %660 = vperm.xlu0 %659, %v618
      %v661 = vpop.permute.xlu0 %660
      %664 = vset.pattern.permute.xlu0 0
      %665 = vperm.xlu0 %664, %v619
      %v666 = vpop.permute.xlu0 %665
      %669 = vset.pattern.permute.xlu0 0
      %670 = vperm.xlu0 %669, %v620
      %v671 = vpop.permute.xlu0 %670
      %674 = vset.pattern.permute.xlu0 0
      %675 = vperm.xlu0 %674, %v621
      %v676 = vpop.permute.xlu0 %675
      %679 = vset.pattern.permute.xlu0 0
      %680 = vperm.xlu0 %679, %v622
      %v681 = vpop.permute.xlu0 %680
      %684 = vset.pattern.permute.xlu0 0
      %685 = vperm.xlu0 %684, %v623
      %v686 = vpop.permute.xlu0 %685
      %689 = vset.pattern.permute.xlu0 0
      %690 = vperm.xlu0 %689, %v624
      %v691 = vpop.permute.xlu0 %690
      %694 = vset.pattern.permute.xlu0 0
      %695 = vperm.xlu0 %694, %v625
      %v696 = vpop.permute.xlu0 %695
      %699 = vset.pattern.permute.xlu0 0
      %700 = vperm.xlu0 %699, %v626
      %v701 = vpop.permute.xlu0 %700
      %704 = vset.pattern.permute.xlu0 0
      %705 = vperm.xlu0 %704, %v627
      %v706 = vpop.permute.xlu0 %705
      %vm708 = vcmask 523264
      %v710 = vsel %vm708, %v596, 0
      %v713 = vsel %vm708, %v597, 0
      %v716 = vsel %vm708, %v598, 0
      %v719 = vsel %vm708, %v599, 0
      %v722 = vsel %vm708, %v600, 0
      %v725 = vsel %vm708, %v601, 0
      %v728 = vsel %vm708, %v602, 0
      %v731 = vsel %vm708, %v603, 0
      %v734 = vsel %vm708, %v604, 0
      %v737 = vsel %vm708, %v605, 0
      %v740 = vsel %vm708, %v606, 0
      %v743 = vsel %vm708, %v607, 0
      %v746 = vsel %vm708, %v608, 0
      %v749 = vsel %vm708, %v609, 0
      %v752 = vsel %vm708, %v610, 0
      %v755 = vsel %vm708, %v611, 0
      %757 = vmatpush.msra.mxu0 0.0
      %758 = vmatpush.msra.mxu0 0.0
      %759 = vmatpush.msra.mxu0 0.0
      %760 = vmatpush.msra.mxu0 0.0
      %761 = vmatpush.msra.mxu0 0.0
      %762 = vmatpush.msra.mxu0 0.0
      %763 = vmatpush.msra.mxu0 0.0
      %764 = vmatpush.msra.mxu0 0.0
      %765 = vmatpush.msra.mxu0 %v594
      %766 = vmatpush.msra.mxu0 %v592
      %767 = vmatpush.msra.mxu0 %v590
      %768 = vmatpush.msra.mxu0 %v588
      %769 = vmatpush.msra.mxu0 %v586
      %770 = vmatpush.msra.mxu0 %v584
      %771 = vmatpush.msra.mxu0 %v582
      %772 = vmatpush.msra.mxu0 %v580
      %773 = vmatmul.f32.gmra.mxu0 %v710
      %v774 = vpop.f32.mrf.mxu0
      %v775 = vadd.f32 %v631, %v774
      %776 = vmatmul.f32.gmra.mxu0 %v713
      %v777 = vpop.f32.mrf.mxu0
      %v778 = vadd.f32 %v636, %v777
      %779 = vmatmul.f32.gmra.mxu0 %v716
      %v780 = vpop.f32.mrf.mxu0
      %v781 = vadd.f32 %v641, %v780
      %782 = vmatmul.f32.gmra.mxu0 %v719
      %v783 = vpop.f32.mrf.mxu0
      %v784 = vadd.f32 %v646, %v783
      %785 = vmatmul.f32.gmra.mxu0 %v722
      %v786 = vpop.f32.mrf.mxu0
      %v787 = vadd.f32 %v651, %v786
      %788 = vmatmul.f32.gmra.mxu0 %v725
      %v789 = vpop.f32.mrf.mxu0
      %v790 = vadd.f32 %v656, %v789
      %791 = vmatmul.f32.gmra.mxu0 %v728
      %v792 = vpop.f32.mrf.mxu0
      %v793 = vadd.f32 %v661, %v792
      %794 = vmatmul.f32.gmra.mxu0 %v731
      %v795 = vpop.f32.mrf.mxu0
      %v796 = vadd.f32 %v666, %v795
      %797 = vmatmul.f32.gmra.mxu0 %v734
      %v798 = vpop.f32.mrf.mxu0
      %v799 = vadd.f32 %v671, %v798
      %800 = vmatmul.f32.gmra.mxu0 %v737
      %v801 = vpop.f32.mrf.mxu0
      %v802 = vadd.f32 %v676, %v801
      %803 = vmatmul.f32.gmra.mxu0 %v740
      %v804 = vpop.f32.mrf.mxu0
      %v805 = vadd.f32 %v681, %v804
      %806 = vmatmul.f32.gmra.mxu0 %v743
      %v807 = vpop.f32.mrf.mxu0
      %v808 = vadd.f32 %v686, %v807
      %809 = vmatmul.f32.gmra.mxu0 %v746
      %v810 = vpop.f32.mrf.mxu0
      %v811 = vadd.f32 %v691, %v810
      %812 = vmatmul.f32.gmra.mxu0 %v749
      %v813 = vpop.f32.mrf.mxu0
      %v814 = vadd.f32 %v696, %v813
      %815 = vmatmul.f32.gmra.mxu0 %v752
      %v816 = vpop.f32.mrf.mxu0
      %v817 = vadd.f32 %v701, %v816
      %818 = vmatmul.f32.gmra.mxu0 %v755
      %v819 = vpop.f32.mrf.mxu0
      %v820 = vadd.f32 %v706, %v819
      %821 = vdwg.mxu0
      %822 = vmatpush.msra.mxu0 0.0
      %823 = vmatpush.msra.mxu0 0.0
      %824 = vmatpush.msra.mxu0 0.0
      %825 = vmatpush.msra.mxu0 0.0
      %826 = vmatpush.msra.mxu0 0.0
      %827 = vmatpush.msra.mxu0 0.0
      %828 = vmatpush.msra.mxu0 0.0
      %829 = vmatpush.msra.mxu0 0.0
      %830 = vmatpush.msra.mxu0 %v595
      %831 = vmatpush.msra.mxu0 %v593
      %832 = vmatpush.msra.mxu0 %v591
      %833 = vmatpush.msra.mxu0 %v589
      %834 = vmatpush.msra.mxu0 %v587
      %835 = vmatpush.msra.mxu0 %v585
      %836 = vmatpush.msra.mxu0 %v583
      %837 = vmatpush.msra.mxu0 %v581
      %838 = vmatmul.f32.gmra.mxu0 %v710
      %v839 = vpop.f32.mrf.mxu0
      %v840 = vadd.f32 %v631, %v839
      %841 = vmatmul.f32.gmra.mxu0 %v713
      %v842 = vpop.f32.mrf.mxu0
      %v843 = vadd.f32 %v636, %v842
      %844 = vmatmul.f32.gmra.mxu0 %v716
      %v845 = vpop.f32.mrf.mxu0
      %v846 = vadd.f32 %v641, %v845
      %847 = vmatmul.f32.gmra.mxu0 %v719
      %v848 = vpop.f32.mrf.mxu0
      %v849 = vadd.f32 %v646, %v848
      %850 = vmatmul.f32.gmra.mxu0 %v722
      %v851 = vpop.f32.mrf.mxu0
      %v852 = vadd.f32 %v651, %v851
      %853 = vmatmul.f32.gmra.mxu0 %v725
      %v854 = vpop.f32.mrf.mxu0
      %v855 = vadd.f32 %v656, %v854
      %856 = vmatmul.f32.gmra.mxu0 %v728
      %v857 = vpop.f32.mrf.mxu0
      %v858 = vadd.f32 %v661, %v857
      %859 = vmatmul.f32.gmra.mxu0 %v731
      %v860 = vpop.f32.mrf.mxu0
      %v861 = vadd.f32 %v666, %v860
      %862 = vmatmul.f32.gmra.mxu0 %v734
      %v863 = vpop.f32.mrf.mxu0
      %v864 = vadd.f32 %v671, %v863
      %865 = vmatmul.f32.gmra.mxu0 %v737
      %v866 = vpop.f32.mrf.mxu0
      %v867 = vadd.f32 %v676, %v866
      %868 = vmatmul.f32.gmra.mxu0 %v740
      %v869 = vpop.f32.mrf.mxu0
      %v870 = vadd.f32 %v681, %v869
      %871 = vmatmul.f32.gmra.mxu0 %v743
      %v872 = vpop.f32.mrf.mxu0
      %v873 = vadd.f32 %v686, %v872
      %874 = vmatmul.f32.gmra.mxu0 %v746
      %v875 = vpop.f32.mrf.mxu0
      %v876 = vadd.f32 %v691, %v875
      %877 = vmatmul.f32.gmra.mxu0 %v749
      %v878 = vpop.f32.mrf.mxu0
      %v879 = vadd.f32 %v696, %v878
      %880 = vmatmul.f32.gmra.mxu0 %v752
      %v881 = vpop.f32.mrf.mxu0
      %v882 = vadd.f32 %v701, %v881
      %883 = vmatmul.f32.gmra.mxu0 %v755
      %v884 = vpop.f32.mrf.mxu0
      %v885 = vadd.f32 %v706, %v884
      %886 = vdwg.mxu0
      %v887 = vld [vmem:[%s5] sm:$0xff]
      %v888 = vld [vmem:[%s5 + $0x8] sm:$0xff]
      %v889 = vld [vmem:[%s5 + $0x10] sm:$0xff]
      %v890 = vld [vmem:[%s5 + $0x18] sm:$0xff]
      %v891 = vld [vmem:[%s6] sm:$0xff]
      %v892 = vld [vmem:[%s6 + $0x8] sm:$0xff]
      %v893 = vld [vmem:[%s6 + $0x10] sm:$0xff]
      %v894 = vld [vmem:[%s6 + $0x18] sm:$0xff]
      %895 = vmatpush.xpose.msra.mxu0 0.0
      %896 = vmatpush.xpose.msra.mxu0 0.0
      %897 = vmatpush.xpose.msra.mxu0 0.0
      %898 = vmatpush.xpose.msra.mxu0 0.0
      %899 = vmatpush.xpose.msra.mxu0 0.0
      %900 = vmatpush.xpose.msra.mxu0 0.0
      %901 = vmatpush.xpose.msra.mxu0 0.0
      %902 = vmatpush.xpose.msra.mxu0 0.0
      %903 = vmatpush.xpose.msra.mxu0 0.0
      %904 = vmatpush.xpose.msra.mxu0 0.0
      %905 = vmatpush.xpose.msra.mxu0 0.0
      %906 = vmatpush.xpose.msra.mxu0 0.0
      %907 = vmatpush.xpose.msra.mxu0 0.0
      %908 = vmatpush.xpose.msra.mxu0 0.0
      %909 = vmatpush.xpose.msra.mxu0 %v889
      %910 = vmatpush.xpose.msra.mxu0 %v887
      %911 = vmatmul.f32.gmra.mxu0 %v775
      %v912 = vpop.f32.mrf.mxu0
      %v913 = vadd.f32 0.0, %v912
      %914 = vmatmul.f32.gmra.mxu0 %v778
      %v915 = vpop.f32.mrf.mxu0
      %v916 = vadd.f32 0.0, %v915
      %917 = vmatmul.f32.gmra.mxu0 %v781
      %v918 = vpop.f32.mrf.mxu0
      %v919 = vadd.f32 0.0, %v918
      %920 = vmatmul.f32.gmra.mxu0 %v784
      %v921 = vpop.f32.mrf.mxu0
      %v922 = vadd.f32 0.0, %v921
      %923 = vmatmul.f32.gmra.mxu0 %v787
      %v924 = vpop.f32.mrf.mxu0
      %v925 = vadd.f32 0.0, %v924
      %926 = vmatmul.f32.gmra.mxu0 %v790
      %v927 = vpop.f32.mrf.mxu0
      %v928 = vadd.f32 0.0, %v927
      %929 = vmatmul.f32.gmra.mxu0 %v793
      %v930 = vpop.f32.mrf.mxu0
      %v931 = vadd.f32 0.0, %v930
      %932 = vmatmul.f32.gmra.mxu0 %v796
      %v933 = vpop.f32.mrf.mxu0
      %v934 = vadd.f32 0.0, %v933
      %935 = vdwg.mxu0
      %936 = vmatpush.xpose.msra.mxu0 0.0
      %937 = vmatpush.xpose.msra.mxu0 0.0
      %938 = vmatpush.xpose.msra.mxu0 0.0
      %939 = vmatpush.xpose.msra.mxu0 0.0
      %940 = vmatpush.xpose.msra.mxu0 0.0
      %941 = vmatpush.xpose.msra.mxu0 0.0
      %942 = vmatpush.xpose.msra.mxu0 0.0
      %943 = vmatpush.xpose.msra.mxu0 0.0
      %944 = vmatpush.xpose.msra.mxu0 0.0
      %945 = vmatpush.xpose.msra.mxu0 0.0
      %946 = vmatpush.xpose.msra.mxu0 0.0
      %947 = vmatpush.xpose.msra.mxu0 0.0
      %948 = vmatpush.xpose.msra.mxu0 0.0
      %949 = vmatpush.xpose.msra.mxu0 0.0
      %950 = vmatpush.xpose.msra.mxu0 %v890
      %951 = vmatpush.xpose.msra.mxu0 %v888
      %952 = vmatmul.f32.gmra.mxu0 %v840
      %v953 = vpop.f32.mrf.mxu0
      %v954 = vadd.f32 %v913, %v953
      %955 = vmatmul.f32.gmra.mxu0 %v843
      %v956 = vpop.f32.mrf.mxu0
      %v957 = vadd.f32 %v916, %v956
      %958 = vmatmul.f32.gmra.mxu0 %v846
      %v959 = vpop.f32.mrf.mxu0
      %v960 = vadd.f32 %v919, %v959
      %961 = vmatmul.f32.gmra.mxu0 %v849
      %v962 = vpop.f32.mrf.mxu0
      %v963 = vadd.f32 %v922, %v962
      %964 = vmatmul.f32.gmra.mxu0 %v852
      %v965 = vpop.f32.mrf.mxu0
      %v966 = vadd.f32 %v925, %v965
      %967 = vmatmul.f32.gmra.mxu0 %v855
      %v968 = vpop.f32.mrf.mxu0
      %v969 = vadd.f32 %v928, %v968
      %970 = vmatmul.f32.gmra.mxu0 %v858
      %v971 = vpop.f32.mrf.mxu0
      %v972 = vadd.f32 %v931, %v971
      %973 = vmatmul.f32.gmra.mxu0 %v861
      %v974 = vpop.f32.mrf.mxu0
      %v975 = vadd.f32 %v934, %v974
      %976 = vdwg.mxu0
      %977 = vmatpush.xpose.msra.mxu0 0.0
      %978 = vmatpush.xpose.msra.mxu0 0.0
      %979 = vmatpush.xpose.msra.mxu0 0.0
      %980 = vmatpush.xpose.msra.mxu0 0.0
      %981 = vmatpush.xpose.msra.mxu0 0.0
      %982 = vmatpush.xpose.msra.mxu0 0.0
      %983 = vmatpush.xpose.msra.mxu0 0.0
      %984 = vmatpush.xpose.msra.mxu0 0.0
      %985 = vmatpush.xpose.msra.mxu0 0.0
      %986 = vmatpush.xpose.msra.mxu0 0.0
      %987 = vmatpush.xpose.msra.mxu0 0.0
      %988 = vmatpush.xpose.msra.mxu0 0.0
      %989 = vmatpush.xpose.msra.mxu0 0.0
      %990 = vmatpush.xpose.msra.mxu0 0.0
      %991 = vmatpush.xpose.msra.mxu0 %v889
      %992 = vmatpush.xpose.msra.mxu0 %v887
      %993 = vmatmul.f32.gmra.mxu0 %v799
      %v994 = vpop.f32.mrf.mxu0
      %v995 = vadd.f32 0.0, %v994
      %996 = vmatmul.f32.gmra.mxu0 %v802
      %v997 = vpop.f32.mrf.mxu0
      %v998 = vadd.f32 0.0, %v997
      %999 = vmatmul.f32.gmra.mxu0 %v805
      %v1000 = vpop.f32.mrf.mxu0
      %v1001 = vadd.f32 0.0, %v1000
      %1002 = vmatmul.f32.gmra.mxu0 %v808
      %v1003 = vpop.f32.mrf.mxu0
      %v1004 = vadd.f32 0.0, %v1003
      %1005 = vmatmul.f32.gmra.mxu0 %v811
      %v1006 = vpop.f32.mrf.mxu0
      %v1007 = vadd.f32 0.0, %v1006
      %1008 = vmatmul.f32.gmra.mxu0 %v814
      %v1009 = vpop.f32.mrf.mxu0
      %v1010 = vadd.f32 0.0, %v1009
      %1011 = vmatmul.f32.gmra.mxu0 %v817
      %v1012 = vpop.f32.mrf.mxu0
      %v1013 = vadd.f32 0.0, %v1012
      %1014 = vmatmul.f32.gmra.mxu0 %v820
      %v1015 = vpop.f32.mrf.mxu0
      %v1016 = vadd.f32 0.0, %v1015
      %1017 = vdwg.mxu0
      %1018 = vmatpush.xpose.msra.mxu0 0.0
      %1019 = vmatpush.xpose.msra.mxu0 0.0
      %1020 = vmatpush.xpose.msra.mxu0 0.0
      %1021 = vmatpush.xpose.msra.mxu0 0.0
      %1022 = vmatpush.xpose.msra.mxu0 0.0
      %1023 = vmatpush.xpose.msra.mxu0 0.0
      %1024 = vmatpush.xpose.msra.mxu0 0.0
      %1025 = vmatpush.xpose.msra.mxu0 0.0
      %1026 = vmatpush.xpose.msra.mxu0 0.0
      %1027 = vmatpush.xpose.msra.mxu0 0.0
      %1028 = vmatpush.xpose.msra.mxu0 0.0
      %1029 = vmatpush.xpose.msra.mxu0 0.0
      %1030 = vmatpush.xpose.msra.mxu0 0.0
      %1031 = vmatpush.xpose.msra.mxu0 0.0
      %1032 = vmatpush.xpose.msra.mxu0 %v890
      %1033 = vmatpush.xpose.msra.mxu0 %v888
      %1034 = vmatmul.f32.gmra.mxu0 %v864
      %v1035 = vpop.f32.mrf.mxu0
      %v1036 = vadd.f32 %v995, %v1035
      %1037 = vmatmul.f32.gmra.mxu0 %v867
      %v1038 = vpop.f32.mrf.mxu0
      %v1039 = vadd.f32 %v998, %v1038
      %1040 = vmatmul.f32.gmra.mxu0 %v870
      %v1041 = vpop.f32.mrf.mxu0
      %v1042 = vadd.f32 %v1001, %v1041
      %1043 = vmatmul.f32.gmra.mxu0 %v873
      %v1044 = vpop.f32.mrf.mxu0
      %v1045 = vadd.f32 %v1004, %v1044
      %1046 = vmatmul.f32.gmra.mxu0 %v876
      %v1047 = vpop.f32.mrf.mxu0
      %v1048 = vadd.f32 %v1007, %v1047
      %1049 = vmatmul.f32.gmra.mxu0 %v879
      %v1050 = vpop.f32.mrf.mxu0
      %v1051 = vadd.f32 %v1010, %v1050
      %1052 = vmatmul.f32.gmra.mxu0 %v882
      %v1053 = vpop.f32.mrf.mxu0
      %v1054 = vadd.f32 %v1013, %v1053
      %1055 = vmatmul.f32.gmra.mxu0 %v885
      %v1056 = vpop.f32.mrf.mxu0
      %v1057 = vadd.f32 %v1016, %v1056
      %1058 = vdwg.mxu0
      %v1059 = vmul.f32 %v954, %v954
      %v1060 = vmul.f32 %v957, %v957
      %vm1061 = vcmask 130048
      %v1062 = vsel %vm1061, %v1059, 0.0
      %v1063 = vsel %vm1061, %v1060, 0.0
      %v1064 = vadd.f32 %v1062, %v1063
      %v1065 = vrot.slane %v1064, 4
      %v1066 = vadd.f32 %v1064, %v1065
      %v1067 = vrot.slane %v1066, 2
      %v1068 = vadd.f32 %v1066, %v1067
      %v1069 = vrot.slane %v1068, 1
      %v1070 = vadd.f32 %v1068, %v1069
      %v1071 = vadd.f32 %v1070, 1e-12
      %v1072 = vrsqrt.pop %v1071
      %v1073 = vmul.f32 %v1072, %v1071
      %v1074 = vmul.f32 %v1073, %v1072
      %v1075 = vmul.f32 0.5, %v1074
      %v1076 = vsub.f32 1.5, %v1075
      %v1077 = vmul.f32 %v1072, %v1076
      %vm1078 = vweird.f32 %v1071
      %vm1079 = vweird.f32 %v1072
      %vm1080 = vmor %vm1078, %vm1079
      %v1081 = vsel %vm1080, %v1072, %v1077
      %v1082 = vmul.f32 %v954, %v1081
      %v1083 = vmul.f32 %v957, %v1081
      %v1084 = vmul.f32 %v775, %v775
      %v1085 = vmul.f32 %v840, %v840
      %v1086 = vmul.f32 %v778, %v778
      %v1087 = vmul.f32 %v843, %v843
      %v1088 = vadd.f32 %v1084, %v1086
      %v1089 = vrot.slane %v1088, 4
      %v1090 = vadd.f32 %v1088, %v1089
      %v1091 = vrot.slane %v1090, 2
      %v1092 = vadd.f32 %v1090, %v1091
      %v1093 = vrot.slane %v1092, 1
      %v1094 = vadd.f32 %v1092, %v1093
      %v1095 = vadd.f32 %v1085, %v1087
      %v1096 = vrot.slane %v1095, 4
      %v1097 = vadd.f32 %v1095, %v1096
      %v1098 = vrot.slane %v1097, 2
      %v1099 = vadd.f32 %v1097, %v1098
      %v1100 = vrot.slane %v1099, 1
      %v1101 = vadd.f32 %v1099, %v1100
      %v1102 = vadd.f32 %v1094, 1e-12
      %v1103 = vadd.f32 %v1101, 1e-12
      %v1104 = vrsqrt.pop %v1102
      %v1105 = vmul.f32 %v1104, %v1102
      %v1106 = vmul.f32 %v1105, %v1104
      %v1107 = vmul.f32 0.5, %v1106
      %v1108 = vsub.f32 1.5, %v1107
      %v1109 = vmul.f32 %v1104, %v1108
      %vm1110 = vweird.f32 %v1102
      %vm1111 = vweird.f32 %v1104
      %vm1112 = vmor %vm1110, %vm1111
      %v1113 = vsel %vm1112, %v1104, %v1109
      %v1114 = vrsqrt.pop %v1103
      %v1115 = vmul.f32 %v1114, %v1103
      %v1116 = vmul.f32 %v1115, %v1114
      %v1117 = vmul.f32 0.5, %v1116
      %v1118 = vsub.f32 1.5, %v1117
      %v1119 = vmul.f32 %v1114, %v1118
      %vm1120 = vweird.f32 %v1103
      %vm1121 = vweird.f32 %v1114
      %vm1122 = vmor %vm1120, %vm1121
      %v1123 = vsel %vm1122, %v1114, %v1119
      %v1124 = vmul.f32 %v775, %v1113
      %v1125 = vmul.f32 %v840, %v1123
      %v1126 = vmul.f32 %v778, %v1113
      %v1127 = vmul.f32 %v843, %v1123
      %1128 = vxpose.xlu0.b32.start [1/16] %v1082, 128
      %1129 = vxpose.xlu0.b32.cont [2/16] %v1083, 128
      %1130 = vxpose.xlu0.b32.cont [3/16] 0.0, 128
      %1131 = vxpose.xlu0.b32.cont [4/16] 0.0, 128
      %1132 = vxpose.xlu0.b32.cont [5/16] 0.0, 128
      %1133 = vxpose.xlu0.b32.cont [6/16] 0.0, 128
      %1134 = vxpose.xlu0.b32.cont [7/16] 0.0, 128
      %1135 = vxpose.xlu0.b32.cont [8/16] 0.0, 128
      %1136 = vxpose.xlu0.b32.cont [9/16] 0.0, 128
      %1137 = vxpose.xlu0.b32.cont [10/16] 0.0, 128
      %1138 = vxpose.xlu0.b32.cont [11/16] 0.0, 128
      %1139 = vxpose.xlu0.b32.cont [12/16] 0.0, 128
      %1140 = vxpose.xlu0.b32.cont [13/16] 0.0, 128
      %1141 = vxpose.xlu0.b32.cont [14/16] 0.0, 128
      %1142 = vxpose.xlu0.b32.cont [15/16] 0.0, 128
      %1143 = vxpose.xlu0.b32.end [16/16] 0.0, 128
      %v1144 = vpop.trf.xlu0
      %v1145 = vpop.trf.xlu0
      %v1146 = vpop.trf.xlu0
      %v1147 = vpop.trf.xlu0
      %v1148 = vpop.trf.xlu0
      %v1149 = vpop.trf.xlu0
      %v1150 = vpop.trf.xlu0
      %v1151 = vpop.trf.xlu0
      %v1152 = vpop.trf.xlu0
      %v1153 = vpop.trf.xlu0
      %v1154 = vpop.trf.xlu0
      %v1155 = vpop.trf.xlu0
      %v1156 = vpop.trf.xlu0
      %v1157 = vpop.trf.xlu0
      %v1158 = vpop.trf.xlu0
      %v1159 = vpop.trf.xlu0
      %v1161 = vsel %vm1061, %v1144, 0
      %v1164 = vsel %vm1061, %v1145, 0
      %1166 = vmatpush.msra.mxu0 0.0
      %1167 = vmatpush.msra.mxu0 0.0
      %1168 = vmatpush.msra.mxu0 0.0
      %1169 = vmatpush.msra.mxu0 0.0
      %1170 = vmatpush.msra.mxu0 0.0
      %1171 = vmatpush.msra.mxu0 0.0
      %1172 = vmatpush.msra.mxu0 0.0
      %1173 = vmatpush.msra.mxu0 0.0
      %1174 = vmatpush.msra.mxu0 0.0
      %1175 = vmatpush.msra.mxu0 0.0
      %1176 = vmatpush.msra.mxu0 0.0
      %1177 = vmatpush.msra.mxu0 0.0
      %1178 = vmatpush.msra.mxu0 0.0
      %1179 = vmatpush.msra.mxu0 0.0
      %1180 = vmatpush.msra.mxu0 %v1126
      %1181 = vmatpush.msra.mxu0 %v1124
      %1182 = vmatmul.f32.gmra.mxu0 %v1161
      %v1183 = vpop.f32.mrf.mxu0
      %v1184 = vadd.f32 0.0, %v1183
      %1185 = vmatmul.f32.gmra.mxu0 %v1164
      %v1186 = vpop.f32.mrf.mxu0
      %v1187 = vadd.f32 0.0, %v1186
      %1188 = vdwg.mxu0
      %1189 = vmatpush.msra.mxu0 0.0
      %1190 = vmatpush.msra.mxu0 0.0
      %1191 = vmatpush.msra.mxu0 0.0
      %1192 = vmatpush.msra.mxu0 0.0
      %1193 = vmatpush.msra.mxu0 0.0
      %1194 = vmatpush.msra.mxu0 0.0
      %1195 = vmatpush.msra.mxu0 0.0
      %1196 = vmatpush.msra.mxu0 0.0
      %1197 = vmatpush.msra.mxu0 0.0
      %1198 = vmatpush.msra.mxu0 0.0
      %1199 = vmatpush.msra.mxu0 0.0
      %1200 = vmatpush.msra.mxu0 0.0
      %1201 = vmatpush.msra.mxu0 0.0
      %1202 = vmatpush.msra.mxu0 0.0
      %1203 = vmatpush.msra.mxu0 %v1127
      %1204 = vmatpush.msra.mxu0 %v1125
      %1205 = vmatmul.f32.gmra.mxu0 %v1161
      %v1206 = vpop.f32.mrf.mxu0
      %v1207 = vadd.f32 0.0, %v1206
      %1208 = vmatmul.f32.gmra.mxu0 %v1164
      %v1209 = vpop.f32.mrf.mxu0
      %v1210 = vadd.f32 0.0, %v1209
      %1211 = vdwg.mxu0
      %v1212 = vstv %s443
      %v1213 = vmul.f32 %v1212, %v1184
      %v1214 = vmul.f32 %v1212, %v1207
      %v1215 = vmul.f32 %v1212, %v1187
      %v1216 = vmul.f32 %v1212, %v1210
      %v1217 = vstv %s444
      %v1218 = vadd.f32 %v1217, %v1213
      %v1219 = vadd.f32 %v1217, %v1214
      %v1220 = vadd.f32 %v1217, %v1215
      %v1221 = vadd.f32 %v1217, %v1216
      %v1222 = vxor.u32 %v1218, 2147483648
      %v1223 = vxor.u32 %v1219, 2147483648
      %v1224 = vxor.u32 %v1220, 2147483648
      %v1225 = vxor.u32 %v1221, 2147483648
      %v1226 = vmul.f32 %v1222, 1.442695
      %v1227 = vpow.pop %v1226
      %v1228 = vmul.f32 %v1223, 1.442695
      %v1229 = vpow.pop %v1228
      %v1230 = vmul.f32 %v1224, 1.442695
      %v1231 = vpow.pop %v1230
      %v1232 = vmul.f32 %v1225, 1.442695
      %v1233 = vpow.pop %v1232
      %v1234 = vadd.f32 %v1227, 1.0
      %v1235 = vadd.f32 %v1229, 1.0
      %v1236 = vadd.f32 %v1231, 1.0
      %v1237 = vadd.f32 %v1233, 1.0
      %v1238 = vrcp.pop %v1234
      %v1239 = vmul.f32 %v1234, %v1238
      %v1240 = vsub.f32 1.0, %v1239
      %v1241 = vmul.f32 %v1238, %v1240
      %v1242 = vadd.f32 %v1238, %v1241
      %vm1243 = vweird.f32 %v1234
      %vm1244 = vweird.f32 %v1238
      %vm1245 = vmor %vm1243, %vm1244
      %v1246 = vsel %vm1245, %v1238, %v1242
      %v1247 = vand.u32 2147483647, %v1234
      %vm1248 = vcmp.eq.f32.partialorder %v1247, 8.507059e+37
      %v1249 = vand.u32 %v1234, 2147483648
      %v1250 = vor.u32 1.1754944e-38, %v1249
      %v1251 = vsel %vm1248, %v1250, %v1246
      %v1252 = vmul.f32 1.0, %v1251
      %v1253 = vrcp.pop %v1235
      %v1254 = vmul.f32 %v1235, %v1253
      %v1255 = vsub.f32 1.0, %v1254
      %v1256 = vmul.f32 %v1253, %v1255
      %v1257 = vadd.f32 %v1253, %v1256
      %vm1258 = vweird.f32 %v1235
      %vm1259 = vweird.f32 %v1253
      %vm1260 = vmor %vm1258, %vm1259
      %v1261 = vsel %vm1260, %v1253, %v1257
      %v1262 = vand.u32 2147483647, %v1235
      %vm1263 = vcmp.eq.f32.partialorder %v1262, 8.507059e+37
      %v1264 = vand.u32 %v1235, 2147483648
      %v1265 = vor.u32 1.1754944e-38, %v1264
      %v1266 = vsel %vm1263, %v1265, %v1261
      %v1267 = vmul.f32 1.0, %v1266
      %v1268 = vrcp.pop %v1236
      %v1269 = vmul.f32 %v1236, %v1268
      %v1270 = vsub.f32 1.0, %v1269
      %v1271 = vmul.f32 %v1268, %v1270
      %v1272 = vadd.f32 %v1268, %v1271
      %vm1273 = vweird.f32 %v1236
      %vm1274 = vweird.f32 %v1268
      %vm1275 = vmor %vm1273, %vm1274
      %v1276 = vsel %vm1275, %v1268, %v1272
      %v1277 = vand.u32 2147483647, %v1236
      %vm1278 = vcmp.eq.f32.partialorder %v1277, 8.507059e+37
      %v1279 = vand.u32 %v1236, 2147483648
      %v1280 = vor.u32 1.1754944e-38, %v1279
      %v1281 = vsel %vm1278, %v1280, %v1276
      %v1282 = vmul.f32 1.0, %v1281
      %v1283 = vrcp.pop %v1237
      %v1284 = vmul.f32 %v1237, %v1283
      %v1285 = vsub.f32 1.0, %v1284
      %v1286 = vmul.f32 %v1283, %v1285
      %v1287 = vadd.f32 %v1283, %v1286
      %vm1288 = vweird.f32 %v1237
      %vm1289 = vweird.f32 %v1283
      %vm1290 = vmor %vm1288, %vm1289
      %v1291 = vsel %vm1290, %v1283, %v1287
      %v1292 = vand.u32 2147483647, %v1237
      %vm1293 = vcmp.eq.f32.partialorder %v1292, 8.507059e+37
      %v1294 = vand.u32 %v1237, 2147483648
      %v1295 = vor.u32 1.1754944e-38, %v1294
      %v1296 = vsel %vm1293, %v1295, %v1291
      %v1297 = vmul.f32 1.0, %v1296
      %v1298 = vmul.f32 %v1252, %v891
      %v1299 = vmul.f32 %v1267, %v892
      %v1300 = vmul.f32 %v1282, %v893
      %v1301 = vmul.f32 %v1297, %v894
      %v1302 = vlaneseq
      %v1303 = vshrl.u32 %v1302, 7
      %v1304 = vadd.s32 %v1303, 8
      %v1305 = vmax.f32 %v1298, %v1300
      %v1306 = vrot.slane %v1305, 4
      %v1307 = vmax.f32 %v1305, %v1306
      %v1308 = vrot.slane %v1307, 2
      %v1309 = vmax.f32 %v1307, %v1308
      %v1310 = vrot.slane %v1309, 1
      %v1311 = vmax.f32 %v1309, %v1310
      %v1312 = vmax.f32 %v1299, %v1301
      %v1313 = vrot.slane %v1312, 4
      %v1314 = vmax.f32 %v1312, %v1313
      %v1315 = vrot.slane %v1314, 2
      %v1316 = vmax.f32 %v1314, %v1315
      %v1317 = vrot.slane %v1316, 1
      %v1318 = vmax.f32 %v1316, %v1317
      %vm1319 = vcmp.eq.f32.partialorder %v1298, %v1311
      %vm1320 = vcmp.eq.f32.partialorder %v1299, %v1318
      %vm1321 = vcmp.eq.f32.partialorder %v1300, %v1311
      %vm1322 = vcmp.eq.f32.partialorder %v1301, %v1318
      %v1323 = vsel %vm1319, %v1303, 16
      %v1324 = vsel %vm1320, %v1303, 16
      %v1325 = vsel %vm1321, %v1304, 16
      %v1326 = vsel %vm1322, %v1304, 16
      %vm1327 = vcmp.lt.s32.totalorder %v1323, %v1325
      %v1328 = vsel %vm1327, %v1323, %v1325
      %v1329 = vrot.slane %v1328, 4
      %vm1330 = vcmp.lt.s32.totalorder %v1328, %v1329
      %v1331 = vsel %vm1330, %v1328, %v1329
      %v1332 = vrot.slane %v1331, 2
      %vm1333 = vcmp.lt.s32.totalorder %v1331, %v1332
      %v1334 = vsel %vm1333, %v1331, %v1332
      %v1335 = vrot.slane %v1334, 1
      %vm1336 = vcmp.lt.s32.totalorder %v1334, %v1335
      %v1337 = vsel %vm1336, %v1334, %v1335
      %vm1338 = vcmp.lt.s32.totalorder %v1324, %v1326
      %v1339 = vsel %vm1338, %v1324, %v1326
      %v1340 = vrot.slane %v1339, 4
      %vm1341 = vcmp.lt.s32.totalorder %v1339, %v1340
      %v1342 = vsel %vm1341, %v1339, %v1340
      %v1343 = vrot.slane %v1342, 2
      %vm1344 = vcmp.lt.s32.totalorder %v1342, %v1343
      %v1345 = vsel %vm1344, %v1342, %v1343
      %v1346 = vrot.slane %v1345, 1
      %vm1347 = vcmp.lt.s32.totalorder %v1345, %v1346
      %v1348 = vsel %vm1347, %v1345, %v1346
      %vm1349 = vcmp.eq.s32.totalorder %v1303, %v1337
      %vm1350 = vcmp.eq.s32.totalorder %v1303, %v1348
      %vm1351 = vcmp.eq.s32.totalorder %v1304, %v1337
      %vm1352 = vcmp.eq.s32.totalorder %v1304, %v1348
      %v1353 = vsel %vm1349, 1, 0
      %v1354 = vsel %vm1350, 1, 0
      %v1355 = vsel %vm1351, 1, 0
      %v1356 = vsel %vm1352, 1, 0
      %v1357 = vcvt.s32.f32 %v1353
      %v1358 = vcvt.s32.f32 %v1354
      %v1359 = vcvt.s32.f32 %v1355
      %v1360 = vcvt.s32.f32 %v1356
      %v1361 = vmul.f32 %v1298, %v1357
      %v1362 = vmul.f32 %v1299, %v1358
      %v1363 = vmul.f32 %v1300, %v1359
      %v1364 = vmul.f32 %v1301, %v1360
      %1365 = vmatpush.xpose.msra.mxu0 0.0
      %1366 = vmatpush.xpose.msra.mxu0 0.0
      %1367 = vmatpush.xpose.msra.mxu0 0.0
      %1368 = vmatpush.xpose.msra.mxu0 0.0
      %1369 = vmatpush.xpose.msra.mxu0 0.0
      %1370 = vmatpush.xpose.msra.mxu0 0.0
      %1371 = vmatpush.xpose.msra.mxu0 0.0
      %1372 = vmatpush.xpose.msra.mxu0 0.0
      %1373 = vmatpush.xpose.msra.mxu0 0.0
      %1374 = vmatpush.xpose.msra.mxu0 0.0
      %1375 = vmatpush.xpose.msra.mxu0 0.0
      %1376 = vmatpush.xpose.msra.mxu0 0.0
      %1377 = vmatpush.xpose.msra.mxu0 0.0
      %1378 = vmatpush.xpose.msra.mxu0 0.0
      %1379 = vmatpush.xpose.msra.mxu0 %v1363
      %1380 = vmatpush.xpose.msra.mxu0 %v1361
      %1381 = vmatmul.f32.gmra.mxu0 %v799
      %v1382 = vpop.f32.mrf.mxu0
      %v1383 = vadd.f32 %v1036, %v1382
      %1384 = vmatmul.f32.gmra.mxu0 %v802
      %v1385 = vpop.f32.mrf.mxu0
      %v1386 = vadd.f32 %v1039, %v1385
      %1387 = vdwg.mxu0
      %1388 = vmatpush.xpose.msra.mxu0 0.0
      %1389 = vmatpush.xpose.msra.mxu0 0.0
      %1390 = vmatpush.xpose.msra.mxu0 0.0
      %1391 = vmatpush.xpose.msra.mxu0 0.0
      %1392 = vmatpush.xpose.msra.mxu0 0.0
      %1393 = vmatpush.xpose.msra.mxu0 0.0
      %1394 = vmatpush.xpose.msra.mxu0 0.0
      %1395 = vmatpush.xpose.msra.mxu0 0.0
      %1396 = vmatpush.xpose.msra.mxu0 0.0
      %1397 = vmatpush.xpose.msra.mxu0 0.0
      %1398 = vmatpush.xpose.msra.mxu0 0.0
      %1399 = vmatpush.xpose.msra.mxu0 0.0
      %1400 = vmatpush.xpose.msra.mxu0 0.0
      %1401 = vmatpush.xpose.msra.mxu0 0.0
      %1402 = vmatpush.xpose.msra.mxu0 %v1364
      %1403 = vmatpush.xpose.msra.mxu0 %v1362
      %1404 = vmatmul.f32.gmra.mxu0 %v864
      %v1405 = vpop.f32.mrf.mxu0
      %v1406 = vadd.f32 %v1383, %v1405
      %1407 = vmatmul.f32.gmra.mxu0 %v867
      %v1408 = vpop.f32.mrf.mxu0
      %v1409 = vadd.f32 %v1386, %v1408
      %1410 = vdwg.mxu0
      %v1411 = vadd.f32 %v1357, %v1358
      %1412 = vadd.xlane.f32.xlu0 %v1411
      %v1413 = vpop.xlane.xlu0 %1412
      %v1414 = vadd.f32 %v1359, %v1360
      %1415 = vadd.xlane.f32.xlu0 %v1414
      %v1416 = vpop.xlane.xlu0 %1415
      %v1417 = vadd.f32 %v1413, 1.0
      %v1418 = vadd.f32 %v1416, 1.0
      %v1419 = vrcp.pop %v1417
      %v1420 = vmul.f32 %v1417, %v1419
      %v1421 = vsub.f32 1.0, %v1420
      %v1422 = vmul.f32 %v1419, %v1421
      %v1423 = vadd.f32 %v1419, %v1422
      %vm1424 = vweird.f32 %v1417
      %vm1425 = vweird.f32 %v1419
      %vm1426 = vmor %vm1424, %vm1425
      %v1427 = vsel %vm1426, %v1419, %v1423
      %v1428 = vand.u32 2147483647, %v1417
      %vm1429 = vcmp.eq.f32.partialorder %v1428, 8.507059e+37
      %v1430 = vand.u32 %v1417, 2147483648
      %v1431 = vor.u32 1.1754944e-38, %v1430
      %v1432 = vsel %vm1429, %v1431, %v1427
      %v1433 = vmul.f32 1.0, %v1432
      %v1434 = vrcp.pop %v1418
      %v1435 = vmul.f32 %v1418, %v1434
      %v1436 = vsub.f32 1.0, %v1435
      %v1437 = vmul.f32 %v1434, %v1436
      %v1438 = vadd.f32 %v1434, %v1437
      %vm1439 = vweird.f32 %v1418
      %vm1440 = vweird.f32 %v1434
      %vm1441 = vmor %vm1439, %vm1440
      %v1442 = vsel %vm1441, %v1434, %v1438
      %v1443 = vand.u32 2147483647, %v1418
      %vm1444 = vcmp.eq.f32.partialorder %v1443, 8.507059e+37
      %v1445 = vand.u32 %v1418, 2147483648
      %v1446 = vor.u32 1.1754944e-38, %v1445
      %v1447 = vsel %vm1444, %v1446, %v1442
      %v1448 = vmul.f32 1.0, %v1447
      %v1449 = vmul.f32 %v1361, %v1433
      %v1450 = vmul.f32 %v1362, %v1433
      %v1451 = vmul.f32 %v1363, %v1448
      %v1452 = vmul.f32 %v1364, %v1448
      %v1454 = vsel %vm1061, %v1406, 0
      %v1457 = vsel %vm1061, %v1409, 0
      %1459 = vmatpush.msra.mxu0 0.0
      %1460 = vmatpush.msra.mxu0 0.0
      %1461 = vmatpush.msra.mxu0 0.0
      %1462 = vmatpush.msra.mxu0 0.0
      %1463 = vmatpush.msra.mxu0 0.0
      %1464 = vmatpush.msra.mxu0 0.0
      %1465 = vmatpush.msra.mxu0 0.0
      %1466 = vmatpush.msra.mxu0 0.0
      %1467 = vmatpush.msra.mxu0 0.0
      %1468 = vmatpush.msra.mxu0 0.0
      %1469 = vmatpush.msra.mxu0 0.0
      %1470 = vmatpush.msra.mxu0 0.0
      %1471 = vmatpush.msra.mxu0 0.0
      %1472 = vmatpush.msra.mxu0 0.0
      %1473 = vmatpush.msra.mxu0 %v1451
      %1474 = vmatpush.msra.mxu0 %v1449
      %1475 = vmatmul.f32.gmra.mxu0 %v1454
      %v1476 = vpop.f32.mrf.mxu0
      %v1477 = vadd.f32 0.0, %v1476
      %1478 = vmatmul.f32.gmra.mxu0 %v1457
      %v1479 = vpop.f32.mrf.mxu0
      %v1480 = vadd.f32 0.0, %v1479
      %1481 = vdwg.mxu0
      %1482 = vmatpush.msra.mxu0 0.0
      %1483 = vmatpush.msra.mxu0 0.0
      %1484 = vmatpush.msra.mxu0 0.0
      %1485 = vmatpush.msra.mxu0 0.0
      %1486 = vmatpush.msra.mxu0 0.0
      %1487 = vmatpush.msra.mxu0 0.0
      %1488 = vmatpush.msra.mxu0 0.0
      %1489 = vmatpush.msra.mxu0 0.0
      %1490 = vmatpush.msra.mxu0 0.0
      %1491 = vmatpush.msra.mxu0 0.0
      %1492 = vmatpush.msra.mxu0 0.0
      %1493 = vmatpush.msra.mxu0 0.0
      %1494 = vmatpush.msra.mxu0 0.0
      %1495 = vmatpush.msra.mxu0 0.0
      %1496 = vmatpush.msra.mxu0 %v1452
      %1497 = vmatpush.msra.mxu0 %v1450
      %1498 = vmatmul.f32.gmra.mxu0 %v1454
      %v1499 = vpop.f32.mrf.mxu0
      %v1500 = vadd.f32 0.0, %v1499
      %1501 = vmatmul.f32.gmra.mxu0 %v1457
      %v1502 = vpop.f32.mrf.mxu0
      %v1503 = vadd.f32 0.0, %v1502
      %1504 = vdwg.mxu0
      %v1505 = vmul.f32 %v960, %v960
      %v1506 = vmul.f32 %v963, %v963
      %v1507 = vsel %vm1061, %v1505, 0.0
      %v1508 = vsel %vm1061, %v1506, 0.0
      %v1509 = vadd.f32 %v1507, %v1508
      %v1510 = vrot.slane %v1509, 4
      %v1511 = vadd.f32 %v1509, %v1510
      %v1512 = vrot.slane %v1511, 2
      %v1513 = vadd.f32 %v1511, %v1512
      %v1514 = vrot.slane %v1513, 1
      %v1515 = vadd.f32 %v1513, %v1514
      %v1516 = vadd.f32 %v1515, 1e-12
      %v1517 = vrsqrt.pop %v1516
      %v1518 = vmul.f32 %v1517, %v1516
      %v1519 = vmul.f32 %v1518, %v1517
      %v1520 = vmul.f32 0.5, %v1519
      %v1521 = vsub.f32 1.5, %v1520
      %v1522 = vmul.f32 %v1517, %v1521
      %vm1523 = vweird.f32 %v1516
      %vm1524 = vweird.f32 %v1517
      %vm1525 = vmor %vm1523, %vm1524
      %v1526 = vsel %vm1525, %v1517, %v1522
      %v1527 = vmul.f32 %v960, %v1526
      %v1528 = vmul.f32 %v963, %v1526
      %v1529 = vmul.f32 %v781, %v781
      %v1530 = vmul.f32 %v846, %v846
      %v1531 = vmul.f32 %v784, %v784
      %v1532 = vmul.f32 %v849, %v849
      %v1533 = vadd.f32 %v1529, %v1531
      %v1534 = vrot.slane %v1533, 4
      %v1535 = vadd.f32 %v1533, %v1534
      %v1536 = vrot.slane %v1535, 2
      %v1537 = vadd.f32 %v1535, %v1536
      %v1538 = vrot.slane %v1537, 1
      %v1539 = vadd.f32 %v1537, %v1538
      %v1540 = vadd.f32 %v1530, %v1532
      %v1541 = vrot.slane %v1540, 4
      %v1542 = vadd.f32 %v1540, %v1541
      %v1543 = vrot.slane %v1542, 2
      %v1544 = vadd.f32 %v1542, %v1543
      %v1545 = vrot.slane %v1544, 1
      %v1546 = vadd.f32 %v1544, %v1545
      %v1547 = vadd.f32 %v1539, 1e-12
      %v1548 = vadd.f32 %v1546, 1e-12
      %v1549 = vrsqrt.pop %v1547
      %v1550 = vmul.f32 %v1549, %v1547
      %v1551 = vmul.f32 %v1550, %v1549
      %v1552 = vmul.f32 0.5, %v1551
      %v1553 = vsub.f32 1.5, %v1552
      %v1554 = vmul.f32 %v1549, %v1553
      %vm1555 = vweird.f32 %v1547
      %vm1556 = vweird.f32 %v1549
      %vm1557 = vmor %vm1555, %vm1556
      %v1558 = vsel %vm1557, %v1549, %v1554
      %v1559 = vrsqrt.pop %v1548
      %v1560 = vmul.f32 %v1559, %v1548
      %v1561 = vmul.f32 %v1560, %v1559
      %v1562 = vmul.f32 0.5, %v1561
      %v1563 = vsub.f32 1.5, %v1562
      %v1564 = vmul.f32 %v1559, %v1563
      %vm1565 = vweird.f32 %v1548
      %vm1566 = vweird.f32 %v1559
      %vm1567 = vmor %vm1565, %vm1566
      %v1568 = vsel %vm1567, %v1559, %v1564
      %v1569 = vmul.f32 %v781, %v1558
      %v1570 = vmul.f32 %v846, %v1568
      %v1571 = vmul.f32 %v784, %v1558
      %v1572 = vmul.f32 %v849, %v1568
      %1573 = vxpose.xlu0.b32.start [1/16] %v1527, 128
      %1574 = vxpose.xlu0.b32.cont [2/16] %v1528, 128
      %1575 = vxpose.xlu0.b32.cont [3/16] 0.0, 128
      %1576 = vxpose.xlu0.b32.cont [4/16] 0.0, 128
      %1577 = vxpose.xlu0.b32.cont [5/16] 0.0, 128
      %1578 = vxpose.xlu0.b32.cont [6/16] 0.0, 128
      %1579 = vxpose.xlu0.b32.cont [7/16] 0.0, 128
      %1580 = vxpose.xlu0.b32.cont [8/16] 0.0, 128
      %1581 = vxpose.xlu0.b32.cont [9/16] 0.0, 128
      %1582 = vxpose.xlu0.b32.cont [10/16] 0.0, 128
      %1583 = vxpose.xlu0.b32.cont [11/16] 0.0, 128
      %1584 = vxpose.xlu0.b32.cont [12/16] 0.0, 128
      %1585 = vxpose.xlu0.b32.cont [13/16] 0.0, 128
      %1586 = vxpose.xlu0.b32.cont [14/16] 0.0, 128
      %1587 = vxpose.xlu0.b32.cont [15/16] 0.0, 128
      %1588 = vxpose.xlu0.b32.end [16/16] 0.0, 128
      %v1589 = vpop.trf.xlu0
      %v1590 = vpop.trf.xlu0
      %v1591 = vpop.trf.xlu0
      %v1592 = vpop.trf.xlu0
      %v1593 = vpop.trf.xlu0
      %v1594 = vpop.trf.xlu0
      %v1595 = vpop.trf.xlu0
      %v1596 = vpop.trf.xlu0
      %v1597 = vpop.trf.xlu0
      %v1598 = vpop.trf.xlu0
      %v1599 = vpop.trf.xlu0
      %v1600 = vpop.trf.xlu0
      %v1601 = vpop.trf.xlu0
      %v1602 = vpop.trf.xlu0
      %v1603 = vpop.trf.xlu0
      %v1604 = vpop.trf.xlu0
      %v1606 = vsel %vm1061, %v1589, 0
      %v1609 = vsel %vm1061, %v1590, 0
      %1611 = vmatpush.msra.mxu0 0.0
      %1612 = vmatpush.msra.mxu0 0.0
      %1613 = vmatpush.msra.mxu0 0.0
      %1614 = vmatpush.msra.mxu0 0.0
      %1615 = vmatpush.msra.mxu0 0.0
      %1616 = vmatpush.msra.mxu0 0.0
      %1617 = vmatpush.msra.mxu0 0.0
      %1618 = vmatpush.msra.mxu0 0.0
      %1619 = vmatpush.msra.mxu0 0.0
      %1620 = vmatpush.msra.mxu0 0.0
      %1621 = vmatpush.msra.mxu0 0.0
      %1622 = vmatpush.msra.mxu0 0.0
      %1623 = vmatpush.msra.mxu0 0.0
      %1624 = vmatpush.msra.mxu0 0.0
      %1625 = vmatpush.msra.mxu0 %v1571
      %1626 = vmatpush.msra.mxu0 %v1569
      %1627 = vmatmul.f32.gmra.mxu0 %v1606
      %v1628 = vpop.f32.mrf.mxu0
      %v1629 = vadd.f32 0.0, %v1628
      %1630 = vmatmul.f32.gmra.mxu0 %v1609
      %v1631 = vpop.f32.mrf.mxu0
      %v1632 = vadd.f32 0.0, %v1631
      %1633 = vdwg.mxu0
      %1634 = vmatpush.msra.mxu0 0.0
      %1635 = vmatpush.msra.mxu0 0.0
      %1636 = vmatpush.msra.mxu0 0.0
      %1637 = vmatpush.msra.mxu0 0.0
      %1638 = vmatpush.msra.mxu0 0.0
      %1639 = vmatpush.msra.mxu0 0.0
      %1640 = vmatpush.msra.mxu0 0.0
      %1641 = vmatpush.msra.mxu0 0.0
      %1642 = vmatpush.msra.mxu0 0.0
      %1643 = vmatpush.msra.mxu0 0.0
      %1644 = vmatpush.msra.mxu0 0.0
      %1645 = vmatpush.msra.mxu0 0.0
      %1646 = vmatpush.msra.mxu0 0.0
      %1647 = vmatpush.msra.mxu0 0.0
      %1648 = vmatpush.msra.mxu0 %v1572
      %1649 = vmatpush.msra.mxu0 %v1570
      %1650 = vmatmul.f32.gmra.mxu0 %v1606
      %v1651 = vpop.f32.mrf.mxu0
      %v1652 = vadd.f32 0.0, %v1651
      %1653 = vmatmul.f32.gmra.mxu0 %v1609
      %v1654 = vpop.f32.mrf.mxu0
      %v1655 = vadd.f32 0.0, %v1654
      %1656 = vdwg.mxu0
      %v1657 = vmul.f32 %v1212, %v1629
      %v1658 = vmul.f32 %v1212, %v1652
      %v1659 = vmul.f32 %v1212, %v1632
      %v1660 = vmul.f32 %v1212, %v1655
      %v1661 = vadd.f32 %v1217, %v1657
      %v1662 = vadd.f32 %v1217, %v1658
      %v1663 = vadd.f32 %v1217, %v1659
      %v1664 = vadd.f32 %v1217, %v1660
      %v1665 = vxor.u32 %v1661, 2147483648
      %v1666 = vxor.u32 %v1662, 2147483648
      %v1667 = vxor.u32 %v1663, 2147483648
      %v1668 = vxor.u32 %v1664, 2147483648
      %v1669 = vmul.f32 %v1665, 1.442695
      %v1670 = vpow.pop %v1669
      %v1671 = vmul.f32 %v1666, 1.442695
      %v1672 = vpow.pop %v1671
      %v1673 = vmul.f32 %v1667, 1.442695
      %v1674 = vpow.pop %v1673
      %v1675 = vmul.f32 %v1668, 1.442695
      %v1676 = vpow.pop %v1675
      %v1677 = vadd.f32 %v1670, 1.0
      %v1678 = vadd.f32 %v1672, 1.0
      %v1679 = vadd.f32 %v1674, 1.0
      %v1680 = vadd.f32 %v1676, 1.0
      %v1681 = vrcp.pop %v1677
      %v1682 = vmul.f32 %v1677, %v1681
      %v1683 = vsub.f32 1.0, %v1682
      %v1684 = vmul.f32 %v1681, %v1683
      %v1685 = vadd.f32 %v1681, %v1684
      %vm1686 = vweird.f32 %v1677
      %vm1687 = vweird.f32 %v1681
      %vm1688 = vmor %vm1686, %vm1687
      %v1689 = vsel %vm1688, %v1681, %v1685
      %v1690 = vand.u32 2147483647, %v1677
      %vm1691 = vcmp.eq.f32.partialorder %v1690, 8.507059e+37
      %v1692 = vand.u32 %v1677, 2147483648
      %v1693 = vor.u32 1.1754944e-38, %v1692
      %v1694 = vsel %vm1691, %v1693, %v1689
      %v1695 = vmul.f32 1.0, %v1694
      %v1696 = vrcp.pop %v1678
      %v1697 = vmul.f32 %v1678, %v1696
      %v1698 = vsub.f32 1.0, %v1697
      %v1699 = vmul.f32 %v1696, %v1698
      %v1700 = vadd.f32 %v1696, %v1699
      %vm1701 = vweird.f32 %v1678
      %vm1702 = vweird.f32 %v1696
      %vm1703 = vmor %vm1701, %vm1702
      %v1704 = vsel %vm1703, %v1696, %v1700
      %v1705 = vand.u32 2147483647, %v1678
      %vm1706 = vcmp.eq.f32.partialorder %v1705, 8.507059e+37
      %v1707 = vand.u32 %v1678, 2147483648
      %v1708 = vor.u32 1.1754944e-38, %v1707
      %v1709 = vsel %vm1706, %v1708, %v1704
      %v1710 = vmul.f32 1.0, %v1709
      %v1711 = vrcp.pop %v1679
      %v1712 = vmul.f32 %v1679, %v1711
      %v1713 = vsub.f32 1.0, %v1712
      %v1714 = vmul.f32 %v1711, %v1713
      %v1715 = vadd.f32 %v1711, %v1714
      %vm1716 = vweird.f32 %v1679
      %vm1717 = vweird.f32 %v1711
      %vm1718 = vmor %vm1716, %vm1717
      %v1719 = vsel %vm1718, %v1711, %v1715
      %v1720 = vand.u32 2147483647, %v1679
      %vm1721 = vcmp.eq.f32.partialorder %v1720, 8.507059e+37
      %v1722 = vand.u32 %v1679, 2147483648
      %v1723 = vor.u32 1.1754944e-38, %v1722
      %v1724 = vsel %vm1721, %v1723, %v1719
      %v1725 = vmul.f32 1.0, %v1724
      %v1726 = vrcp.pop %v1680
      %v1727 = vmul.f32 %v1680, %v1726
      %v1728 = vsub.f32 1.0, %v1727
      %v1729 = vmul.f32 %v1726, %v1728
      %v1730 = vadd.f32 %v1726, %v1729
      %vm1731 = vweird.f32 %v1680
      %vm1732 = vweird.f32 %v1726
      %vm1733 = vmor %vm1731, %vm1732
      %v1734 = vsel %vm1733, %v1726, %v1730
      %v1735 = vand.u32 2147483647, %v1680
      %vm1736 = vcmp.eq.f32.partialorder %v1735, 8.507059e+37
      %v1737 = vand.u32 %v1680, 2147483648
      %v1738 = vor.u32 1.1754944e-38, %v1737
      %v1739 = vsel %vm1736, %v1738, %v1734
      %v1740 = vmul.f32 1.0, %v1739
      %v1741 = vmul.f32 %v1695, %v891
      %v1742 = vmul.f32 %v1710, %v892
      %v1743 = vmul.f32 %v1725, %v893
      %v1744 = vmul.f32 %v1740, %v894
      %v1745 = vmax.f32 %v1741, %v1743
      %v1746 = vrot.slane %v1745, 4
      %v1747 = vmax.f32 %v1745, %v1746
      %v1748 = vrot.slane %v1747, 2
      %v1749 = vmax.f32 %v1747, %v1748
      %v1750 = vrot.slane %v1749, 1
      %v1751 = vmax.f32 %v1749, %v1750
      %v1752 = vmax.f32 %v1742, %v1744
      %v1753 = vrot.slane %v1752, 4
      %v1754 = vmax.f32 %v1752, %v1753
      %v1755 = vrot.slane %v1754, 2
      %v1756 = vmax.f32 %v1754, %v1755
      %v1757 = vrot.slane %v1756, 1
      %v1758 = vmax.f32 %v1756, %v1757
      %vm1759 = vcmp.eq.f32.partialorder %v1741, %v1751
      %vm1760 = vcmp.eq.f32.partialorder %v1742, %v1758
      %vm1761 = vcmp.eq.f32.partialorder %v1743, %v1751
      %vm1762 = vcmp.eq.f32.partialorder %v1744, %v1758
      %v1763 = vsel %vm1759, %v1303, 16
      %v1764 = vsel %vm1760, %v1303, 16
      %v1765 = vsel %vm1761, %v1304, 16
      %v1766 = vsel %vm1762, %v1304, 16
      %vm1767 = vcmp.lt.s32.totalorder %v1763, %v1765
      %v1768 = vsel %vm1767, %v1763, %v1765
      %v1769 = vrot.slane %v1768, 4
      %vm1770 = vcmp.lt.s32.totalorder %v1768, %v1769
      %v1771 = vsel %vm1770, %v1768, %v1769
      %v1772 = vrot.slane %v1771, 2
      %vm1773 = vcmp.lt.s32.totalorder %v1771, %v1772
      %v1774 = vsel %vm1773, %v1771, %v1772
      %v1775 = vrot.slane %v1774, 1
      %vm1776 = vcmp.lt.s32.totalorder %v1774, %v1775
      %v1777 = vsel %vm1776, %v1774, %v1775
      %vm1778 = vcmp.lt.s32.totalorder %v1764, %v1766
      %v1779 = vsel %vm1778, %v1764, %v1766
      %v1780 = vrot.slane %v1779, 4
      %vm1781 = vcmp.lt.s32.totalorder %v1779, %v1780
      %v1782 = vsel %vm1781, %v1779, %v1780
      %v1783 = vrot.slane %v1782, 2
      %vm1784 = vcmp.lt.s32.totalorder %v1782, %v1783
      %v1785 = vsel %vm1784, %v1782, %v1783
      %v1786 = vrot.slane %v1785, 1
      %vm1787 = vcmp.lt.s32.totalorder %v1785, %v1786
      %v1788 = vsel %vm1787, %v1785, %v1786
      %vm1789 = vcmp.eq.s32.totalorder %v1303, %v1777
      %vm1790 = vcmp.eq.s32.totalorder %v1303, %v1788
      %vm1791 = vcmp.eq.s32.totalorder %v1304, %v1777
      %vm1792 = vcmp.eq.s32.totalorder %v1304, %v1788
      %v1793 = vsel %vm1789, 1, 0
      %v1794 = vsel %vm1790, 1, 0
      %v1795 = vsel %vm1791, 1, 0
      %v1796 = vsel %vm1792, 1, 0
      %v1797 = vcvt.s32.f32 %v1793
      %v1798 = vcvt.s32.f32 %v1794
      %v1799 = vcvt.s32.f32 %v1795
      %v1800 = vcvt.s32.f32 %v1796
      %v1801 = vmul.f32 %v1741, %v1797
      %v1802 = vmul.f32 %v1742, %v1798
      %v1803 = vmul.f32 %v1743, %v1799
      %v1804 = vmul.f32 %v1744, %v1800
      %1805 = vmatpush.xpose.msra.mxu0 0.0
      %1806 = vmatpush.xpose.msra.mxu0 0.0
      %1807 = vmatpush.xpose.msra.mxu0 0.0
      %1808 = vmatpush.xpose.msra.mxu0 0.0
      %1809 = vmatpush.xpose.msra.mxu0 0.0
      %1810 = vmatpush.xpose.msra.mxu0 0.0
      %1811 = vmatpush.xpose.msra.mxu0 0.0
      %1812 = vmatpush.xpose.msra.mxu0 0.0
      %1813 = vmatpush.xpose.msra.mxu0 0.0
      %1814 = vmatpush.xpose.msra.mxu0 0.0
      %1815 = vmatpush.xpose.msra.mxu0 0.0
      %1816 = vmatpush.xpose.msra.mxu0 0.0
      %1817 = vmatpush.xpose.msra.mxu0 0.0
      %1818 = vmatpush.xpose.msra.mxu0 0.0
      %1819 = vmatpush.xpose.msra.mxu0 %v1803
      %1820 = vmatpush.xpose.msra.mxu0 %v1801
      %1821 = vmatmul.f32.gmra.mxu0 %v805
      %v1822 = vpop.f32.mrf.mxu0
      %v1823 = vadd.f32 %v1042, %v1822
      %1824 = vmatmul.f32.gmra.mxu0 %v808
      %v1825 = vpop.f32.mrf.mxu0
      %v1826 = vadd.f32 %v1045, %v1825
      %1827 = vdwg.mxu0
      %1828 = vmatpush.xpose.msra.mxu0 0.0
      %1829 = vmatpush.xpose.msra.mxu0 0.0
      %1830 = vmatpush.xpose.msra.mxu0 0.0
      %1831 = vmatpush.xpose.msra.mxu0 0.0
      %1832 = vmatpush.xpose.msra.mxu0 0.0
      %1833 = vmatpush.xpose.msra.mxu0 0.0
      %1834 = vmatpush.xpose.msra.mxu0 0.0
      %1835 = vmatpush.xpose.msra.mxu0 0.0
      %1836 = vmatpush.xpose.msra.mxu0 0.0
      %1837 = vmatpush.xpose.msra.mxu0 0.0
      %1838 = vmatpush.xpose.msra.mxu0 0.0
      %1839 = vmatpush.xpose.msra.mxu0 0.0
      %1840 = vmatpush.xpose.msra.mxu0 0.0
      %1841 = vmatpush.xpose.msra.mxu0 0.0
      %1842 = vmatpush.xpose.msra.mxu0 %v1804
      %1843 = vmatpush.xpose.msra.mxu0 %v1802
      %1844 = vmatmul.f32.gmra.mxu0 %v870
      %v1845 = vpop.f32.mrf.mxu0
      %v1846 = vadd.f32 %v1823, %v1845
      %1847 = vmatmul.f32.gmra.mxu0 %v873
      %v1848 = vpop.f32.mrf.mxu0
      %v1849 = vadd.f32 %v1826, %v1848
      %1850 = vdwg.mxu0
      %v1851 = vadd.f32 %v1797, %v1798
      %1852 = vadd.xlane.f32.xlu0 %v1851
      %v1853 = vpop.xlane.xlu0 %1852
      %v1854 = vadd.f32 %v1799, %v1800
      %1855 = vadd.xlane.f32.xlu0 %v1854
      %v1856 = vpop.xlane.xlu0 %1855
      %v1857 = vadd.f32 %v1853, 1.0
      %v1858 = vadd.f32 %v1856, 1.0
      %v1859 = vrcp.pop %v1857
      %v1860 = vmul.f32 %v1857, %v1859
      %v1861 = vsub.f32 1.0, %v1860
      %v1862 = vmul.f32 %v1859, %v1861
      %v1863 = vadd.f32 %v1859, %v1862
      %vm1864 = vweird.f32 %v1857
      %vm1865 = vweird.f32 %v1859
      %vm1866 = vmor %vm1864, %vm1865
      %v1867 = vsel %vm1866, %v1859, %v1863
      %v1868 = vand.u32 2147483647, %v1857
      %vm1869 = vcmp.eq.f32.partialorder %v1868, 8.507059e+37
      %v1870 = vand.u32 %v1857, 2147483648
      %v1871 = vor.u32 1.1754944e-38, %v1870
      %v1872 = vsel %vm1869, %v1871, %v1867
      %v1873 = vmul.f32 1.0, %v1872
      %v1874 = vrcp.pop %v1858
      %v1875 = vmul.f32 %v1858, %v1874
      %v1876 = vsub.f32 1.0, %v1875
      %v1877 = vmul.f32 %v1874, %v1876
      %v1878 = vadd.f32 %v1874, %v1877
      %vm1879 = vweird.f32 %v1858
      %vm1880 = vweird.f32 %v1874
      %vm1881 = vmor %vm1879, %vm1880
      %v1882 = vsel %vm1881, %v1874, %v1878
      %v1883 = vand.u32 2147483647, %v1858
      %vm1884 = vcmp.eq.f32.partialorder %v1883, 8.507059e+37
      %v1885 = vand.u32 %v1858, 2147483648
      %v1886 = vor.u32 1.1754944e-38, %v1885
      %v1887 = vsel %vm1884, %v1886, %v1882
      %v1888 = vmul.f32 1.0, %v1887
      %v1889 = vmul.f32 %v1801, %v1873
      %v1890 = vmul.f32 %v1802, %v1873
      %v1891 = vmul.f32 %v1803, %v1888
      %v1892 = vmul.f32 %v1804, %v1888
      %v1894 = vsel %vm1061, %v1846, 0
      %v1897 = vsel %vm1061, %v1849, 0
      %1899 = vmatpush.msra.mxu0 0.0
      %1900 = vmatpush.msra.mxu0 0.0
      %1901 = vmatpush.msra.mxu0 0.0
      %1902 = vmatpush.msra.mxu0 0.0
      %1903 = vmatpush.msra.mxu0 0.0
      %1904 = vmatpush.msra.mxu0 0.0
      %1905 = vmatpush.msra.mxu0 0.0
      %1906 = vmatpush.msra.mxu0 0.0
      %1907 = vmatpush.msra.mxu0 0.0
      %1908 = vmatpush.msra.mxu0 0.0
      %1909 = vmatpush.msra.mxu0 0.0
      %1910 = vmatpush.msra.mxu0 0.0
      %1911 = vmatpush.msra.mxu0 0.0
      %1912 = vmatpush.msra.mxu0 0.0
      %1913 = vmatpush.msra.mxu0 %v1891
      %1914 = vmatpush.msra.mxu0 %v1889
      %1915 = vmatmul.f32.gmra.mxu0 %v1894
      %v1916 = vpop.f32.mrf.mxu0
      %v1917 = vadd.f32 0.0, %v1916
      %1918 = vmatmul.f32.gmra.mxu0 %v1897
      %v1919 = vpop.f32.mrf.mxu0
      %v1920 = vadd.f32 0.0, %v1919
      %1921 = vdwg.mxu0
      %1922 = vmatpush.msra.mxu0 0.0
      %1923 = vmatpush.msra.mxu0 0.0
      %1924 = vmatpush.msra.mxu0 0.0
      %1925 = vmatpush.msra.mxu0 0.0
      %1926 = vmatpush.msra.mxu0 0.0
      %1927 = vmatpush.msra.mxu0 0.0
      %1928 = vmatpush.msra.mxu0 0.0
      %1929 = vmatpush.msra.mxu0 0.0
      %1930 = vmatpush.msra.mxu0 0.0
      %1931 = vmatpush.msra.mxu0 0.0
      %1932 = vmatpush.msra.mxu0 0.0
      %1933 = vmatpush.msra.mxu0 0.0
      %1934 = vmatpush.msra.mxu0 0.0
      %1935 = vmatpush.msra.mxu0 0.0
      %1936 = vmatpush.msra.mxu0 %v1892
      %1937 = vmatpush.msra.mxu0 %v1890
      %1938 = vmatmul.f32.gmra.mxu0 %v1894
      %v1939 = vpop.f32.mrf.mxu0
      %v1940 = vadd.f32 0.0, %v1939
      %1941 = vmatmul.f32.gmra.mxu0 %v1897
      %v1942 = vpop.f32.mrf.mxu0
      %v1943 = vadd.f32 0.0, %v1942
      %1944 = vdwg.mxu0
      %v1945 = vmul.f32 %v966, %v966
      %v1946 = vmul.f32 %v969, %v969
      %v1947 = vsel %vm1061, %v1945, 0.0
      %v1948 = vsel %vm1061, %v1946, 0.0
      %v1949 = vadd.f32 %v1947, %v1948
      %v1950 = vrot.slane %v1949, 4
      %v1951 = vadd.f32 %v1949, %v1950
      %v1952 = vrot.slane %v1951, 2
      %v1953 = vadd.f32 %v1951, %v1952
      %v1954 = vrot.slane %v1953, 1
      %v1955 = vadd.f32 %v1953, %v1954
      %v1956 = vadd.f32 %v1955, 1e-12
      %v1957 = vrsqrt.pop %v1956
      %v1958 = vmul.f32 %v1957, %v1956
      %v1959 = vmul.f32 %v1958, %v1957
      %v1960 = vmul.f32 0.5, %v1959
      %v1961 = vsub.f32 1.5, %v1960
      %v1962 = vmul.f32 %v1957, %v1961
      %vm1963 = vweird.f32 %v1956
      %vm1964 = vweird.f32 %v1957
      %vm1965 = vmor %vm1963, %vm1964
      %v1966 = vsel %vm1965, %v1957, %v1962
      %v1967 = vmul.f32 %v966, %v1966
      %v1968 = vmul.f32 %v969, %v1966
      %v1969 = vmul.f32 %v787, %v787
      %v1970 = vmul.f32 %v852, %v852
      %v1971 = vmul.f32 %v790, %v790
      %v1972 = vmul.f32 %v855, %v855
      %v1973 = vadd.f32 %v1969, %v1971
      %v1974 = vrot.slane %v1973, 4
      %v1975 = vadd.f32 %v1973, %v1974
      %v1976 = vrot.slane %v1975, 2
      %v1977 = vadd.f32 %v1975, %v1976
      %v1978 = vrot.slane %v1977, 1
      %v1979 = vadd.f32 %v1977, %v1978
      %v1980 = vadd.f32 %v1970, %v1972
      %v1981 = vrot.slane %v1980, 4
      %v1982 = vadd.f32 %v1980, %v1981
      %v1983 = vrot.slane %v1982, 2
      %v1984 = vadd.f32 %v1982, %v1983
      %v1985 = vrot.slane %v1984, 1
      %v1986 = vadd.f32 %v1984, %v1985
      %v1987 = vadd.f32 %v1979, 1e-12
      %v1988 = vadd.f32 %v1986, 1e-12
      %v1989 = vrsqrt.pop %v1987
      %v1990 = vmul.f32 %v1989, %v1987
      %v1991 = vmul.f32 %v1990, %v1989
      %v1992 = vmul.f32 0.5, %v1991
      %v1993 = vsub.f32 1.5, %v1992
      %v1994 = vmul.f32 %v1989, %v1993
      %vm1995 = vweird.f32 %v1987
      %vm1996 = vweird.f32 %v1989
      %vm1997 = vmor %vm1995, %vm1996
      %v1998 = vsel %vm1997, %v1989, %v1994
      %v1999 = vrsqrt.pop %v1988
      %v2000 = vmul.f32 %v1999, %v1988
      %v2001 = vmul.f32 %v2000, %v1999
      %v2002 = vmul.f32 0.5, %v2001
      %v2003 = vsub.f32 1.5, %v2002
      %v2004 = vmul.f32 %v1999, %v2003
      %vm2005 = vweird.f32 %v1988
      %vm2006 = vweird.f32 %v1999
      %vm2007 = vmor %vm2005, %vm2006
      %v2008 = vsel %vm2007, %v1999, %v2004
      %v2009 = vmul.f32 %v787, %v1998
      %v2010 = vmul.f32 %v852, %v2008
      %v2011 = vmul.f32 %v790, %v1998
      %v2012 = vmul.f32 %v855, %v2008
      %2013 = vxpose.xlu0.b32.start [1/16] %v1967, 128
      %2014 = vxpose.xlu0.b32.cont [2/16] %v1968, 128
      %2015 = vxpose.xlu0.b32.cont [3/16] 0.0, 128
      %2016 = vxpose.xlu0.b32.cont [4/16] 0.0, 128
      %2017 = vxpose.xlu0.b32.cont [5/16] 0.0, 128
      %2018 = vxpose.xlu0.b32.cont [6/16] 0.0, 128
      %2019 = vxpose.xlu0.b32.cont [7/16] 0.0, 128
      %2020 = vxpose.xlu0.b32.cont [8/16] 0.0, 128
      %2021 = vxpose.xlu0.b32.cont [9/16] 0.0, 128
      %2022 = vxpose.xlu0.b32.cont [10/16] 0.0, 128
      %2023 = vxpose.xlu0.b32.cont [11/16] 0.0, 128
      %2024 = vxpose.xlu0.b32.cont [12/16] 0.0, 128
      %2025 = vxpose.xlu0.b32.cont [13/16] 0.0, 128
      %2026 = vxpose.xlu0.b32.cont [14/16] 0.0, 128
      %2027 = vxpose.xlu0.b32.cont [15/16] 0.0, 128
      %2028 = vxpose.xlu0.b32.end [16/16] 0.0, 128
      %v2029 = vpop.trf.xlu0
      %v2030 = vpop.trf.xlu0
      %v2031 = vpop.trf.xlu0
      %v2032 = vpop.trf.xlu0
      %v2033 = vpop.trf.xlu0
      %v2034 = vpop.trf.xlu0
      %v2035 = vpop.trf.xlu0
      %v2036 = vpop.trf.xlu0
      %v2037 = vpop.trf.xlu0
      %v2038 = vpop.trf.xlu0
      %v2039 = vpop.trf.xlu0
      %v2040 = vpop.trf.xlu0
      %v2041 = vpop.trf.xlu0
      %v2042 = vpop.trf.xlu0
      %v2043 = vpop.trf.xlu0
      %v2044 = vpop.trf.xlu0
      %v2046 = vsel %vm1061, %v2029, 0
      %v2049 = vsel %vm1061, %v2030, 0
      %2051 = vmatpush.msra.mxu0 0.0
      %2052 = vmatpush.msra.mxu0 0.0
      %2053 = vmatpush.msra.mxu0 0.0
      %2054 = vmatpush.msra.mxu0 0.0
      %2055 = vmatpush.msra.mxu0 0.0
      %2056 = vmatpush.msra.mxu0 0.0
      %2057 = vmatpush.msra.mxu0 0.0
      %2058 = vmatpush.msra.mxu0 0.0
      %2059 = vmatpush.msra.mxu0 0.0
      %2060 = vmatpush.msra.mxu0 0.0
      %2061 = vmatpush.msra.mxu0 0.0
      %2062 = vmatpush.msra.mxu0 0.0
      %2063 = vmatpush.msra.mxu0 0.0
      %2064 = vmatpush.msra.mxu0 0.0
      %2065 = vmatpush.msra.mxu0 %v2011
      %2066 = vmatpush.msra.mxu0 %v2009
      %2067 = vmatmul.f32.gmra.mxu0 %v2046
      %v2068 = vpop.f32.mrf.mxu0
      %v2069 = vadd.f32 0.0, %v2068
      %2070 = vmatmul.f32.gmra.mxu0 %v2049
      %v2071 = vpop.f32.mrf.mxu0
      %v2072 = vadd.f32 0.0, %v2071
      %2073 = vdwg.mxu0
      %2074 = vmatpush.msra.mxu0 0.0
      %2075 = vmatpush.msra.mxu0 0.0
      %2076 = vmatpush.msra.mxu0 0.0
      %2077 = vmatpush.msra.mxu0 0.0
      %2078 = vmatpush.msra.mxu0 0.0
      %2079 = vmatpush.msra.mxu0 0.0
      %2080 = vmatpush.msra.mxu0 0.0
      %2081 = vmatpush.msra.mxu0 0.0
      %2082 = vmatpush.msra.mxu0 0.0
      %2083 = vmatpush.msra.mxu0 0.0
      %2084 = vmatpush.msra.mxu0 0.0
      %2085 = vmatpush.msra.mxu0 0.0
      %2086 = vmatpush.msra.mxu0 0.0
      %2087 = vmatpush.msra.mxu0 0.0
      %2088 = vmatpush.msra.mxu0 %v2012
      %2089 = vmatpush.msra.mxu0 %v2010
      %2090 = vmatmul.f32.gmra.mxu0 %v2046
      %v2091 = vpop.f32.mrf.mxu0
      %v2092 = vadd.f32 0.0, %v2091
      %2093 = vmatmul.f32.gmra.mxu0 %v2049
      %v2094 = vpop.f32.mrf.mxu0
      %v2095 = vadd.f32 0.0, %v2094
      %2096 = vdwg.mxu0
      %v2097 = vmul.f32 %v1212, %v2069
      %v2098 = vmul.f32 %v1212, %v2092
      %v2099 = vmul.f32 %v1212, %v2072
      %v2100 = vmul.f32 %v1212, %v2095
      %v2101 = vadd.f32 %v1217, %v2097
      %v2102 = vadd.f32 %v1217, %v2098
      %v2103 = vadd.f32 %v1217, %v2099
      %v2104 = vadd.f32 %v1217, %v2100
      %v2105 = vxor.u32 %v2101, 2147483648
      %v2106 = vxor.u32 %v2102, 2147483648
      %v2107 = vxor.u32 %v2103, 2147483648
      %v2108 = vxor.u32 %v2104, 2147483648
      %v2109 = vmul.f32 %v2105, 1.442695
      %v2110 = vpow.pop %v2109
      %v2111 = vmul.f32 %v2106, 1.442695
      %v2112 = vpow.pop %v2111
      %v2113 = vmul.f32 %v2107, 1.442695
      %v2114 = vpow.pop %v2113
      %v2115 = vmul.f32 %v2108, 1.442695
      %v2116 = vpow.pop %v2115
      %v2117 = vadd.f32 %v2110, 1.0
      %v2118 = vadd.f32 %v2112, 1.0
      %v2119 = vadd.f32 %v2114, 1.0
      %v2120 = vadd.f32 %v2116, 1.0
      %v2121 = vrcp.pop %v2117
      %v2122 = vmul.f32 %v2117, %v2121
      %v2123 = vsub.f32 1.0, %v2122
      %v2124 = vmul.f32 %v2121, %v2123
      %v2125 = vadd.f32 %v2121, %v2124
      %vm2126 = vweird.f32 %v2117
      %vm2127 = vweird.f32 %v2121
      %vm2128 = vmor %vm2126, %vm2127
      %v2129 = vsel %vm2128, %v2121, %v2125
      %v2130 = vand.u32 2147483647, %v2117
      %vm2131 = vcmp.eq.f32.partialorder %v2130, 8.507059e+37
      %v2132 = vand.u32 %v2117, 2147483648
      %v2133 = vor.u32 1.1754944e-38, %v2132
      %v2134 = vsel %vm2131, %v2133, %v2129
      %v2135 = vmul.f32 1.0, %v2134
      %v2136 = vrcp.pop %v2118
      %v2137 = vmul.f32 %v2118, %v2136
      %v2138 = vsub.f32 1.0, %v2137
      %v2139 = vmul.f32 %v2136, %v2138
      %v2140 = vadd.f32 %v2136, %v2139
      %vm2141 = vweird.f32 %v2118
      %vm2142 = vweird.f32 %v2136
      %vm2143 = vmor %vm2141, %vm2142
      %v2144 = vsel %vm2143, %v2136, %v2140
      %v2145 = vand.u32 2147483647, %v2118
      %vm2146 = vcmp.eq.f32.partialorder %v2145, 8.507059e+37
      %v2147 = vand.u32 %v2118, 2147483648
      %v2148 = vor.u32 1.1754944e-38, %v2147
      %v2149 = vsel %vm2146, %v2148, %v2144
      %v2150 = vmul.f32 1.0, %v2149
      %v2151 = vrcp.pop %v2119
      %v2152 = vmul.f32 %v2119, %v2151
      %v2153 = vsub.f32 1.0, %v2152
      %v2154 = vmul.f32 %v2151, %v2153
      %v2155 = vadd.f32 %v2151, %v2154
      %vm2156 = vweird.f32 %v2119
      %vm2157 = vweird.f32 %v2151
      %vm2158 = vmor %vm2156, %vm2157
      %v2159 = vsel %vm2158, %v2151, %v2155
      %v2160 = vand.u32 2147483647, %v2119
      %vm2161 = vcmp.eq.f32.partialorder %v2160, 8.507059e+37
      %v2162 = vand.u32 %v2119, 2147483648
      %v2163 = vor.u32 1.1754944e-38, %v2162
      %v2164 = vsel %vm2161, %v2163, %v2159
      %v2165 = vmul.f32 1.0, %v2164
      %v2166 = vrcp.pop %v2120
      %v2167 = vmul.f32 %v2120, %v2166
      %v2168 = vsub.f32 1.0, %v2167
      %v2169 = vmul.f32 %v2166, %v2168
      %v2170 = vadd.f32 %v2166, %v2169
      %vm2171 = vweird.f32 %v2120
      %vm2172 = vweird.f32 %v2166
      %vm2173 = vmor %vm2171, %vm2172
      %v2174 = vsel %vm2173, %v2166, %v2170
      %v2175 = vand.u32 2147483647, %v2120
      %vm2176 = vcmp.eq.f32.partialorder %v2175, 8.507059e+37
      %v2177 = vand.u32 %v2120, 2147483648
      %v2178 = vor.u32 1.1754944e-38, %v2177
      %v2179 = vsel %vm2176, %v2178, %v2174
      %v2180 = vmul.f32 1.0, %v2179
      %v2181 = vmul.f32 %v2135, %v891
      %v2182 = vmul.f32 %v2150, %v892
      %v2183 = vmul.f32 %v2165, %v893
      %v2184 = vmul.f32 %v2180, %v894
      %v2185 = vmax.f32 %v2181, %v2183
      %v2186 = vrot.slane %v2185, 4
      %v2187 = vmax.f32 %v2185, %v2186
      %v2188 = vrot.slane %v2187, 2
      %v2189 = vmax.f32 %v2187, %v2188
      %v2190 = vrot.slane %v2189, 1
      %v2191 = vmax.f32 %v2189, %v2190
      %v2192 = vmax.f32 %v2182, %v2184
      %v2193 = vrot.slane %v2192, 4
      %v2194 = vmax.f32 %v2192, %v2193
      %v2195 = vrot.slane %v2194, 2
      %v2196 = vmax.f32 %v2194, %v2195
      %v2197 = vrot.slane %v2196, 1
      %v2198 = vmax.f32 %v2196, %v2197
      %vm2199 = vcmp.eq.f32.partialorder %v2181, %v2191
      %vm2200 = vcmp.eq.f32.partialorder %v2182, %v2198
      %vm2201 = vcmp.eq.f32.partialorder %v2183, %v2191
      %vm2202 = vcmp.eq.f32.partialorder %v2184, %v2198
      %v2203 = vsel %vm2199, %v1303, 16
      %v2204 = vsel %vm2200, %v1303, 16
      %v2205 = vsel %vm2201, %v1304, 16
      %v2206 = vsel %vm2202, %v1304, 16
      %vm2207 = vcmp.lt.s32.totalorder %v2203, %v2205
      %v2208 = vsel %vm2207, %v2203, %v2205
      %v2209 = vrot.slane %v2208, 4
      %vm2210 = vcmp.lt.s32.totalorder %v2208, %v2209
      %v2211 = vsel %vm2210, %v2208, %v2209
      %v2212 = vrot.slane %v2211, 2
      %vm2213 = vcmp.lt.s32.totalorder %v2211, %v2212
      %v2214 = vsel %vm2213, %v2211, %v2212
      %v2215 = vrot.slane %v2214, 1
      %vm2216 = vcmp.lt.s32.totalorder %v2214, %v2215
      %v2217 = vsel %vm2216, %v2214, %v2215
      %vm2218 = vcmp.lt.s32.totalorder %v2204, %v2206
      %v2219 = vsel %vm2218, %v2204, %v2206
      %v2220 = vrot.slane %v2219, 4
      %vm2221 = vcmp.lt.s32.totalorder %v2219, %v2220
      %v2222 = vsel %vm2221, %v2219, %v2220
      %v2223 = vrot.slane %v2222, 2
      %vm2224 = vcmp.lt.s32.totalorder %v2222, %v2223
      %v2225 = vsel %vm2224, %v2222, %v2223
      %v2226 = vrot.slane %v2225, 1
      %vm2227 = vcmp.lt.s32.totalorder %v2225, %v2226
      %v2228 = vsel %vm2227, %v2225, %v2226
      %vm2229 = vcmp.eq.s32.totalorder %v1303, %v2217
      %vm2230 = vcmp.eq.s32.totalorder %v1303, %v2228
      %vm2231 = vcmp.eq.s32.totalorder %v1304, %v2217
      %vm2232 = vcmp.eq.s32.totalorder %v1304, %v2228
      %v2233 = vsel %vm2229, 1, 0
      %v2234 = vsel %vm2230, 1, 0
      %v2235 = vsel %vm2231, 1, 0
      %v2236 = vsel %vm2232, 1, 0
      %v2237 = vcvt.s32.f32 %v2233
      %v2238 = vcvt.s32.f32 %v2234
      %v2239 = vcvt.s32.f32 %v2235
      %v2240 = vcvt.s32.f32 %v2236
      %v2241 = vmul.f32 %v2181, %v2237
      %v2242 = vmul.f32 %v2182, %v2238
      %v2243 = vmul.f32 %v2183, %v2239
      %v2244 = vmul.f32 %v2184, %v2240
      %2245 = vmatpush.xpose.msra.mxu0 0.0
      %2246 = vmatpush.xpose.msra.mxu0 0.0
      %2247 = vmatpush.xpose.msra.mxu0 0.0
      %2248 = vmatpush.xpose.msra.mxu0 0.0
      %2249 = vmatpush.xpose.msra.mxu0 0.0
      %2250 = vmatpush.xpose.msra.mxu0 0.0
      %2251 = vmatpush.xpose.msra.mxu0 0.0
      %2252 = vmatpush.xpose.msra.mxu0 0.0
      %2253 = vmatpush.xpose.msra.mxu0 0.0
      %2254 = vmatpush.xpose.msra.mxu0 0.0
      %2255 = vmatpush.xpose.msra.mxu0 0.0
      %2256 = vmatpush.xpose.msra.mxu0 0.0
      %2257 = vmatpush.xpose.msra.mxu0 0.0
      %2258 = vmatpush.xpose.msra.mxu0 0.0
      %2259 = vmatpush.xpose.msra.mxu0 %v2243
      %2260 = vmatpush.xpose.msra.mxu0 %v2241
      %2261 = vmatmul.f32.gmra.mxu0 %v811
      %v2262 = vpop.f32.mrf.mxu0
      %v2263 = vadd.f32 %v1048, %v2262
      %2264 = vmatmul.f32.gmra.mxu0 %v814
      %v2265 = vpop.f32.mrf.mxu0
      %v2266 = vadd.f32 %v1051, %v2265
      %2267 = vdwg.mxu0
      %2268 = vmatpush.xpose.msra.mxu0 0.0
      %2269 = vmatpush.xpose.msra.mxu0 0.0
      %2270 = vmatpush.xpose.msra.mxu0 0.0
      %2271 = vmatpush.xpose.msra.mxu0 0.0
      %2272 = vmatpush.xpose.msra.mxu0 0.0
      %2273 = vmatpush.xpose.msra.mxu0 0.0
      %2274 = vmatpush.xpose.msra.mxu0 0.0
      %2275 = vmatpush.xpose.msra.mxu0 0.0
      %2276 = vmatpush.xpose.msra.mxu0 0.0
      %2277 = vmatpush.xpose.msra.mxu0 0.0
      %2278 = vmatpush.xpose.msra.mxu0 0.0
      %2279 = vmatpush.xpose.msra.mxu0 0.0
      %2280 = vmatpush.xpose.msra.mxu0 0.0
      %2281 = vmatpush.xpose.msra.mxu0 0.0
      %2282 = vmatpush.xpose.msra.mxu0 %v2244
      %2283 = vmatpush.xpose.msra.mxu0 %v2242
      %2284 = vmatmul.f32.gmra.mxu0 %v876
      %v2285 = vpop.f32.mrf.mxu0
      %v2286 = vadd.f32 %v2263, %v2285
      %2287 = vmatmul.f32.gmra.mxu0 %v879
      %v2288 = vpop.f32.mrf.mxu0
      %v2289 = vadd.f32 %v2266, %v2288
      %2290 = vdwg.mxu0
      %v2291 = vadd.f32 %v2237, %v2238
      %2292 = vadd.xlane.f32.xlu0 %v2291
      %v2293 = vpop.xlane.xlu0 %2292
      %v2294 = vadd.f32 %v2239, %v2240
      %2295 = vadd.xlane.f32.xlu0 %v2294
      %v2296 = vpop.xlane.xlu0 %2295
      %v2297 = vadd.f32 %v2293, 1.0
      %v2298 = vadd.f32 %v2296, 1.0
      %v2299 = vrcp.pop %v2297
      %v2300 = vmul.f32 %v2297, %v2299
      %v2301 = vsub.f32 1.0, %v2300
      %v2302 = vmul.f32 %v2299, %v2301
      %v2303 = vadd.f32 %v2299, %v2302
      %vm2304 = vweird.f32 %v2297
      %vm2305 = vweird.f32 %v2299
      %vm2306 = vmor %vm2304, %vm2305
      %v2307 = vsel %vm2306, %v2299, %v2303
      %v2308 = vand.u32 2147483647, %v2297
      %vm2309 = vcmp.eq.f32.partialorder %v2308, 8.507059e+37
      %v2310 = vand.u32 %v2297, 2147483648
      %v2311 = vor.u32 1.1754944e-38, %v2310
      %v2312 = vsel %vm2309, %v2311, %v2307
      %v2313 = vmul.f32 1.0, %v2312
      %v2314 = vrcp.pop %v2298
      %v2315 = vmul.f32 %v2298, %v2314
      %v2316 = vsub.f32 1.0, %v2315
      %v2317 = vmul.f32 %v2314, %v2316
      %v2318 = vadd.f32 %v2314, %v2317
      %vm2319 = vweird.f32 %v2298
      %vm2320 = vweird.f32 %v2314
      %vm2321 = vmor %vm2319, %vm2320
      %v2322 = vsel %vm2321, %v2314, %v2318
      %v2323 = vand.u32 2147483647, %v2298
      %vm2324 = vcmp.eq.f32.partialorder %v2323, 8.507059e+37
      %v2325 = vand.u32 %v2298, 2147483648
      %v2326 = vor.u32 1.1754944e-38, %v2325
      %v2327 = vsel %vm2324, %v2326, %v2322
      %v2328 = vmul.f32 1.0, %v2327
      %v2329 = vmul.f32 %v2241, %v2313
      %v2330 = vmul.f32 %v2242, %v2313
      %v2331 = vmul.f32 %v2243, %v2328
      %v2332 = vmul.f32 %v2244, %v2328
      %v2334 = vsel %vm1061, %v2286, 0
      %v2337 = vsel %vm1061, %v2289, 0
      %2339 = vmatpush.msra.mxu0 0.0
      %2340 = vmatpush.msra.mxu0 0.0
      %2341 = vmatpush.msra.mxu0 0.0
      %2342 = vmatpush.msra.mxu0 0.0
      %2343 = vmatpush.msra.mxu0 0.0
      %2344 = vmatpush.msra.mxu0 0.0
      %2345 = vmatpush.msra.mxu0 0.0
      %2346 = vmatpush.msra.mxu0 0.0
      %2347 = vmatpush.msra.mxu0 0.0
      %2348 = vmatpush.msra.mxu0 0.0
      %2349 = vmatpush.msra.mxu0 0.0
      %2350 = vmatpush.msra.mxu0 0.0
      %2351 = vmatpush.msra.mxu0 0.0
      %2352 = vmatpush.msra.mxu0 0.0
      %2353 = vmatpush.msra.mxu0 %v2331
      %2354 = vmatpush.msra.mxu0 %v2329
      %2355 = vmatmul.f32.gmra.mxu0 %v2334
      %v2356 = vpop.f32.mrf.mxu0
      %v2357 = vadd.f32 0.0, %v2356
      %2358 = vmatmul.f32.gmra.mxu0 %v2337
      %v2359 = vpop.f32.mrf.mxu0
      %v2360 = vadd.f32 0.0, %v2359
      %2361 = vdwg.mxu0
      %2362 = vmatpush.msra.mxu0 0.0
      %2363 = vmatpush.msra.mxu0 0.0
      %2364 = vmatpush.msra.mxu0 0.0
      %2365 = vmatpush.msra.mxu0 0.0
      %2366 = vmatpush.msra.mxu0 0.0
      %2367 = vmatpush.msra.mxu0 0.0
      %2368 = vmatpush.msra.mxu0 0.0
      %2369 = vmatpush.msra.mxu0 0.0
      %2370 = vmatpush.msra.mxu0 0.0
      %2371 = vmatpush.msra.mxu0 0.0
      %2372 = vmatpush.msra.mxu0 0.0
      %2373 = vmatpush.msra.mxu0 0.0
      %2374 = vmatpush.msra.mxu0 0.0
      %2375 = vmatpush.msra.mxu0 0.0
      %2376 = vmatpush.msra.mxu0 %v2332
      %2377 = vmatpush.msra.mxu0 %v2330
      %2378 = vmatmul.f32.gmra.mxu0 %v2334
      %v2379 = vpop.f32.mrf.mxu0
      %v2380 = vadd.f32 0.0, %v2379
      %2381 = vmatmul.f32.gmra.mxu0 %v2337
      %v2382 = vpop.f32.mrf.mxu0
      %v2383 = vadd.f32 0.0, %v2382
      %2384 = vdwg.mxu0
      %v2385 = vmul.f32 %v972, %v972
      %v2386 = vmul.f32 %v975, %v975
      %v2387 = vsel %vm1061, %v2385, 0.0
      %v2388 = vsel %vm1061, %v2386, 0.0
      %v2389 = vadd.f32 %v2387, %v2388
      %v2390 = vrot.slane %v2389, 4
      %v2391 = vadd.f32 %v2389, %v2390
      %v2392 = vrot.slane %v2391, 2
      %v2393 = vadd.f32 %v2391, %v2392
      %v2394 = vrot.slane %v2393, 1
      %v2395 = vadd.f32 %v2393, %v2394
      %v2396 = vadd.f32 %v2395, 1e-12
      %v2397 = vrsqrt.pop %v2396
      %v2398 = vmul.f32 %v2397, %v2396
      %v2399 = vmul.f32 %v2398, %v2397
      %v2400 = vmul.f32 0.5, %v2399
      %v2401 = vsub.f32 1.5, %v2400
      %v2402 = vmul.f32 %v2397, %v2401
      %vm2403 = vweird.f32 %v2396
      %vm2404 = vweird.f32 %v2397
      %vm2405 = vmor %vm2403, %vm2404
      %v2406 = vsel %vm2405, %v2397, %v2402
      %v2407 = vmul.f32 %v972, %v2406
      %v2408 = vmul.f32 %v975, %v2406
      %v2409 = vmul.f32 %v793, %v793
      %v2410 = vmul.f32 %v858, %v858
      %v2411 = vmul.f32 %v796, %v796
      %v2412 = vmul.f32 %v861, %v861
      %v2413 = vadd.f32 %v2409, %v2411
      %v2414 = vrot.slane %v2413, 4
      %v2415 = vadd.f32 %v2413, %v2414
      %v2416 = vrot.slane %v2415, 2
      %v2417 = vadd.f32 %v2415, %v2416
      %v2418 = vrot.slane %v2417, 1
      %v2419 = vadd.f32 %v2417, %v2418
      %v2420 = vadd.f32 %v2410, %v2412
      %v2421 = vrot.slane %v2420, 4
      %v2422 = vadd.f32 %v2420, %v2421
      %v2423 = vrot.slane %v2422, 2
      %v2424 = vadd.f32 %v2422, %v2423
      %v2425 = vrot.slane %v2424, 1
      %v2426 = vadd.f32 %v2424, %v2425
      %v2427 = vadd.f32 %v2419, 1e-12
      %v2428 = vadd.f32 %v2426, 1e-12
      %v2429 = vrsqrt.pop %v2427
      %v2430 = vmul.f32 %v2429, %v2427
      %v2431 = vmul.f32 %v2430, %v2429
      %v2432 = vmul.f32 0.5, %v2431
      %v2433 = vsub.f32 1.5, %v2432
      %v2434 = vmul.f32 %v2429, %v2433
      %vm2435 = vweird.f32 %v2427
      %vm2436 = vweird.f32 %v2429
      %vm2437 = vmor %vm2435, %vm2436
      %v2438 = vsel %vm2437, %v2429, %v2434
      %v2439 = vrsqrt.pop %v2428
      %v2440 = vmul.f32 %v2439, %v2428
      %v2441 = vmul.f32 %v2440, %v2439
      %v2442 = vmul.f32 0.5, %v2441
      %v2443 = vsub.f32 1.5, %v2442
      %v2444 = vmul.f32 %v2439, %v2443
      %vm2445 = vweird.f32 %v2428
      %vm2446 = vweird.f32 %v2439
      %vm2447 = vmor %vm2445, %vm2446
      %v2448 = vsel %vm2447, %v2439, %v2444
      %v2449 = vmul.f32 %v793, %v2438
      %v2450 = vmul.f32 %v858, %v2448
      %v2451 = vmul.f32 %v796, %v2438
      %v2452 = vmul.f32 %v861, %v2448
      %2453 = vxpose.xlu0.b32.start [1/16] %v2407, 128
      %2454 = vxpose.xlu0.b32.cont [2/16] %v2408, 128
      %2455 = vxpose.xlu0.b32.cont [3/16] 0.0, 128
      %2456 = vxpose.xlu0.b32.cont [4/16] 0.0, 128
      %2457 = vxpose.xlu0.b32.cont [5/16] 0.0, 128
      %2458 = vxpose.xlu0.b32.cont [6/16] 0.0, 128
      %2459 = vxpose.xlu0.b32.cont [7/16] 0.0, 128
      %2460 = vxpose.xlu0.b32.cont [8/16] 0.0, 128
      %2461 = vxpose.xlu0.b32.cont [9/16] 0.0, 128
      %2462 = vxpose.xlu0.b32.cont [10/16] 0.0, 128
      %2463 = vxpose.xlu0.b32.cont [11/16] 0.0, 128
      %2464 = vxpose.xlu0.b32.cont [12/16] 0.0, 128
      %2465 = vxpose.xlu0.b32.cont [13/16] 0.0, 128
      %2466 = vxpose.xlu0.b32.cont [14/16] 0.0, 128
      %2467 = vxpose.xlu0.b32.cont [15/16] 0.0, 128
      %2468 = vxpose.xlu0.b32.end [16/16] 0.0, 128
      %v2469 = vpop.trf.xlu0
      %v2470 = vpop.trf.xlu0
      %v2471 = vpop.trf.xlu0
      %v2472 = vpop.trf.xlu0
      %v2473 = vpop.trf.xlu0
      %v2474 = vpop.trf.xlu0
      %v2475 = vpop.trf.xlu0
      %v2476 = vpop.trf.xlu0
      %v2477 = vpop.trf.xlu0
      %v2478 = vpop.trf.xlu0
      %v2479 = vpop.trf.xlu0
      %v2480 = vpop.trf.xlu0
      %v2481 = vpop.trf.xlu0
      %v2482 = vpop.trf.xlu0
      %v2483 = vpop.trf.xlu0
      %v2484 = vpop.trf.xlu0
      %v2486 = vsel %vm1061, %v2469, 0
      %v2489 = vsel %vm1061, %v2470, 0
      %2491 = vmatpush.msra.mxu0 0.0
      %2492 = vmatpush.msra.mxu0 0.0
      %2493 = vmatpush.msra.mxu0 0.0
      %2494 = vmatpush.msra.mxu0 0.0
      %2495 = vmatpush.msra.mxu0 0.0
      %2496 = vmatpush.msra.mxu0 0.0
      %2497 = vmatpush.msra.mxu0 0.0
      %2498 = vmatpush.msra.mxu0 0.0
      %2499 = vmatpush.msra.mxu0 0.0
      %2500 = vmatpush.msra.mxu0 0.0
      %2501 = vmatpush.msra.mxu0 0.0
      %2502 = vmatpush.msra.mxu0 0.0
      %2503 = vmatpush.msra.mxu0 0.0
      %2504 = vmatpush.msra.mxu0 0.0
      %2505 = vmatpush.msra.mxu0 %v2451
      %2506 = vmatpush.msra.mxu0 %v2449
      %2507 = vmatmul.f32.gmra.mxu0 %v2486
      %v2508 = vpop.f32.mrf.mxu0
      %v2509 = vadd.f32 0.0, %v2508
      %2510 = vmatmul.f32.gmra.mxu0 %v2489
      %v2511 = vpop.f32.mrf.mxu0
      %v2512 = vadd.f32 0.0, %v2511
      %2513 = vdwg.mxu0
      %2514 = vmatpush.msra.mxu0 0.0
      %2515 = vmatpush.msra.mxu0 0.0
      %2516 = vmatpush.msra.mxu0 0.0
      %2517 = vmatpush.msra.mxu0 0.0
      %2518 = vmatpush.msra.mxu0 0.0
      %2519 = vmatpush.msra.mxu0 0.0
      %2520 = vmatpush.msra.mxu0 0.0
      %2521 = vmatpush.msra.mxu0 0.0
      %2522 = vmatpush.msra.mxu0 0.0
      %2523 = vmatpush.msra.mxu0 0.0
      %2524 = vmatpush.msra.mxu0 0.0
      %2525 = vmatpush.msra.mxu0 0.0
      %2526 = vmatpush.msra.mxu0 0.0
      %2527 = vmatpush.msra.mxu0 0.0
      %2528 = vmatpush.msra.mxu0 %v2452
      %2529 = vmatpush.msra.mxu0 %v2450
      %2530 = vmatmul.f32.gmra.mxu0 %v2486
      %v2531 = vpop.f32.mrf.mxu0
      %v2532 = vadd.f32 0.0, %v2531
      %2533 = vmatmul.f32.gmra.mxu0 %v2489
      %v2534 = vpop.f32.mrf.mxu0
      %v2535 = vadd.f32 0.0, %v2534
      %2536 = vdwg.mxu0
      %v2537 = vmul.f32 %v1212, %v2509
      %v2538 = vmul.f32 %v1212, %v2532
      %v2539 = vmul.f32 %v1212, %v2512
      %v2540 = vmul.f32 %v1212, %v2535
      %v2541 = vadd.f32 %v1217, %v2537
      %v2542 = vadd.f32 %v1217, %v2538
      %v2543 = vadd.f32 %v1217, %v2539
      %v2544 = vadd.f32 %v1217, %v2540
      %v2545 = vxor.u32 %v2541, 2147483648
      %v2546 = vxor.u32 %v2542, 2147483648
      %v2547 = vxor.u32 %v2543, 2147483648
      %v2548 = vxor.u32 %v2544, 2147483648
      %v2549 = vmul.f32 %v2545, 1.442695
      %v2550 = vpow.pop %v2549
      %v2551 = vmul.f32 %v2546, 1.442695
      %v2552 = vpow.pop %v2551
      %v2553 = vmul.f32 %v2547, 1.442695
      %v2554 = vpow.pop %v2553
      %v2555 = vmul.f32 %v2548, 1.442695
      %v2556 = vpow.pop %v2555
      %v2557 = vadd.f32 %v2550, 1.0
      %v2558 = vadd.f32 %v2552, 1.0
      %v2559 = vadd.f32 %v2554, 1.0
      %v2560 = vadd.f32 %v2556, 1.0
      %v2561 = vrcp.pop %v2557
      %v2562 = vmul.f32 %v2557, %v2561
      %v2563 = vsub.f32 1.0, %v2562
      %v2564 = vmul.f32 %v2561, %v2563
      %v2565 = vadd.f32 %v2561, %v2564
      %vm2566 = vweird.f32 %v2557
      %vm2567 = vweird.f32 %v2561
      %vm2568 = vmor %vm2566, %vm2567
      %v2569 = vsel %vm2568, %v2561, %v2565
      %v2570 = vand.u32 2147483647, %v2557
      %vm2571 = vcmp.eq.f32.partialorder %v2570, 8.507059e+37
      %v2572 = vand.u32 %v2557, 2147483648
      %v2573 = vor.u32 1.1754944e-38, %v2572
      %v2574 = vsel %vm2571, %v2573, %v2569
      %v2575 = vmul.f32 1.0, %v2574
      %v2576 = vrcp.pop %v2558
      %v2577 = vmul.f32 %v2558, %v2576
      %v2578 = vsub.f32 1.0, %v2577
      %v2579 = vmul.f32 %v2576, %v2578
      %v2580 = vadd.f32 %v2576, %v2579
      %vm2581 = vweird.f32 %v2558
      %vm2582 = vweird.f32 %v2576
      %vm2583 = vmor %vm2581, %vm2582
      %v2584 = vsel %vm2583, %v2576, %v2580
      %v2585 = vand.u32 2147483647, %v2558
      %vm2586 = vcmp.eq.f32.partialorder %v2585, 8.507059e+37
      %v2587 = vand.u32 %v2558, 2147483648
      %v2588 = vor.u32 1.1754944e-38, %v2587
      %v2589 = vsel %vm2586, %v2588, %v2584
      %v2590 = vmul.f32 1.0, %v2589
      %v2591 = vrcp.pop %v2559
      %v2592 = vmul.f32 %v2559, %v2591
      %v2593 = vsub.f32 1.0, %v2592
      %v2594 = vmul.f32 %v2591, %v2593
      %v2595 = vadd.f32 %v2591, %v2594
      %vm2596 = vweird.f32 %v2559
      %vm2597 = vweird.f32 %v2591
      %vm2598 = vmor %vm2596, %vm2597
      %v2599 = vsel %vm2598, %v2591, %v2595
      %v2600 = vand.u32 2147483647, %v2559
      %vm2601 = vcmp.eq.f32.partialorder %v2600, 8.507059e+37
      %v2602 = vand.u32 %v2559, 2147483648
      %v2603 = vor.u32 1.1754944e-38, %v2602
      %v2604 = vsel %vm2601, %v2603, %v2599
      %v2605 = vmul.f32 1.0, %v2604
      %v2606 = vrcp.pop %v2560
      %v2607 = vmul.f32 %v2560, %v2606
      %v2608 = vsub.f32 1.0, %v2607
      %v2609 = vmul.f32 %v2606, %v2608
      %v2610 = vadd.f32 %v2606, %v2609
      %vm2611 = vweird.f32 %v2560
      %vm2612 = vweird.f32 %v2606
      %vm2613 = vmor %vm2611, %vm2612
      %v2614 = vsel %vm2613, %v2606, %v2610
      %v2615 = vand.u32 2147483647, %v2560
      %vm2616 = vcmp.eq.f32.partialorder %v2615, 8.507059e+37
      %v2617 = vand.u32 %v2560, 2147483648
      %v2618 = vor.u32 1.1754944e-38, %v2617
      %v2619 = vsel %vm2616, %v2618, %v2614
      %v2620 = vmul.f32 1.0, %v2619
      %v2621 = vmul.f32 %v2575, %v891
      %v2622 = vmul.f32 %v2590, %v892
      %v2623 = vmul.f32 %v2605, %v893
      %v2624 = vmul.f32 %v2620, %v894
      %v2625 = vmax.f32 %v2621, %v2623
      %v2626 = vrot.slane %v2625, 4
      %v2627 = vmax.f32 %v2625, %v2626
      %v2628 = vrot.slane %v2627, 2
      %v2629 = vmax.f32 %v2627, %v2628
      %v2630 = vrot.slane %v2629, 1
      %v2631 = vmax.f32 %v2629, %v2630
      %v2632 = vmax.f32 %v2622, %v2624
      %v2633 = vrot.slane %v2632, 4
      %v2634 = vmax.f32 %v2632, %v2633
      %v2635 = vrot.slane %v2634, 2
      %v2636 = vmax.f32 %v2634, %v2635
      %v2637 = vrot.slane %v2636, 1
      %v2638 = vmax.f32 %v2636, %v2637
      %vm2639 = vcmp.eq.f32.partialorder %v2621, %v2631
      %vm2640 = vcmp.eq.f32.partialorder %v2622, %v2638
      %vm2641 = vcmp.eq.f32.partialorder %v2623, %v2631
      %vm2642 = vcmp.eq.f32.partialorder %v2624, %v2638
      %v2643 = vsel %vm2639, %v1303, 16
      %v2644 = vsel %vm2640, %v1303, 16
      %v2645 = vsel %vm2641, %v1304, 16
      %v2646 = vsel %vm2642, %v1304, 16
      %vm2647 = vcmp.lt.s32.totalorder %v2643, %v2645
      %v2648 = vsel %vm2647, %v2643, %v2645
      %v2649 = vrot.slane %v2648, 4
      %vm2650 = vcmp.lt.s32.totalorder %v2648, %v2649
      %v2651 = vsel %vm2650, %v2648, %v2649
      %v2652 = vrot.slane %v2651, 2
      %vm2653 = vcmp.lt.s32.totalorder %v2651, %v2652
      %v2654 = vsel %vm2653, %v2651, %v2652
      %v2655 = vrot.slane %v2654, 1
      %vm2656 = vcmp.lt.s32.totalorder %v2654, %v2655
      %v2657 = vsel %vm2656, %v2654, %v2655
      %vm2658 = vcmp.lt.s32.totalorder %v2644, %v2646
      %v2659 = vsel %vm2658, %v2644, %v2646
      %v2660 = vrot.slane %v2659, 4
      %vm2661 = vcmp.lt.s32.totalorder %v2659, %v2660
      %v2662 = vsel %vm2661, %v2659, %v2660
      %v2663 = vrot.slane %v2662, 2
      %vm2664 = vcmp.lt.s32.totalorder %v2662, %v2663
      %v2665 = vsel %vm2664, %v2662, %v2663
      %v2666 = vrot.slane %v2665, 1
      %vm2667 = vcmp.lt.s32.totalorder %v2665, %v2666
      %v2668 = vsel %vm2667, %v2665, %v2666
      %vm2669 = vcmp.eq.s32.totalorder %v1303, %v2657
      %vm2670 = vcmp.eq.s32.totalorder %v1303, %v2668
      %vm2671 = vcmp.eq.s32.totalorder %v1304, %v2657
      %vm2672 = vcmp.eq.s32.totalorder %v1304, %v2668
      %v2673 = vsel %vm2669, 1, 0
      %v2674 = vsel %vm2670, 1, 0
      %v2675 = vsel %vm2671, 1, 0
      %v2676 = vsel %vm2672, 1, 0
      %v2677 = vcvt.s32.f32 %v2673
      %v2678 = vcvt.s32.f32 %v2674
      %v2679 = vcvt.s32.f32 %v2675
      %v2680 = vcvt.s32.f32 %v2676
      %v2681 = vmul.f32 %v2621, %v2677
      %v2682 = vmul.f32 %v2622, %v2678
      %v2683 = vmul.f32 %v2623, %v2679
      %v2684 = vmul.f32 %v2624, %v2680
      %2685 = vmatpush.xpose.msra.mxu0 0.0
      %2686 = vmatpush.xpose.msra.mxu0 0.0
      %2687 = vmatpush.xpose.msra.mxu0 0.0
      %2688 = vmatpush.xpose.msra.mxu0 0.0
      %2689 = vmatpush.xpose.msra.mxu0 0.0
      %2690 = vmatpush.xpose.msra.mxu0 0.0
      %2691 = vmatpush.xpose.msra.mxu0 0.0
      %2692 = vmatpush.xpose.msra.mxu0 0.0
      %2693 = vmatpush.xpose.msra.mxu0 0.0
      %2694 = vmatpush.xpose.msra.mxu0 0.0
      %2695 = vmatpush.xpose.msra.mxu0 0.0
      %2696 = vmatpush.xpose.msra.mxu0 0.0
      %2697 = vmatpush.xpose.msra.mxu0 0.0
      %2698 = vmatpush.xpose.msra.mxu0 0.0
      %2699 = vmatpush.xpose.msra.mxu0 %v2683
      %2700 = vmatpush.xpose.msra.mxu0 %v2681
      %2701 = vmatmul.f32.gmra.mxu0 %v817
      %v2702 = vpop.f32.mrf.mxu0
      %v2703 = vadd.f32 %v1054, %v2702
      %2704 = vmatmul.f32.gmra.mxu0 %v820
      %v2705 = vpop.f32.mrf.mxu0
      %v2706 = vadd.f32 %v1057, %v2705
      %2707 = vdwg.mxu0
      %2708 = vmatpush.xpose.msra.mxu0 0.0
      %2709 = vmatpush.xpose.msra.mxu0 0.0
      %2710 = vmatpush.xpose.msra.mxu0 0.0
      %2711 = vmatpush.xpose.msra.mxu0 0.0
      %2712 = vmatpush.xpose.msra.mxu0 0.0
      %2713 = vmatpush.xpose.msra.mxu0 0.0
      %2714 = vmatpush.xpose.msra.mxu0 0.0
      %2715 = vmatpush.xpose.msra.mxu0 0.0
      %2716 = vmatpush.xpose.msra.mxu0 0.0
      %2717 = vmatpush.xpose.msra.mxu0 0.0
      %2718 = vmatpush.xpose.msra.mxu0 0.0
      %2719 = vmatpush.xpose.msra.mxu0 0.0
      %2720 = vmatpush.xpose.msra.mxu0 0.0
      %2721 = vmatpush.xpose.msra.mxu0 0.0
      %2722 = vmatpush.xpose.msra.mxu0 %v2684
      %2723 = vmatpush.xpose.msra.mxu0 %v2682
      %2724 = vmatmul.f32.gmra.mxu0 %v882
      %v2725 = vpop.f32.mrf.mxu0
      %v2726 = vadd.f32 %v2703, %v2725
      %2727 = vmatmul.f32.gmra.mxu0 %v885
      %v2728 = vpop.f32.mrf.mxu0
      %v2729 = vadd.f32 %v2706, %v2728
      %2730 = vdwg.mxu0
      %v2731 = vadd.f32 %v2677, %v2678
      %2732 = vadd.xlane.f32.xlu0 %v2731
      %v2733 = vpop.xlane.xlu0 %2732
      %v2734 = vadd.f32 %v2679, %v2680
      %2735 = vadd.xlane.f32.xlu0 %v2734
      %v2736 = vpop.xlane.xlu0 %2735
      %v2737 = vadd.f32 %v2733, 1.0
      %v2738 = vadd.f32 %v2736, 1.0
      %v2739 = vrcp.pop %v2737
      %v2740 = vmul.f32 %v2737, %v2739
      %v2741 = vsub.f32 1.0, %v2740
      %v2742 = vmul.f32 %v2739, %v2741
      %v2743 = vadd.f32 %v2739, %v2742
      %vm2744 = vweird.f32 %v2737
      %vm2745 = vweird.f32 %v2739
      %vm2746 = vmor %vm2744, %vm2745
      %v2747 = vsel %vm2746, %v2739, %v2743
      %v2748 = vand.u32 2147483647, %v2737
      %vm2749 = vcmp.eq.f32.partialorder %v2748, 8.507059e+37
      %v2750 = vand.u32 %v2737, 2147483648
      %v2751 = vor.u32 1.1754944e-38, %v2750
      %v2752 = vsel %vm2749, %v2751, %v2747
      %v2753 = vmul.f32 1.0, %v2752
      %v2754 = vrcp.pop %v2738
      %v2755 = vmul.f32 %v2738, %v2754
      %v2756 = vsub.f32 1.0, %v2755
      %v2757 = vmul.f32 %v2754, %v2756
      %v2758 = vadd.f32 %v2754, %v2757
      %vm2759 = vweird.f32 %v2738
      %vm2760 = vweird.f32 %v2754
      %vm2761 = vmor %vm2759, %vm2760
      %v2762 = vsel %vm2761, %v2754, %v2758
      %v2763 = vand.u32 2147483647, %v2738
      %vm2764 = vcmp.eq.f32.partialorder %v2763, 8.507059e+37
      %v2765 = vand.u32 %v2738, 2147483648
      %v2766 = vor.u32 1.1754944e-38, %v2765
      %v2767 = vsel %vm2764, %v2766, %v2762
      %v2768 = vmul.f32 1.0, %v2767
      %v2769 = vmul.f32 %v2681, %v2753
      %v2770 = vmul.f32 %v2682, %v2753
      %v2771 = vmul.f32 %v2683, %v2768
      %v2772 = vmul.f32 %v2684, %v2768
      %v2774 = vsel %vm1061, %v2726, 0
      %v2777 = vsel %vm1061, %v2729, 0
      %2779 = vmatpush.msra.mxu0 0.0
      %2780 = vmatpush.msra.mxu0 0.0
      %2781 = vmatpush.msra.mxu0 0.0
      %2782 = vmatpush.msra.mxu0 0.0
      %2783 = vmatpush.msra.mxu0 0.0
      %2784 = vmatpush.msra.mxu0 0.0
      %2785 = vmatpush.msra.mxu0 0.0
      %2786 = vmatpush.msra.mxu0 0.0
      %2787 = vmatpush.msra.mxu0 0.0
      %2788 = vmatpush.msra.mxu0 0.0
      %2789 = vmatpush.msra.mxu0 0.0
      %2790 = vmatpush.msra.mxu0 0.0
      %2791 = vmatpush.msra.mxu0 0.0
      %2792 = vmatpush.msra.mxu0 0.0
      %2793 = vmatpush.msra.mxu0 %v2771
      %2794 = vmatpush.msra.mxu0 %v2769
      %2795 = vmatmul.f32.gmra.mxu0 %v2774
      %v2796 = vpop.f32.mrf.mxu0
      %v2797 = vadd.f32 0.0, %v2796
      %2798 = vmatmul.f32.gmra.mxu0 %v2777
      %v2799 = vpop.f32.mrf.mxu0
      %v2800 = vadd.f32 0.0, %v2799
      %2801 = vdwg.mxu0
      %2802 = vmatpush.msra.mxu0 0.0
      %2803 = vmatpush.msra.mxu0 0.0
      %2804 = vmatpush.msra.mxu0 0.0
      %2805 = vmatpush.msra.mxu0 0.0
      %2806 = vmatpush.msra.mxu0 0.0
      %2807 = vmatpush.msra.mxu0 0.0
      %2808 = vmatpush.msra.mxu0 0.0
      %2809 = vmatpush.msra.mxu0 0.0
      %2810 = vmatpush.msra.mxu0 0.0
      %2811 = vmatpush.msra.mxu0 0.0
      %2812 = vmatpush.msra.mxu0 0.0
      %2813 = vmatpush.msra.mxu0 0.0
      %2814 = vmatpush.msra.mxu0 0.0
      %2815 = vmatpush.msra.mxu0 0.0
      %2816 = vmatpush.msra.mxu0 %v2772
      %2817 = vmatpush.msra.mxu0 %v2770
      %2818 = vmatmul.f32.gmra.mxu0 %v2774
      %v2819 = vpop.f32.mrf.mxu0
      %v2820 = vadd.f32 0.0, %v2819
      %2821 = vmatmul.f32.gmra.mxu0 %v2777
      %v2822 = vpop.f32.mrf.mxu0
      %v2823 = vadd.f32 0.0, %v2822
      %2824 = vdwg.mxu0
      %v2825 = vld [vmem:[%s7] sm:$0xff]
      %v2826 = vld [vmem:[%s7 + $0x8] sm:$0xff]
      %v2827 = vld [vmem:[%s7 + $0x10] sm:$0xff]
      %v2828 = vld [vmem:[%s7 + $0x18] sm:$0xff]
      %v2829 = vld [vmem:[%s7 + $0x20] sm:$0xff]
      %v2830 = vld [vmem:[%s7 + $0x28] sm:$0xff]
      %v2831 = vld [vmem:[%s7 + $0x30] sm:$0xff]
      %v2832 = vld [vmem:[%s7 + $0x38] sm:$0xff]
      %v2833 = vld [vmem:[%s8] sm:$0xff]
      %v2834 = vld [vmem:[%s8 + $0x8] sm:$0xff]
      %v2835 = vld [vmem:[%s8 + $0x10] sm:$0xff]
      %v2836 = vld [vmem:[%s8 + $0x18] sm:$0xff]
      %v2837 = vld [vmem:[%s8 + $0x20] sm:$0xff]
      %v2838 = vld [vmem:[%s8 + $0x28] sm:$0xff]
      %v2839 = vld [vmem:[%s8 + $0x30] sm:$0xff]
      %v2840 = vld [vmem:[%s8 + $0x38] sm:$0xff]
      %2842 = vset.pattern.permute.xlu0 0
      %2843 = vperm.xlu0 %2842, %v2833
      %v2844 = vpop.permute.xlu0 %2843
      %2847 = vset.pattern.permute.xlu0 0
      %2848 = vperm.xlu0 %2847, %v2834
      %v2849 = vpop.permute.xlu0 %2848
      %2852 = vset.pattern.permute.xlu0 0
      %2853 = vperm.xlu0 %2852, %v2835
      %v2854 = vpop.permute.xlu0 %2853
      %2857 = vset.pattern.permute.xlu0 0
      %2858 = vperm.xlu0 %2857, %v2836
      %v2859 = vpop.permute.xlu0 %2858
      %2862 = vset.pattern.permute.xlu0 0
      %2863 = vperm.xlu0 %2862, %v2837
      %v2864 = vpop.permute.xlu0 %2863
      %2867 = vset.pattern.permute.xlu0 0
      %2868 = vperm.xlu0 %2867, %v2838
      %v2869 = vpop.permute.xlu0 %2868
      %2872 = vset.pattern.permute.xlu0 0
      %2873 = vperm.xlu0 %2872, %v2839
      %v2874 = vpop.permute.xlu0 %2873
      %2877 = vset.pattern.permute.xlu0 0
      %2878 = vperm.xlu0 %2877, %v2840
      %v2879 = vpop.permute.xlu0 %2878
      %v2882 = vsel %vm708, %v2825, 0
      %v2885 = vsel %vm708, %v2826, 0
      %v2888 = vsel %vm708, %v2827, 0
      %v2891 = vsel %vm708, %v2828, 0
      %v2894 = vsel %vm708, %v2829, 0
      %v2897 = vsel %vm708, %v2830, 0
      %v2900 = vsel %vm708, %v2831, 0
      %v2903 = vsel %vm708, %v2832, 0
      %2905 = vmatpush.msra.mxu0 0.0
      %2906 = vmatpush.msra.mxu0 0.0
      %2907 = vmatpush.msra.mxu0 0.0
      %2908 = vmatpush.msra.mxu0 0.0
      %2909 = vmatpush.msra.mxu0 0.0
      %2910 = vmatpush.msra.mxu0 0.0
      %2911 = vmatpush.msra.mxu0 0.0
      %2912 = vmatpush.msra.mxu0 0.0
      %2913 = vmatpush.msra.mxu0 %v2800
      %2914 = vmatpush.msra.mxu0 %v2797
      %2915 = vmatpush.msra.mxu0 %v2360
      %2916 = vmatpush.msra.mxu0 %v2357
      %2917 = vmatpush.msra.mxu0 %v1920
      %2918 = vmatpush.msra.mxu0 %v1917
      %2919 = vmatpush.msra.mxu0 %v1480
      %2920 = vmatpush.msra.mxu0 %v1477
      %2921 = vmatmul.f32.gmra.mxu0 %v2882
      %v2922 = vpop.f32.mrf.mxu0
      %v2923 = vadd.f32 %v2844, %v2922
      %2924 = vmatmul.f32.gmra.mxu0 %v2885
      %v2925 = vpop.f32.mrf.mxu0
      %v2926 = vadd.f32 %v2849, %v2925
      %2927 = vmatmul.f32.gmra.mxu0 %v2888
      %v2928 = vpop.f32.mrf.mxu0
      %v2929 = vadd.f32 %v2854, %v2928
      %2930 = vmatmul.f32.gmra.mxu0 %v2891
      %v2931 = vpop.f32.mrf.mxu0
      %v2932 = vadd.f32 %v2859, %v2931
      %2933 = vmatmul.f32.gmra.mxu0 %v2894
      %v2934 = vpop.f32.mrf.mxu0
      %v2935 = vadd.f32 %v2864, %v2934
      %2936 = vmatmul.f32.gmra.mxu0 %v2897
      %v2937 = vpop.f32.mrf.mxu0
      %v2938 = vadd.f32 %v2869, %v2937
      %2939 = vmatmul.f32.gmra.mxu0 %v2900
      %v2940 = vpop.f32.mrf.mxu0
      %v2941 = vadd.f32 %v2874, %v2940
      %2942 = vmatmul.f32.gmra.mxu0 %v2903
      %v2943 = vpop.f32.mrf.mxu0
      %v2944 = vadd.f32 %v2879, %v2943
      %2945 = vdwg.mxu0
      %2946 = vmatpush.msra.mxu0 0.0
      %2947 = vmatpush.msra.mxu0 0.0
      %2948 = vmatpush.msra.mxu0 0.0
      %2949 = vmatpush.msra.mxu0 0.0
      %2950 = vmatpush.msra.mxu0 0.0
      %2951 = vmatpush.msra.mxu0 0.0
      %2952 = vmatpush.msra.mxu0 0.0
      %2953 = vmatpush.msra.mxu0 0.0
      %2954 = vmatpush.msra.mxu0 %v2823
      %2955 = vmatpush.msra.mxu0 %v2820
      %2956 = vmatpush.msra.mxu0 %v2383
      %2957 = vmatpush.msra.mxu0 %v2380
      %2958 = vmatpush.msra.mxu0 %v1943
      %2959 = vmatpush.msra.mxu0 %v1940
      %2960 = vmatpush.msra.mxu0 %v1503
      %2961 = vmatpush.msra.mxu0 %v1500
      %2962 = vmatmul.f32.gmra.mxu0 %v2882
      %v2963 = vpop.f32.mrf.mxu0
      %v2964 = vadd.f32 %v2844, %v2963
      %2965 = vmatmul.f32.gmra.mxu0 %v2885
      %v2966 = vpop.f32.mrf.mxu0
      %v2967 = vadd.f32 %v2849, %v2966
      %2968 = vmatmul.f32.gmra.mxu0 %v2888
      %v2969 = vpop.f32.mrf.mxu0
      %v2970 = vadd.f32 %v2854, %v2969
      %2971 = vmatmul.f32.gmra.mxu0 %v2891
      %v2972 = vpop.f32.mrf.mxu0
      %v2973 = vadd.f32 %v2859, %v2972
      %2974 = vmatmul.f32.gmra.mxu0 %v2894
      %v2975 = vpop.f32.mrf.mxu0
      %v2976 = vadd.f32 %v2864, %v2975
      %2977 = vmatmul.f32.gmra.mxu0 %v2897
      %v2978 = vpop.f32.mrf.mxu0
      %v2979 = vadd.f32 %v2869, %v2978
      %2980 = vmatmul.f32.gmra.mxu0 %v2900
      %v2981 = vpop.f32.mrf.mxu0
      %v2982 = vadd.f32 %v2874, %v2981
      %2983 = vmatmul.f32.gmra.mxu0 %v2903
      %v2984 = vpop.f32.mrf.mxu0
      %v2985 = vadd.f32 %v2879, %v2984
      %2986 = vdwg.mxu0
      %v2987 = vadd.f32 %v445, %v2923
      %v2988 = vadd.f32 %v446, %v2964
      %v2989 = vadd.f32 %v447, %v2926
      %v2990 = vadd.f32 %v448, %v2967
      %v2991 = vadd.f32 %v449, %v2929
      %v2992 = vadd.f32 %v450, %v2970
      %v2993 = vadd.f32 %v451, %v2932
      %v2994 = vadd.f32 %v452, %v2973
      %v2995 = vadd.f32 %v453, %v2935
      %v2996 = vadd.f32 %v454, %v2976
      %v2997 = vadd.f32 %v455, %v2938
      %v2998 = vadd.f32 %v456, %v2979
      %v2999 = vadd.f32 %v457, %v2941
      %v3000 = vadd.f32 %v458, %v2982
      %v3001 = vadd.f32 %v459, %v2944
      %v3002 = vadd.f32 %v460, %v2985
      %v3003 = vadd.f32 %v2987, %v2988
      %3004 = vadd.xlane.f32.xlu0 %v3003
      %v3005 = vpop.xlane.xlu0 %3004
      %v3006 = vadd.f32 %v2989, %v2990
      %3007 = vadd.xlane.f32.xlu0 %v3006
      %v3008 = vpop.xlane.xlu0 %3007
      %v3009 = vadd.f32 %v2991, %v2992
      %3010 = vadd.xlane.f32.xlu0 %v3009
      %v3011 = vpop.xlane.xlu0 %3010
      %v3012 = vadd.f32 %v2993, %v2994
      %3013 = vadd.xlane.f32.xlu0 %v3012
      %v3014 = vpop.xlane.xlu0 %3013
      %v3015 = vadd.f32 %v2995, %v2996
      %3016 = vadd.xlane.f32.xlu0 %v3015
      %v3017 = vpop.xlane.xlu0 %3016
      %v3018 = vadd.f32 %v2997, %v2998
      %3019 = vadd.xlane.f32.xlu0 %v3018
      %v3020 = vpop.xlane.xlu0 %3019
      %v3021 = vadd.f32 %v2999, %v3000
      %3022 = vadd.xlane.f32.xlu0 %v3021
      %v3023 = vpop.xlane.xlu0 %3022
      %v3024 = vadd.f32 %v3001, %v3002
      %3025 = vadd.xlane.f32.xlu0 %v3024
      %v3026 = vpop.xlane.xlu0 %3025
      %v3027 = vadd.f32 %v3005, %v3008
      %v3028 = vadd.f32 %v3027, %v3011
      %v3029 = vadd.f32 %v3028, %v3014
      %v3030 = vadd.f32 %v3029, %v3017
      %v3031 = vadd.f32 %v3030, %v3020
      %v3032 = vadd.f32 %v3031, %v3023
      %v3033 = vadd.f32 %v3032, %v3026
      %v3034 = vrot.slane %v3033, 4
      %v3035 = vadd.f32 %v3033, %v3034
      %v3036 = vrot.slane %v3035, 2
      %v3037 = vadd.f32 %v3035, %v3036
      %v3038 = vrot.slane %v3037, 1
      %v3039 = vadd.f32 %v3037, %v3038
      %v3040 = vmul.f32 %v3039, 6.1035156e-05
      %v3041 = vsub.f32 %v2987, %v3040
      %v3042 = vsub.f32 %v2988, %v3040
      %v3043 = vsub.f32 %v2989, %v3040
      %v3044 = vsub.f32 %v2990, %v3040
      %v3045 = vsub.f32 %v2991, %v3040
      %v3046 = vsub.f32 %v2992, %v3040
      %v3047 = vsub.f32 %v2993, %v3040
      %v3048 = vsub.f32 %v2994, %v3040
      %v3049 = vsub.f32 %v2995, %v3040
      %v3050 = vsub.f32 %v2996, %v3040
      %v3051 = vsub.f32 %v2997, %v3040
      %v3052 = vsub.f32 %v2998, %v3040
      %v3053 = vsub.f32 %v2999, %v3040
      %v3054 = vsub.f32 %v3000, %v3040
      %v3055 = vsub.f32 %v3001, %v3040
      %v3056 = vsub.f32 %v3002, %v3040
      %v3057 = vmul.f32 %v3041, %v3041
      %v3058 = vmul.f32 %v3042, %v3042
      %v3059 = vmul.f32 %v3043, %v3043
      %v3060 = vmul.f32 %v3044, %v3044
      %v3061 = vmul.f32 %v3045, %v3045
      %v3062 = vmul.f32 %v3046, %v3046
      %v3063 = vmul.f32 %v3047, %v3047
      %v3064 = vmul.f32 %v3048, %v3048
      %v3065 = vmul.f32 %v3049, %v3049
      %v3066 = vmul.f32 %v3050, %v3050
      %v3067 = vmul.f32 %v3051, %v3051
      %v3068 = vmul.f32 %v3052, %v3052
      %v3069 = vmul.f32 %v3053, %v3053
      %v3070 = vmul.f32 %v3054, %v3054
      %v3071 = vmul.f32 %v3055, %v3055
      %v3072 = vmul.f32 %v3056, %v3056
      %v3073 = vadd.f32 %v3057, %v3058
      %3074 = vadd.xlane.f32.xlu0 %v3073
      %v3075 = vpop.xlane.xlu0 %3074
      %v3076 = vadd.f32 %v3059, %v3060
      %3077 = vadd.xlane.f32.xlu0 %v3076
      %v3078 = vpop.xlane.xlu0 %3077
      %v3079 = vadd.f32 %v3061, %v3062
      %3080 = vadd.xlane.f32.xlu0 %v3079
      %v3081 = vpop.xlane.xlu0 %3080
      %v3082 = vadd.f32 %v3063, %v3064
      %3083 = vadd.xlane.f32.xlu0 %v3082
      %v3084 = vpop.xlane.xlu0 %3083
      %v3085 = vadd.f32 %v3065, %v3066
      %3086 = vadd.xlane.f32.xlu0 %v3085
      %v3087 = vpop.xlane.xlu0 %3086
      %v3088 = vadd.f32 %v3067, %v3068
      %3089 = vadd.xlane.f32.xlu0 %v3088
      %v3090 = vpop.xlane.xlu0 %3089
      %v3091 = vadd.f32 %v3069, %v3070
      %3092 = vadd.xlane.f32.xlu0 %v3091
      %v3093 = vpop.xlane.xlu0 %3092
      %v3094 = vadd.f32 %v3071, %v3072
      %3095 = vadd.xlane.f32.xlu0 %v3094
      %v3096 = vpop.xlane.xlu0 %3095
      %v3097 = vadd.f32 %v3075, %v3078
      %v3098 = vadd.f32 %v3097, %v3081
      %v3099 = vadd.f32 %v3098, %v3084
      %v3100 = vadd.f32 %v3099, %v3087
      %v3101 = vadd.f32 %v3100, %v3090
      %v3102 = vadd.f32 %v3101, %v3093
      %v3103 = vadd.f32 %v3102, %v3096
      %v3104 = vrot.slane %v3103, 4
      %v3105 = vadd.f32 %v3103, %v3104
      %v3106 = vrot.slane %v3105, 2
      %v3107 = vadd.f32 %v3105, %v3106
      %v3108 = vrot.slane %v3107, 1
      %v3109 = vadd.f32 %v3107, %v3108
      %v3110 = vmul.f32 %v3109, 6.1035156e-05
      %v3111 = vadd.f32 %v3110, 1e-05
      %v3112 = vrsqrt.pop %v3111
      %v3113 = vmul.f32 %v3112, %v3111
      %v3114 = vmul.f32 %v3113, %v3112
      %v3115 = vmul.f32 0.5, %v3114
      %v3116 = vsub.f32 1.5, %v3115
      %v3117 = vmul.f32 %v3112, %v3116
      %vm3118 = vweird.f32 %v3111
      %vm3119 = vweird.f32 %v3112
      %vm3120 = vmor %vm3118, %vm3119
      %v3121 = vsel %vm3120, %v3112, %v3117
      %v3122 = vmul.f32 %v3041, %v3121
      %v3123 = vmul.f32 %v3042, %v3121
      %v3124 = vmul.f32 %v3043, %v3121
      %v3125 = vmul.f32 %v3044, %v3121
      %v3126 = vmul.f32 %v3045, %v3121
      %v3127 = vmul.f32 %v3046, %v3121
      %v3128 = vmul.f32 %v3047, %v3121
      %v3129 = vmul.f32 %v3048, %v3121
      %v3130 = vmul.f32 %v3049, %v3121
      %v3131 = vmul.f32 %v3050, %v3121
      %v3132 = vmul.f32 %v3051, %v3121
      %v3133 = vmul.f32 %v3052, %v3121
      %v3134 = vmul.f32 %v3053, %v3121
      %v3135 = vmul.f32 %v3054, %v3121
      %v3136 = vmul.f32 %v3055, %v3121
      %v3137 = vmul.f32 %v3056, %v3121
      %v3138 = vld [vmem:[%s9] sm:$0xff]
      %v3139 = vld [vmem:[%s9 + $0x8] sm:$0xff]
      %v3140 = vld [vmem:[%s9 + $0x10] sm:$0xff]
      %v3141 = vld [vmem:[%s9 + $0x18] sm:$0xff]
      %v3142 = vld [vmem:[%s9 + $0x20] sm:$0xff]
      %v3143 = vld [vmem:[%s9 + $0x28] sm:$0xff]
      %v3144 = vld [vmem:[%s9 + $0x30] sm:$0xff]
      %v3145 = vld [vmem:[%s9 + $0x38] sm:$0xff]
      %v3146 = vld [vmem:[%s9 + $0x40] sm:$0xff]
      %v3147 = vld [vmem:[%s9 + $0x48] sm:$0xff]
      %v3148 = vld [vmem:[%s9 + $0x50] sm:$0xff]
      %v3149 = vld [vmem:[%s9 + $0x58] sm:$0xff]
      %v3150 = vld [vmem:[%s9 + $0x60] sm:$0xff]
      %v3151 = vld [vmem:[%s9 + $0x68] sm:$0xff]
      %v3152 = vld [vmem:[%s9 + $0x70] sm:$0xff]
      %v3153 = vld [vmem:[%s9 + $0x78] sm:$0xff]
      %v3154 = vld [vmem:[%s9 + $0x80] sm:$0xff]
      %v3155 = vld [vmem:[%s9 + $0x88] sm:$0xff]
      %v3156 = vld [vmem:[%s9 + $0x90] sm:$0xff]
      %v3157 = vld [vmem:[%s9 + $0x98] sm:$0xff]
      %v3158 = vld [vmem:[%s9 + $0xa0] sm:$0xff]
      %v3159 = vld [vmem:[%s9 + $0xa8] sm:$0xff]
      %v3160 = vld [vmem:[%s9 + $0xb0] sm:$0xff]
      %v3161 = vld [vmem:[%s9 + $0xb8] sm:$0xff]
      %v3162 = vld [vmem:[%s9 + $0xc0] sm:$0xff]
      %v3163 = vld [vmem:[%s9 + $0xc8] sm:$0xff]
      %v3164 = vld [vmem:[%s9 + $0xd0] sm:$0xff]
      %v3165 = vld [vmem:[%s9 + $0xd8] sm:$0xff]
      %v3166 = vld [vmem:[%s9 + $0xe0] sm:$0xff]
      %v3167 = vld [vmem:[%s9 + $0xe8] sm:$0xff]
      %v3168 = vld [vmem:[%s9 + $0xf0] sm:$0xff]
      %v3169 = vld [vmem:[%s9 + $0xf8] sm:$0xff]
      %v3170 = vld [vmem:[%s10] sm:$0xff]
      %v3171 = vld [vmem:[%s10 + $0x8] sm:$0xff]
      %v3172 = vld [vmem:[%s10 + $0x10] sm:$0xff]
      %v3173 = vld [vmem:[%s10 + $0x18] sm:$0xff]
      %v3174 = vld [vmem:[%s10 + $0x20] sm:$0xff]
      %v3175 = vld [vmem:[%s10 + $0x28] sm:$0xff]
      %v3176 = vld [vmem:[%s10 + $0x30] sm:$0xff]
      %v3177 = vld [vmem:[%s10 + $0x38] sm:$0xff]
      %v3178 = vld [vmem:[%s10 + $0x40] sm:$0xff]
      %v3179 = vld [vmem:[%s10 + $0x48] sm:$0xff]
      %v3180 = vld [vmem:[%s10 + $0x50] sm:$0xff]
      %v3181 = vld [vmem:[%s10 + $0x58] sm:$0xff]
      %v3182 = vld [vmem:[%s10 + $0x60] sm:$0xff]
      %v3183 = vld [vmem:[%s10 + $0x68] sm:$0xff]
      %v3184 = vld [vmem:[%s10 + $0x70] sm:$0xff]
      %v3185 = vld [vmem:[%s10 + $0x78] sm:$0xff]
      %v3186 = vld [vmem:[%s10 + $0x80] sm:$0xff]
      %v3187 = vld [vmem:[%s10 + $0x88] sm:$0xff]
      %v3188 = vld [vmem:[%s10 + $0x90] sm:$0xff]
      %v3189 = vld [vmem:[%s10 + $0x98] sm:$0xff]
      %v3190 = vld [vmem:[%s10 + $0xa0] sm:$0xff]
      %v3191 = vld [vmem:[%s10 + $0xa8] sm:$0xff]
      %v3192 = vld [vmem:[%s10 + $0xb0] sm:$0xff]
      %v3193 = vld [vmem:[%s10 + $0xb8] sm:$0xff]
      %v3194 = vld [vmem:[%s10 + $0xc0] sm:$0xff]
      %v3195 = vld [vmem:[%s10 + $0xc8] sm:$0xff]
      %v3196 = vld [vmem:[%s10 + $0xd0] sm:$0xff]
      %v3197 = vld [vmem:[%s10 + $0xd8] sm:$0xff]
      %v3198 = vld [vmem:[%s10 + $0xe0] sm:$0xff]
      %v3199 = vld [vmem:[%s10 + $0xe8] sm:$0xff]
      %v3200 = vld [vmem:[%s10 + $0xf0] sm:$0xff]
      %v3201 = vld [vmem:[%s10 + $0xf8] sm:$0xff]
      %3203 = vset.pattern.permute.xlu0 0
      %3204 = vperm.xlu0 %3203, %v3170
      %v3205 = vpop.permute.xlu0 %3204
      %3208 = vset.pattern.permute.xlu0 0
      %3209 = vperm.xlu0 %3208, %v3171
      %v3210 = vpop.permute.xlu0 %3209
      %3213 = vset.pattern.permute.xlu0 0
      %3214 = vperm.xlu0 %3213, %v3172
      %v3215 = vpop.permute.xlu0 %3214
      %3218 = vset.pattern.permute.xlu0 0
      %3219 = vperm.xlu0 %3218, %v3173
      %v3220 = vpop.permute.xlu0 %3219
      %3223 = vset.pattern.permute.xlu0 0
      %3224 = vperm.xlu0 %3223, %v3174
      %v3225 = vpop.permute.xlu0 %3224
      %3228 = vset.pattern.permute.xlu0 0
      %3229 = vperm.xlu0 %3228, %v3175
      %v3230 = vpop.permute.xlu0 %3229
      %3233 = vset.pattern.permute.xlu0 0
      %3234 = vperm.xlu0 %3233, %v3176
      %v3235 = vpop.permute.xlu0 %3234
      %3238 = vset.pattern.permute.xlu0 0
      %3239 = vperm.xlu0 %3238, %v3177
      %v3240 = vpop.permute.xlu0 %3239
      %3243 = vset.pattern.permute.xlu0 0
      %3244 = vperm.xlu0 %3243, %v3178
      %v3245 = vpop.permute.xlu0 %3244
      %3248 = vset.pattern.permute.xlu0 0
      %3249 = vperm.xlu0 %3248, %v3179
      %v3250 = vpop.permute.xlu0 %3249
      %3253 = vset.pattern.permute.xlu0 0
      %3254 = vperm.xlu0 %3253, %v3180
      %v3255 = vpop.permute.xlu0 %3254
      %3258 = vset.pattern.permute.xlu0 0
      %3259 = vperm.xlu0 %3258, %v3181
      %v3260 = vpop.permute.xlu0 %3259
      %3263 = vset.pattern.permute.xlu0 0
      %3264 = vperm.xlu0 %3263, %v3182
      %v3265 = vpop.permute.xlu0 %3264
      %3268 = vset.pattern.permute.xlu0 0
      %3269 = vperm.xlu0 %3268, %v3183
      %v3270 = vpop.permute.xlu0 %3269
      %3273 = vset.pattern.permute.xlu0 0
      %3274 = vperm.xlu0 %3273, %v3184
      %v3275 = vpop.permute.xlu0 %3274
      %3278 = vset.pattern.permute.xlu0 0
      %3279 = vperm.xlu0 %3278, %v3185
      %v3280 = vpop.permute.xlu0 %3279
      %3283 = vset.pattern.permute.xlu0 0
      %3284 = vperm.xlu0 %3283, %v3186
      %v3285 = vpop.permute.xlu0 %3284
      %3288 = vset.pattern.permute.xlu0 0
      %3289 = vperm.xlu0 %3288, %v3187
      %v3290 = vpop.permute.xlu0 %3289
      %3293 = vset.pattern.permute.xlu0 0
      %3294 = vperm.xlu0 %3293, %v3188
      %v3295 = vpop.permute.xlu0 %3294
      %3298 = vset.pattern.permute.xlu0 0
      %3299 = vperm.xlu0 %3298, %v3189
      %v3300 = vpop.permute.xlu0 %3299
      %3303 = vset.pattern.permute.xlu0 0
      %3304 = vperm.xlu0 %3303, %v3190
      %v3305 = vpop.permute.xlu0 %3304
      %3308 = vset.pattern.permute.xlu0 0
      %3309 = vperm.xlu0 %3308, %v3191
      %v3310 = vpop.permute.xlu0 %3309
      %3313 = vset.pattern.permute.xlu0 0
      %3314 = vperm.xlu0 %3313, %v3192
      %v3315 = vpop.permute.xlu0 %3314
      %3318 = vset.pattern.permute.xlu0 0
      %3319 = vperm.xlu0 %3318, %v3193
      %v3320 = vpop.permute.xlu0 %3319
      %3323 = vset.pattern.permute.xlu0 0
      %3324 = vperm.xlu0 %3323, %v3194
      %v3325 = vpop.permute.xlu0 %3324
      %3328 = vset.pattern.permute.xlu0 0
      %3329 = vperm.xlu0 %3328, %v3195
      %v3330 = vpop.permute.xlu0 %3329
      %3333 = vset.pattern.permute.xlu0 0
      %3334 = vperm.xlu0 %3333, %v3196
      %v3335 = vpop.permute.xlu0 %3334
      %3338 = vset.pattern.permute.xlu0 0
      %3339 = vperm.xlu0 %3338, %v3197
      %v3340 = vpop.permute.xlu0 %3339
      %3343 = vset.pattern.permute.xlu0 0
      %3344 = vperm.xlu0 %3343, %v3198
      %v3345 = vpop.permute.xlu0 %3344
      %3348 = vset.pattern.permute.xlu0 0
      %3349 = vperm.xlu0 %3348, %v3199
      %v3350 = vpop.permute.xlu0 %3349
      %3353 = vset.pattern.permute.xlu0 0
      %3354 = vperm.xlu0 %3353, %v3200
      %v3355 = vpop.permute.xlu0 %3354
      %3358 = vset.pattern.permute.xlu0 0
      %3359 = vperm.xlu0 %3358, %v3201
      %v3360 = vpop.permute.xlu0 %3359
      %v3363 = vsel %vm708, %v3138, 0
      %v3366 = vsel %vm708, %v3139, 0
      %v3369 = vsel %vm708, %v3140, 0
      %v3372 = vsel %vm708, %v3141, 0
      %v3375 = vsel %vm708, %v3142, 0
      %v3378 = vsel %vm708, %v3143, 0
      %v3381 = vsel %vm708, %v3144, 0
      %v3384 = vsel %vm708, %v3145, 0
      %v3387 = vsel %vm708, %v3146, 0
      %v3390 = vsel %vm708, %v3147, 0
      %v3393 = vsel %vm708, %v3148, 0
      %v3396 = vsel %vm708, %v3149, 0
      %v3399 = vsel %vm708, %v3150, 0
      %v3402 = vsel %vm708, %v3151, 0
      %v3405 = vsel %vm708, %v3152, 0
      %v3408 = vsel %vm708, %v3153, 0
      %v3411 = vsel %vm708, %v3154, 0
      %v3414 = vsel %vm708, %v3155, 0
      %v3417 = vsel %vm708, %v3156, 0
      %v3420 = vsel %vm708, %v3157, 0
      %v3423 = vsel %vm708, %v3158, 0
      %v3426 = vsel %vm708, %v3159, 0
      %v3429 = vsel %vm708, %v3160, 0
      %v3432 = vsel %vm708, %v3161, 0
      %v3435 = vsel %vm708, %v3162, 0
      %v3438 = vsel %vm708, %v3163, 0
      %v3441 = vsel %vm708, %v3164, 0
      %v3444 = vsel %vm708, %v3165, 0
      %v3447 = vsel %vm708, %v3166, 0
      %v3450 = vsel %vm708, %v3167, 0
      %v3453 = vsel %vm708, %v3168, 0
      %v3456 = vsel %vm708, %v3169, 0
      %3458 = vmatpush.msra.mxu0 0.0
      %3459 = vmatpush.msra.mxu0 0.0
      %3460 = vmatpush.msra.mxu0 0.0
      %3461 = vmatpush.msra.mxu0 0.0
      %3462 = vmatpush.msra.mxu0 0.0
      %3463 = vmatpush.msra.mxu0 0.0
      %3464 = vmatpush.msra.mxu0 0.0
      %3465 = vmatpush.msra.mxu0 0.0
      %3466 = vmatpush.msra.mxu0 %v3136
      %3467 = vmatpush.msra.mxu0 %v3134
      %3468 = vmatpush.msra.mxu0 %v3132
      %3469 = vmatpush.msra.mxu0 %v3130
      %3470 = vmatpush.msra.mxu0 %v3128
      %3471 = vmatpush.msra.mxu0 %v3126
      %3472 = vmatpush.msra.mxu0 %v3124
      %3473 = vmatpush.msra.mxu0 %v3122
      %3474 = vmatmul.f32.gmra.mxu0 %v3363
      %v3475 = vpop.f32.mrf.mxu0
      %v3476 = vadd.f32 %v3205, %v3475
      %3477 = vmatmul.f32.gmra.mxu0 %v3366
      %v3478 = vpop.f32.mrf.mxu0
      %v3479 = vadd.f32 %v3210, %v3478
      %3480 = vmatmul.f32.gmra.mxu0 %v3369
      %v3481 = vpop.f32.mrf.mxu0
      %v3482 = vadd.f32 %v3215, %v3481
      %3483 = vmatmul.f32.gmra.mxu0 %v3372
      %v3484 = vpop.f32.mrf.mxu0
      %v3485 = vadd.f32 %v3220, %v3484
      %3486 = vmatmul.f32.gmra.mxu0 %v3375
      %v3487 = vpop.f32.mrf.mxu0
      %v3488 = vadd.f32 %v3225, %v3487
      %3489 = vmatmul.f32.gmra.mxu0 %v3378
      %v3490 = vpop.f32.mrf.mxu0
      %v3491 = vadd.f32 %v3230, %v3490
      %3492 = vmatmul.f32.gmra.mxu0 %v3381
      %v3493 = vpop.f32.mrf.mxu0
      %v3494 = vadd.f32 %v3235, %v3493
      %3495 = vmatmul.f32.gmra.mxu0 %v3384
      %v3496 = vpop.f32.mrf.mxu0
      %v3497 = vadd.f32 %v3240, %v3496
      %3498 = vmatmul.f32.gmra.mxu0 %v3387
      %v3499 = vpop.f32.mrf.mxu0
      %v3500 = vadd.f32 %v3245, %v3499
      %3501 = vmatmul.f32.gmra.mxu0 %v3390
      %v3502 = vpop.f32.mrf.mxu0
      %v3503 = vadd.f32 %v3250, %v3502
      %3504 = vmatmul.f32.gmra.mxu0 %v3393
      %v3505 = vpop.f32.mrf.mxu0
      %v3506 = vadd.f32 %v3255, %v3505
      %3507 = vmatmul.f32.gmra.mxu0 %v3396
      %v3508 = vpop.f32.mrf.mxu0
      %v3509 = vadd.f32 %v3260, %v3508
      %3510 = vmatmul.f32.gmra.mxu0 %v3399
      %v3511 = vpop.f32.mrf.mxu0
      %v3512 = vadd.f32 %v3265, %v3511
      %3513 = vmatmul.f32.gmra.mxu0 %v3402
      %v3514 = vpop.f32.mrf.mxu0
      %v3515 = vadd.f32 %v3270, %v3514
      %3516 = vmatmul.f32.gmra.mxu0 %v3405
      %v3517 = vpop.f32.mrf.mxu0
      %v3518 = vadd.f32 %v3275, %v3517
      %3519 = vmatmul.f32.gmra.mxu0 %v3408
      %v3520 = vpop.f32.mrf.mxu0
      %v3521 = vadd.f32 %v3280, %v3520
      %3522 = vmatmul.f32.gmra.mxu0 %v3411
      %v3523 = vpop.f32.mrf.mxu0
      %v3524 = vadd.f32 %v3285, %v3523
      %3525 = vmatmul.f32.gmra.mxu0 %v3414
      %v3526 = vpop.f32.mrf.mxu0
      %v3527 = vadd.f32 %v3290, %v3526
      %3528 = vmatmul.f32.gmra.mxu0 %v3417
      %v3529 = vpop.f32.mrf.mxu0
      %v3530 = vadd.f32 %v3295, %v3529
      %3531 = vmatmul.f32.gmra.mxu0 %v3420
      %v3532 = vpop.f32.mrf.mxu0
      %v3533 = vadd.f32 %v3300, %v3532
      %3534 = vmatmul.f32.gmra.mxu0 %v3423
      %v3535 = vpop.f32.mrf.mxu0
      %v3536 = vadd.f32 %v3305, %v3535
      %3537 = vmatmul.f32.gmra.mxu0 %v3426
      %v3538 = vpop.f32.mrf.mxu0
      %v3539 = vadd.f32 %v3310, %v3538
      %3540 = vmatmul.f32.gmra.mxu0 %v3429
      %v3541 = vpop.f32.mrf.mxu0
      %v3542 = vadd.f32 %v3315, %v3541
      %3543 = vmatmul.f32.gmra.mxu0 %v3432
      %v3544 = vpop.f32.mrf.mxu0
      %v3545 = vadd.f32 %v3320, %v3544
      %3546 = vmatmul.f32.gmra.mxu0 %v3435
      %v3547 = vpop.f32.mrf.mxu0
      %v3548 = vadd.f32 %v3325, %v3547
      %3549 = vmatmul.f32.gmra.mxu0 %v3438
      %v3550 = vpop.f32.mrf.mxu0
      %v3551 = vadd.f32 %v3330, %v3550
      %3552 = vmatmul.f32.gmra.mxu0 %v3441
      %v3553 = vpop.f32.mrf.mxu0
      %v3554 = vadd.f32 %v3335, %v3553
      %3555 = vmatmul.f32.gmra.mxu0 %v3444
      %v3556 = vpop.f32.mrf.mxu0
      %v3557 = vadd.f32 %v3340, %v3556
      %3558 = vmatmul.f32.gmra.mxu0 %v3447
      %v3559 = vpop.f32.mrf.mxu0
      %v3560 = vadd.f32 %v3345, %v3559
      %3561 = vmatmul.f32.gmra.mxu0 %v3450
      %v3562 = vpop.f32.mrf.mxu0
      %v3563 = vadd.f32 %v3350, %v3562
      %3564 = vmatmul.f32.gmra.mxu0 %v3453
      %v3565 = vpop.f32.mrf.mxu0
      %v3566 = vadd.f32 %v3355, %v3565
      %3567 = vmatmul.f32.gmra.mxu0 %v3456
      %v3568 = vpop.f32.mrf.mxu0
      %v3569 = vadd.f32 %v3360, %v3568
      %3570 = vdwg.mxu0
      %3571 = vmatpush.msra.mxu0 0.0
      %3572 = vmatpush.msra.mxu0 0.0
      %3573 = vmatpush.msra.mxu0 0.0
      %3574 = vmatpush.msra.mxu0 0.0
      %3575 = vmatpush.msra.mxu0 0.0
      %3576 = vmatpush.msra.mxu0 0.0
      %3577 = vmatpush.msra.mxu0 0.0
      %3578 = vmatpush.msra.mxu0 0.0
      %3579 = vmatpush.msra.mxu0 %v3137
      %3580 = vmatpush.msra.mxu0 %v3135
      %3581 = vmatpush.msra.mxu0 %v3133
      %3582 = vmatpush.msra.mxu0 %v3131
      %3583 = vmatpush.msra.mxu0 %v3129
      %3584 = vmatpush.msra.mxu0 %v3127
      %3585 = vmatpush.msra.mxu0 %v3125
      %3586 = vmatpush.msra.mxu0 %v3123
      %3587 = vmatmul.f32.gmra.mxu0 %v3363
      %v3588 = vpop.f32.mrf.mxu0
      %v3589 = vadd.f32 %v3205, %v3588
      %3590 = vmatmul.f32.gmra.mxu0 %v3366
      %v3591 = vpop.f32.mrf.mxu0
      %v3592 = vadd.f32 %v3210, %v3591
      %3593 = vmatmul.f32.gmra.mxu0 %v3369
      %v3594 = vpop.f32.mrf.mxu0
      %v3595 = vadd.f32 %v3215, %v3594
      %3596 = vmatmul.f32.gmra.mxu0 %v3372
      %v3597 = vpop.f32.mrf.mxu0
      %v3598 = vadd.f32 %v3220, %v3597
      %3599 = vmatmul.f32.gmra.mxu0 %v3375
      %v3600 = vpop.f32.mrf.mxu0
      %v3601 = vadd.f32 %v3225, %v3600
      %3602 = vmatmul.f32.gmra.mxu0 %v3378
      %v3603 = vpop.f32.mrf.mxu0
      %v3604 = vadd.f32 %v3230, %v3603
      %3605 = vmatmul.f32.gmra.mxu0 %v3381
      %v3606 = vpop.f32.mrf.mxu0
      %v3607 = vadd.f32 %v3235, %v3606
      %3608 = vmatmul.f32.gmra.mxu0 %v3384
      %v3609 = vpop.f32.mrf.mxu0
      %v3610 = vadd.f32 %v3240, %v3609
      %3611 = vmatmul.f32.gmra.mxu0 %v3387
      %v3612 = vpop.f32.mrf.mxu0
      %v3613 = vadd.f32 %v3245, %v3612
      %3614 = vmatmul.f32.gmra.mxu0 %v3390
      %v3615 = vpop.f32.mrf.mxu0
      %v3616 = vadd.f32 %v3250, %v3615
      %3617 = vmatmul.f32.gmra.mxu0 %v3393
      %v3618 = vpop.f32.mrf.mxu0
      %v3619 = vadd.f32 %v3255, %v3618
      %3620 = vmatmul.f32.gmra.mxu0 %v3396
      %v3621 = vpop.f32.mrf.mxu0
      %v3622 = vadd.f32 %v3260, %v3621
      %3623 = vmatmul.f32.gmra.mxu0 %v3399
      %v3624 = vpop.f32.mrf.mxu0
      %v3625 = vadd.f32 %v3265, %v3624
      %3626 = vmatmul.f32.gmra.mxu0 %v3402
      %v3627 = vpop.f32.mrf.mxu0
      %v3628 = vadd.f32 %v3270, %v3627
      %3629 = vmatmul.f32.gmra.mxu0 %v3405
      %v3630 = vpop.f32.mrf.mxu0
      %v3631 = vadd.f32 %v3275, %v3630
      %3632 = vmatmul.f32.gmra.mxu0 %v3408
      %v3633 = vpop.f32.mrf.mxu0
      %v3634 = vadd.f32 %v3280, %v3633
      %3635 = vmatmul.f32.gmra.mxu0 %v3411
      %v3636 = vpop.f32.mrf.mxu0
      %v3637 = vadd.f32 %v3285, %v3636
      %3638 = vmatmul.f32.gmra.mxu0 %v3414
      %v3639 = vpop.f32.mrf.mxu0
      %v3640 = vadd.f32 %v3290, %v3639
      %3641 = vmatmul.f32.gmra.mxu0 %v3417
      %v3642 = vpop.f32.mrf.mxu0
      %v3643 = vadd.f32 %v3295, %v3642
      %3644 = vmatmul.f32.gmra.mxu0 %v3420
      %v3645 = vpop.f32.mrf.mxu0
      %v3646 = vadd.f32 %v3300, %v3645
      %3647 = vmatmul.f32.gmra.mxu0 %v3423
      %v3648 = vpop.f32.mrf.mxu0
      %v3649 = vadd.f32 %v3305, %v3648
      %3650 = vmatmul.f32.gmra.mxu0 %v3426
      %v3651 = vpop.f32.mrf.mxu0
      %v3652 = vadd.f32 %v3310, %v3651
      %3653 = vmatmul.f32.gmra.mxu0 %v3429
      %v3654 = vpop.f32.mrf.mxu0
      %v3655 = vadd.f32 %v3315, %v3654
      %3656 = vmatmul.f32.gmra.mxu0 %v3432
      %v3657 = vpop.f32.mrf.mxu0
      %v3658 = vadd.f32 %v3320, %v3657
      %3659 = vmatmul.f32.gmra.mxu0 %v3435
      %v3660 = vpop.f32.mrf.mxu0
      %v3661 = vadd.f32 %v3325, %v3660
      %3662 = vmatmul.f32.gmra.mxu0 %v3438
      %v3663 = vpop.f32.mrf.mxu0
      %v3664 = vadd.f32 %v3330, %v3663
      %3665 = vmatmul.f32.gmra.mxu0 %v3441
      %v3666 = vpop.f32.mrf.mxu0
      %v3667 = vadd.f32 %v3335, %v3666
      %3668 = vmatmul.f32.gmra.mxu0 %v3444
      %v3669 = vpop.f32.mrf.mxu0
      %v3670 = vadd.f32 %v3340, %v3669
      %3671 = vmatmul.f32.gmra.mxu0 %v3447
      %v3672 = vpop.f32.mrf.mxu0
      %v3673 = vadd.f32 %v3345, %v3672
      %3674 = vmatmul.f32.gmra.mxu0 %v3450
      %v3675 = vpop.f32.mrf.mxu0
      %v3676 = vadd.f32 %v3350, %v3675
      %3677 = vmatmul.f32.gmra.mxu0 %v3453
      %v3678 = vpop.f32.mrf.mxu0
      %v3679 = vadd.f32 %v3355, %v3678
      %3680 = vmatmul.f32.gmra.mxu0 %v3456
      %v3681 = vpop.f32.mrf.mxu0
      %v3682 = vadd.f32 %v3360, %v3681
      %3683 = vdwg.mxu0
      %v3684 = vmul.f32 %v3476, 0.70710677
      %v3685 = vmul.f32 %v3589, 0.70710677
      %v3686 = vmul.f32 %v3479, 0.70710677
      %v3687 = vmul.f32 %v3592, 0.70710677
      %v3688 = vmul.f32 %v3482, 0.70710677
      %v3689 = vmul.f32 %v3595, 0.70710677
      %v3690 = vmul.f32 %v3485, 0.70710677
      %v3691 = vmul.f32 %v3598, 0.70710677
      %v3692 = vmul.f32 %v3488, 0.70710677
      %v3693 = vmul.f32 %v3601, 0.70710677
      %v3694 = vmul.f32 %v3491, 0.70710677
      %v3695 = vmul.f32 %v3604, 0.70710677
      %v3696 = vmul.f32 %v3494, 0.70710677
      %v3697 = vmul.f32 %v3607, 0.70710677
      %v3698 = vmul.f32 %v3497, 0.70710677
      %v3699 = vmul.f32 %v3610, 0.70710677
      %v3700 = vmul.f32 %v3500, 0.70710677
      %v3701 = vmul.f32 %v3613, 0.70710677
      %v3702 = vmul.f32 %v3503, 0.70710677
      %v3703 = vmul.f32 %v3616, 0.70710677
      %v3704 = vmul.f32 %v3506, 0.70710677
      %v3705 = vmul.f32 %v3619, 0.70710677
      %v3706 = vmul.f32 %v3509, 0.70710677
      %v3707 = vmul.f32 %v3622, 0.70710677
      %v3708 = vmul.f32 %v3512, 0.70710677
      %v3709 = vmul.f32 %v3625, 0.70710677
      %v3710 = vmul.f32 %v3515, 0.70710677
      %v3711 = vmul.f32 %v3628, 0.70710677
      %v3712 = vmul.f32 %v3518, 0.70710677
      %v3713 = vmul.f32 %v3631, 0.70710677
      %v3714 = vmul.f32 %v3521, 0.70710677
      %v3715 = vmul.f32 %v3634, 0.70710677
      %v3716 = vmul.f32 %v3524, 0.70710677
      %v3717 = vmul.f32 %v3637, 0.70710677
      %v3718 = vmul.f32 %v3527, 0.70710677
      %v3719 = vmul.f32 %v3640, 0.70710677
      %v3720 = vmul.f32 %v3530, 0.70710677
      %v3721 = vmul.f32 %v3643, 0.70710677
      %v3722 = vmul.f32 %v3533, 0.70710677
      %v3723 = vmul.f32 %v3646, 0.70710677
      %v3724 = vmul.f32 %v3536, 0.70710677
      %v3725 = vmul.f32 %v3649, 0.70710677
      %v3726 = vmul.f32 %v3539, 0.70710677
      %v3727 = vmul.f32 %v3652, 0.70710677
      %v3728 = vmul.f32 %v3542, 0.70710677
      %v3729 = vmul.f32 %v3655, 0.70710677
      %v3730 = vmul.f32 %v3545, 0.70710677
      %v3731 = vmul.f32 %v3658, 0.70710677
      %v3732 = vmul.f32 %v3548, 0.70710677
      %v3733 = vmul.f32 %v3661, 0.70710677
      %v3734 = vmul.f32 %v3551, 0.70710677
      %v3735 = vmul.f32 %v3664, 0.70710677
      %v3736 = vmul.f32 %v3554, 0.70710677
      %v3737 = vmul.f32 %v3667, 0.70710677
      %v3738 = vmul.f32 %v3557, 0.70710677
      %v3739 = vmul.f32 %v3670, 0.70710677
      %v3740 = vmul.f32 %v3560, 0.70710677
      %v3741 = vmul.f32 %v3673, 0.70710677
      %v3742 = vmul.f32 %v3563, 0.70710677
      %v3743 = vmul.f32 %v3676, 0.70710677
      %v3744 = vmul.f32 %v3566, 0.70710677
      %v3745 = vmul.f32 %v3679, 0.70710677
      %v3746 = vmul.f32 %v3569, 0.70710677
      %v3747 = vmul.f32 %v3682, 0.70710677
      %v3748 = vand.u32 2147483647, %v3684
      %v3749 = vand.u32 2147483647, %v3685
      %v3750 = vand.u32 2147483647, %v3686
      %v3751 = vand.u32 2147483647, %v3687
      %v3752 = vand.u32 2147483647, %v3688
      %v3753 = vand.u32 2147483647, %v3689
      %v3754 = vand.u32 2147483647, %v3690
      %v3755 = vand.u32 2147483647, %v3691
      %v3756 = vand.u32 2147483647, %v3692
      %v3757 = vand.u32 2147483647, %v3693
      %v3758 = vand.u32 2147483647, %v3694
      %v3759 = vand.u32 2147483647, %v3695
      %v3760 = vand.u32 2147483647, %v3696
      %v3761 = vand.u32 2147483647, %v3697
      %v3762 = vand.u32 2147483647, %v3698
      %v3763 = vand.u32 2147483647, %v3699
      %v3764 = vand.u32 2147483647, %v3700
      %v3765 = vand.u32 2147483647, %v3701
      %v3766 = vand.u32 2147483647, %v3702
      %v3767 = vand.u32 2147483647, %v3703
      %v3768 = vand.u32 2147483647, %v3704
      %v3769 = vand.u32 2147483647, %v3705
      %v3770 = vand.u32 2147483647, %v3706
      %v3771 = vand.u32 2147483647, %v3707
      %v3772 = vand.u32 2147483647, %v3708
      %v3773 = vand.u32 2147483647, %v3709
      %v3774 = vand.u32 2147483647, %v3710
      %v3775 = vand.u32 2147483647, %v3711
      %v3776 = vand.u32 2147483647, %v3712
      %v3777 = vand.u32 2147483647, %v3713
      %v3778 = vand.u32 2147483647, %v3714
      %v3779 = vand.u32 2147483647, %v3715
      %v3780 = vand.u32 2147483647, %v3716
      %v3781 = vand.u32 2147483647, %v3717
      %v3782 = vand.u32 2147483647, %v3718
      %v3783 = vand.u32 2147483647, %v3719
      %v3784 = vand.u32 2147483647, %v3720
      %v3785 = vand.u32 2147483647, %v3721
      %v3786 = vand.u32 2147483647, %v3722
      %v3787 = vand.u32 2147483647, %v3723
      %v3788 = vand.u32 2147483647, %v3724
      %v3789 = vand.u32 2147483647, %v3725
      %v3790 = vand.u32 2147483647, %v3726
      %v3791 = vand.u32 2147483647, %v3727
      %v3792 = vand.u32 2147483647, %v3728
      %v3793 = vand.u32 2147483647, %v3729
      %v3794 = vand.u32 2147483647, %v3730
      %v3795 = vand.u32 2147483647, %v3731
      %v3796 = vand.u32 2147483647, %v3732
      %v3797 = vand.u32 2147483647, %v3733
      %v3798 = vand.u32 2147483647, %v3734
      %v3799 = vand.u32 2147483647, %v3735
      %v3800 = vand.u32 2147483647, %v3736
      %v3801 = vand.u32 2147483647, %v3737
      %v3802 = vand.u32 2147483647, %v3738
      %v3803 = vand.u32 2147483647, %v3739
      %v3804 = vand.u32 2147483647, %v3740
      %v3805 = vand.u32 2147483647, %v3741
      %v3806 = vand.u32 2147483647, %v3742
      %v3807 = vand.u32 2147483647, %v3743
      %v3808 = vand.u32 2147483647, %v3744
      %v3809 = vand.u32 2147483647, %v3745
      %v3810 = vand.u32 2147483647, %v3746
      %v3811 = vand.u32 2147483647, %v3747
      %v3812 = vmul.f32 %v3748, 0.3275911
      %v3813 = vmul.f32 %v3749, 0.3275911
      %v3814 = vmul.f32 %v3750, 0.3275911
      %v3815 = vmul.f32 %v3751, 0.3275911
      %v3816 = vmul.f32 %v3752, 0.3275911
      %v3817 = vmul.f32 %v3753, 0.3275911
      %v3818 = vmul.f32 %v3754, 0.3275911
      %v3819 = vmul.f32 %v3755, 0.3275911
      %v3820 = vmul.f32 %v3756, 0.3275911
      %v3821 = vmul.f32 %v3757, 0.3275911
      %v3822 = vmul.f32 %v3758, 0.3275911
      %v3823 = vmul.f32 %v3759, 0.3275911
      %v3824 = vmul.f32 %v3760, 0.3275911
      %v3825 = vmul.f32 %v3761, 0.3275911
      %v3826 = vmul.f32 %v3762, 0.3275911
      %v3827 = vmul.f32 %v3763, 0.3275911
      %v3828 = vmul.f32 %v3764, 0.3275911
      %v3829 = vmul.f32 %v3765, 0.3275911
      %v3830 = vmul.f32 %v3766, 0.3275911
      %v3831 = vmul.f32 %v3767, 0.3275911
      %v3832 = vmul.f32 %v3768, 0.3275911
      %v3833 = vmul.f32 %v3769, 0.3275911
      %v3834 = vmul.f32 %v3770, 0.3275911
      %v3835 = vmul.f32 %v3771, 0.3275911
      %v3836 = vmul.f32 %v3772, 0.3275911
      %v3837 = vmul.f32 %v3773, 0.3275911
      %v3838 = vmul.f32 %v3774, 0.3275911
      %v3839 = vmul.f32 %v3775, 0.3275911
      %v3840 = vmul.f32 %v3776, 0.3275911
      %v3841 = vmul.f32 %v3777, 0.3275911
      %v3842 = vmul.f32 %v3778, 0.3275911
      %v3843 = vmul.f32 %v3779, 0.3275911
      %v3844 = vmul.f32 %v3780, 0.3275911
      %v3845 = vmul.f32 %v3781, 0.3275911
      %v3846 = vmul.f32 %v3782, 0.3275911
      %v3847 = vmul.f32 %v3783, 0.3275911
      %v3848 = vmul.f32 %v3784, 0.3275911
      %v3849 = vmul.f32 %v3785, 0.3275911
      %v3850 = vmul.f32 %v3786, 0.3275911
      %v3851 = vmul.f32 %v3787, 0.3275911
      %v3852 = vmul.f32 %v3788, 0.3275911
      %v3853 = vmul.f32 %v3789, 0.3275911
      %v3854 = vmul.f32 %v3790, 0.3275911
      %v3855 = vmul.f32 %v3791, 0.3275911
      %v3856 = vmul.f32 %v3792, 0.3275911
      %v3857 = vmul.f32 %v3793, 0.3275911
      %v3858 = vmul.f32 %v3794, 0.3275911
      %v3859 = vmul.f32 %v3795, 0.3275911
      %v3860 = vmul.f32 %v3796, 0.3275911
      %v3861 = vmul.f32 %v3797, 0.3275911
      %v3862 = vmul.f32 %v3798, 0.3275911
      %v3863 = vmul.f32 %v3799, 0.3275911
      %v3864 = vmul.f32 %v3800, 0.3275911
      %v3865 = vmul.f32 %v3801, 0.3275911
      %v3866 = vmul.f32 %v3802, 0.3275911
      %v3867 = vmul.f32 %v3803, 0.3275911
      %v3868 = vmul.f32 %v3804, 0.3275911
      %v3869 = vmul.f32 %v3805, 0.3275911
      %v3870 = vmul.f32 %v3806, 0.3275911
      %v3871 = vmul.f32 %v3807, 0.3275911
      %v3872 = vmul.f32 %v3808, 0.3275911
      %v3873 = vmul.f32 %v3809, 0.3275911
      %v3874 = vmul.f32 %v3810, 0.3275911
      %v3875 = vmul.f32 %v3811, 0.3275911
      %v3876 = vadd.f32 %v3812, 1.0
      %v3877 = vadd.f32 %v3813, 1.0
      %v3878 = vadd.f32 %v3814, 1.0
      %v3879 = vadd.f32 %v3815, 1.0
      %v3880 = vadd.f32 %v3816, 1.0
      %v3881 = vadd.f32 %v3817, 1.0
      %v3882 = vadd.f32 %v3818, 1.0
      %v3883 = vadd.f32 %v3819, 1.0
      %v3884 = vadd.f32 %v3820, 1.0
      %v3885 = vadd.f32 %v3821, 1.0
      %v3886 = vadd.f32 %v3822, 1.0
      %v3887 = vadd.f32 %v3823, 1.0
      %v3888 = vadd.f32 %v3824, 1.0
      %v3889 = vadd.f32 %v3825, 1.0
      %v3890 = vadd.f32 %v3826, 1.0
      %v3891 = vadd.f32 %v3827, 1.0
      %v3892 = vadd.f32 %v3828, 1.0
      %v3893 = vadd.f32 %v3829, 1.0
      %v3894 = vadd.f32 %v3830, 1.0
      %v3895 = vadd.f32 %v3831, 1.0
      %v3896 = vadd.f32 %v3832, 1.0
      %v3897 = vadd.f32 %v3833, 1.0
      %v3898 = vadd.f32 %v3834, 1.0
      %v3899 = vadd.f32 %v3835, 1.0
      %v3900 = vadd.f32 %v3836, 1.0
      %v3901 = vadd.f32 %v3837, 1.0
      %v3902 = vadd.f32 %v3838, 1.0
      %v3903 = vadd.f32 %v3839, 1.0
      %v3904 = vadd.f32 %v3840, 1.0
      %v3905 = vadd.f32 %v3841, 1.0
      %v3906 = vadd.f32 %v3842, 1.0
      %v3907 = vadd.f32 %v3843, 1.0
      %v3908 = vadd.f32 %v3844, 1.0
      %v3909 = vadd.f32 %v3845, 1.0
      %v3910 = vadd.f32 %v3846, 1.0
      %v3911 = vadd.f32 %v3847, 1.0
      %v3912 = vadd.f32 %v3848, 1.0
      %v3913 = vadd.f32 %v3849, 1.0
      %v3914 = vadd.f32 %v3850, 1.0
      %v3915 = vadd.f32 %v3851, 1.0
      %v3916 = vadd.f32 %v3852, 1.0
      %v3917 = vadd.f32 %v3853, 1.0
      %v3918 = vadd.f32 %v3854, 1.0
      %v3919 = vadd.f32 %v3855, 1.0
      %v3920 = vadd.f32 %v3856, 1.0
      %v3921 = vadd.f32 %v3857, 1.0
      %v3922 = vadd.f32 %v3858, 1.0
      %v3923 = vadd.f32 %v3859, 1.0
      %v3924 = vadd.f32 %v3860, 1.0
      %v3925 = vadd.f32 %v3861, 1.0
      %v3926 = vadd.f32 %v3862, 1.0
      %v3927 = vadd.f32 %v3863, 1.0
      %v3928 = vadd.f32 %v3864, 1.0
      %v3929 = vadd.f32 %v3865, 1.0
      %v3930 = vadd.f32 %v3866, 1.0
      %v3931 = vadd.f32 %v3867, 1.0
      %v3932 = vadd.f32 %v3868, 1.0
      %v3933 = vadd.f32 %v3869, 1.0
      %v3934 = vadd.f32 %v3870, 1.0
      %v3935 = vadd.f32 %v3871, 1.0
      %v3936 = vadd.f32 %v3872, 1.0
      %v3937 = vadd.f32 %v3873, 1.0
      %v3938 = vadd.f32 %v3874, 1.0
      %v3939 = vadd.f32 %v3875, 1.0
      %v3940 = vrcp.pop %v3876
      %v3941 = vmul.f32 %v3876, %v3940
      %v3942 = vsub.f32 1.0, %v3941
      %v3943 = vmul.f32 %v3940, %v3942
      %v3944 = vadd.f32 %v3940, %v3943
      %vm3945 = vweird.f32 %v3876
      %vm3946 = vweird.f32 %v3940
      %vm3947 = vmor %vm3945, %vm3946
      %v3948 = vsel %vm3947, %v3940, %v3944
      %v3949 = vand.u32 2147483647, %v3876
      %vm3950 = vcmp.eq.f32.partialorder %v3949, 8.507059e+37
      %v3951 = vand.u32 %v3876, 2147483648
      %v3952 = vor.u32 1.1754944e-38, %v3951
      %v3953 = vsel %vm3950, %v3952, %v3948
      %v3954 = vmul.f32 1.0, %v3953
      %v3955 = vrcp.pop %v3877
      %v3956 = vmul.f32 %v3877, %v3955
      %v3957 = vsub.f32 1.0, %v3956
      %v3958 = vmul.f32 %v3955, %v3957
      %v3959 = vadd.f32 %v3955, %v3958
      %vm3960 = vweird.f32 %v3877
      %vm3961 = vweird.f32 %v3955
      %vm3962 = vmor %vm3960, %vm3961
      %v3963 = vsel %vm3962, %v3955, %v3959
      %v3964 = vand.u32 2147483647, %v3877
      %vm3965 = vcmp.eq.f32.partialorder %v3964, 8.507059e+37
      %v3966 = vand.u32 %v3877, 2147483648
      %v3967 = vor.u32 1.1754944e-38, %v3966
      %v3968 = vsel %vm3965, %v3967, %v3963
      %v3969 = vmul.f32 1.0, %v3968
      %v3970 = vrcp.pop %v3878
      %v3971 = vmul.f32 %v3878, %v3970
      %v3972 = vsub.f32 1.0, %v3971
      %v3973 = vmul.f32 %v3970, %v3972
      %v3974 = vadd.f32 %v3970, %v3973
      %vm3975 = vweird.f32 %v3878
      %vm3976 = vweird.f32 %v3970
      %vm3977 = vmor %vm3975, %vm3976
      %v3978 = vsel %vm3977, %v3970, %v3974
      %v3979 = vand.u32 2147483647, %v3878
      %vm3980 = vcmp.eq.f32.partialorder %v3979, 8.507059e+37
      %v3981 = vand.u32 %v3878, 2147483648
      %v3982 = vor.u32 1.1754944e-38, %v3981
      %v3983 = vsel %vm3980, %v3982, %v3978
      %v3984 = vmul.f32 1.0, %v3983
      %v3985 = vrcp.pop %v3879
      %v3986 = vmul.f32 %v3879, %v3985
      %v3987 = vsub.f32 1.0, %v3986
      %v3988 = vmul.f32 %v3985, %v3987
      %v3989 = vadd.f32 %v3985, %v3988
      %vm3990 = vweird.f32 %v3879
      %vm3991 = vweird.f32 %v3985
      %vm3992 = vmor %vm3990, %vm3991
      %v3993 = vsel %vm3992, %v3985, %v3989
      %v3994 = vand.u32 2147483647, %v3879
      %vm3995 = vcmp.eq.f32.partialorder %v3994, 8.507059e+37
      %v3996 = vand.u32 %v3879, 2147483648
      %v3997 = vor.u32 1.1754944e-38, %v3996
      %v3998 = vsel %vm3995, %v3997, %v3993
      %v3999 = vmul.f32 1.0, %v3998
      %v4000 = vrcp.pop %v3880
      %v4001 = vmul.f32 %v3880, %v4000
      %v4002 = vsub.f32 1.0, %v4001
      %v4003 = vmul.f32 %v4000, %v4002
      %v4004 = vadd.f32 %v4000, %v4003
      %vm4005 = vweird.f32 %v3880
      %vm4006 = vweird.f32 %v4000
      %vm4007 = vmor %vm4005, %vm4006
      %v4008 = vsel %vm4007, %v4000, %v4004
      %v4009 = vand.u32 2147483647, %v3880
      %vm4010 = vcmp.eq.f32.partialorder %v4009, 8.507059e+37
      %v4011 = vand.u32 %v3880, 2147483648
      %v4012 = vor.u32 1.1754944e-38, %v4011
      %v4013 = vsel %vm4010, %v4012, %v4008
      %v4014 = vmul.f32 1.0, %v4013
      %v4015 = vrcp.pop %v3881
      %v4016 = vmul.f32 %v3881, %v4015
      %v4017 = vsub.f32 1.0, %v4016
      %v4018 = vmul.f32 %v4015, %v4017
      %v4019 = vadd.f32 %v4015, %v4018
      %vm4020 = vweird.f32 %v3881
      %vm4021 = vweird.f32 %v4015
      %vm4022 = vmor %vm4020, %vm4021
      %v4023 = vsel %vm4022, %v4015, %v4019
      %v4024 = vand.u32 2147483647, %v3881
      %vm4025 = vcmp.eq.f32.partialorder %v4024, 8.507059e+37
      %v4026 = vand.u32 %v3881, 2147483648
      %v4027 = vor.u32 1.1754944e-38, %v4026
      %v4028 = vsel %vm4025, %v4027, %v4023
      %v4029 = vmul.f32 1.0, %v4028
      %v4030 = vrcp.pop %v3882
      %v4031 = vmul.f32 %v3882, %v4030
      %v4032 = vsub.f32 1.0, %v4031
      %v4033 = vmul.f32 %v4030, %v4032
      %v4034 = vadd.f32 %v4030, %v4033
      %vm4035 = vweird.f32 %v3882
      %vm4036 = vweird.f32 %v4030
      %vm4037 = vmor %vm4035, %vm4036
      %v4038 = vsel %vm4037, %v4030, %v4034
      %v4039 = vand.u32 2147483647, %v3882
      %vm4040 = vcmp.eq.f32.partialorder %v4039, 8.507059e+37
      %v4041 = vand.u32 %v3882, 2147483648
      %v4042 = vor.u32 1.1754944e-38, %v4041
      %v4043 = vsel %vm4040, %v4042, %v4038
      %v4044 = vmul.f32 1.0, %v4043
      %v4045 = vrcp.pop %v3883
      %v4046 = vmul.f32 %v3883, %v4045
      %v4047 = vsub.f32 1.0, %v4046
      %v4048 = vmul.f32 %v4045, %v4047
      %v4049 = vadd.f32 %v4045, %v4048
      %vm4050 = vweird.f32 %v3883
      %vm4051 = vweird.f32 %v4045
      %vm4052 = vmor %vm4050, %vm4051
      %v4053 = vsel %vm4052, %v4045, %v4049
      %v4054 = vand.u32 2147483647, %v3883
      %vm4055 = vcmp.eq.f32.partialorder %v4054, 8.507059e+37
      %v4056 = vand.u32 %v3883, 2147483648
      %v4057 = vor.u32 1.1754944e-38, %v4056
      %v4058 = vsel %vm4055, %v4057, %v4053
      %v4059 = vmul.f32 1.0, %v4058
      %v4060 = vrcp.pop %v3884
      %v4061 = vmul.f32 %v3884, %v4060
      %v4062 = vsub.f32 1.0, %v4061
      %v4063 = vmul.f32 %v4060, %v4062
      %v4064 = vadd.f32 %v4060, %v4063
      %vm4065 = vweird.f32 %v3884
      %vm4066 = vweird.f32 %v4060
      %vm4067 = vmor %vm4065, %vm4066
      %v4068 = vsel %vm4067, %v4060, %v4064
      %v4069 = vand.u32 2147483647, %v3884
      %vm4070 = vcmp.eq.f32.partialorder %v4069, 8.507059e+37
      %v4071 = vand.u32 %v3884, 2147483648
      %v4072 = vor.u32 1.1754944e-38, %v4071
      %v4073 = vsel %vm4070, %v4072, %v4068
      %v4074 = vmul.f32 1.0, %v4073
      %v4075 = vrcp.pop %v3885
      %v4076 = vmul.f32 %v3885, %v4075
      %v4077 = vsub.f32 1.0, %v4076
      %v4078 = vmul.f32 %v4075, %v4077
      %v4079 = vadd.f32 %v4075, %v4078
      %vm4080 = vweird.f32 %v3885
      %vm4081 = vweird.f32 %v4075
      %vm4082 = vmor %vm4080, %vm4081
      %v4083 = vsel %vm4082, %v4075, %v4079
      %v4084 = vand.u32 2147483647, %v3885
      %vm4085 = vcmp.eq.f32.partialorder %v4084, 8.507059e+37
      %v4086 = vand.u32 %v3885, 2147483648
      %v4087 = vor.u32 1.1754944e-38, %v4086
      %v4088 = vsel %vm4085, %v4087, %v4083
      %v4089 = vmul.f32 1.0, %v4088
      %v4090 = vrcp.pop %v3886
      %v4091 = vmul.f32 %v3886, %v4090
      %v4092 = vsub.f32 1.0, %v4091
      %v4093 = vmul.f32 %v4090, %v4092
      %v4094 = vadd.f32 %v4090, %v4093
      %vm4095 = vweird.f32 %v3886
      %vm4096 = vweird.f32 %v4090
      %vm4097 = vmor %vm4095, %vm4096
      %v4098 = vsel %vm4097, %v4090, %v4094
      %v4099 = vand.u32 2147483647, %v3886
      %vm4100 = vcmp.eq.f32.partialorder %v4099, 8.507059e+37
      %v4101 = vand.u32 %v3886, 2147483648
      %v4102 = vor.u32 1.1754944e-38, %v4101
      %v4103 = vsel %vm4100, %v4102, %v4098
      %v4104 = vmul.f32 1.0, %v4103
      %v4105 = vrcp.pop %v3887
      %v4106 = vmul.f32 %v3887, %v4105
      %v4107 = vsub.f32 1.0, %v4106
      %v4108 = vmul.f32 %v4105, %v4107
      %v4109 = vadd.f32 %v4105, %v4108
      %vm4110 = vweird.f32 %v3887
      %vm4111 = vweird.f32 %v4105
      %vm4112 = vmor %vm4110, %vm4111
      %v4113 = vsel %vm4112, %v4105, %v4109
      %v4114 = vand.u32 2147483647, %v3887
      %vm4115 = vcmp.eq.f32.partialorder %v4114, 8.507059e+37
      %v4116 = vand.u32 %v3887, 2147483648
      %v4117 = vor.u32 1.1754944e-38, %v4116
      %v4118 = vsel %vm4115, %v4117, %v4113
      %v4119 = vmul.f32 1.0, %v4118
      %v4120 = vrcp.pop %v3888
      %v4121 = vmul.f32 %v3888, %v4120
      %v4122 = vsub.f32 1.0, %v4121
      %v4123 = vmul.f32 %v4120, %v4122
      %v4124 = vadd.f32 %v4120, %v4123
      %vm4125 = vweird.f32 %v3888
      %vm4126 = vweird.f32 %v4120
      %vm4127 = vmor %vm4125, %vm4126
      %v4128 = vsel %vm4127, %v4120, %v4124
      %v4129 = vand.u32 2147483647, %v3888
      %vm4130 = vcmp.eq.f32.partialorder %v4129, 8.507059e+37
      %v4131 = vand.u32 %v3888, 2147483648
      %v4132 = vor.u32 1.1754944e-38, %v4131
      %v4133 = vsel %vm4130, %v4132, %v4128
      %v4134 = vmul.f32 1.0, %v4133
      %v4135 = vrcp.pop %v3889
      %v4136 = vmul.f32 %v3889, %v4135
      %v4137 = vsub.f32 1.0, %v4136
      %v4138 = vmul.f32 %v4135, %v4137
      %v4139 = vadd.f32 %v4135, %v4138
      %vm4140 = vweird.f32 %v3889
      %vm4141 = vweird.f32 %v4135
      %vm4142 = vmor %vm4140, %vm4141
      %v4143 = vsel %vm4142, %v4135, %v4139
      %v4144 = vand.u32 2147483647, %v3889
      %vm4145 = vcmp.eq.f32.partialorder %v4144, 8.507059e+37
      %v4146 = vand.u32 %v3889, 2147483648
      %v4147 = vor.u32 1.1754944e-38, %v4146
      %v4148 = vsel %vm4145, %v4147, %v4143
      %v4149 = vmul.f32 1.0, %v4148
      %v4150 = vrcp.pop %v3890
      %v4151 = vmul.f32 %v3890, %v4150
      %v4152 = vsub.f32 1.0, %v4151
      %v4153 = vmul.f32 %v4150, %v4152
      %v4154 = vadd.f32 %v4150, %v4153
      %vm4155 = vweird.f32 %v3890
      %vm4156 = vweird.f32 %v4150
      %vm4157 = vmor %vm4155, %vm4156
      %v4158 = vsel %vm4157, %v4150, %v4154
      %v4159 = vand.u32 2147483647, %v3890
      %vm4160 = vcmp.eq.f32.partialorder %v4159, 8.507059e+37
      %v4161 = vand.u32 %v3890, 2147483648
      %v4162 = vor.u32 1.1754944e-38, %v4161
      %v4163 = vsel %vm4160, %v4162, %v4158
      %v4164 = vmul.f32 1.0, %v4163
      %v4165 = vrcp.pop %v3891
      %v4166 = vmul.f32 %v3891, %v4165
      %v4167 = vsub.f32 1.0, %v4166
      %v4168 = vmul.f32 %v4165, %v4167
      %v4169 = vadd.f32 %v4165, %v4168
      %vm4170 = vweird.f32 %v3891
      %vm4171 = vweird.f32 %v4165
      %vm4172 = vmor %vm4170, %vm4171
      %v4173 = vsel %vm4172, %v4165, %v4169
      %v4174 = vand.u32 2147483647, %v3891
      %vm4175 = vcmp.eq.f32.partialorder %v4174, 8.507059e+37
      %v4176 = vand.u32 %v3891, 2147483648
      %v4177 = vor.u32 1.1754944e-38, %v4176
      %v4178 = vsel %vm4175, %v4177, %v4173
      %v4179 = vmul.f32 1.0, %v4178
      %v4180 = vrcp.pop %v3892
      %v4181 = vmul.f32 %v3892, %v4180
      %v4182 = vsub.f32 1.0, %v4181
      %v4183 = vmul.f32 %v4180, %v4182
      %v4184 = vadd.f32 %v4180, %v4183
      %vm4185 = vweird.f32 %v3892
      %vm4186 = vweird.f32 %v4180
      %vm4187 = vmor %vm4185, %vm4186
      %v4188 = vsel %vm4187, %v4180, %v4184
      %v4189 = vand.u32 2147483647, %v3892
      %vm4190 = vcmp.eq.f32.partialorder %v4189, 8.507059e+37
      %v4191 = vand.u32 %v3892, 2147483648
      %v4192 = vor.u32 1.1754944e-38, %v4191
      %v4193 = vsel %vm4190, %v4192, %v4188
      %v4194 = vmul.f32 1.0, %v4193
      %v4195 = vrcp.pop %v3893
      %v4196 = vmul.f32 %v3893, %v4195
      %v4197 = vsub.f32 1.0, %v4196
      %v4198 = vmul.f32 %v4195, %v4197
      %v4199 = vadd.f32 %v4195, %v4198
      %vm4200 = vweird.f32 %v3893
      %vm4201 = vweird.f32 %v4195
      %vm4202 = vmor %vm4200, %vm4201
      %v4203 = vsel %vm4202, %v4195, %v4199
      %v4204 = vand.u32 2147483647, %v3893
      %vm4205 = vcmp.eq.f32.partialorder %v4204, 8.507059e+37
      %v4206 = vand.u32 %v3893, 2147483648
      %v4207 = vor.u32 1.1754944e-38, %v4206
      %v4208 = vsel %vm4205, %v4207, %v4203
      %v4209 = vmul.f32 1.0, %v4208
      %v4210 = vrcp.pop %v3894
      %v4211 = vmul.f32 %v3894, %v4210
      %v4212 = vsub.f32 1.0, %v4211
      %v4213 = vmul.f32 %v4210, %v4212
      %v4214 = vadd.f32 %v4210, %v4213
      %vm4215 = vweird.f32 %v3894
      %vm4216 = vweird.f32 %v4210
      %vm4217 = vmor %vm4215, %vm4216
      %v4218 = vsel %vm4217, %v4210, %v4214
      %v4219 = vand.u32 2147483647, %v3894
      %vm4220 = vcmp.eq.f32.partialorder %v4219, 8.507059e+37
      %v4221 = vand.u32 %v3894, 2147483648
      %v4222 = vor.u32 1.1754944e-38, %v4221
      %v4223 = vsel %vm4220, %v4222, %v4218
      %v4224 = vmul.f32 1.0, %v4223
      %v4225 = vrcp.pop %v3895
      %v4226 = vmul.f32 %v3895, %v4225
      %v4227 = vsub.f32 1.0, %v4226
      %v4228 = vmul.f32 %v4225, %v4227
      %v4229 = vadd.f32 %v4225, %v4228
      %vm4230 = vweird.f32 %v3895
      %vm4231 = vweird.f32 %v4225
      %vm4232 = vmor %vm4230, %vm4231
      %v4233 = vsel %vm4232, %v4225, %v4229
      %v4234 = vand.u32 2147483647, %v3895
      %vm4235 = vcmp.eq.f32.partialorder %v4234, 8.507059e+37
      %v4236 = vand.u32 %v3895, 2147483648
      %v4237 = vor.u32 1.1754944e-38, %v4236
      %v4238 = vsel %vm4235, %v4237, %v4233
      %v4239 = vmul.f32 1.0, %v4238
      %v4240 = vrcp.pop %v3896
      %v4241 = vmul.f32 %v3896, %v4240
      %v4242 = vsub.f32 1.0, %v4241
      %v4243 = vmul.f32 %v4240, %v4242
      %v4244 = vadd.f32 %v4240, %v4243
      %vm4245 = vweird.f32 %v3896
      %vm4246 = vweird.f32 %v4240
      %vm4247 = vmor %vm4245, %vm4246
      %v4248 = vsel %vm4247, %v4240, %v4244
      %v4249 = vand.u32 2147483647, %v3896
      %vm4250 = vcmp.eq.f32.partialorder %v4249, 8.507059e+37
      %v4251 = vand.u32 %v3896, 2147483648
      %v4252 = vor.u32 1.1754944e-38, %v4251
      %v4253 = vsel %vm4250, %v4252, %v4248
      %v4254 = vmul.f32 1.0, %v4253
      %v4255 = vrcp.pop %v3897
      %v4256 = vmul.f32 %v3897, %v4255
      %v4257 = vsub.f32 1.0, %v4256
      %v4258 = vmul.f32 %v4255, %v4257
      %v4259 = vadd.f32 %v4255, %v4258
      %vm4260 = vweird.f32 %v3897
      %vm4261 = vweird.f32 %v4255
      %vm4262 = vmor %vm4260, %vm4261
      %v4263 = vsel %vm4262, %v4255, %v4259
      %v4264 = vand.u32 2147483647, %v3897
      %vm4265 = vcmp.eq.f32.partialorder %v4264, 8.507059e+37
      %v4266 = vand.u32 %v3897, 2147483648
      %v4267 = vor.u32 1.1754944e-38, %v4266
      %v4268 = vsel %vm4265, %v4267, %v4263
      %v4269 = vmul.f32 1.0, %v4268
      %v4270 = vrcp.pop %v3898
      %v4271 = vmul.f32 %v3898, %v4270
      %v4272 = vsub.f32 1.0, %v4271
      %v4273 = vmul.f32 %v4270, %v4272
      %v4274 = vadd.f32 %v4270, %v4273
      %vm4275 = vweird.f32 %v3898
      %vm4276 = vweird.f32 %v4270
      %vm4277 = vmor %vm4275, %vm4276
      %v4278 = vsel %vm4277, %v4270, %v4274
      %v4279 = vand.u32 2147483647, %v3898
      %vm4280 = vcmp.eq.f32.partialorder %v4279, 8.507059e+37
      %v4281 = vand.u32 %v3898, 2147483648
      %v4282 = vor.u32 1.1754944e-38, %v4281
      %v4283 = vsel %vm4280, %v4282, %v4278
      %v4284 = vmul.f32 1.0, %v4283
      %v4285 = vrcp.pop %v3899
      %v4286 = vmul.f32 %v3899, %v4285
      %v4287 = vsub.f32 1.0, %v4286
      %v4288 = vmul.f32 %v4285, %v4287
      %v4289 = vadd.f32 %v4285, %v4288
      %vm4290 = vweird.f32 %v3899
      %vm4291 = vweird.f32 %v4285
      %vm4292 = vmor %vm4290, %vm4291
      %v4293 = vsel %vm4292, %v4285, %v4289
      %v4294 = vand.u32 2147483647, %v3899
      %vm4295 = vcmp.eq.f32.partialorder %v4294, 8.507059e+37
      %v4296 = vand.u32 %v3899, 2147483648
      %v4297 = vor.u32 1.1754944e-38, %v4296
      %v4298 = vsel %vm4295, %v4297, %v4293
      %v4299 = vmul.f32 1.0, %v4298
      %v4300 = vrcp.pop %v3900
      %v4301 = vmul.f32 %v3900, %v4300
      %v4302 = vsub.f32 1.0, %v4301
      %v4303 = vmul.f32 %v4300, %v4302
      %v4304 = vadd.f32 %v4300, %v4303
      %vm4305 = vweird.f32 %v3900
      %vm4306 = vweird.f32 %v4300
      %vm4307 = vmor %vm4305, %vm4306
      %v4308 = vsel %vm4307, %v4300, %v4304
      %v4309 = vand.u32 2147483647, %v3900
      %vm4310 = vcmp.eq.f32.partialorder %v4309, 8.507059e+37
      %v4311 = vand.u32 %v3900, 2147483648
      %v4312 = vor.u32 1.1754944e-38, %v4311
      %v4313 = vsel %vm4310, %v4312, %v4308
      %v4314 = vmul.f32 1.0, %v4313
      %v4315 = vrcp.pop %v3901
      %v4316 = vmul.f32 %v3901, %v4315
      %v4317 = vsub.f32 1.0, %v4316
      %v4318 = vmul.f32 %v4315, %v4317
      %v4319 = vadd.f32 %v4315, %v4318
      %vm4320 = vweird.f32 %v3901
      %vm4321 = vweird.f32 %v4315
      %vm4322 = vmor %vm4320, %vm4321
      %v4323 = vsel %vm4322, %v4315, %v4319
      %v4324 = vand.u32 2147483647, %v3901
      %vm4325 = vcmp.eq.f32.partialorder %v4324, 8.507059e+37
      %v4326 = vand.u32 %v3901, 2147483648
      %v4327 = vor.u32 1.1754944e-38, %v4326
      %v4328 = vsel %vm4325, %v4327, %v4323
      %v4329 = vmul.f32 1.0, %v4328
      %v4330 = vrcp.pop %v3902
      %v4331 = vmul.f32 %v3902, %v4330
      %v4332 = vsub.f32 1.0, %v4331
      %v4333 = vmul.f32 %v4330, %v4332
      %v4334 = vadd.f32 %v4330, %v4333
      %vm4335 = vweird.f32 %v3902
      %vm4336 = vweird.f32 %v4330
      %vm4337 = vmor %vm4335, %vm4336
      %v4338 = vsel %vm4337, %v4330, %v4334
      %v4339 = vand.u32 2147483647, %v3902
      %vm4340 = vcmp.eq.f32.partialorder %v4339, 8.507059e+37
      %v4341 = vand.u32 %v3902, 2147483648
      %v4342 = vor.u32 1.1754944e-38, %v4341
      %v4343 = vsel %vm4340, %v4342, %v4338
      %v4344 = vmul.f32 1.0, %v4343
      %v4345 = vrcp.pop %v3903
      %v4346 = vmul.f32 %v3903, %v4345
      %v4347 = vsub.f32 1.0, %v4346
      %v4348 = vmul.f32 %v4345, %v4347
      %v4349 = vadd.f32 %v4345, %v4348
      %vm4350 = vweird.f32 %v3903
      %vm4351 = vweird.f32 %v4345
      %vm4352 = vmor %vm4350, %vm4351
      %v4353 = vsel %vm4352, %v4345, %v4349
      %v4354 = vand.u32 2147483647, %v3903
      %vm4355 = vcmp.eq.f32.partialorder %v4354, 8.507059e+37
      %v4356 = vand.u32 %v3903, 2147483648
      %v4357 = vor.u32 1.1754944e-38, %v4356
      %v4358 = vsel %vm4355, %v4357, %v4353
      %v4359 = vmul.f32 1.0, %v4358
      %v4360 = vrcp.pop %v3904
      %v4361 = vmul.f32 %v3904, %v4360
      %v4362 = vsub.f32 1.0, %v4361
      %v4363 = vmul.f32 %v4360, %v4362
      %v4364 = vadd.f32 %v4360, %v4363
      %vm4365 = vweird.f32 %v3904
      %vm4366 = vweird.f32 %v4360
      %vm4367 = vmor %vm4365, %vm4366
      %v4368 = vsel %vm4367, %v4360, %v4364
      %v4369 = vand.u32 2147483647, %v3904
      %vm4370 = vcmp.eq.f32.partialorder %v4369, 8.507059e+37
      %v4371 = vand.u32 %v3904, 2147483648
      %v4372 = vor.u32 1.1754944e-38, %v4371
      %v4373 = vsel %vm4370, %v4372, %v4368
      %v4374 = vmul.f32 1.0, %v4373
      %v4375 = vrcp.pop %v3905
      %v4376 = vmul.f32 %v3905, %v4375
      %v4377 = vsub.f32 1.0, %v4376
      %v4378 = vmul.f32 %v4375, %v4377
      %v4379 = vadd.f32 %v4375, %v4378
      %vm4380 = vweird.f32 %v3905
      %vm4381 = vweird.f32 %v4375
      %vm4382 = vmor %vm4380, %vm4381
      %v4383 = vsel %vm4382, %v4375, %v4379
      %v4384 = vand.u32 2147483647, %v3905
      %vm4385 = vcmp.eq.f32.partialorder %v4384, 8.507059e+37
      %v4386 = vand.u32 %v3905, 2147483648
      %v4387 = vor.u32 1.1754944e-38, %v4386
      %v4388 = vsel %vm4385, %v4387, %v4383
      %v4389 = vmul.f32 1.0, %v4388
      %v4390 = vrcp.pop %v3906
      %v4391 = vmul.f32 %v3906, %v4390
      %v4392 = vsub.f32 1.0, %v4391
      %v4393 = vmul.f32 %v4390, %v4392
      %v4394 = vadd.f32 %v4390, %v4393
      %vm4395 = vweird.f32 %v3906
      %vm4396 = vweird.f32 %v4390
      %vm4397 = vmor %vm4395, %vm4396
      %v4398 = vsel %vm4397, %v4390, %v4394
      %v4399 = vand.u32 2147483647, %v3906
      %vm4400 = vcmp.eq.f32.partialorder %v4399, 8.507059e+37
      %v4401 = vand.u32 %v3906, 2147483648
      %v4402 = vor.u32 1.1754944e-38, %v4401
      %v4403 = vsel %vm4400, %v4402, %v4398
      %v4404 = vmul.f32 1.0, %v4403
      %v4405 = vrcp.pop %v3907
      %v4406 = vmul.f32 %v3907, %v4405
      %v4407 = vsub.f32 1.0, %v4406
      %v4408 = vmul.f32 %v4405, %v4407
      %v4409 = vadd.f32 %v4405, %v4408
      %vm4410 = vweird.f32 %v3907
      %vm4411 = vweird.f32 %v4405
      %vm4412 = vmor %vm4410, %vm4411
      %v4413 = vsel %vm4412, %v4405, %v4409
      %v4414 = vand.u32 2147483647, %v3907
      %vm4415 = vcmp.eq.f32.partialorder %v4414, 8.507059e+37
      %v4416 = vand.u32 %v3907, 2147483648
      %v4417 = vor.u32 1.1754944e-38, %v4416
      %v4418 = vsel %vm4415, %v4417, %v4413
      %v4419 = vmul.f32 1.0, %v4418
      %v4420 = vrcp.pop %v3908
      %v4421 = vmul.f32 %v3908, %v4420
      %v4422 = vsub.f32 1.0, %v4421
      %v4423 = vmul.f32 %v4420, %v4422
      %v4424 = vadd.f32 %v4420, %v4423
      %vm4425 = vweird.f32 %v3908
      %vm4426 = vweird.f32 %v4420
      %vm4427 = vmor %vm4425, %vm4426
      %v4428 = vsel %vm4427, %v4420, %v4424
      %v4429 = vand.u32 2147483647, %v3908
      %vm4430 = vcmp.eq.f32.partialorder %v4429, 8.507059e+37
      %v4431 = vand.u32 %v3908, 2147483648
      %v4432 = vor.u32 1.1754944e-38, %v4431
      %v4433 = vsel %vm4430, %v4432, %v4428
      %v4434 = vmul.f32 1.0, %v4433
      %v4435 = vrcp.pop %v3909
      %v4436 = vmul.f32 %v3909, %v4435
      %v4437 = vsub.f32 1.0, %v4436
      %v4438 = vmul.f32 %v4435, %v4437
      %v4439 = vadd.f32 %v4435, %v4438
      %vm4440 = vweird.f32 %v3909
      %vm4441 = vweird.f32 %v4435
      %vm4442 = vmor %vm4440, %vm4441
      %v4443 = vsel %vm4442, %v4435, %v4439
      %v4444 = vand.u32 2147483647, %v3909
      %vm4445 = vcmp.eq.f32.partialorder %v4444, 8.507059e+37
      %v4446 = vand.u32 %v3909, 2147483648
      %v4447 = vor.u32 1.1754944e-38, %v4446
      %v4448 = vsel %vm4445, %v4447, %v4443
      %v4449 = vmul.f32 1.0, %v4448
      %v4450 = vrcp.pop %v3910
      %v4451 = vmul.f32 %v3910, %v4450
      %v4452 = vsub.f32 1.0, %v4451
      %v4453 = vmul.f32 %v4450, %v4452
      %v4454 = vadd.f32 %v4450, %v4453
      %vm4455 = vweird.f32 %v3910
      %vm4456 = vweird.f32 %v4450
      %vm4457 = vmor %vm4455, %vm4456
      %v4458 = vsel %vm4457, %v4450, %v4454
      %v4459 = vand.u32 2147483647, %v3910
      %vm4460 = vcmp.eq.f32.partialorder %v4459, 8.507059e+37
      %v4461 = vand.u32 %v3910, 2147483648
      %v4462 = vor.u32 1.1754944e-38, %v4461
      %v4463 = vsel %vm4460, %v4462, %v4458
      %v4464 = vmul.f32 1.0, %v4463
      %v4465 = vrcp.pop %v3911
      %v4466 = vmul.f32 %v3911, %v4465
      %v4467 = vsub.f32 1.0, %v4466
      %v4468 = vmul.f32 %v4465, %v4467
      %v4469 = vadd.f32 %v4465, %v4468
      %vm4470 = vweird.f32 %v3911
      %vm4471 = vweird.f32 %v4465
      %vm4472 = vmor %vm4470, %vm4471
      %v4473 = vsel %vm4472, %v4465, %v4469
      %v4474 = vand.u32 2147483647, %v3911
      %vm4475 = vcmp.eq.f32.partialorder %v4474, 8.507059e+37
      %v4476 = vand.u32 %v3911, 2147483648
      %v4477 = vor.u32 1.1754944e-38, %v4476
      %v4478 = vsel %vm4475, %v4477, %v4473
      %v4479 = vmul.f32 1.0, %v4478
      %v4480 = vrcp.pop %v3912
      %v4481 = vmul.f32 %v3912, %v4480
      %v4482 = vsub.f32 1.0, %v4481
      %v4483 = vmul.f32 %v4480, %v4482
      %v4484 = vadd.f32 %v4480, %v4483
      %vm4485 = vweird.f32 %v3912
      %vm4486 = vweird.f32 %v4480
      %vm4487 = vmor %vm4485, %vm4486
      %v4488 = vsel %vm4487, %v4480, %v4484
      %v4489 = vand.u32 2147483647, %v3912
      %vm4490 = vcmp.eq.f32.partialorder %v4489, 8.507059e+37
      %v4491 = vand.u32 %v3912, 2147483648
      %v4492 = vor.u32 1.1754944e-38, %v4491
      %v4493 = vsel %vm4490, %v4492, %v4488
      %v4494 = vmul.f32 1.0, %v4493
      %v4495 = vrcp.pop %v3913
      %v4496 = vmul.f32 %v3913, %v4495
      %v4497 = vsub.f32 1.0, %v4496
      %v4498 = vmul.f32 %v4495, %v4497
      %v4499 = vadd.f32 %v4495, %v4498
      %vm4500 = vweird.f32 %v3913
      %vm4501 = vweird.f32 %v4495
      %vm4502 = vmor %vm4500, %vm4501
      %v4503 = vsel %vm4502, %v4495, %v4499
      %v4504 = vand.u32 2147483647, %v3913
      %vm4505 = vcmp.eq.f32.partialorder %v4504, 8.507059e+37
      %v4506 = vand.u32 %v3913, 2147483648
      %v4507 = vor.u32 1.1754944e-38, %v4506
      %v4508 = vsel %vm4505, %v4507, %v4503
      %v4509 = vmul.f32 1.0, %v4508
      %v4510 = vrcp.pop %v3914
      %v4511 = vmul.f32 %v3914, %v4510
      %v4512 = vsub.f32 1.0, %v4511
      %v4513 = vmul.f32 %v4510, %v4512
      %v4514 = vadd.f32 %v4510, %v4513
      %vm4515 = vweird.f32 %v3914
      %vm4516 = vweird.f32 %v4510
      %vm4517 = vmor %vm4515, %vm4516
      %v4518 = vsel %vm4517, %v4510, %v4514
      %v4519 = vand.u32 2147483647, %v3914
      %vm4520 = vcmp.eq.f32.partialorder %v4519, 8.507059e+37
      %v4521 = vand.u32 %v3914, 2147483648
      %v4522 = vor.u32 1.1754944e-38, %v4521
      %v4523 = vsel %vm4520, %v4522, %v4518
      %v4524 = vmul.f32 1.0, %v4523
      %v4525 = vrcp.pop %v3915
      %v4526 = vmul.f32 %v3915, %v4525
      %v4527 = vsub.f32 1.0, %v4526
      %v4528 = vmul.f32 %v4525, %v4527
      %v4529 = vadd.f32 %v4525, %v4528
      %vm4530 = vweird.f32 %v3915
      %vm4531 = vweird.f32 %v4525
      %vm4532 = vmor %vm4530, %vm4531
      %v4533 = vsel %vm4532, %v4525, %v4529
      %v4534 = vand.u32 2147483647, %v3915
      %vm4535 = vcmp.eq.f32.partialorder %v4534, 8.507059e+37
      %v4536 = vand.u32 %v3915, 2147483648
      %v4537 = vor.u32 1.1754944e-38, %v4536
      %v4538 = vsel %vm4535, %v4537, %v4533
      %v4539 = vmul.f32 1.0, %v4538
      %v4540 = vrcp.pop %v3916
      %v4541 = vmul.f32 %v3916, %v4540
      %v4542 = vsub.f32 1.0, %v4541
      %v4543 = vmul.f32 %v4540, %v4542
      %v4544 = vadd.f32 %v4540, %v4543
      %vm4545 = vweird.f32 %v3916
      %vm4546 = vweird.f32 %v4540
      %vm4547 = vmor %vm4545, %vm4546
      %v4548 = vsel %vm4547, %v4540, %v4544
      %v4549 = vand.u32 2147483647, %v3916
      %vm4550 = vcmp.eq.f32.partialorder %v4549, 8.507059e+37
      %v4551 = vand.u32 %v3916, 2147483648
      %v4552 = vor.u32 1.1754944e-38, %v4551
      %v4553 = vsel %vm4550, %v4552, %v4548
      %v4554 = vmul.f32 1.0, %v4553
      %v4555 = vrcp.pop %v3917
      %v4556 = vmul.f32 %v3917, %v4555
      %v4557 = vsub.f32 1.0, %v4556
      %v4558 = vmul.f32 %v4555, %v4557
      %v4559 = vadd.f32 %v4555, %v4558
      %vm4560 = vweird.f32 %v3917
      %vm4561 = vweird.f32 %v4555
      %vm4562 = vmor %vm4560, %vm4561
      %v4563 = vsel %vm4562, %v4555, %v4559
      %v4564 = vand.u32 2147483647, %v3917
      %vm4565 = vcmp.eq.f32.partialorder %v4564, 8.507059e+37
      %v4566 = vand.u32 %v3917, 2147483648
      %v4567 = vor.u32 1.1754944e-38, %v4566
      %v4568 = vsel %vm4565, %v4567, %v4563
      %v4569 = vmul.f32 1.0, %v4568
      %v4570 = vrcp.pop %v3918
      %v4571 = vmul.f32 %v3918, %v4570
      %v4572 = vsub.f32 1.0, %v4571
      %v4573 = vmul.f32 %v4570, %v4572
      %v4574 = vadd.f32 %v4570, %v4573
      %vm4575 = vweird.f32 %v3918
      %vm4576 = vweird.f32 %v4570
      %vm4577 = vmor %vm4575, %vm4576
      %v4578 = vsel %vm4577, %v4570, %v4574
      %v4579 = vand.u32 2147483647, %v3918
      %vm4580 = vcmp.eq.f32.partialorder %v4579, 8.507059e+37
      %v4581 = vand.u32 %v3918, 2147483648
      %v4582 = vor.u32 1.1754944e-38, %v4581
      %v4583 = vsel %vm4580, %v4582, %v4578
      %v4584 = vmul.f32 1.0, %v4583
      %v4585 = vrcp.pop %v3919
      %v4586 = vmul.f32 %v3919, %v4585
      %v4587 = vsub.f32 1.0, %v4586
      %v4588 = vmul.f32 %v4585, %v4587
      %v4589 = vadd.f32 %v4585, %v4588
      %vm4590 = vweird.f32 %v3919
      %vm4591 = vweird.f32 %v4585
      %vm4592 = vmor %vm4590, %vm4591
      %v4593 = vsel %vm4592, %v4585, %v4589
      %v4594 = vand.u32 2147483647, %v3919
      %vm4595 = vcmp.eq.f32.partialorder %v4594, 8.507059e+37
      %v4596 = vand.u32 %v3919, 2147483648
      %v4597 = vor.u32 1.1754944e-38, %v4596
      %v4598 = vsel %vm4595, %v4597, %v4593
      %v4599 = vmul.f32 1.0, %v4598
      %v4600 = vrcp.pop %v3920
      %v4601 = vmul.f32 %v3920, %v4600
      %v4602 = vsub.f32 1.0, %v4601
      %v4603 = vmul.f32 %v4600, %v4602
      %v4604 = vadd.f32 %v4600, %v4603
      %vm4605 = vweird.f32 %v3920
      %vm4606 = vweird.f32 %v4600
      %vm4607 = vmor %vm4605, %vm4606
      %v4608 = vsel %vm4607, %v4600, %v4604
      %v4609 = vand.u32 2147483647, %v3920
      %vm4610 = vcmp.eq.f32.partialorder %v4609, 8.507059e+37
      %v4611 = vand.u32 %v3920, 2147483648
      %v4612 = vor.u32 1.1754944e-38, %v4611
      %v4613 = vsel %vm4610, %v4612, %v4608
      %v4614 = vmul.f32 1.0, %v4613
      %v4615 = vrcp.pop %v3921
      %v4616 = vmul.f32 %v3921, %v4615
      %v4617 = vsub.f32 1.0, %v4616
      %v4618 = vmul.f32 %v4615, %v4617
      %v4619 = vadd.f32 %v4615, %v4618
      %vm4620 = vweird.f32 %v3921
      %vm4621 = vweird.f32 %v4615
      %vm4622 = vmor %vm4620, %vm4621
      %v4623 = vsel %vm4622, %v4615, %v4619
      %v4624 = vand.u32 2147483647, %v3921
      %vm4625 = vcmp.eq.f32.partialorder %v4624, 8.507059e+37
      %v4626 = vand.u32 %v3921, 2147483648
      %v4627 = vor.u32 1.1754944e-38, %v4626
      %v4628 = vsel %vm4625, %v4627, %v4623
      %v4629 = vmul.f32 1.0, %v4628
      %v4630 = vrcp.pop %v3922
      %v4631 = vmul.f32 %v3922, %v4630
      %v4632 = vsub.f32 1.0, %v4631
      %v4633 = vmul.f32 %v4630, %v4632
      %v4634 = vadd.f32 %v4630, %v4633
      %vm4635 = vweird.f32 %v3922
      %vm4636 = vweird.f32 %v4630
      %vm4637 = vmor %vm4635, %vm4636
      %v4638 = vsel %vm4637, %v4630, %v4634
      %v4639 = vand.u32 2147483647, %v3922
      %vm4640 = vcmp.eq.f32.partialorder %v4639, 8.507059e+37
      %v4641 = vand.u32 %v3922, 2147483648
      %v4642 = vor.u32 1.1754944e-38, %v4641
      %v4643 = vsel %vm4640, %v4642, %v4638
      %v4644 = vmul.f32 1.0, %v4643
      %v4645 = vrcp.pop %v3923
      %v4646 = vmul.f32 %v3923, %v4645
      %v4647 = vsub.f32 1.0, %v4646
      %v4648 = vmul.f32 %v4645, %v4647
      %v4649 = vadd.f32 %v4645, %v4648
      %vm4650 = vweird.f32 %v3923
      %vm4651 = vweird.f32 %v4645
      %vm4652 = vmor %vm4650, %vm4651
      %v4653 = vsel %vm4652, %v4645, %v4649
      %v4654 = vand.u32 2147483647, %v3923
      %vm4655 = vcmp.eq.f32.partialorder %v4654, 8.507059e+37
      %v4656 = vand.u32 %v3923, 2147483648
      %v4657 = vor.u32 1.1754944e-38, %v4656
      %v4658 = vsel %vm4655, %v4657, %v4653
      %v4659 = vmul.f32 1.0, %v4658
      %v4660 = vrcp.pop %v3924
      %v4661 = vmul.f32 %v3924, %v4660
      %v4662 = vsub.f32 1.0, %v4661
      %v4663 = vmul.f32 %v4660, %v4662
      %v4664 = vadd.f32 %v4660, %v4663
      %vm4665 = vweird.f32 %v3924
      %vm4666 = vweird.f32 %v4660
      %vm4667 = vmor %vm4665, %vm4666
      %v4668 = vsel %vm4667, %v4660, %v4664
      %v4669 = vand.u32 2147483647, %v3924
      %vm4670 = vcmp.eq.f32.partialorder %v4669, 8.507059e+37
      %v4671 = vand.u32 %v3924, 2147483648
      %v4672 = vor.u32 1.1754944e-38, %v4671
      %v4673 = vsel %vm4670, %v4672, %v4668
      %v4674 = vmul.f32 1.0, %v4673
      %v4675 = vrcp.pop %v3925
      %v4676 = vmul.f32 %v3925, %v4675
      %v4677 = vsub.f32 1.0, %v4676
      %v4678 = vmul.f32 %v4675, %v4677
      %v4679 = vadd.f32 %v4675, %v4678
      %vm4680 = vweird.f32 %v3925
      %vm4681 = vweird.f32 %v4675
      %vm4682 = vmor %vm4680, %vm4681
      %v4683 = vsel %vm4682, %v4675, %v4679
      %v4684 = vand.u32 2147483647, %v3925
      %vm4685 = vcmp.eq.f32.partialorder %v4684, 8.507059e+37
      %v4686 = vand.u32 %v3925, 2147483648
      %v4687 = vor.u32 1.1754944e-38, %v4686
      %v4688 = vsel %vm4685, %v4687, %v4683
      %v4689 = vmul.f32 1.0, %v4688
      %v4690 = vrcp.pop %v3926
      %v4691 = vmul.f32 %v3926, %v4690
      %v4692 = vsub.f32 1.0, %v4691
      %v4693 = vmul.f32 %v4690, %v4692
      %v4694 = vadd.f32 %v4690, %v4693
      %vm4695 = vweird.f32 %v3926
      %vm4696 = vweird.f32 %v4690
      %vm4697 = vmor %vm4695, %vm4696
      %v4698 = vsel %vm4697, %v4690, %v4694
      %v4699 = vand.u32 2147483647, %v3926
      %vm4700 = vcmp.eq.f32.partialorder %v4699, 8.507059e+37
      %v4701 = vand.u32 %v3926, 2147483648
      %v4702 = vor.u32 1.1754944e-38, %v4701
      %v4703 = vsel %vm4700, %v4702, %v4698
      %v4704 = vmul.f32 1.0, %v4703
      %v4705 = vrcp.pop %v3927
      %v4706 = vmul.f32 %v3927, %v4705
      %v4707 = vsub.f32 1.0, %v4706
      %v4708 = vmul.f32 %v4705, %v4707
      %v4709 = vadd.f32 %v4705, %v4708
      %vm4710 = vweird.f32 %v3927
      %vm4711 = vweird.f32 %v4705
      %vm4712 = vmor %vm4710, %vm4711
      %v4713 = vsel %vm4712, %v4705, %v4709
      %v4714 = vand.u32 2147483647, %v3927
      %vm4715 = vcmp.eq.f32.partialorder %v4714, 8.507059e+37
      %v4716 = vand.u32 %v3927, 2147483648
      %v4717 = vor.u32 1.1754944e-38, %v4716
      %v4718 = vsel %vm4715, %v4717, %v4713
      %v4719 = vmul.f32 1.0, %v4718
      %v4720 = vrcp.pop %v3928
      %v4721 = vmul.f32 %v3928, %v4720
      %v4722 = vsub.f32 1.0, %v4721
      %v4723 = vmul.f32 %v4720, %v4722
      %v4724 = vadd.f32 %v4720, %v4723
      %vm4725 = vweird.f32 %v3928
      %vm4726 = vweird.f32 %v4720
      %vm4727 = vmor %vm4725, %vm4726
      %v4728 = vsel %vm4727, %v4720, %v4724
      %v4729 = vand.u32 2147483647, %v3928
      %vm4730 = vcmp.eq.f32.partialorder %v4729, 8.507059e+37
      %v4731 = vand.u32 %v3928, 2147483648
      %v4732 = vor.u32 1.1754944e-38, %v4731
      %v4733 = vsel %vm4730, %v4732, %v4728
      %v4734 = vmul.f32 1.0, %v4733
      %v4735 = vrcp.pop %v3929
      %v4736 = vmul.f32 %v3929, %v4735
      %v4737 = vsub.f32 1.0, %v4736
      %v4738 = vmul.f32 %v4735, %v4737
      %v4739 = vadd.f32 %v4735, %v4738
      %vm4740 = vweird.f32 %v3929
      %vm4741 = vweird.f32 %v4735
      %vm4742 = vmor %vm4740, %vm4741
      %v4743 = vsel %vm4742, %v4735, %v4739
      %v4744 = vand.u32 2147483647, %v3929
      %vm4745 = vcmp.eq.f32.partialorder %v4744, 8.507059e+37
      %v4746 = vand.u32 %v3929, 2147483648
      %v4747 = vor.u32 1.1754944e-38, %v4746
      %v4748 = vsel %vm4745, %v4747, %v4743
      %v4749 = vmul.f32 1.0, %v4748
      %v4750 = vrcp.pop %v3930
      %v4751 = vmul.f32 %v3930, %v4750
      %v4752 = vsub.f32 1.0, %v4751
      %v4753 = vmul.f32 %v4750, %v4752
      %v4754 = vadd.f32 %v4750, %v4753
      %vm4755 = vweird.f32 %v3930
      %vm4756 = vweird.f32 %v4750
      %vm4757 = vmor %vm4755, %vm4756
      %v4758 = vsel %vm4757, %v4750, %v4754
      %v4759 = vand.u32 2147483647, %v3930
      %vm4760 = vcmp.eq.f32.partialorder %v4759, 8.507059e+37
      %v4761 = vand.u32 %v3930, 2147483648
      %v4762 = vor.u32 1.1754944e-38, %v4761
      %v4763 = vsel %vm4760, %v4762, %v4758
      %v4764 = vmul.f32 1.0, %v4763
      %v4765 = vrcp.pop %v3931
      %v4766 = vmul.f32 %v3931, %v4765
      %v4767 = vsub.f32 1.0, %v4766
      %v4768 = vmul.f32 %v4765, %v4767
      %v4769 = vadd.f32 %v4765, %v4768
      %vm4770 = vweird.f32 %v3931
      %vm4771 = vweird.f32 %v4765
      %vm4772 = vmor %vm4770, %vm4771
      %v4773 = vsel %vm4772, %v4765, %v4769
      %v4774 = vand.u32 2147483647, %v3931
      %vm4775 = vcmp.eq.f32.partialorder %v4774, 8.507059e+37
      %v4776 = vand.u32 %v3931, 2147483648
      %v4777 = vor.u32 1.1754944e-38, %v4776
      %v4778 = vsel %vm4775, %v4777, %v4773
      %v4779 = vmul.f32 1.0, %v4778
      %v4780 = vrcp.pop %v3932
      %v4781 = vmul.f32 %v3932, %v4780
      %v4782 = vsub.f32 1.0, %v4781
      %v4783 = vmul.f32 %v4780, %v4782
      %v4784 = vadd.f32 %v4780, %v4783
      %vm4785 = vweird.f32 %v3932
      %vm4786 = vweird.f32 %v4780
      %vm4787 = vmor %vm4785, %vm4786
      %v4788 = vsel %vm4787, %v4780, %v4784
      %v4789 = vand.u32 2147483647, %v3932
      %vm4790 = vcmp.eq.f32.partialorder %v4789, 8.507059e+37
      %v4791 = vand.u32 %v3932, 2147483648
      %v4792 = vor.u32 1.1754944e-38, %v4791
      %v4793 = vsel %vm4790, %v4792, %v4788
      %v4794 = vmul.f32 1.0, %v4793
      %v4795 = vrcp.pop %v3933
      %v4796 = vmul.f32 %v3933, %v4795
      %v4797 = vsub.f32 1.0, %v4796
      %v4798 = vmul.f32 %v4795, %v4797
      %v4799 = vadd.f32 %v4795, %v4798
      %vm4800 = vweird.f32 %v3933
      %vm4801 = vweird.f32 %v4795
      %vm4802 = vmor %vm4800, %vm4801
      %v4803 = vsel %vm4802, %v4795, %v4799
      %v4804 = vand.u32 2147483647, %v3933
      %vm4805 = vcmp.eq.f32.partialorder %v4804, 8.507059e+37
      %v4806 = vand.u32 %v3933, 2147483648
      %v4807 = vor.u32 1.1754944e-38, %v4806
      %v4808 = vsel %vm4805, %v4807, %v4803
      %v4809 = vmul.f32 1.0, %v4808
      %v4810 = vrcp.pop %v3934
      %v4811 = vmul.f32 %v3934, %v4810
      %v4812 = vsub.f32 1.0, %v4811
      %v4813 = vmul.f32 %v4810, %v4812
      %v4814 = vadd.f32 %v4810, %v4813
      %vm4815 = vweird.f32 %v3934
      %vm4816 = vweird.f32 %v4810
      %vm4817 = vmor %vm4815, %vm4816
      %v4818 = vsel %vm4817, %v4810, %v4814
      %v4819 = vand.u32 2147483647, %v3934
      %vm4820 = vcmp.eq.f32.partialorder %v4819, 8.507059e+37
      %v4821 = vand.u32 %v3934, 2147483648
      %v4822 = vor.u32 1.1754944e-38, %v4821
      %v4823 = vsel %vm4820, %v4822, %v4818
      %v4824 = vmul.f32 1.0, %v4823
      %v4825 = vrcp.pop %v3935
      %v4826 = vmul.f32 %v3935, %v4825
      %v4827 = vsub.f32 1.0, %v4826
      %v4828 = vmul.f32 %v4825, %v4827
      %v4829 = vadd.f32 %v4825, %v4828
      %vm4830 = vweird.f32 %v3935
      %vm4831 = vweird.f32 %v4825
      %vm4832 = vmor %vm4830, %vm4831
      %v4833 = vsel %vm4832, %v4825, %v4829
      %v4834 = vand.u32 2147483647, %v3935
      %vm4835 = vcmp.eq.f32.partialorder %v4834, 8.507059e+37
      %v4836 = vand.u32 %v3935, 2147483648
      %v4837 = vor.u32 1.1754944e-38, %v4836
      %v4838 = vsel %vm4835, %v4837, %v4833
      %v4839 = vmul.f32 1.0, %v4838
      %v4840 = vrcp.pop %v3936
      %v4841 = vmul.f32 %v3936, %v4840
      %v4842 = vsub.f32 1.0, %v4841
      %v4843 = vmul.f32 %v4840, %v4842
      %v4844 = vadd.f32 %v4840, %v4843
      %vm4845 = vweird.f32 %v3936
      %vm4846 = vweird.f32 %v4840
      %vm4847 = vmor %vm4845, %vm4846
      %v4848 = vsel %vm4847, %v4840, %v4844
      %v4849 = vand.u32 2147483647, %v3936
      %vm4850 = vcmp.eq.f32.partialorder %v4849, 8.507059e+37
      %v4851 = vand.u32 %v3936, 2147483648
      %v4852 = vor.u32 1.1754944e-38, %v4851
      %v4853 = vsel %vm4850, %v4852, %v4848
      %v4854 = vmul.f32 1.0, %v4853
      %v4855 = vrcp.pop %v3937
      %v4856 = vmul.f32 %v3937, %v4855
      %v4857 = vsub.f32 1.0, %v4856
      %v4858 = vmul.f32 %v4855, %v4857
      %v4859 = vadd.f32 %v4855, %v4858
      %vm4860 = vweird.f32 %v3937
      %vm4861 = vweird.f32 %v4855
      %vm4862 = vmor %vm4860, %vm4861
      %v4863 = vsel %vm4862, %v4855, %v4859
      %v4864 = vand.u32 2147483647, %v3937
      %vm4865 = vcmp.eq.f32.partialorder %v4864, 8.507059e+37
      %v4866 = vand.u32 %v3937, 2147483648
      %v4867 = vor.u32 1.1754944e-38, %v4866
      %v4868 = vsel %vm4865, %v4867, %v4863
      %v4869 = vmul.f32 1.0, %v4868
      %v4870 = vrcp.pop %v3938
      %v4871 = vmul.f32 %v3938, %v4870
      %v4872 = vsub.f32 1.0, %v4871
      %v4873 = vmul.f32 %v4870, %v4872
      %v4874 = vadd.f32 %v4870, %v4873
      %vm4875 = vweird.f32 %v3938
      %vm4876 = vweird.f32 %v4870
      %vm4877 = vmor %vm4875, %vm4876
      %v4878 = vsel %vm4877, %v4870, %v4874
      %v4879 = vand.u32 2147483647, %v3938
      %vm4880 = vcmp.eq.f32.partialorder %v4879, 8.507059e+37
      %v4881 = vand.u32 %v3938, 2147483648
      %v4882 = vor.u32 1.1754944e-38, %v4881
      %v4883 = vsel %vm4880, %v4882, %v4878
      %v4884 = vmul.f32 1.0, %v4883
      %v4885 = vrcp.pop %v3939
      %v4886 = vmul.f32 %v3939, %v4885
      %v4887 = vsub.f32 1.0, %v4886
      %v4888 = vmul.f32 %v4885, %v4887
      %v4889 = vadd.f32 %v4885, %v4888
      %vm4890 = vweird.f32 %v3939
      %vm4891 = vweird.f32 %v4885
      %vm4892 = vmor %vm4890, %vm4891
      %v4893 = vsel %vm4892, %v4885, %v4889
      %v4894 = vand.u32 2147483647, %v3939
      %vm4895 = vcmp.eq.f32.partialorder %v4894, 8.507059e+37
      %v4896 = vand.u32 %v3939, 2147483648
      %v4897 = vor.u32 1.1754944e-38, %v4896
      %v4898 = vsel %vm4895, %v4897, %v4893
      %v4899 = vmul.f32 1.0, %v4898
      %v4900 = vmul.f32 %v3954, 1.0614054
      %v4901 = vmul.f32 %v3969, 1.0614054
      %v4902 = vmul.f32 %v3984, 1.0614054
      %v4903 = vmul.f32 %v3999, 1.0614054
      %v4904 = vmul.f32 %v4014, 1.0614054
      %v4905 = vmul.f32 %v4029, 1.0614054
      %v4906 = vmul.f32 %v4044, 1.0614054
      %v4907 = vmul.f32 %v4059, 1.0614054
      %v4908 = vmul.f32 %v4074, 1.0614054
      %v4909 = vmul.f32 %v4089, 1.0614054
      %v4910 = vmul.f32 %v4104, 1.0614054
      %v4911 = vmul.f32 %v4119, 1.0614054
      %v4912 = vmul.f32 %v4134, 1.0614054
      %v4913 = vmul.f32 %v4149, 1.0614054
      %v4914 = vmul.f32 %v4164, 1.0614054
      %v4915 = vmul.f32 %v4179, 1.0614054
      %v4916 = vmul.f32 %v4194, 1.0614054
      %v4917 = vmul.f32 %v4209, 1.0614054
      %v4918 = vmul.f32 %v4224, 1.0614054
      %v4919 = vmul.f32 %v4239, 1.0614054
      %v4920 = vmul.f32 %v4254, 1.0614054
      %v4921 = vmul.f32 %v4269, 1.0614054
      %v4922 = vmul.f32 %v4284, 1.0614054
      %v4923 = vmul.f32 %v4299, 1.0614054
      %v4924 = vmul.f32 %v4314, 1.0614054
      %v4925 = vmul.f32 %v4329, 1.0614054
      %v4926 = vmul.f32 %v4344, 1.0614054
      %v4927 = vmul.f32 %v4359, 1.0614054
      %v4928 = vmul.f32 %v4374, 1.0614054
      %v4929 = vmul.f32 %v4389, 1.0614054
      %v4930 = vmul.f32 %v4404, 1.0614054
      %v4931 = vmul.f32 %v4419, 1.0614054
      %v4932 = vmul.f32 %v4434, 1.0614054
      %v4933 = vmul.f32 %v4449, 1.0614054
      %v4934 = vmul.f32 %v4464, 1.0614054
      %v4935 = vmul.f32 %v4479, 1.0614054
      %v4936 = vmul.f32 %v4494, 1.0614054
      %v4937 = vmul.f32 %v4509, 1.0614054
      %v4938 = vmul.f32 %v4524, 1.0614054
      %v4939 = vmul.f32 %v4539, 1.0614054
      %v4940 = vmul.f32 %v4554, 1.0614054
      %v4941 = vmul.f32 %v4569, 1.0614054
      %v4942 = vmul.f32 %v4584, 1.0614054
      %v4943 = vmul.f32 %v4599, 1.0614054
      %v4944 = vmul.f32 %v4614, 1.0614054
      %v4945 = vmul.f32 %v4629, 1.0614054
      %v4946 = vmul.f32 %v4644, 1.0614054
      %v4947 = vmul.f32 %v4659, 1.0614054
      %v4948 = vmul.f32 %v4674, 1.0614054
      %v4949 = vmul.f32 %v4689, 1.0614054
      %v4950 = vmul.f32 %v4704, 1.0614054
      %v4951 = vmul.f32 %v4719, 1.0614054
      %v4952 = vmul.f32 %v4734, 1.0614054
      %v4953 = vmul.f32 %v4749, 1.0614054
      %v4954 = vmul.f32 %v4764, 1.0614054
      %v4955 = vmul.f32 %v4779, 1.0614054
      %v4956 = vmul.f32 %v4794, 1.0614054
      %v4957 = vmul.f32 %v4809, 1.0614054
      %v4958 = vmul.f32 %v4824, 1.0614054
      %v4959 = vmul.f32 %v4839, 1.0614054
      %v4960 = vmul.f32 %v4854, 1.0614054
      %v4961 = vmul.f32 %v4869, 1.0614054
      %v4962 = vmul.f32 %v4884, 1.0614054
      %v4963 = vmul.f32 %v4899, 1.0614054
      %v4964 = vsub.f32 %v4900, 1.4531521
      %v4965 = vsub.f32 %v4901, 1.4531521
      %v4966 = vsub.f32 %v4902, 1.4531521
      %v4967 = vsub.f32 %v4903, 1.4531521
      %v4968 = vsub.f32 %v4904, 1.4531521
      %v4969 = vsub.f32 %v4905, 1.4531521
      %v4970 = vsub.f32 %v4906, 1.4531521
      %v4971 = vsub.f32 %v4907, 1.4531521
      %v4972 = vsub.f32 %v4908, 1.4531521
      %v4973 = vsub.f32 %v4909, 1.4531521
      %v4974 = vsub.f32 %v4910, 1.4531521
      %v4975 = vsub.f32 %v4911, 1.4531521
      %v4976 = vsub.f32 %v4912, 1.4531521
      %v4977 = vsub.f32 %v4913, 1.4531521
      %v4978 = vsub.f32 %v4914, 1.4531521
      %v4979 = vsub.f32 %v4915, 1.4531521
      %v4980 = vsub.f32 %v4916, 1.4531521
      %v4981 = vsub.f32 %v4917, 1.4531521
      %v4982 = vsub.f32 %v4918, 1.4531521
      %v4983 = vsub.f32 %v4919, 1.4531521
      %v4984 = vsub.f32 %v4920, 1.4531521
      %v4985 = vsub.f32 %v4921, 1.4531521
      %v4986 = vsub.f32 %v4922, 1.4531521
      %v4987 = vsub.f32 %v4923, 1.4531521
      %v4988 = vsub.f32 %v4924, 1.4531521
      %v4989 = vsub.f32 %v4925, 1.4531521
      %v4990 = vsub.f32 %v4926, 1.4531521
      %v4991 = vsub.f32 %v4927, 1.4531521
      %v4992 = vsub.f32 %v4928, 1.4531521
      %v4993 = vsub.f32 %v4929, 1.4531521
      %v4994 = vsub.f32 %v4930, 1.4531521
      %v4995 = vsub.f32 %v4931, 1.4531521
      %v4996 = vsub.f32 %v4932, 1.4531521
      %v4997 = vsub.f32 %v4933, 1.4531521
      %v4998 = vsub.f32 %v4934, 1.4531521
      %v4999 = vsub.f32 %v4935, 1.4531521
      %v5000 = vsub.f32 %v4936, 1.4531521
      %v5001 = vsub.f32 %v4937, 1.4531521
      %v5002 = vsub.f32 %v4938, 1.4531521
      %v5003 = vsub.f32 %v4939, 1.4531521
      %v5004 = vsub.f32 %v4940, 1.4531521
      %v5005 = vsub.f32 %v4941, 1.4531521
      %v5006 = vsub.f32 %v4942, 1.4531521
      %v5007 = vsub.f32 %v4943, 1.4531521
      %v5008 = vsub.f32 %v4944, 1.4531521
      %v5009 = vsub.f32 %v4945, 1.4531521
      %v5010 = vsub.f32 %v4946, 1.4531521
      %v5011 = vsub.f32 %v4947, 1.4531521
      %v5012 = vsub.f32 %v4948, 1.4531521
      %v5013 = vsub.f32 %v4949, 1.4531521
      %v5014 = vsub.f32 %v4950, 1.4531521
      %v5015 = vsub.f32 %v4951, 1.4531521
      %v5016 = vsub.f32 %v4952, 1.4531521
      %v5017 = vsub.f32 %v4953, 1.4531521
      %v5018 = vsub.f32 %v4954, 1.4531521
      %v5019 = vsub.f32 %v4955, 1.4531521
      %v5020 = vsub.f32 %v4956, 1.4531521
      %v5021 = vsub.f32 %v4957, 1.4531521
      %v5022 = vsub.f32 %v4958, 1.4531521
      %v5023 = vsub.f32 %v4959, 1.4531521
      %v5024 = vsub.f32 %v4960, 1.4531521
      %v5025 = vsub.f32 %v4961, 1.4531521
      %v5026 = vsub.f32 %v4962, 1.4531521
      %v5027 = vsub.f32 %v4963, 1.4531521
      %v5028 = vmul.f32 %v4964, %v3954
      %v5029 = vmul.f32 %v4965, %v3969
      %v5030 = vmul.f32 %v4966, %v3984
      %v5031 = vmul.f32 %v4967, %v3999
      %v5032 = vmul.f32 %v4968, %v4014
      %v5033 = vmul.f32 %v4969, %v4029
      %v5034 = vmul.f32 %v4970, %v4044
      %v5035 = vmul.f32 %v4971, %v4059
      %v5036 = vmul.f32 %v4972, %v4074
      %v5037 = vmul.f32 %v4973, %v4089
      %v5038 = vmul.f32 %v4974, %v4104
      %v5039 = vmul.f32 %v4975, %v4119
      %v5040 = vmul.f32 %v4976, %v4134
      %v5041 = vmul.f32 %v4977, %v4149
      %v5042 = vmul.f32 %v4978, %v4164
      %v5043 = vmul.f32 %v4979, %v4179
      %v5044 = vmul.f32 %v4980, %v4194
      %v5045 = vmul.f32 %v4981, %v4209
      %v5046 = vmul.f32 %v4982, %v4224
      %v5047 = vmul.f32 %v4983, %v4239
      %v5048 = vmul.f32 %v4984, %v4254
      %v5049 = vmul.f32 %v4985, %v4269
      %v5050 = vmul.f32 %v4986, %v4284
      %v5051 = vmul.f32 %v4987, %v4299
      %v5052 = vmul.f32 %v4988, %v4314
      %v5053 = vmul.f32 %v4989, %v4329
      %v5054 = vmul.f32 %v4990, %v4344
      %v5055 = vmul.f32 %v4991, %v4359
      %v5056 = vmul.f32 %v4992, %v4374
      %v5057 = vmul.f32 %v4993, %v4389
      %v5058 = vmul.f32 %v4994, %v4404
      %v5059 = vmul.f32 %v4995, %v4419
      %v5060 = vmul.f32 %v4996, %v4434
      %v5061 = vmul.f32 %v4997, %v4449
      %v5062 = vmul.f32 %v4998, %v4464
      %v5063 = vmul.f32 %v4999, %v4479
      %v5064 = vmul.f32 %v5000, %v4494
      %v5065 = vmul.f32 %v5001, %v4509
      %v5066 = vmul.f32 %v5002, %v4524
      %v5067 = vmul.f32 %v5003, %v4539
      %v5068 = vmul.f32 %v5004, %v4554
      %v5069 = vmul.f32 %v5005, %v4569
      %v5070 = vmul.f32 %v5006, %v4584
      %v5071 = vmul.f32 %v5007, %v4599
      %v5072 = vmul.f32 %v5008, %v4614
      %v5073 = vmul.f32 %v5009, %v4629
      %v5074 = vmul.f32 %v5010, %v4644
      %v5075 = vmul.f32 %v5011, %v4659
      %v5076 = vmul.f32 %v5012, %v4674
      %v5077 = vmul.f32 %v5013, %v4689
      %v5078 = vmul.f32 %v5014, %v4704
      %v5079 = vmul.f32 %v5015, %v4719
      %v5080 = vmul.f32 %v5016, %v4734
      %v5081 = vmul.f32 %v5017, %v4749
      %v5082 = vmul.f32 %v5018, %v4764
      %v5083 = vmul.f32 %v5019, %v4779
      %v5084 = vmul.f32 %v5020, %v4794
      %v5085 = vmul.f32 %v5021, %v4809
      %v5086 = vmul.f32 %v5022, %v4824
      %v5087 = vmul.f32 %v5023, %v4839
      %v5088 = vmul.f32 %v5024, %v4854
      %v5089 = vmul.f32 %v5025, %v4869
      %v5090 = vmul.f32 %v5026, %v4884
      %v5091 = vmul.f32 %v5027, %v4899
      %v5092 = vadd.f32 %v5028, 1.4214138
      %v5093 = vadd.f32 %v5029, 1.4214138
      %v5094 = vadd.f32 %v5030, 1.4214138
      %v5095 = vadd.f32 %v5031, 1.4214138
      %v5096 = vadd.f32 %v5032, 1.4214138
      %v5097 = vadd.f32 %v5033, 1.4214138
      %v5098 = vadd.f32 %v5034, 1.4214138
      %v5099 = vadd.f32 %v5035, 1.4214138
      %v5100 = vadd.f32 %v5036, 1.4214138
      %v5101 = vadd.f32 %v5037, 1.4214138
      %v5102 = vadd.f32 %v5038, 1.4214138
      %v5103 = vadd.f32 %v5039, 1.4214138
      %v5104 = vadd.f32 %v5040, 1.4214138
      %v5105 = vadd.f32 %v5041, 1.4214138
      %v5106 = vadd.f32 %v5042, 1.4214138
      %v5107 = vadd.f32 %v5043, 1.4214138
      %v5108 = vadd.f32 %v5044, 1.4214138
      %v5109 = vadd.f32 %v5045, 1.4214138
      %v5110 = vadd.f32 %v5046, 1.4214138
      %v5111 = vadd.f32 %v5047, 1.4214138
      %v5112 = vadd.f32 %v5048, 1.4214138
      %v5113 = vadd.f32 %v5049, 1.4214138
      %v5114 = vadd.f32 %v5050, 1.4214138
      %v5115 = vadd.f32 %v5051, 1.4214138
      %v5116 = vadd.f32 %v5052, 1.4214138
      %v5117 = vadd.f32 %v5053, 1.4214138
      %v5118 = vadd.f32 %v5054, 1.4214138
      %v5119 = vadd.f32 %v5055, 1.4214138
      %v5120 = vadd.f32 %v5056, 1.4214138
      %v5121 = vadd.f32 %v5057, 1.4214138
      %v5122 = vadd.f32 %v5058, 1.4214138
      %v5123 = vadd.f32 %v5059, 1.4214138
      %v5124 = vadd.f32 %v5060, 1.4214138
      %v5125 = vadd.f32 %v5061, 1.4214138
      %v5126 = vadd.f32 %v5062, 1.4214138
      %v5127 = vadd.f32 %v5063, 1.4214138
      %v5128 = vadd.f32 %v5064, 1.4214138
      %v5129 = vadd.f32 %v5065, 1.4214138
      %v5130 = vadd.f32 %v5066, 1.4214138
      %v5131 = vadd.f32 %v5067, 1.4214138
      %v5132 = vadd.f32 %v5068, 1.4214138
      %v5133 = vadd.f32 %v5069, 1.4214138
      %v5134 = vadd.f32 %v5070, 1.4214138
      %v5135 = vadd.f32 %v5071, 1.4214138
      %v5136 = vadd.f32 %v5072, 1.4214138
      %v5137 = vadd.f32 %v5073, 1.4214138
      %v5138 = vadd.f32 %v5074, 1.4214138
      %v5139 = vadd.f32 %v5075, 1.4214138
      %v5140 = vadd.f32 %v5076, 1.4214138
      %v5141 = vadd.f32 %v5077, 1.4214138
      %v5142 = vadd.f32 %v5078, 1.4214138
      %v5143 = vadd.f32 %v5079, 1.4214138
      %v5144 = vadd.f32 %v5080, 1.4214138
      %v5145 = vadd.f32 %v5081, 1.4214138
      %v5146 = vadd.f32 %v5082, 1.4214138
      %v5147 = vadd.f32 %v5083, 1.4214138
      %v5148 = vadd.f32 %v5084, 1.4214138
      %v5149 = vadd.f32 %v5085, 1.4214138
      %v5150 = vadd.f32 %v5086, 1.4214138
      %v5151 = vadd.f32 %v5087, 1.4214138
      %v5152 = vadd.f32 %v5088, 1.4214138
      %v5153 = vadd.f32 %v5089, 1.4214138
      %v5154 = vadd.f32 %v5090, 1.4214138
      %v5155 = vadd.f32 %v5091, 1.4214138
      %v5156 = vmul.f32 %v5092, %v3954
      %v5157 = vmul.f32 %v5093, %v3969
      %v5158 = vmul.f32 %v5094, %v3984
      %v5159 = vmul.f32 %v5095, %v3999
      %v5160 = vmul.f32 %v5096, %v4014
      %v5161 = vmul.f32 %v5097, %v4029
      %v5162 = vmul.f32 %v5098, %v4044
      %v5163 = vmul.f32 %v5099, %v4059
      %v5164 = vmul.f32 %v5100, %v4074
      %v5165 = vmul.f32 %v5101, %v4089
      %v5166 = vmul.f32 %v5102, %v4104
      %v5167 = vmul.f32 %v5103, %v4119
      %v5168 = vmul.f32 %v5104, %v4134
      %v5169 = vmul.f32 %v5105, %v4149
      %v5170 = vmul.f32 %v5106, %v4164
      %v5171 = vmul.f32 %v5107, %v4179
      %v5172 = vmul.f32 %v5108, %v4194
      %v5173 = vmul.f32 %v5109, %v4209
      %v5174 = vmul.f32 %v5110, %v4224
      %v5175 = vmul.f32 %v5111, %v4239
      %v5176 = vmul.f32 %v5112, %v4254
      %v5177 = vmul.f32 %v5113, %v4269
      %v5178 = vmul.f32 %v5114, %v4284
      %v5179 = vmul.f32 %v5115, %v4299
      %v5180 = vmul.f32 %v5116, %v4314
      %v5181 = vmul.f32 %v5117, %v4329
      %v5182 = vmul.f32 %v5118, %v4344
      %v5183 = vmul.f32 %v5119, %v4359
      %v5184 = vmul.f32 %v5120, %v4374
      %v5185 = vmul.f32 %v5121, %v4389
      %v5186 = vmul.f32 %v5122, %v4404
      %v5187 = vmul.f32 %v5123, %v4419
      %v5188 = vmul.f32 %v5124, %v4434
      %v5189 = vmul.f32 %v5125, %v4449
      %v5190 = vmul.f32 %v5126, %v4464
      %v5191 = vmul.f32 %v5127, %v4479
      %v5192 = vmul.f32 %v5128, %v4494
      %v5193 = vmul.f32 %v5129, %v4509
      %v5194 = vmul.f32 %v5130, %v4524
      %v5195 = vmul.f32 %v5131, %v4539
      %v5196 = vmul.f32 %v5132, %v4554
      %v5197 = vmul.f32 %v5133, %v4569
      %v5198 = vmul.f32 %v5134, %v4584
      %v5199 = vmul.f32 %v5135, %v4599
      %v5200 = vmul.f32 %v5136, %v4614
      %v5201 = vmul.f32 %v5137, %v4629
      %v5202 = vmul.f32 %v5138, %v4644
      %v5203 = vmul.f32 %v5139, %v4659
      %v5204 = vmul.f32 %v5140, %v4674
      %v5205 = vmul.f32 %v5141, %v4689
      %v5206 = vmul.f32 %v5142, %v4704
      %v5207 = vmul.f32 %v5143, %v4719
      %v5208 = vmul.f32 %v5144, %v4734
      %v5209 = vmul.f32 %v5145, %v4749
      %v5210 = vmul.f32 %v5146, %v4764
      %v5211 = vmul.f32 %v5147, %v4779
      %v5212 = vmul.f32 %v5148, %v4794
      %v5213 = vmul.f32 %v5149, %v4809
      %v5214 = vmul.f32 %v5150, %v4824
      %v5215 = vmul.f32 %v5151, %v4839
      %v5216 = vmul.f32 %v5152, %v4854
      %v5217 = vmul.f32 %v5153, %v4869
      %v5218 = vmul.f32 %v5154, %v4884
      %v5219 = vmul.f32 %v5155, %v4899
      %v5220 = vsub.f32 %v5156, 0.28449672
      %v5221 = vsub.f32 %v5157, 0.28449672
      %v5222 = vsub.f32 %v5158, 0.28449672
      %v5223 = vsub.f32 %v5159, 0.28449672
      %v5224 = vsub.f32 %v5160, 0.28449672
      %v5225 = vsub.f32 %v5161, 0.28449672
      %v5226 = vsub.f32 %v5162, 0.28449672
      %v5227 = vsub.f32 %v5163, 0.28449672
      %v5228 = vsub.f32 %v5164, 0.28449672
      %v5229 = vsub.f32 %v5165, 0.28449672
      %v5230 = vsub.f32 %v5166, 0.28449672
      %v5231 = vsub.f32 %v5167, 0.28449672
      %v5232 = vsub.f32 %v5168, 0.28449672
      %v5233 = vsub.f32 %v5169, 0.28449672
      %v5234 = vsub.f32 %v5170, 0.28449672
      %v5235 = vsub.f32 %v5171, 0.28449672
      %v5236 = vsub.f32 %v5172, 0.28449672
      %v5237 = vsub.f32 %v5173, 0.28449672
      %v5238 = vsub.f32 %v5174, 0.28449672
      %v5239 = vsub.f32 %v5175, 0.28449672
      %v5240 = vsub.f32 %v5176, 0.28449672
      %v5241 = vsub.f32 %v5177, 0.28449672
      %v5242 = vsub.f32 %v5178, 0.28449672
      %v5243 = vsub.f32 %v5179, 0.28449672
      %v5244 = vsub.f32 %v5180, 0.28449672
      %v5245 = vsub.f32 %v5181, 0.28449672
      %v5246 = vsub.f32 %v5182, 0.28449672
      %v5247 = vsub.f32 %v5183, 0.28449672
      %v5248 = vsub.f32 %v5184, 0.28449672
      %v5249 = vsub.f32 %v5185, 0.28449672
      %v5250 = vsub.f32 %v5186, 0.28449672
      %v5251 = vsub.f32 %v5187, 0.28449672
      %v5252 = vsub.f32 %v5188, 0.28449672
      %v5253 = vsub.f32 %v5189, 0.28449672
      %v5254 = vsub.f32 %v5190, 0.28449672
      %v5255 = vsub.f32 %v5191, 0.28449672
      %v5256 = vsub.f32 %v5192, 0.28449672
      %v5257 = vsub.f32 %v5193, 0.28449672
      %v5258 = vsub.f32 %v5194, 0.28449672
      %v5259 = vsub.f32 %v5195, 0.28449672
      %v5260 = vsub.f32 %v5196, 0.28449672
      %v5261 = vsub.f32 %v5197, 0.28449672
      %v5262 = vsub.f32 %v5198, 0.28449672
      %v5263 = vsub.f32 %v5199, 0.28449672
      %v5264 = vsub.f32 %v5200, 0.28449672
      %v5265 = vsub.f32 %v5201, 0.28449672
      %v5266 = vsub.f32 %v5202, 0.28449672
      %v5267 = vsub.f32 %v5203, 0.28449672
      %v5268 = vsub.f32 %v5204, 0.28449672
      %v5269 = vsub.f32 %v5205, 0.28449672
      %v5270 = vsub.f32 %v5206, 0.28449672
      %v5271 = vsub.f32 %v5207, 0.28449672
      %v5272 = vsub.f32 %v5208, 0.28449672
      %v5273 = vsub.f32 %v5209, 0.28449672
      %v5274 = vsub.f32 %v5210, 0.28449672
      %v5275 = vsub.f32 %v5211, 0.28449672
      %v5276 = vsub.f32 %v5212, 0.28449672
      %v5277 = vsub.f32 %v5213, 0.28449672
      %v5278 = vsub.f32 %v5214, 0.28449672
      %v5279 = vsub.f32 %v5215, 0.28449672
      %v5280 = vsub.f32 %v5216, 0.28449672
      %v5281 = vsub.f32 %v5217, 0.28449672
      %v5282 = vsub.f32 %v5218, 0.28449672
      %v5283 = vsub.f32 %v5219, 0.28449672
      %v5284 = vmul.f32 %v5220, %v3954
      %v5285 = vmul.f32 %v5221, %v3969
      %v5286 = vmul.f32 %v5222, %v3984
      %v5287 = vmul.f32 %v5223, %v3999
      %v5288 = vmul.f32 %v5224, %v4014
      %v5289 = vmul.f32 %v5225, %v4029
      %v5290 = vmul.f32 %v5226, %v4044
      %v5291 = vmul.f32 %v5227, %v4059
      %v5292 = vmul.f32 %v5228, %v4074
      %v5293 = vmul.f32 %v5229, %v4089
      %v5294 = vmul.f32 %v5230, %v4104
      %v5295 = vmul.f32 %v5231, %v4119
      %v5296 = vmul.f32 %v5232, %v4134
      %v5297 = vmul.f32 %v5233, %v4149
      %v5298 = vmul.f32 %v5234, %v4164
      %v5299 = vmul.f32 %v5235, %v4179
      %v5300 = vmul.f32 %v5236, %v4194
      %v5301 = vmul.f32 %v5237, %v4209
      %v5302 = vmul.f32 %v5238, %v4224
      %v5303 = vmul.f32 %v5239, %v4239
      %v5304 = vmul.f32 %v5240, %v4254
      %v5305 = vmul.f32 %v5241, %v4269
      %v5306 = vmul.f32 %v5242, %v4284
      %v5307 = vmul.f32 %v5243, %v4299
      %v5308 = vmul.f32 %v5244, %v4314
      %v5309 = vmul.f32 %v5245, %v4329
      %v5310 = vmul.f32 %v5246, %v4344
      %v5311 = vmul.f32 %v5247, %v4359
      %v5312 = vmul.f32 %v5248, %v4374
      %v5313 = vmul.f32 %v5249, %v4389
      %v5314 = vmul.f32 %v5250, %v4404
      %v5315 = vmul.f32 %v5251, %v4419
      %v5316 = vmul.f32 %v5252, %v4434
      %v5317 = vmul.f32 %v5253, %v4449
      %v5318 = vmul.f32 %v5254, %v4464
      %v5319 = vmul.f32 %v5255, %v4479
      %v5320 = vmul.f32 %v5256, %v4494
      %v5321 = vmul.f32 %v5257, %v4509
      %v5322 = vmul.f32 %v5258, %v4524
      %v5323 = vmul.f32 %v5259, %v4539
      %v5324 = vmul.f32 %v5260, %v4554
      %v5325 = vmul.f32 %v5261, %v4569
      %v5326 = vmul.f32 %v5262, %v4584
      %v5327 = vmul.f32 %v5263, %v4599
      %v5328 = vmul.f32 %v5264, %v4614
      %v5329 = vmul.f32 %v5265, %v4629
      %v5330 = vmul.f32 %v5266, %v4644
      %v5331 = vmul.f32 %v5267, %v4659
      %v5332 = vmul.f32 %v5268, %v4674
      %v5333 = vmul.f32 %v5269, %v4689
      %v5334 = vmul.f32 %v5270, %v4704
      %v5335 = vmul.f32 %v5271, %v4719
      %v5336 = vmul.f32 %v5272, %v4734
      %v5337 = vmul.f32 %v5273, %v4749
      %v5338 = vmul.f32 %v5274, %v4764
      %v5339 = vmul.f32 %v5275, %v4779
      %v5340 = vmul.f32 %v5276, %v4794
      %v5341 = vmul.f32 %v5277, %v4809
      %v5342 = vmul.f32 %v5278, %v4824
      %v5343 = vmul.f32 %v5279, %v4839
      %v5344 = vmul.f32 %v5280, %v4854
      %v5345 = vmul.f32 %v5281, %v4869
      %v5346 = vmul.f32 %v5282, %v4884
      %v5347 = vmul.f32 %v5283, %v4899
      %v5348 = vadd.f32 %v5284, 0.2548296
      %v5349 = vadd.f32 %v5285, 0.2548296
      %v5350 = vadd.f32 %v5286, 0.2548296
      %v5351 = vadd.f32 %v5287, 0.2548296
      %v5352 = vadd.f32 %v5288, 0.2548296
      %v5353 = vadd.f32 %v5289, 0.2548296
      %v5354 = vadd.f32 %v5290, 0.2548296
      %v5355 = vadd.f32 %v5291, 0.2548296
      %v5356 = vadd.f32 %v5292, 0.2548296
      %v5357 = vadd.f32 %v5293, 0.2548296
      %v5358 = vadd.f32 %v5294, 0.2548296
      %v5359 = vadd.f32 %v5295, 0.2548296
      %v5360 = vadd.f32 %v5296, 0.2548296
      %v5361 = vadd.f32 %v5297, 0.2548296
      %v5362 = vadd.f32 %v5298, 0.2548296
      %v5363 = vadd.f32 %v5299, 0.2548296
      %v5364 = vadd.f32 %v5300, 0.2548296
      %v5365 = vadd.f32 %v5301, 0.2548296
      %v5366 = vadd.f32 %v5302, 0.2548296
      %v5367 = vadd.f32 %v5303, 0.2548296
      %v5368 = vadd.f32 %v5304, 0.2548296
      %v5369 = vadd.f32 %v5305, 0.2548296
      %v5370 = vadd.f32 %v5306, 0.2548296
      %v5371 = vadd.f32 %v5307, 0.2548296
      %v5372 = vadd.f32 %v5308, 0.2548296
      %v5373 = vadd.f32 %v5309, 0.2548296
      %v5374 = vadd.f32 %v5310, 0.2548296
      %v5375 = vadd.f32 %v5311, 0.2548296
      %v5376 = vadd.f32 %v5312, 0.2548296
      %v5377 = vadd.f32 %v5313, 0.2548296
      %v5378 = vadd.f32 %v5314, 0.2548296
      %v5379 = vadd.f32 %v5315, 0.2548296
      %v5380 = vadd.f32 %v5316, 0.2548296
      %v5381 = vadd.f32 %v5317, 0.2548296
      %v5382 = vadd.f32 %v5318, 0.2548296
      %v5383 = vadd.f32 %v5319, 0.2548296
      %v5384 = vadd.f32 %v5320, 0.2548296
      %v5385 = vadd.f32 %v5321, 0.2548296
      %v5386 = vadd.f32 %v5322, 0.2548296
      %v5387 = vadd.f32 %v5323, 0.2548296
      %v5388 = vadd.f32 %v5324, 0.2548296
      %v5389 = vadd.f32 %v5325, 0.2548296
      %v5390 = vadd.f32 %v5326, 0.2548296
      %v5391 = vadd.f32 %v5327, 0.2548296
      %v5392 = vadd.f32 %v5328, 0.2548296
      %v5393 = vadd.f32 %v5329, 0.2548296
      %v5394 = vadd.f32 %v5330, 0.2548296
      %v5395 = vadd.f32 %v5331, 0.2548296
      %v5396 = vadd.f32 %v5332, 0.2548296
      %v5397 = vadd.f32 %v5333, 0.2548296
      %v5398 = vadd.f32 %v5334, 0.2548296
      %v5399 = vadd.f32 %v5335, 0.2548296
      %v5400 = vadd.f32 %v5336, 0.2548296
      %v5401 = vadd.f32 %v5337, 0.2548296
      %v5402 = vadd.f32 %v5338, 0.2548296
      %v5403 = vadd.f32 %v5339, 0.2548296
      %v5404 = vadd.f32 %v5340, 0.2548296
      %v5405 = vadd.f32 %v5341, 0.2548296
      %v5406 = vadd.f32 %v5342, 0.2548296
      %v5407 = vadd.f32 %v5343, 0.2548296
      %v5408 = vadd.f32 %v5344, 0.2548296
      %v5409 = vadd.f32 %v5345, 0.2548296
      %v5410 = vadd.f32 %v5346, 0.2548296
      %v5411 = vadd.f32 %v5347, 0.2548296
      %v5412 = vmul.f32 %v5348, %v3954
      %v5413 = vmul.f32 %v5349, %v3969
      %v5414 = vmul.f32 %v5350, %v3984
      %v5415 = vmul.f32 %v5351, %v3999
      %v5416 = vmul.f32 %v5352, %v4014
      %v5417 = vmul.f32 %v5353, %v4029
      %v5418 = vmul.f32 %v5354, %v4044
      %v5419 = vmul.f32 %v5355, %v4059
      %v5420 = vmul.f32 %v5356, %v4074
      %v5421 = vmul.f32 %v5357, %v4089
      %v5422 = vmul.f32 %v5358, %v4104
      %v5423 = vmul.f32 %v5359, %v4119
      %v5424 = vmul.f32 %v5360, %v4134
      %v5425 = vmul.f32 %v5361, %v4149
      %v5426 = vmul.f32 %v5362, %v4164
      %v5427 = vmul.f32 %v5363, %v4179
      %v5428 = vmul.f32 %v5364, %v4194
      %v5429 = vmul.f32 %v5365, %v4209
      %v5430 = vmul.f32 %v5366, %v4224
      %v5431 = vmul.f32 %v5367, %v4239
      %v5432 = vmul.f32 %v5368, %v4254
      %v5433 = vmul.f32 %v5369, %v4269
      %v5434 = vmul.f32 %v5370, %v4284
      %v5435 = vmul.f32 %v5371, %v4299
      %v5436 = vmul.f32 %v5372, %v4314
      %v5437 = vmul.f32 %v5373, %v4329
      %v5438 = vmul.f32 %v5374, %v4344
      %v5439 = vmul.f32 %v5375, %v4359
      %v5440 = vmul.f32 %v5376, %v4374
      %v5441 = vmul.f32 %v5377, %v4389
      %v5442 = vmul.f32 %v5378, %v4404
      %v5443 = vmul.f32 %v5379, %v4419
      %v5444 = vmul.f32 %v5380, %v4434
      %v5445 = vmul.f32 %v5381, %v4449
      %v5446 = vmul.f32 %v5382, %v4464
      %v5447 = vmul.f32 %v5383, %v4479
      %v5448 = vmul.f32 %v5384, %v4494
      %v5449 = vmul.f32 %v5385, %v4509
      %v5450 = vmul.f32 %v5386, %v4524
      %v5451 = vmul.f32 %v5387, %v4539
      %v5452 = vmul.f32 %v5388, %v4554
      %v5453 = vmul.f32 %v5389, %v4569
      %v5454 = vmul.f32 %v5390, %v4584
      %v5455 = vmul.f32 %v5391, %v4599
      %v5456 = vmul.f32 %v5392, %v4614
      %v5457 = vmul.f32 %v5393, %v4629
      %v5458 = vmul.f32 %v5394, %v4644
      %v5459 = vmul.f32 %v5395, %v4659
      %v5460 = vmul.f32 %v5396, %v4674
      %v5461 = vmul.f32 %v5397, %v4689
      %v5462 = vmul.f32 %v5398, %v4704
      %v5463 = vmul.f32 %v5399, %v4719
      %v5464 = vmul.f32 %v5400, %v4734
      %v5465 = vmul.f32 %v5401, %v4749
      %v5466 = vmul.f32 %v5402, %v4764
      %v5467 = vmul.f32 %v5403, %v4779
      %v5468 = vmul.f32 %v5404, %v4794
      %v5469 = vmul.f32 %v5405, %v4809
      %v5470 = vmul.f32 %v5406, %v4824
      %v5471 = vmul.f32 %v5407, %v4839
      %v5472 = vmul.f32 %v5408, %v4854
      %v5473 = vmul.f32 %v5409, %v4869
      %v5474 = vmul.f32 %v5410, %v4884
      %v5475 = vmul.f32 %v5411, %v4899
      %v5476 = vsub.f32 0.0, %v3748
      %v5477 = vsub.f32 0.0, %v3749
      %v5478 = vsub.f32 0.0, %v3750
      %v5479 = vsub.f32 0.0, %v3751
      %v5480 = vsub.f32 0.0, %v3752
      %v5481 = vsub.f32 0.0, %v3753
      %v5482 = vsub.f32 0.0, %v3754
      %v5483 = vsub.f32 0.0, %v3755
      %v5484 = vsub.f32 0.0, %v3756
      %v5485 = vsub.f32 0.0, %v3757
      %v5486 = vsub.f32 0.0, %v3758
      %v5487 = vsub.f32 0.0, %v3759
      %v5488 = vsub.f32 0.0, %v3760
      %v5489 = vsub.f32 0.0, %v3761
      %v5490 = vsub.f32 0.0, %v3762
      %v5491 = vsub.f32 0.0, %v3763
      %v5492 = vsub.f32 0.0, %v3764
      %v5493 = vsub.f32 0.0, %v3765
      %v5494 = vsub.f32 0.0, %v3766
      %v5495 = vsub.f32 0.0, %v3767
      %v5496 = vsub.f32 0.0, %v3768
      %v5497 = vsub.f32 0.0, %v3769
      %v5498 = vsub.f32 0.0, %v3770
      %v5499 = vsub.f32 0.0, %v3771
      %v5500 = vsub.f32 0.0, %v3772
      %v5501 = vsub.f32 0.0, %v3773
      %v5502 = vsub.f32 0.0, %v3774
      %v5503 = vsub.f32 0.0, %v3775
      %v5504 = vsub.f32 0.0, %v3776
      %v5505 = vsub.f32 0.0, %v3777
      %v5506 = vsub.f32 0.0, %v3778
      %v5507 = vsub.f32 0.0, %v3779
      %v5508 = vsub.f32 0.0, %v3780
      %v5509 = vsub.f32 0.0, %v3781
      %v5510 = vsub.f32 0.0, %v3782
      %v5511 = vsub.f32 0.0, %v3783
      %v5512 = vsub.f32 0.0, %v3784
      %v5513 = vsub.f32 0.0, %v3785
      %v5514 = vsub.f32 0.0, %v3786
      %v5515 = vsub.f32 0.0, %v3787
      %v5516 = vsub.f32 0.0, %v3788
      %v5517 = vsub.f32 0.0, %v3789
      %v5518 = vsub.f32 0.0, %v3790
      %v5519 = vsub.f32 0.0, %v3791
      %v5520 = vsub.f32 0.0, %v3792
      %v5521 = vsub.f32 0.0, %v3793
      %v5522 = vsub.f32 0.0, %v3794
      %v5523 = vsub.f32 0.0, %v3795
      %v5524 = vsub.f32 0.0, %v3796
      %v5525 = vsub.f32 0.0, %v3797
      %v5526 = vsub.f32 0.0, %v3798
      %v5527 = vsub.f32 0.0, %v3799
      %v5528 = vsub.f32 0.0, %v3800
      %v5529 = vsub.f32 0.0, %v3801
      %v5530 = vsub.f32 0.0, %v3802
      %v5531 = vsub.f32 0.0, %v3803
      %v5532 = vsub.f32 0.0, %v3804
      %v5533 = vsub.f32 0.0, %v3805
      %v5534 = vsub.f32 0.0, %v3806
      %v5535 = vsub.f32 0.0, %v3807
      %v5536 = vsub.f32 0.0, %v3808
      %v5537 = vsub.f32 0.0, %v3809
      %v5538 = vsub.f32 0.0, %v3810
      %v5539 = vsub.f32 0.0, %v3811
      %v5540 = vmul.f32 %v5476, %v3748
      %v5541 = vmul.f32 %v5477, %v3749
      %v5542 = vmul.f32 %v5478, %v3750
      %v5543 = vmul.f32 %v5479, %v3751
      %v5544 = vmul.f32 %v5480, %v3752
      %v5545 = vmul.f32 %v5481, %v3753
      %v5546 = vmul.f32 %v5482, %v3754
      %v5547 = vmul.f32 %v5483, %v3755
      %v5548 = vmul.f32 %v5484, %v3756
      %v5549 = vmul.f32 %v5485, %v3757
      %v5550 = vmul.f32 %v5486, %v3758
      %v5551 = vmul.f32 %v5487, %v3759
      %v5552 = vmul.f32 %v5488, %v3760
      %v5553 = vmul.f32 %v5489, %v3761
      %v5554 = vmul.f32 %v5490, %v3762
      %v5555 = vmul.f32 %v5491, %v3763
      %v5556 = vmul.f32 %v5492, %v3764
      %v5557 = vmul.f32 %v5493, %v3765
      %v5558 = vmul.f32 %v5494, %v3766
      %v5559 = vmul.f32 %v5495, %v3767
      %v5560 = vmul.f32 %v5496, %v3768
      %v5561 = vmul.f32 %v5497, %v3769
      %v5562 = vmul.f32 %v5498, %v3770
      %v5563 = vmul.f32 %v5499, %v3771
      %v5564 = vmul.f32 %v5500, %v3772
      %v5565 = vmul.f32 %v5501, %v3773
      %v5566 = vmul.f32 %v5502, %v3774
      %v5567 = vmul.f32 %v5503, %v3775
      %v5568 = vmul.f32 %v5504, %v3776
      %v5569 = vmul.f32 %v5505, %v3777
      %v5570 = vmul.f32 %v5506, %v3778
      %v5571 = vmul.f32 %v5507, %v3779
      %v5572 = vmul.f32 %v5508, %v3780
      %v5573 = vmul.f32 %v5509, %v3781
      %v5574 = vmul.f32 %v5510, %v3782
      %v5575 = vmul.f32 %v5511, %v3783
      %v5576 = vmul.f32 %v5512, %v3784
      %v5577 = vmul.f32 %v5513, %v3785
      %v5578 = vmul.f32 %v5514, %v3786
      %v5579 = vmul.f32 %v5515, %v3787
      %v5580 = vmul.f32 %v5516, %v3788
      %v5581 = vmul.f32 %v5517, %v3789
      %v5582 = vmul.f32 %v5518, %v3790
      %v5583 = vmul.f32 %v5519, %v3791
      %v5584 = vmul.f32 %v5520, %v3792
      %v5585 = vmul.f32 %v5521, %v3793
      %v5586 = vmul.f32 %v5522, %v3794
      %v5587 = vmul.f32 %v5523, %v3795
      %v5588 = vmul.f32 %v5524, %v3796
      %v5589 = vmul.f32 %v5525, %v3797
      %v5590 = vmul.f32 %v5526, %v3798
      %v5591 = vmul.f32 %v5527, %v3799
      %v5592 = vmul.f32 %v5528, %v3800
      %v5593 = vmul.f32 %v5529, %v3801
      %v5594 = vmul.f32 %v5530, %v3802
      %v5595 = vmul.f32 %v5531, %v3803
      %v5596 = vmul.f32 %v5532, %v3804
      %v5597 = vmul.f32 %v5533, %v3805
      %v5598 = vmul.f32 %v5534, %v3806
      %v5599 = vmul.f32 %v5535, %v3807
      %v5600 = vmul.f32 %v5536, %v3808
      %v5601 = vmul.f32 %v5537, %v3809
      %v5602 = vmul.f32 %v5538, %v3810
      %v5603 = vmul.f32 %v5539, %v3811
      %v5604 = vmul.f32 %v5540, 1.442695
      %v5605 = vpow.pop %v5604
      %v5606 = vmul.f32 %v5541, 1.442695
      %v5607 = vpow.pop %v5606
      %v5608 = vmul.f32 %v5542, 1.442695
      %v5609 = vpow.pop %v5608
      %v5610 = vmul.f32 %v5543, 1.442695
      %v5611 = vpow.pop %v5610
      %v5612 = vmul.f32 %v5544, 1.442695
      %v5613 = vpow.pop %v5612
      %v5614 = vmul.f32 %v5545, 1.442695
      %v5615 = vpow.pop %v5614
      %v5616 = vmul.f32 %v5546, 1.442695
      %v5617 = vpow.pop %v5616
      %v5618 = vmul.f32 %v5547, 1.442695
      %v5619 = vpow.pop %v5618
      %v5620 = vmul.f32 %v5548, 1.442695
      %v5621 = vpow.pop %v5620
      %v5622 = vmul.f32 %v5549, 1.442695
      %v5623 = vpow.pop %v5622
      %v5624 = vmul.f32 %v5550, 1.442695
      %v5625 = vpow.pop %v5624
      %v5626 = vmul.f32 %v5551, 1.442695
      %v5627 = vpow.pop %v5626
      %v5628 = vmul.f32 %v5552, 1.442695
      %v5629 = vpow.pop %v5628
      %v5630 = vmul.f32 %v5553, 1.442695
      %v5631 = vpow.pop %v5630
      %v5632 = vmul.f32 %v5554, 1.442695
      %v5633 = vpow.pop %v5632
      %v5634 = vmul.f32 %v5555, 1.442695
      %v5635 = vpow.pop %v5634
      %v5636 = vmul.f32 %v5556, 1.442695
      %v5637 = vpow.pop %v5636
      %v5638 = vmul.f32 %v5557, 1.442695
      %v5639 = vpow.pop %v5638
      %v5640 = vmul.f32 %v5558, 1.442695
      %v5641 = vpow.pop %v5640
      %v5642 = vmul.f32 %v5559, 1.442695
      %v5643 = vpow.pop %v5642
      %v5644 = vmul.f32 %v5560, 1.442695
      %v5645 = vpow.pop %v5644
      %v5646 = vmul.f32 %v5561, 1.442695
      %v5647 = vpow.pop %v5646
      %v5648 = vmul.f32 %v5562, 1.442695
      %v5649 = vpow.pop %v5648
      %v5650 = vmul.f32 %v5563, 1.442695
      %v5651 = vpow.pop %v5650
      %v5652 = vmul.f32 %v5564, 1.442695
      %v5653 = vpow.pop %v5652
      %v5654 = vmul.f32 %v5565, 1.442695
      %v5655 = vpow.pop %v5654
      %v5656 = vmul.f32 %v5566, 1.442695
      %v5657 = vpow.pop %v5656
      %v5658 = vmul.f32 %v5567, 1.442695
      %v5659 = vpow.pop %v5658
      %v5660 = vmul.f32 %v5568, 1.442695
      %v5661 = vpow.pop %v5660
      %v5662 = vmul.f32 %v5569, 1.442695
      %v5663 = vpow.pop %v5662
      %v5664 = vmul.f32 %v5570, 1.442695
      %v5665 = vpow.pop %v5664
      %v5666 = vmul.f32 %v5571, 1.442695
      %v5667 = vpow.pop %v5666
      %v5668 = vmul.f32 %v5572, 1.442695
      %v5669 = vpow.pop %v5668
      %v5670 = vmul.f32 %v5573, 1.442695
      %v5671 = vpow.pop %v5670
      %v5672 = vmul.f32 %v5574, 1.442695
      %v5673 = vpow.pop %v5672
      %v5674 = vmul.f32 %v5575, 1.442695
      %v5675 = vpow.pop %v5674
      %v5676 = vmul.f32 %v5576, 1.442695
      %v5677 = vpow.pop %v5676
      %v5678 = vmul.f32 %v5577, 1.442695
      %v5679 = vpow.pop %v5678
      %v5680 = vmul.f32 %v5578, 1.442695
      %v5681 = vpow.pop %v5680
      %v5682 = vmul.f32 %v5579, 1.442695
      %v5683 = vpow.pop %v5682
      %v5684 = vmul.f32 %v5580, 1.442695
      %v5685 = vpow.pop %v5684
      %v5686 = vmul.f32 %v5581, 1.442695
      %v5687 = vpow.pop %v5686
      %v5688 = vmul.f32 %v5582, 1.442695
      %v5689 = vpow.pop %v5688
      %v5690 = vmul.f32 %v5583, 1.442695
      %v5691 = vpow.pop %v5690
      %v5692 = vmul.f32 %v5584, 1.442695
      %v5693 = vpow.pop %v5692
      %v5694 = vmul.f32 %v5585, 1.442695
      %v5695 = vpow.pop %v5694
      %v5696 = vmul.f32 %v5586, 1.442695
      %v5697 = vpow.pop %v5696
      %v5698 = vmul.f32 %v5587, 1.442695
      %v5699 = vpow.pop %v5698
      %v5700 = vmul.f32 %v5588, 1.442695
      %v5701 = vpow.pop %v5700
      %v5702 = vmul.f32 %v5589, 1.442695
      %v5703 = vpow.pop %v5702
      %v5704 = vmul.f32 %v5590, 1.442695
      %v5705 = vpow.pop %v5704
      %v5706 = vmul.f32 %v5591, 1.442695
      %v5707 = vpow.pop %v5706
      %v5708 = vmul.f32 %v5592, 1.442695
      %v5709 = vpow.pop %v5708
      %v5710 = vmul.f32 %v5593, 1.442695
      %v5711 = vpow.pop %v5710
      %v5712 = vmul.f32 %v5594, 1.442695
      %v5713 = vpow.pop %v5712
      %v5714 = vmul.f32 %v5595, 1.442695
      %v5715 = vpow.pop %v5714
      %v5716 = vmul.f32 %v5596, 1.442695
      %v5717 = vpow.pop %v5716
      %v5718 = vmul.f32 %v5597, 1.442695
      %v5719 = vpow.pop %v5718
      %v5720 = vmul.f32 %v5598, 1.442695
      %v5721 = vpow.pop %v5720
      %v5722 = vmul.f32 %v5599, 1.442695
      %v5723 = vpow.pop %v5722
      %v5724 = vmul.f32 %v5600, 1.442695
      %v5725 = vpow.pop %v5724
      %v5726 = vmul.f32 %v5601, 1.442695
      %v5727 = vpow.pop %v5726
      %v5728 = vmul.f32 %v5602, 1.442695
      %v5729 = vpow.pop %v5728
      %v5730 = vmul.f32 %v5603, 1.442695
      %v5731 = vpow.pop %v5730
      %v5732 = vmul.f32 %v5412, %v5605
      %v5733 = vmul.f32 %v5413, %v5607
      %v5734 = vmul.f32 %v5414, %v5609
      %v5735 = vmul.f32 %v5415, %v5611
      %v5736 = vmul.f32 %v5416, %v5613
      %v5737 = vmul.f32 %v5417, %v5615
      %v5738 = vmul.f32 %v5418, %v5617
      %v5739 = vmul.f32 %v5419, %v5619
      %v5740 = vmul.f32 %v5420, %v5621
      %v5741 = vmul.f32 %v5421, %v5623
      %v5742 = vmul.f32 %v5422, %v5625
      %v5743 = vmul.f32 %v5423, %v5627
      %v5744 = vmul.f32 %v5424, %v5629
      %v5745 = vmul.f32 %v5425, %v5631
      %v5746 = vmul.f32 %v5426, %v5633
      %v5747 = vmul.f32 %v5427, %v5635
      %v5748 = vmul.f32 %v5428, %v5637
      %v5749 = vmul.f32 %v5429, %v5639
      %v5750 = vmul.f32 %v5430, %v5641
      %v5751 = vmul.f32 %v5431, %v5643
      %v5752 = vmul.f32 %v5432, %v5645
      %v5753 = vmul.f32 %v5433, %v5647
      %v5754 = vmul.f32 %v5434, %v5649
      %v5755 = vmul.f32 %v5435, %v5651
      %v5756 = vmul.f32 %v5436, %v5653
      %v5757 = vmul.f32 %v5437, %v5655
      %v5758 = vmul.f32 %v5438, %v5657
      %v5759 = vmul.f32 %v5439, %v5659
      %v5760 = vmul.f32 %v5440, %v5661
      %v5761 = vmul.f32 %v5441, %v5663
      %v5762 = vmul.f32 %v5442, %v5665
      %v5763 = vmul.f32 %v5443, %v5667
      %v5764 = vmul.f32 %v5444, %v5669
      %v5765 = vmul.f32 %v5445, %v5671
      %v5766 = vmul.f32 %v5446, %v5673
      %v5767 = vmul.f32 %v5447, %v5675
      %v5768 = vmul.f32 %v5448, %v5677
      %v5769 = vmul.f32 %v5449, %v5679
      %v5770 = vmul.f32 %v5450, %v5681
      %v5771 = vmul.f32 %v5451, %v5683
      %v5772 = vmul.f32 %v5452, %v5685
      %v5773 = vmul.f32 %v5453, %v5687
      %v5774 = vmul.f32 %v5454, %v5689
      %v5775 = vmul.f32 %v5455, %v5691
      %v5776 = vmul.f32 %v5456, %v5693
      %v5777 = vmul.f32 %v5457, %v5695
      %v5778 = vmul.f32 %v5458, %v5697
      %v5779 = vmul.f32 %v5459, %v5699
      %v5780 = vmul.f32 %v5460, %v5701
      %v5781 = vmul.f32 %v5461, %v5703
      %v5782 = vmul.f32 %v5462, %v5705
      %v5783 = vmul.f32 %v5463, %v5707
      %v5784 = vmul.f32 %v5464, %v5709
      %v5785 = vmul.f32 %v5465, %v5711
      %v5786 = vmul.f32 %v5466, %v5713
      %v5787 = vmul.f32 %v5467, %v5715
      %v5788 = vmul.f32 %v5468, %v5717
      %v5789 = vmul.f32 %v5469, %v5719
      %v5790 = vmul.f32 %v5470, %v5721
      %v5791 = vmul.f32 %v5471, %v5723
      %v5792 = vmul.f32 %v5472, %v5725
      %v5793 = vmul.f32 %v5473, %v5727
      %v5794 = vmul.f32 %v5474, %v5729
      %v5795 = vmul.f32 %v5475, %v5731
      %v5796 = vsub.f32 1.0, %v5732
      %v5797 = vsub.f32 1.0, %v5733
      %v5798 = vsub.f32 1.0, %v5734
      %v5799 = vsub.f32 1.0, %v5735
      %v5800 = vsub.f32 1.0, %v5736
      %v5801 = vsub.f32 1.0, %v5737
      %v5802 = vsub.f32 1.0, %v5738
      %v5803 = vsub.f32 1.0, %v5739
      %v5804 = vsub.f32 1.0, %v5740
      %v5805 = vsub.f32 1.0, %v5741
      %v5806 = vsub.f32 1.0, %v5742
      %v5807 = vsub.f32 1.0, %v5743
      %v5808 = vsub.f32 1.0, %v5744
      %v5809 = vsub.f32 1.0, %v5745
      %v5810 = vsub.f32 1.0, %v5746
      %v5811 = vsub.f32 1.0, %v5747
      %v5812 = vsub.f32 1.0, %v5748
      %v5813 = vsub.f32 1.0, %v5749
      %v5814 = vsub.f32 1.0, %v5750
      %v5815 = vsub.f32 1.0, %v5751
      %v5816 = vsub.f32 1.0, %v5752
      %v5817 = vsub.f32 1.0, %v5753
      %v5818 = vsub.f32 1.0, %v5754
      %v5819 = vsub.f32 1.0, %v5755
      %v5820 = vsub.f32 1.0, %v5756
      %v5821 = vsub.f32 1.0, %v5757
      %v5822 = vsub.f32 1.0, %v5758
      %v5823 = vsub.f32 1.0, %v5759
      %v5824 = vsub.f32 1.0, %v5760
      %v5825 = vsub.f32 1.0, %v5761
      %v5826 = vsub.f32 1.0, %v5762
      %v5827 = vsub.f32 1.0, %v5763
      %v5828 = vsub.f32 1.0, %v5764
      %v5829 = vsub.f32 1.0, %v5765
      %v5830 = vsub.f32 1.0, %v5766
      %v5831 = vsub.f32 1.0, %v5767
      %v5832 = vsub.f32 1.0, %v5768
      %v5833 = vsub.f32 1.0, %v5769
      %v5834 = vsub.f32 1.0, %v5770
      %v5835 = vsub.f32 1.0, %v5771
      %v5836 = vsub.f32 1.0, %v5772
      %v5837 = vsub.f32 1.0, %v5773
      %v5838 = vsub.f32 1.0, %v5774
      %v5839 = vsub.f32 1.0, %v5775
      %v5840 = vsub.f32 1.0, %v5776
      %v5841 = vsub.f32 1.0, %v5777
      %v5842 = vsub.f32 1.0, %v5778
      %v5843 = vsub.f32 1.0, %v5779
      %v5844 = vsub.f32 1.0, %v5780
      %v5845 = vsub.f32 1.0, %v5781
      %v5846 = vsub.f32 1.0, %v5782
      %v5847 = vsub.f32 1.0, %v5783
      %v5848 = vsub.f32 1.0, %v5784
      %v5849 = vsub.f32 1.0, %v5785
      %v5850 = vsub.f32 1.0, %v5786
      %v5851 = vsub.f32 1.0, %v5787
      %v5852 = vsub.f32 1.0, %v5788
      %v5853 = vsub.f32 1.0, %v5789
      %v5854 = vsub.f32 1.0, %v5790
      %v5855 = vsub.f32 1.0, %v5791
      %v5856 = vsub.f32 1.0, %v5792
      %v5857 = vsub.f32 1.0, %v5793
      %v5858 = vsub.f32 1.0, %v5794
      %v5859 = vsub.f32 1.0, %v5795
      %vm5860 = vcmp.lt.f32.partialorder %v3684, 0.0
      %vm5861 = vcmp.lt.f32.partialorder %v3685, 0.0
      %vm5862 = vcmp.lt.f32.partialorder %v3686, 0.0
      %vm5863 = vcmp.lt.f32.partialorder %v3687, 0.0
      %vm5864 = vcmp.lt.f32.partialorder %v3688, 0.0
      %vm5865 = vcmp.lt.f32.partialorder %v3689, 0.0
      %vm5866 = vcmp.lt.f32.partialorder %v3690, 0.0
      %vm5867 = vcmp.lt.f32.partialorder %v3691, 0.0
      %vm5868 = vcmp.lt.f32.partialorder %v3692, 0.0
      %vm5869 = vcmp.lt.f32.partialorder %v3693, 0.0
      %vm5870 = vcmp.lt.f32.partialorder %v3694, 0.0
      %vm5871 = vcmp.lt.f32.partialorder %v3695, 0.0
      %vm5872 = vcmp.lt.f32.partialorder %v3696, 0.0
      %vm5873 = vcmp.lt.f32.partialorder %v3697, 0.0
      %vm5874 = vcmp.lt.f32.partialorder %v3698, 0.0
      %vm5875 = vcmp.lt.f32.partialorder %v3699, 0.0
      %vm5876 = vcmp.lt.f32.partialorder %v3700, 0.0
      %vm5877 = vcmp.lt.f32.partialorder %v3701, 0.0
      %vm5878 = vcmp.lt.f32.partialorder %v3702, 0.0
      %vm5879 = vcmp.lt.f32.partialorder %v3703, 0.0
      %vm5880 = vcmp.lt.f32.partialorder %v3704, 0.0
      %vm5881 = vcmp.lt.f32.partialorder %v3705, 0.0
      %vm5882 = vcmp.lt.f32.partialorder %v3706, 0.0
      %vm5883 = vcmp.lt.f32.partialorder %v3707, 0.0
      %vm5884 = vcmp.lt.f32.partialorder %v3708, 0.0
      %vm5885 = vcmp.lt.f32.partialorder %v3709, 0.0
      %vm5886 = vcmp.lt.f32.partialorder %v3710, 0.0
      %vm5887 = vcmp.lt.f32.partialorder %v3711, 0.0
      %vm5888 = vcmp.lt.f32.partialorder %v3712, 0.0
      %vm5889 = vcmp.lt.f32.partialorder %v3713, 0.0
      %vm5890 = vcmp.lt.f32.partialorder %v3714, 0.0
      %vm5891 = vcmp.lt.f32.partialorder %v3715, 0.0
      %vm5892 = vcmp.lt.f32.partialorder %v3716, 0.0
      %vm5893 = vcmp.lt.f32.partialorder %v3717, 0.0
      %vm5894 = vcmp.lt.f32.partialorder %v3718, 0.0
      %vm5895 = vcmp.lt.f32.partialorder %v3719, 0.0
      %vm5896 = vcmp.lt.f32.partialorder %v3720, 0.0
      %vm5897 = vcmp.lt.f32.partialorder %v3721, 0.0
      %vm5898 = vcmp.lt.f32.partialorder %v3722, 0.0
      %vm5899 = vcmp.lt.f32.partialorder %v3723, 0.0
      %vm5900 = vcmp.lt.f32.partialorder %v3724, 0.0
      %vm5901 = vcmp.lt.f32.partialorder %v3725, 0.0
      %vm5902 = vcmp.lt.f32.partialorder %v3726, 0.0
      %vm5903 = vcmp.lt.f32.partialorder %v3727, 0.0
      %vm5904 = vcmp.lt.f32.partialorder %v3728, 0.0
      %vm5905 = vcmp.lt.f32.partialorder %v3729, 0.0
      %vm5906 = vcmp.lt.f32.partialorder %v3730, 0.0
      %vm5907 = vcmp.lt.f32.partialorder %v3731, 0.0
      %vm5908 = vcmp.lt.f32.partialorder %v3732, 0.0
      %vm5909 = vcmp.lt.f32.partialorder %v3733, 0.0
      %vm5910 = vcmp.lt.f32.partialorder %v3734, 0.0
      %vm5911 = vcmp.lt.f32.partialorder %v3735, 0.0
      %vm5912 = vcmp.lt.f32.partialorder %v3736, 0.0
      %vm5913 = vcmp.lt.f32.partialorder %v3737, 0.0
      %vm5914 = vcmp.lt.f32.partialorder %v3738, 0.0
      %vm5915 = vcmp.lt.f32.partialorder %v3739, 0.0
      %vm5916 = vcmp.lt.f32.partialorder %v3740, 0.0
      %vm5917 = vcmp.lt.f32.partialorder %v3741, 0.0
      %vm5918 = vcmp.lt.f32.partialorder %v3742, 0.0
      %vm5919 = vcmp.lt.f32.partialorder %v3743, 0.0
      %vm5920 = vcmp.lt.f32.partialorder %v3744, 0.0
      %vm5921 = vcmp.lt.f32.partialorder %v3745, 0.0
      %vm5922 = vcmp.lt.f32.partialorder %v3746, 0.0
      %vm5923 = vcmp.lt.f32.partialorder %v3747, 0.0
      %v5924 = vsub.f32 0.0, %v5796
      %v5925 = vsub.f32 0.0, %v5797
      %v5926 = vsub.f32 0.0, %v5798
      %v5927 = vsub.f32 0.0, %v5799
      %v5928 = vsub.f32 0.0, %v5800
      %v5929 = vsub.f32 0.0, %v5801
      %v5930 = vsub.f32 0.0, %v5802
      %v5931 = vsub.f32 0.0, %v5803
      %v5932 = vsub.f32 0.0, %v5804
      %v5933 = vsub.f32 0.0, %v5805
      %v5934 = vsub.f32 0.0, %v5806
      %v5935 = vsub.f32 0.0, %v5807
      %v5936 = vsub.f32 0.0, %v5808
      %v5937 = vsub.f32 0.0, %v5809
      %v5938 = vsub.f32 0.0, %v5810
      %v5939 = vsub.f32 0.0, %v5811
      %v5940 = vsub.f32 0.0, %v5812
      %v5941 = vsub.f32 0.0, %v5813
      %v5942 = vsub.f32 0.0, %v5814
      %v5943 = vsub.f32 0.0, %v5815
      %v5944 = vsub.f32 0.0, %v5816
      %v5945 = vsub.f32 0.0, %v5817
      %v5946 = vsub.f32 0.0, %v5818
      %v5947 = vsub.f32 0.0, %v5819
      %v5948 = vsub.f32 0.0, %v5820
      %v5949 = vsub.f32 0.0, %v5821
      %v5950 = vsub.f32 0.0, %v5822
      %v5951 = vsub.f32 0.0, %v5823
      %v5952 = vsub.f32 0.0, %v5824
      %v5953 = vsub.f32 0.0, %v5825
      %v5954 = vsub.f32 0.0, %v5826
      %v5955 = vsub.f32 0.0, %v5827
      %v5956 = vsub.f32 0.0, %v5828
      %v5957 = vsub.f32 0.0, %v5829
      %v5958 = vsub.f32 0.0, %v5830
      %v5959 = vsub.f32 0.0, %v5831
      %v5960 = vsub.f32 0.0, %v5832
      %v5961 = vsub.f32 0.0, %v5833
      %v5962 = vsub.f32 0.0, %v5834
      %v5963 = vsub.f32 0.0, %v5835
      %v5964 = vsub.f32 0.0, %v5836
      %v5965 = vsub.f32 0.0, %v5837
      %v5966 = vsub.f32 0.0, %v5838
      %v5967 = vsub.f32 0.0, %v5839
      %v5968 = vsub.f32 0.0, %v5840
      %v5969 = vsub.f32 0.0, %v5841
      %v5970 = vsub.f32 0.0, %v5842
      %v5971 = vsub.f32 0.0, %v5843
      %v5972 = vsub.f32 0.0, %v5844
      %v5973 = vsub.f32 0.0, %v5845
      %v5974 = vsub.f32 0.0, %v5846
      %v5975 = vsub.f32 0.0, %v5847
      %v5976 = vsub.f32 0.0, %v5848
      %v5977 = vsub.f32 0.0, %v5849
      %v5978 = vsub.f32 0.0, %v5850
      %v5979 = vsub.f32 0.0, %v5851
      %v5980 = vsub.f32 0.0, %v5852
      %v5981 = vsub.f32 0.0, %v5853
      %v5982 = vsub.f32 0.0, %v5854
      %v5983 = vsub.f32 0.0, %v5855
      %v5984 = vsub.f32 0.0, %v5856
      %v5985 = vsub.f32 0.0, %v5857
      %v5986 = vsub.f32 0.0, %v5858
      %v5987 = vsub.f32 0.0, %v5859
      %v5988 = vsel %vm5860, %v5924, %v5796
      %v5989 = vsel %vm5861, %v5925, %v5797
      %v5990 = vsel %vm5862, %v5926, %v5798
      %v5991 = vsel %vm5863, %v5927, %v5799
      %v5992 = vsel %vm5864, %v5928, %v5800
      %v5993 = vsel %vm5865, %v5929, %v5801
      %v5994 = vsel %vm5866, %v5930, %v5802
      %v5995 = vsel %vm5867, %v5931, %v5803
      %v5996 = vsel %vm5868, %v5932, %v5804
      %v5997 = vsel %vm5869, %v5933, %v5805
      %v5998 = vsel %vm5870, %v5934, %v5806
      %v5999 = vsel %vm5871, %v5935, %v5807
      %v6000 = vsel %vm5872, %v5936, %v5808
      %v6001 = vsel %vm5873, %v5937, %v5809
      %v6002 = vsel %vm5874, %v5938, %v5810
      %v6003 = vsel %vm5875, %v5939, %v5811
      %v6004 = vsel %vm5876, %v5940, %v5812
      %v6005 = vsel %vm5877, %v5941, %v5813
      %v6006 = vsel %vm5878, %v5942, %v5814
      %v6007 = vsel %vm5879, %v5943, %v5815
      %v6008 = vsel %vm5880, %v5944, %v5816
      %v6009 = vsel %vm5881, %v5945, %v5817
      %v6010 = vsel %vm5882, %v5946, %v5818
      %v6011 = vsel %vm5883, %v5947, %v5819
      %v6012 = vsel %vm5884, %v5948, %v5820
      %v6013 = vsel %vm5885, %v5949, %v5821
      %v6014 = vsel %vm5886, %v5950, %v5822
      %v6015 = vsel %vm5887, %v5951, %v5823
      %v6016 = vsel %vm5888, %v5952, %v5824
      %v6017 = vsel %vm5889, %v5953, %v5825
      %v6018 = vsel %vm5890, %v5954, %v5826
      %v6019 = vsel %vm5891, %v5955, %v5827
      %v6020 = vsel %vm5892, %v5956, %v5828
      %v6021 = vsel %vm5893, %v5957, %v5829
      %v6022 = vsel %vm5894, %v5958, %v5830
      %v6023 = vsel %vm5895, %v5959, %v5831
      %v6024 = vsel %vm5896, %v5960, %v5832
      %v6025 = vsel %vm5897, %v5961, %v5833
      %v6026 = vsel %vm5898, %v5962, %v5834
      %v6027 = vsel %vm5899, %v5963, %v5835
      %v6028 = vsel %vm5900, %v5964, %v5836
      %v6029 = vsel %vm5901, %v5965, %v5837
      %v6030 = vsel %vm5902, %v5966, %v5838
      %v6031 = vsel %vm5903, %v5967, %v5839
      %v6032 = vsel %vm5904, %v5968, %v5840
      %v6033 = vsel %vm5905, %v5969, %v5841
      %v6034 = vsel %vm5906, %v5970, %v5842
      %v6035 = vsel %vm5907, %v5971, %v5843
      %v6036 = vsel %vm5908, %v5972, %v5844
      %v6037 = vsel %vm5909, %v5973, %v5845
      %v6038 = vsel %vm5910, %v5974, %v5846
      %v6039 = vsel %vm5911, %v5975, %v5847
      %v6040 = vsel %vm5912, %v5976, %v5848
      %v6041 = vsel %vm5913, %v5977, %v5849
      %v6042 = vsel %vm5914, %v5978, %v5850
      %v6043 = vsel %vm5915, %v5979, %v5851
      %v6044 = vsel %vm5916, %v5980, %v5852
      %v6045 = vsel %vm5917, %v5981, %v5853
      %v6046 = vsel %vm5918, %v5982, %v5854
      %v6047 = vsel %vm5919, %v5983, %v5855
      %v6048 = vsel %vm5920, %v5984, %v5856
      %v6049 = vsel %vm5921, %v5985, %v5857
      %v6050 = vsel %vm5922, %v5986, %v5858
      %v6051 = vsel %vm5923, %v5987, %v5859
      %v6052 = vmul.f32 %v3476, 0.5
      %v6053 = vmul.f32 %v3589, 0.5
      %v6054 = vmul.f32 %v3479, 0.5
      %v6055 = vmul.f32 %v3592, 0.5
      %v6056 = vmul.f32 %v3482, 0.5
      %v6057 = vmul.f32 %v3595, 0.5
      %v6058 = vmul.f32 %v3485, 0.5
      %v6059 = vmul.f32 %v3598, 0.5
      %v6060 = vmul.f32 %v3488, 0.5
      %v6061 = vmul.f32 %v3601, 0.5
      %v6062 = vmul.f32 %v3491, 0.5
      %v6063 = vmul.f32 %v3604, 0.5
      %v6064 = vmul.f32 %v3494, 0.5
      %v6065 = vmul.f32 %v3607, 0.5
      %v6066 = vmul.f32 %v3497, 0.5
      %v6067 = vmul.f32 %v3610, 0.5
      %v6068 = vmul.f32 %v3500, 0.5
      %v6069 = vmul.f32 %v3613, 0.5
      %v6070 = vmul.f32 %v3503, 0.5
      %v6071 = vmul.f32 %v3616, 0.5
      %v6072 = vmul.f32 %v3506, 0.5
      %v6073 = vmul.f32 %v3619, 0.5
      %v6074 = vmul.f32 %v3509, 0.5
      %v6075 = vmul.f32 %v3622, 0.5
      %v6076 = vmul.f32 %v3512, 0.5
      %v6077 = vmul.f32 %v3625, 0.5
      %v6078 = vmul.f32 %v3515, 0.5
      %v6079 = vmul.f32 %v3628, 0.5
      %v6080 = vmul.f32 %v3518, 0.5
      %v6081 = vmul.f32 %v3631, 0.5
      %v6082 = vmul.f32 %v3521, 0.5
      %v6083 = vmul.f32 %v3634, 0.5
      %v6084 = vmul.f32 %v3524, 0.5
      %v6085 = vmul.f32 %v3637, 0.5
      %v6086 = vmul.f32 %v3527, 0.5
      %v6087 = vmul.f32 %v3640, 0.5
      %v6088 = vmul.f32 %v3530, 0.5
      %v6089 = vmul.f32 %v3643, 0.5
      %v6090 = vmul.f32 %v3533, 0.5
      %v6091 = vmul.f32 %v3646, 0.5
      %v6092 = vmul.f32 %v3536, 0.5
      %v6093 = vmul.f32 %v3649, 0.5
      %v6094 = vmul.f32 %v3539, 0.5
      %v6095 = vmul.f32 %v3652, 0.5
      %v6096 = vmul.f32 %v3542, 0.5
      %v6097 = vmul.f32 %v3655, 0.5
      %v6098 = vmul.f32 %v3545, 0.5
      %v6099 = vmul.f32 %v3658, 0.5
      %v6100 = vmul.f32 %v3548, 0.5
      %v6101 = vmul.f32 %v3661, 0.5
      %v6102 = vmul.f32 %v3551, 0.5
      %v6103 = vmul.f32 %v3664, 0.5
      %v6104 = vmul.f32 %v3554, 0.5
      %v6105 = vmul.f32 %v3667, 0.5
      %v6106 = vmul.f32 %v3557, 0.5
      %v6107 = vmul.f32 %v3670, 0.5
      %v6108 = vmul.f32 %v3560, 0.5
      %v6109 = vmul.f32 %v3673, 0.5
      %v6110 = vmul.f32 %v3563, 0.5
      %v6111 = vmul.f32 %v3676, 0.5
      %v6112 = vmul.f32 %v3566, 0.5
      %v6113 = vmul.f32 %v3679, 0.5
      %v6114 = vmul.f32 %v3569, 0.5
      %v6115 = vmul.f32 %v3682, 0.5
      %v6116 = vadd.f32 %v5988, 1.0
      %v6117 = vadd.f32 %v5989, 1.0
      %v6118 = vadd.f32 %v5990, 1.0
      %v6119 = vadd.f32 %v5991, 1.0
      %v6120 = vadd.f32 %v5992, 1.0
      %v6121 = vadd.f32 %v5993, 1.0
      %v6122 = vadd.f32 %v5994, 1.0
      %v6123 = vadd.f32 %v5995, 1.0
      %v6124 = vadd.f32 %v5996, 1.0
      %v6125 = vadd.f32 %v5997, 1.0
      %v6126 = vadd.f32 %v5998, 1.0
      %v6127 = vadd.f32 %v5999, 1.0
      %v6128 = vadd.f32 %v6000, 1.0
      %v6129 = vadd.f32 %v6001, 1.0
      %v6130 = vadd.f32 %v6002, 1.0
      %v6131 = vadd.f32 %v6003, 1.0
      %v6132 = vadd.f32 %v6004, 1.0
      %v6133 = vadd.f32 %v6005, 1.0
      %v6134 = vadd.f32 %v6006, 1.0
      %v6135 = vadd.f32 %v6007, 1.0
      %v6136 = vadd.f32 %v6008, 1.0
      %v6137 = vadd.f32 %v6009, 1.0
      %v6138 = vadd.f32 %v6010, 1.0
      %v6139 = vadd.f32 %v6011, 1.0
      %v6140 = vadd.f32 %v6012, 1.0
      %v6141 = vadd.f32 %v6013, 1.0
      %v6142 = vadd.f32 %v6014, 1.0
      %v6143 = vadd.f32 %v6015, 1.0
      %v6144 = vadd.f32 %v6016, 1.0
      %v6145 = vadd.f32 %v6017, 1.0
      %v6146 = vadd.f32 %v6018, 1.0
      %v6147 = vadd.f32 %v6019, 1.0
      %v6148 = vadd.f32 %v6020, 1.0
      %v6149 = vadd.f32 %v6021, 1.0
      %v6150 = vadd.f32 %v6022, 1.0
      %v6151 = vadd.f32 %v6023, 1.0
      %v6152 = vadd.f32 %v6024, 1.0
      %v6153 = vadd.f32 %v6025, 1.0
      %v6154 = vadd.f32 %v6026, 1.0
      %v6155 = vadd.f32 %v6027, 1.0
      %v6156 = vadd.f32 %v6028, 1.0
      %v6157 = vadd.f32 %v6029, 1.0
      %v6158 = vadd.f32 %v6030, 1.0
      %v6159 = vadd.f32 %v6031, 1.0
      %v6160 = vadd.f32 %v6032, 1.0
      %v6161 = vadd.f32 %v6033, 1.0
      %v6162 = vadd.f32 %v6034, 1.0
      %v6163 = vadd.f32 %v6035, 1.0
      %v6164 = vadd.f32 %v6036, 1.0
      %v6165 = vadd.f32 %v6037, 1.0
      %v6166 = vadd.f32 %v6038, 1.0
      %v6167 = vadd.f32 %v6039, 1.0
      %v6168 = vadd.f32 %v6040, 1.0
      %v6169 = vadd.f32 %v6041, 1.0
      %v6170 = vadd.f32 %v6042, 1.0
      %v6171 = vadd.f32 %v6043, 1.0
      %v6172 = vadd.f32 %v6044, 1.0
      %v6173 = vadd.f32 %v6045, 1.0
      %v6174 = vadd.f32 %v6046, 1.0
      %v6175 = vadd.f32 %v6047, 1.0
      %v6176 = vadd.f32 %v6048, 1.0
      %v6177 = vadd.f32 %v6049, 1.0
      %v6178 = vadd.f32 %v6050, 1.0
      %v6179 = vadd.f32 %v6051, 1.0
      %v6180 = vmul.f32 %v6052, %v6116
      %v6181 = vmul.f32 %v6053, %v6117
      %v6182 = vmul.f32 %v6054, %v6118
      %v6183 = vmul.f32 %v6055, %v6119
      %v6184 = vmul.f32 %v6056, %v6120
      %v6185 = vmul.f32 %v6057, %v6121
      %v6186 = vmul.f32 %v6058, %v6122
      %v6187 = vmul.f32 %v6059, %v6123
      %v6188 = vmul.f32 %v6060, %v6124
      %v6189 = vmul.f32 %v6061, %v6125
      %v6190 = vmul.f32 %v6062, %v6126
      %v6191 = vmul.f32 %v6063, %v6127
      %v6192 = vmul.f32 %v6064, %v6128
      %v6193 = vmul.f32 %v6065, %v6129
      %v6194 = vmul.f32 %v6066, %v6130
      %v6195 = vmul.f32 %v6067, %v6131
      %v6196 = vmul.f32 %v6068, %v6132
      %v6197 = vmul.f32 %v6069, %v6133
      %v6198 = vmul.f32 %v6070, %v6134
      %v6199 = vmul.f32 %v6071, %v6135
      %v6200 = vmul.f32 %v6072, %v6136
      %v6201 = vmul.f32 %v6073, %v6137
      %v6202 = vmul.f32 %v6074, %v6138
      %v6203 = vmul.f32 %v6075, %v6139
      %v6204 = vmul.f32 %v6076, %v6140
      %v6205 = vmul.f32 %v6077, %v6141
      %v6206 = vmul.f32 %v6078, %v6142
      %v6207 = vmul.f32 %v6079, %v6143
      %v6208 = vmul.f32 %v6080, %v6144
      %v6209 = vmul.f32 %v6081, %v6145
      %v6210 = vmul.f32 %v6082, %v6146
      %v6211 = vmul.f32 %v6083, %v6147
      %v6212 = vmul.f32 %v6084, %v6148
      %v6213 = vmul.f32 %v6085, %v6149
      %v6214 = vmul.f32 %v6086, %v6150
      %v6215 = vmul.f32 %v6087, %v6151
      %v6216 = vmul.f32 %v6088, %v6152
      %v6217 = vmul.f32 %v6089, %v6153
      %v6218 = vmul.f32 %v6090, %v6154
      %v6219 = vmul.f32 %v6091, %v6155
      %v6220 = vmul.f32 %v6092, %v6156
      %v6221 = vmul.f32 %v6093, %v6157
      %v6222 = vmul.f32 %v6094, %v6158
      %v6223 = vmul.f32 %v6095, %v6159
      %v6224 = vmul.f32 %v6096, %v6160
      %v6225 = vmul.f32 %v6097, %v6161
      %v6226 = vmul.f32 %v6098, %v6162
      %v6227 = vmul.f32 %v6099, %v6163
      %v6228 = vmul.f32 %v6100, %v6164
      %v6229 = vmul.f32 %v6101, %v6165
      %v6230 = vmul.f32 %v6102, %v6166
      %v6231 = vmul.f32 %v6103, %v6167
      %v6232 = vmul.f32 %v6104, %v6168
      %v6233 = vmul.f32 %v6105, %v6169
      %v6234 = vmul.f32 %v6106, %v6170
      %v6235 = vmul.f32 %v6107, %v6171
      %v6236 = vmul.f32 %v6108, %v6172
      %v6237 = vmul.f32 %v6109, %v6173
      %v6238 = vmul.f32 %v6110, %v6174
      %v6239 = vmul.f32 %v6111, %v6175
      %v6240 = vmul.f32 %v6112, %v6176
      %v6241 = vmul.f32 %v6113, %v6177
      %v6242 = vmul.f32 %v6114, %v6178
      %v6243 = vmul.f32 %v6115, %v6179
      %v6244 = vld [vmem:[%s11] sm:$0xff]
      %v6245 = vld [vmem:[%s11 + $0x8] sm:$0xff]
      %v6246 = vld [vmem:[%s11 + $0x10] sm:$0xff]
      %v6247 = vld [vmem:[%s11 + $0x18] sm:$0xff]
      %v6248 = vld [vmem:[%s11 + $0x20] sm:$0xff]
      %v6249 = vld [vmem:[%s11 + $0x28] sm:$0xff]
      %v6250 = vld [vmem:[%s11 + $0x30] sm:$0xff]
      %v6251 = vld [vmem:[%s11 + $0x38] sm:$0xff]
      %v6252 = vld [vmem:[%s11 + $0x40] sm:$0xff]
      %v6253 = vld [vmem:[%s11 + $0x48] sm:$0xff]
      %v6254 = vld [vmem:[%s11 + $0x50] sm:$0xff]
      %v6255 = vld [vmem:[%s11 + $0x58] sm:$0xff]
      %v6256 = vld [vmem:[%s11 + $0x60] sm:$0xff]
      %v6257 = vld [vmem:[%s11 + $0x68] sm:$0xff]
      %v6258 = vld [vmem:[%s11 + $0x70] sm:$0xff]
      %v6259 = vld [vmem:[%s11 + $0x78] sm:$0xff]
      %v6260 = vld [vmem:[%s12] sm:$0xff]
      %v6261 = vld [vmem:[%s12 + $0x8] sm:$0xff]
      %v6262 = vld [vmem:[%s12 + $0x10] sm:$0xff]
      %v6263 = vld [vmem:[%s12 + $0x18] sm:$0xff]
      %v6264 = vld [vmem:[%s12 + $0x20] sm:$0xff]
      %v6265 = vld [vmem:[%s12 + $0x28] sm:$0xff]
      %v6266 = vld [vmem:[%s12 + $0x30] sm:$0xff]
      %v6267 = vld [vmem:[%s12 + $0x38] sm:$0xff]
      %6269 = vset.pattern.permute.xlu0 0
      %6270 = vperm.xlu0 %6269, %v6260
      %v6271 = vpop.permute.xlu0 %6270
      %6274 = vset.pattern.permute.xlu0 0
      %6275 = vperm.xlu0 %6274, %v6261
      %v6276 = vpop.permute.xlu0 %6275
      %6279 = vset.pattern.permute.xlu0 0
      %6280 = vperm.xlu0 %6279, %v6262
      %v6281 = vpop.permute.xlu0 %6280
      %6284 = vset.pattern.permute.xlu0 0
      %6285 = vperm.xlu0 %6284, %v6263
      %v6286 = vpop.permute.xlu0 %6285
      %6289 = vset.pattern.permute.xlu0 0
      %6290 = vperm.xlu0 %6289, %v6264
      %v6291 = vpop.permute.xlu0 %6290
      %6294 = vset.pattern.permute.xlu0 0
      %6295 = vperm.xlu0 %6294, %v6265
      %v6296 = vpop.permute.xlu0 %6295
      %6299 = vset.pattern.permute.xlu0 0
      %6300 = vperm.xlu0 %6299, %v6266
      %v6301 = vpop.permute.xlu0 %6300
      %6304 = vset.pattern.permute.xlu0 0
      %6305 = vperm.xlu0 %6304, %v6267
      %v6306 = vpop.permute.xlu0 %6305
      %6308 = vmatpush.msra.mxu0 %v6210
      %6309 = vmatpush.msra.mxu0 %v6208
      %6310 = vmatpush.msra.mxu0 %v6206
      %6311 = vmatpush.msra.mxu0 %v6204
      %6312 = vmatpush.msra.mxu0 %v6202
      %6313 = vmatpush.msra.mxu0 %v6200
      %6314 = vmatpush.msra.mxu0 %v6198
      %6315 = vmatpush.msra.mxu0 %v6196
      %6316 = vmatpush.msra.mxu0 %v6194
      %6317 = vmatpush.msra.mxu0 %v6192
      %6318 = vmatpush.msra.mxu0 %v6190
      %6319 = vmatpush.msra.mxu0 %v6188
      %6320 = vmatpush.msra.mxu0 %v6186
      %6321 = vmatpush.msra.mxu0 %v6184
      %6322 = vmatpush.msra.mxu0 %v6182
      %6323 = vmatpush.msra.mxu0 %v6180
      %6324 = vmatmul.f32.gmra.mxu0 %v6244
      %v6325 = vpop.f32.mrf.mxu0
      %v6326 = vadd.f32 %v6271, %v6325
      %6327 = vmatmul.f32.gmra.mxu0 %v6246
      %v6328 = vpop.f32.mrf.mxu0
      %v6329 = vadd.f32 %v6276, %v6328
      %6330 = vmatmul.f32.gmra.mxu0 %v6248
      %v6331 = vpop.f32.mrf.mxu0
      %v6332 = vadd.f32 %v6281, %v6331
      %6333 = vmatmul.f32.gmra.mxu0 %v6250
      %v6334 = vpop.f32.mrf.mxu0
      %v6335 = vadd.f32 %v6286, %v6334
      %6336 = vmatmul.f32.gmra.mxu0 %v6252
      %v6337 = vpop.f32.mrf.mxu0
      %v6338 = vadd.f32 %v6291, %v6337
      %6339 = vmatmul.f32.gmra.mxu0 %v6254
      %v6340 = vpop.f32.mrf.mxu0
      %v6341 = vadd.f32 %v6296, %v6340
      %6342 = vmatmul.f32.gmra.mxu0 %v6256
      %v6343 = vpop.f32.mrf.mxu0
      %v6344 = vadd.f32 %v6301, %v6343
      %6345 = vmatmul.f32.gmra.mxu0 %v6258
      %v6346 = vpop.f32.mrf.mxu0
      %v6347 = vadd.f32 %v6306, %v6346
      %6348 = vdwg.mxu0
      %6349 = vmatpush.msra.mxu0 %v6242
      %6350 = vmatpush.msra.mxu0 %v6240
      %6351 = vmatpush.msra.mxu0 %v6238
      %6352 = vmatpush.msra.mxu0 %v6236
      %6353 = vmatpush.msra.mxu0 %v6234
      %6354 = vmatpush.msra.mxu0 %v6232
      %6355 = vmatpush.msra.mxu0 %v6230
      %6356 = vmatpush.msra.mxu0 %v6228
      %6357 = vmatpush.msra.mxu0 %v6226
      %6358 = vmatpush.msra.mxu0 %v6224
      %6359 = vmatpush.msra.mxu0 %v6222
      %6360 = vmatpush.msra.mxu0 %v6220
      %6361 = vmatpush.msra.mxu0 %v6218
      %6362 = vmatpush.msra.mxu0 %v6216
      %6363 = vmatpush.msra.mxu0 %v6214
      %6364 = vmatpush.msra.mxu0 %v6212
      %6365 = vmatmul.f32.gmra.mxu0 %v6245
      %v6366 = vpop.f32.mrf.mxu0
      %v6367 = vadd.f32 %v6326, %v6366
      %6368 = vmatmul.f32.gmra.mxu0 %v6247
      %v6369 = vpop.f32.mrf.mxu0
      %v6370 = vadd.f32 %v6329, %v6369
      %6371 = vmatmul.f32.gmra.mxu0 %v6249
      %v6372 = vpop.f32.mrf.mxu0
      %v6373 = vadd.f32 %v6332, %v6372
      %6374 = vmatmul.f32.gmra.mxu0 %v6251
      %v6375 = vpop.f32.mrf.mxu0
      %v6376 = vadd.f32 %v6335, %v6375
      %6377 = vmatmul.f32.gmra.mxu0 %v6253
      %v6378 = vpop.f32.mrf.mxu0
      %v6379 = vadd.f32 %v6338, %v6378
      %6380 = vmatmul.f32.gmra.mxu0 %v6255
      %v6381 = vpop.f32.mrf.mxu0
      %v6382 = vadd.f32 %v6341, %v6381
      %6383 = vmatmul.f32.gmra.mxu0 %v6257
      %v6384 = vpop.f32.mrf.mxu0
      %v6385 = vadd.f32 %v6344, %v6384
      %6386 = vmatmul.f32.gmra.mxu0 %v6259
      %v6387 = vpop.f32.mrf.mxu0
      %v6388 = vadd.f32 %v6347, %v6387
      %6389 = vdwg.mxu0
      %6390 = vmatpush.msra.mxu0 %v6211
      %6391 = vmatpush.msra.mxu0 %v6209
      %6392 = vmatpush.msra.mxu0 %v6207
      %6393 = vmatpush.msra.mxu0 %v6205
      %6394 = vmatpush.msra.mxu0 %v6203
      %6395 = vmatpush.msra.mxu0 %v6201
      %6396 = vmatpush.msra.mxu0 %v6199
      %6397 = vmatpush.msra.mxu0 %v6197
      %6398 = vmatpush.msra.mxu0 %v6195
      %6399 = vmatpush.msra.mxu0 %v6193
      %6400 = vmatpush.msra.mxu0 %v6191
      %6401 = vmatpush.msra.mxu0 %v6189
      %6402 = vmatpush.msra.mxu0 %v6187
      %6403 = vmatpush.msra.mxu0 %v6185
      %6404 = vmatpush.msra.mxu0 %v6183
      %6405 = vmatpush.msra.mxu0 %v6181
      %6406 = vmatmul.f32.gmra.mxu0 %v6244
      %v6407 = vpop.f32.mrf.mxu0
      %v6408 = vadd.f32 %v6271, %v6407
      %6409 = vmatmul.f32.gmra.mxu0 %v6246
      %v6410 = vpop.f32.mrf.mxu0
      %v6411 = vadd.f32 %v6276, %v6410
      %6412 = vmatmul.f32.gmra.mxu0 %v6248
      %v6413 = vpop.f32.mrf.mxu0
      %v6414 = vadd.f32 %v6281, %v6413
      %6415 = vmatmul.f32.gmra.mxu0 %v6250
      %v6416 = vpop.f32.mrf.mxu0
      %v6417 = vadd.f32 %v6286, %v6416
      %6418 = vmatmul.f32.gmra.mxu0 %v6252
      %v6419 = vpop.f32.mrf.mxu0
      %v6420 = vadd.f32 %v6291, %v6419
      %6421 = vmatmul.f32.gmra.mxu0 %v6254
      %v6422 = vpop.f32.mrf.mxu0
      %v6423 = vadd.f32 %v6296, %v6422
      %6424 = vmatmul.f32.gmra.mxu0 %v6256
      %v6425 = vpop.f32.mrf.mxu0
      %v6426 = vadd.f32 %v6301, %v6425
      %6427 = vmatmul.f32.gmra.mxu0 %v6258
      %v6428 = vpop.f32.mrf.mxu0
      %v6429 = vadd.f32 %v6306, %v6428
      %6430 = vdwg.mxu0
      %6431 = vmatpush.msra.mxu0 %v6243
      %6432 = vmatpush.msra.mxu0 %v6241
      %6433 = vmatpush.msra.mxu0 %v6239
      %6434 = vmatpush.msra.mxu0 %v6237
      %6435 = vmatpush.msra.mxu0 %v6235
      %6436 = vmatpush.msra.mxu0 %v6233
      %6437 = vmatpush.msra.mxu0 %v6231
      %6438 = vmatpush.msra.mxu0 %v6229
      %6439 = vmatpush.msra.mxu0 %v6227
      %6440 = vmatpush.msra.mxu0 %v6225
      %6441 = vmatpush.msra.mxu0 %v6223
      %6442 = vmatpush.msra.mxu0 %v6221
      %6443 = vmatpush.msra.mxu0 %v6219
      %6444 = vmatpush.msra.mxu0 %v6217
      %6445 = vmatpush.msra.mxu0 %v6215
      %6446 = vmatpush.msra.mxu0 %v6213
      %6447 = vmatmul.f32.gmra.mxu0 %v6245
      %v6448 = vpop.f32.mrf.mxu0
      %v6449 = vadd.f32 %v6408, %v6448
      %6450 = vmatmul.f32.gmra.mxu0 %v6247
      %v6451 = vpop.f32.mrf.mxu0
      %v6452 = vadd.f32 %v6411, %v6451
      %6453 = vmatmul.f32.gmra.mxu0 %v6249
      %v6454 = vpop.f32.mrf.mxu0
      %v6455 = vadd.f32 %v6414, %v6454
      %6456 = vmatmul.f32.gmra.mxu0 %v6251
      %v6457 = vpop.f32.mrf.mxu0
      %v6458 = vadd.f32 %v6417, %v6457
      %6459 = vmatmul.f32.gmra.mxu0 %v6253
      %v6460 = vpop.f32.mrf.mxu0
      %v6461 = vadd.f32 %v6420, %v6460
      %6462 = vmatmul.f32.gmra.mxu0 %v6255
      %v6463 = vpop.f32.mrf.mxu0
      %v6464 = vadd.f32 %v6423, %v6463
      %6465 = vmatmul.f32.gmra.mxu0 %v6257
      %v6466 = vpop.f32.mrf.mxu0
      %v6467 = vadd.f32 %v6426, %v6466
      %6468 = vmatmul.f32.gmra.mxu0 %v6259
      %v6469 = vpop.f32.mrf.mxu0
      %v6470 = vadd.f32 %v6429, %v6469
      %6471 = vdwg.mxu0
      %v6472 = vadd.f32 %v2987, %v6367
      %v6473 = vadd.f32 %v2988, %v6449
      %v6474 = vadd.f32 %v2989, %v6370
      %v6475 = vadd.f32 %v2990, %v6452
      %v6476 = vadd.f32 %v2991, %v6373
      %v6477 = vadd.f32 %v2992, %v6455
      %v6478 = vadd.f32 %v2993, %v6376
      %v6479 = vadd.f32 %v2994, %v6458
      %v6480 = vadd.f32 %v2995, %v6379
      %v6481 = vadd.f32 %v2996, %v6461
      %v6482 = vadd.f32 %v2997, %v6382
      %v6483 = vadd.f32 %v2998, %v6464
      %v6484 = vadd.f32 %v2999, %v6385
      %v6485 = vadd.f32 %v3000, %v6467
      %v6486 = vadd.f32 %v3001, %v6388
      %v6487 = vadd.f32 %v3002, %v6470
      %6488 = vst [vmem:[%s442] sm:$0xff] %v6472
      %6489 = vst [vmem:[%s442 + $0x8] sm:$0xff] %v6473
      %6490 = vst [vmem:[%s442 + $0x10] sm:$0xff] %v6474
      %6491 = vst [vmem:[%s442 + $0x18] sm:$0xff] %v6475
      %6492 = vst [vmem:[%s442 + $0x20] sm:$0xff] %v6476
      %6493 = vst [vmem:[%s442 + $0x28] sm:$0xff] %v6477
      %6494 = vst [vmem:[%s442 + $0x30] sm:$0xff] %v6478
      %6495 = vst [vmem:[%s442 + $0x38] sm:$0xff] %v6479
      %6496 = vst [vmem:[%s442 + $0x40] sm:$0xff] %v6480
      %6497 = vst [vmem:[%s442 + $0x48] sm:$0xff] %v6481
      %6498 = vst [vmem:[%s442 + $0x50] sm:$0xff] %v6482
      %6499 = vst [vmem:[%s442 + $0x58] sm:$0xff] %v6483
      %6500 = vst [vmem:[%s442 + $0x60] sm:$0xff] %v6484
      %6501 = vst [vmem:[%s442 + $0x68] sm:$0xff] %v6485
      %6502 = vst [vmem:[%s442 + $0x70] sm:$0xff] %v6486
      %6503 = vst [vmem:[%s442 + $0x78] sm:$0xff] %v6487
      %p6504 = scmp.lt.s32.totalorder %s26, 1
      %s6505 = scalar_select %p6504, %s26, 1
      %s6506 = smul.addr %s6505, 16
      %s6507 = smul.addr %s6506, 8
      %s6508 = scalar_lea.vmem %s13, %s6507
      // Predicated region
      $region73: #{cluster_block_forward.1} parent=71 // pred_check
        %p6509 = pneg %p322
      $region74: #{cluster_block_forward.1} parent=71 // pred_check_branch
        %6511 = sbr.rel (%p6509) target = $region76
      $region75: #{cluster_block_forward.1} parent=71 // pred_region
        _
      $region76: #{cluster_block_forward.1} parent=71 // pred_fallthru
        _
    $region72: #{cluster_block_forward.1} parent=5 // pred_fallthru
      _
    %p6512 = scmp.le.s32.totalorder 2, %s21
    // Predicated region
    $region77: #{cluster_block_forward.1} parent=5 // pred_check
      %p6513 = pneg %p6512
    $region78: #{cluster_block_forward.1} parent=5 // pred_check_branch
      %6515 = sbr.rel (%p6513) target = $region80
    $region79: #{cluster_block_forward.1} parent=5 // pred_region
      %s6516 = ssub.s32 %s21, 2
      // Predicated region
      $region81: #{cluster_block_forward.1} parent=79 // pred_check
        %p6517 = pneg %p328
      $region82: #{cluster_block_forward.1} parent=79 // pred_check_branch
        %6519 = sbr.rel (%p6517) target = $region84
      $region83: #{cluster_block_forward.1} parent=79 // pred_region
        %p6520 = scmp.lt.s32.totalorder %s27, 1
        %s6521 = scalar_select %p6520, %s27, 1
        %s6522 = smul.addr %s6521, 16
        %s6523 = smul.addr %s6522, 8
        %s6524 = scalar_lea.vmem %s13, %s6523
      $region84: #{cluster_block_forward.1} parent=79 // pred_fallthru
        _
    $region80: #{cluster_block_forward.1} parent=5 // pred_fallthru
      _
  $region6: #{cluster_block_forward.1} parent=0 // loop_footer
    %s25 = sadd.s32 1, %s21
  $region7: #{cluster_block_forward.1} parent=0 // loop_footer_branch
    %20 = sbr.rel target = $region3
  $region8: #{cluster_block_forward.1} parent=0 // loop_exit
    _

</llo_original>
